<compile_context>
chip_gen: v6e
topology: v6e:2x2x1
jax: 0.10.0
libtpu: 0.0.40
codegen_flags: <defaults>
</compile_context>

<pallas_src>
import functools

import jax
import jax.numpy as jnp
from jax.experimental import pallas as pl
from jax.experimental.pallas import tpu as pltpu

ALPHA = 0.1  # LeakyReLU negative slope


# ------------------------------- Pallas kernel ------------------------------ #

def _convres_kernel(x_hbm, w_ref, b_ref, o_ref, xf_ref, sem,
                    *, shifts, tm, tr, rows_block, alpha):
    """Fused Conv3d + residual + bias + LeakyReLU for one row tile.

    x_hbm : (R_x2, L)  f32 activations in HBM (corner-row layout), manual DMA
    w_ref : (9, L, L)  bf16 banded tap weights (L = W*C)
    b_ref : (1, L)     f32 bias tiled across W
    o_ref : (tm, L)    f32 lane-dense output row tile
    xf_ref: (rows_block, L) f32 VMEM scratch holding this tile's haloed slab
    """
    i = pl.program_id(0)
    row0 = pl.multiple_of(i * tm, 8)

    # Manual haloed DMA: rows [row0, row0 + rows_block) of the activations.
    cp = pltpu.make_async_copy(x_hbm.at[pl.ds(row0, rows_block)], xf_ref, sem)
    cp.start()
    cp.wait()

    center = shifts[len(shifts) // 2]      # (kd=1, kh=1) tap row == residual row
    bias = b_ref[...]

    def chunk(r):
        # 9 (kd,kh) taps: bf16 MXU matmuls with f32 accumulation, acc stays in vregs.
        acc = None
        for t, s in enumerate(shifts):
            xa = xf_ref[pl.ds(r + s, tr), :].astype(jnp.bfloat16)
            d = jnp.dot(xa, w_ref[t], preferred_element_type=jnp.float32)
            acc = d if acc is None else acc + d
        # Residual skip in full f32 (not through the MXU) + bias.
        acc = acc + xf_ref[pl.ds(r + center, tr), :] + bias
        # LeakyReLU(alpha in (0,1)):  max(x, alpha*x)
        o_ref[pl.ds(r, tr), :] = jnp.maximum(acc, alpha * acc).astype(o_ref.dtype)

    nchunks = tm // tr
    if nchunks <= 16:
        for c in range(nchunks):           # static unroll, starts are compile-time
            chunk(c * tr)
    else:
        # Bound code size for very large row tiles.
        def body(c, carry):
            chunk(pl.multiple_of(c * tr, 8))
            return carry
        jax.lax.fori_loop(0, nchunks, body, 0)


# ------------------------------ weight preparation -------------------------- #

def _build_banded_weights(w, W):
    """Torch-layout weights (Cout, Cin, K, K, K) -> (K*K, W*Cin, W*Cout) bf16
    banded tap matrices.  kw taps, the channel contraction and the W zero-padding
    are folded into the band, so activations need no padding along W."""
    Cout, Cin, K = w.shape[0], w.shape[1], w.shape[2]
    pad = K // 2
    wt = jnp.transpose(w, (2, 3, 4, 1, 0)).astype(jnp.float32)   # (kd, kh, kw, Cin, Cout)

    w_in = jnp.arange(W)[:, None]
    w_out = jnp.arange(W)[None, :]
    kw = w_in - w_out + pad                                      # tap index feeding w_out from w_in
    valid = ((kw >= 0) & (kw < K)).astype(jnp.float32)
    kw_c = jnp.clip(kw, 0, K - 1)

    band = jnp.take(wt, kw_c, axis=2)                            # (kd, kh, W_in, W_out, Cin, Cout)
    band = band * valid[None, None, :, :, None, None]
    band = jnp.transpose(band, (0, 1, 2, 4, 3, 5))               # (kd, kh, W_in, Cin, W_out, Cout)
    return band.reshape(K * K, W * Cin, W * Cout).astype(jnp.bfloat16)


def prepare_conv_res_params(w, b, W):
    """One-time weight/bias prep, hoisted out of the per-call path."""
    wband = _build_banded_weights(w, W)                          # (9, W*Cin, W*Cout) bf16
    b_row = jnp.tile(b.astype(jnp.float32), W).reshape(1, W * b.shape[0])
    return wband, b_row


# ------------------------------- JAX wrapper -------------------------------- #

def _round_up(n, m):
    return (n + m - 1) // m * m


def _pick_tr(tm):
    """Largest sub-chunk (multiple of 8, <= 256) dividing tm -> register-resident acc."""
    base = tm // 8
    best = 1
    for d in range(1, 33):
        if base % d == 0:
            best = d
    return 8 * best


def _num_tensorcores():
    """Generation-aware grid split: 2 TensorCores per chip on v7x, else 1."""
    try:
        kind = jax.devices()[0].device_kind.lower()
    except Exception:
        return 1
    return 2 if ("v7" in kind or "7x" in kind) else 1


def conv_res_block(x, wband, b_row, *, alpha=ALPHA, n_cores=None):
    """ConvResBlock forward: LeakyReLU(x + Conv3d(x, 3, 1, 1) + b).

    x: (N, D, H, W, C) NDHWC f32;  wband/b_row from prepare_conv_res_params().
    """
    N, D, H, W, C = x.shape
    KK = wband.shape[0]
    K = int(round(KK ** 0.5))                   # 3
    L = W * C                                   # lane width (input == output)
    assert wband.shape[1] == L and wband.shape[2] == L
    assert b_row.shape == (1, L)

    Dp, Hp = D + (K - 1), H + (K - 1)
    rpb = Dp * Hp                               # corner rows per batch
    rows_needed = (N - 1) * rpb + (D - 1) * Hp + (H - 1) + 1   # last valid output row + 1
    halo = (K - 1) * Hp + (K - 1)
    halo_pad = _round_up(halo, 8)

    if n_cores is None:
        n_cores = _num_tensorcores()
    tm = _round_up(pl.cdiv(rows_needed, n_cores), 8)
    grid_m = pl.cdiv(rows_needed, tm)
    R_pad = grid_m * tm
    rows_block = tm + halo_pad
    tr = _pick_tr(tm)

    # One spatial pad only; halo rows come from appending zero batch(es) at the end,
    # which keeps the corner-row indexing unchanged.
    rows_have = N * rpb
    rows_req = (grid_m - 1) * tm + rows_block
    n_extra = max(0, pl.cdiv(max(rows_req - rows_have, 0), rpb))
    pad = K // 2
    x_pad = jnp.pad(x, ((0, n_extra), (pad, pad), (pad, pad), (0, 0), (0, 0)))
    x2 = x_pad.reshape((N + n_extra) * rpb, L)  # rows = (n, dp, hp) corners, lanes = (w, c)

    shifts = tuple(kd * Hp + kh for kd in range(K) for kh in range(K))
    kernel = functools.partial(_convres_kernel, shifts=shifts, tm=tm, tr=tr,
                               rows_block=rows_block, alpha=alpha)

    cost = pl.CostEstimate(
        flops=2 * KK * R_pad * L * L,
        transcendentals=0,
        bytes_accessed=int(x2.size) * x2.dtype.itemsize + int(wband.size) * 2
                       + int(b_row.size) * 4 + R_pad * L * 4,
    )

    out2 = pl.pallas_call(
        kernel,
        out_shape=jax.ShapeDtypeStruct((R_pad, L), x.dtype),
        grid=(grid_m,),
        in_specs=[
            pl.BlockSpec(memory_space=pl.ANY),                   # activations: raw HBM, manual haloed DMA
            pl.BlockSpec((KK, L, L), lambda i: (0, 0, 0)),       # bf16 banded weights (fetched once)
            pl.BlockSpec((1, L), lambda i: (0, 0)),              # f32 bias row
        ],
        out_specs=pl.BlockSpec((tm, L), lambda i: (i, 0)),       # lane-dense output rows
        scratch_shapes=[
            pltpu.VMEM((rows_block, L), jnp.float32),            # haloed f32 activation slab
            pltpu.SemaphoreType.DMA(()),
        ],
        compiler_params=pltpu.CompilerParams(dimension_semantics=("parallel",)),
        cost_estimate=cost,
    )(x2, wband, b_row)

    # Crop the border-corner garbage rows and return NDHWC.
    R_corner = N * rpb
    if R_pad < R_corner:
        out2 = jnp.pad(out2, ((0, R_corner - R_pad), (0, 0)))
    else:
        out2 = out2[:R_corner]
    return out2.reshape(N, Dp, Hp, W, C)[:, :D, :H]


# ----------------------------------- main ------------------------------------ #

if __name__ == "__main__":
    key = jax.random.PRNGKey(0)
    kx, kw_, kb = jax.random.split(key, 3)

    # NDHWC; the equivalent PyTorch NCDHW input is (2, 8, 16, 16, 16).
    N, D, H, W, C = 2, 16, 16, 16, 8
    K = 3
    bound = float(C * K * K * K) ** -0.5
    x = jax.random.normal(kx, (N, D, H, W, C), dtype=jnp.float32)
    w = jax.random.uniform(kw_, (C, C, K, K, K), jnp.float32, -bound, bound)
    b = jax.random.uniform(kb, (C,), jnp.float32, -bound, bound)

    wband, b_row = prepare_conv_res_params(w, b, W)        # one-time weight prep
    fwd = jax.jit(conv_res_block)
    out = jax.block_until_ready(fwd(x, wband, b_row))
    assert out.shape == (N, D, H, W, C)
    assert bool(jnp.all(jnp.isfinite(out)))

    # Reference 1: matched operand precision (bf16 conv operands, f32 accumulation,
    # f32 residual/bias) -> tight tolerance proves the kernel math is right.
    x_ncdhw = jnp.transpose(x, (0, 4, 1, 2, 3))
    x_bf = x_ncdhw.astype(jnp.bfloat16).astype(jnp.float32)
    w_bf = w.astype(jnp.bfloat16).astype(jnp.float32)
    conv = jax.lax.conv_general_dilated(
        x_bf, w_bf, window_strides=(1, 1, 1), padding=((1, 1),) * 3,
        dimension_numbers=("NCDHW", "OIDHW", "NCDHW"),
        precision=jax.lax.Precision.HIGHEST,
    ) + b[None, :, None, None, None]
    ref = x_ncdhw + conv
    ref = jnp.where(ref > 0, ref, ALPHA * ref)
    ref = jnp.transpose(ref, (0, 2, 3, 4, 1))
    err = float(jnp.max(jnp.abs(out - ref)))
    assert err < 2e-3, f"max abs err vs matched-precision reference = {err}"

    # Reference 2 (sanity): full-f32 conv; error is only the bf16 rounding of the
    # MXU operands (the residual skip stays exact f32 in the kernel).
    conv32 = jax.lax.conv_general_dilated(
        x_ncdhw, w, window_strides=(1, 1, 1), padding=((1, 1),) * 3,
        dimension_numbers=("NCDHW", "OIDHW", "NCDHW"),
        precision=jax.lax.Precision.HIGHEST,
    ) + b[None, :, None, None, None]
    ref32 = x_ncdhw + conv32
    ref32 = jnp.where(ref32 > 0, ref32, ALPHA * ref32)
    ref32 = jnp.transpose(ref32, (0, 2, 3, 4, 1))
    err32 = float(jnp.max(jnp.abs(out - ref32)))
    assert err32 < 6e-2, f"max abs err vs f32 reference = {err32}"

    print("KERNEL_OK")
</pallas_src>

<mosaic_0001>
module attributes {stable_mosaic.version = 11 : i64} {
  func.func @_convres_kernel(%arg0: i32, %arg1: memref<972x128xf32, #tpu.memory_space<any>>, %arg2: memref<9x128x128xbf16, #tpu.memory_space<vmem>>, %arg3: memref<1x128xf32, #tpu.memory_space<vmem>>, %arg4: memref<616x128xf32, #tpu.memory_space<vmem>>, %arg5: memref<656x128xf32, #tpu.memory_space<vmem>>, %arg6: memref<!tpu.dma_semaphore, #tpu.memory_space<semaphore_mem>>) attributes {dimension_semantics = [#tpu.dimension_semantics<parallel>], iteration_bounds = array<i64: 1>, scalar_prefetch = 0 : i64, scratch_operands = 2 : i64, tpu.core_type = #tpu.core_type<tc>, window_params = [{}, {pipeline_mode = #tpu.pipeline_mode<synchronous>, transform_indices = @transform_1, window_bounds = array<i64: 9, 128, 128>}, {pipeline_mode = #tpu.pipeline_mode<synchronous>, transform_indices = @transform_2, window_bounds = array<i64: 1, 128>}, {transform_indices = @transform_3, window_bounds = array<i64: 616, 128>}]} {
    %c616_i32 = arith.constant 616 : i32
    %0 = arith.muli %arg0, %c616_i32 : i32
    %1 = tpu.assume_multiple %0, 8 : i32
    %c0_i32 = arith.constant 0 : i32
    %2 = tpu.memref_slice %arg1[%1, %c0_i32] : memref<972x128xf32, #tpu.memory_space<any>> -> memref<656x128xf32, #tpu.memory_space<any>>
    tpu.enqueue_dma source(%2 : memref<656x128xf32, #tpu.memory_space<any>>) target(%arg5 : memref<656x128xf32, #tpu.memory_space<vmem>>) target_semaphore(%arg6 : memref<!tpu.dma_semaphore, #tpu.memory_space<semaphore_mem>>)
    %c0_i32_0 = arith.constant 0 : i32
    %3 = tpu.memref_slice %arg1[%1, %c0_i32_0] : memref<972x128xf32, #tpu.memory_space<any>> -> memref<656x128xf32, #tpu.memory_space<any>>
    tpu.wait_dma2 semaphore(%arg6 : memref<!tpu.dma_semaphore, #tpu.memory_space<semaphore_mem>>) src(%3 : memref<656x128xf32, #tpu.memory_space<any>>) dst(%arg5 : memref<656x128xf32, #tpu.memory_space<vmem>>)
    %c0 = arith.constant 0 : index
    %c0_1 = arith.constant 0 : index
    %4 = vector.load %arg3[%c0, %c0_1] : memref<1x128xf32, #tpu.memory_space<vmem>>, vector<1x128xf32>
    %c0_2 = arith.constant 0 : index
    %c0_3 = arith.constant 0 : index
    %5 = vector.load %arg5[%c0_2, %c0_3] : memref<656x128xf32, #tpu.memory_space<vmem>>, vector<88x128xf32>
    %6 = arith.truncf %5 : vector<88x128xf32> to vector<88x128xbf16>
    %c0_4 = arith.constant 0 : index
    %c0_5 = arith.constant 0 : index
    %c0_6 = arith.constant 0 : index
    %7 = vector.load %arg2[%c0_4, %c0_5, %c0_6] : memref<9x128x128xbf16, #tpu.memory_space<vmem>>, vector<1x128x128xbf16>
    %8 = vector.shape_cast %7 : vector<1x128x128xbf16> to vector<128x128xbf16>
    %cst = arith.constant dense<0.000000e+00> : vector<88x128xf32>
    %9 = tpu.matmul %6, %8, %cst {dimension_numbers = #tpu.dot_dimension_numbers<[1], [0], [0], [1], [0, 0, 1, 1], [], []>} : vector<88x128xbf16>, vector<128x128xbf16>, vector<88x128xf32> -> vector<88x128xf32>
    %c1 = arith.constant 1 : index
    %c0_7 = arith.constant 0 : index
    %10 = vector.load %arg5[%c1, %c0_7] : memref<656x128xf32, #tpu.memory_space<vmem>>, vector<88x128xf32>
    %11 = arith.truncf %10 : vector<88x128xf32> to vector<88x128xbf16>
    %c1_8 = arith.constant 1 : index
    %c0_9 = arith.constant 0 : index
    %c0_10 = arith.constant 0 : index
    %12 = vector.load %arg2[%c1_8, %c0_9, %c0_10] : memref<9x128x128xbf16, #tpu.memory_space<vmem>>, vector<1x128x128xbf16>
    %13 = vector.shape_cast %12 : vector<1x128x128xbf16> to vector<128x128xbf16>
    %cst_11 = arith.constant dense<0.000000e+00> : vector<88x128xf32>
    %14 = tpu.matmul %11, %13, %cst_11 {dimension_numbers = #tpu.dot_dimension_numbers<[1], [0], [0], [1], [0, 0, 1, 1], [], []>} : vector<88x128xbf16>, vector<128x128xbf16>, vector<88x128xf32> -> vector<88x128xf32>
    %15 = arith.addf %9, %14 : vector<88x128xf32>
    %c2 = arith.constant 2 : index
    %c0_12 = arith.constant 0 : index
    %16 = vector.load %arg5[%c2, %c0_12] : memref<656x128xf32, #tpu.memory_space<vmem>>, vector<88x128xf32>
    %17 = arith.truncf %16 : vector<88x128xf32> to vector<88x128xbf16>
    %c2_13 = arith.constant 2 : index
    %c0_14 = arith.constant 0 : index
    %c0_15 = arith.constant 0 : index
    %18 = vector.load %arg2[%c2_13, %c0_14, %c0_15] : memref<9x128x128xbf16, #tpu.memory_space<vmem>>, vector<1x128x128xbf16>
    %19 = vector.shape_cast %18 : vector<1x128x128xbf16> to vector<128x128xbf16>
    %cst_16 = arith.constant dense<0.000000e+00> : vector<88x128xf32>
    %20 = tpu.matmul %17, %19, %cst_16 {dimension_numbers = #tpu.dot_dimension_numbers<[1], [0], [0], [1], [0, 0, 1, 1], [], []>} : vector<88x128xbf16>, vector<128x128xbf16>, vector<88x128xf32> -> vector<88x128xf32>
    %21 = arith.addf %15, %20 : vector<88x128xf32>
    %c18 = arith.constant 18 : index
    %c0_17 = arith.constant 0 : index
    %22 = vector.load %arg5[%c18, %c0_17] : memref<656x128xf32, #tpu.memory_space<vmem>>, vector<88x128xf32>
    %23 = arith.truncf %22 : vector<88x128xf32> to vector<88x128xbf16>
    %c3 = arith.constant 3 : index
    %c0_18 = arith.constant 0 : index
    %c0_19 = arith.constant 0 : index
    %24 = vector.load %arg2[%c3, %c0_18, %c0_19] : memref<9x128x128xbf16, #tpu.memory_space<vmem>>, vector<1x128x128xbf16>
    %25 = vector.shape_cast %24 : vector<1x128x128xbf16> to vector<128x128xbf16>
    %cst_20 = arith.constant dense<0.000000e+00> : vector<88x128xf32>
    %26 = tpu.matmul %23, %25, %cst_20 {dimension_numbers = #tpu.dot_dimension_numbers<[1], [0], [0], [1], [0, 0, 1, 1], [], []>} : vector<88x128xbf16>, vector<128x128xbf16>, vector<88x128xf32> -> vector<88x128xf32>
    %27 = arith.addf %21, %26 : vector<88x128xf32>
    %c19 = arith.constant 19 : index
    %c0_21 = arith.constant 0 : index
    %28 = vector.load %arg5[%c19, %c0_21] : memref<656x128xf32, #tpu.memory_space<vmem>>, vector<88x128xf32>
    %29 = arith.truncf %28 : vector<88x128xf32> to vector<88x128xbf16>
    %c4 = arith.constant 4 : index
    %c0_22 = arith.constant 0 : index
    %c0_23 = arith.constant 0 : index
    %30 = vector.load %arg2[%c4, %c0_22, %c0_23] : memref<9x128x128xbf16, #tpu.memory_space<vmem>>, vector<1x128x128xbf16>
    %31 = vector.shape_cast %30 : vector<1x128x128xbf16> to vector<128x128xbf16>
    %cst_24 = arith.constant dense<0.000000e+00> : vector<88x128xf32>
    %32 = tpu.matmul %29, %31, %cst_24 {dimension_numbers = #tpu.dot_dimension_numbers<[1], [0], [0], [1], [0, 0, 1, 1], [], []>} : vector<88x128xbf16>, vector<128x128xbf16>, vector<88x128xf32> -> vector<88x128xf32>
    %33 = arith.addf %27, %32 : vector<88x128xf32>
    %c20 = arith.constant 20 : index
    %c0_25 = arith.constant 0 : index
    %34 = vector.load %arg5[%c20, %c0_25] : memref<656x128xf32, #tpu.memory_space<vmem>>, vector<88x128xf32>
    %35 = arith.truncf %34 : vector<88x128xf32> to vector<88x128xbf16>
    %c5 = arith.constant 5 : index
    %c0_26 = arith.constant 0 : index
    %c0_27 = arith.constant 0 : index
    %36 = vector.load %arg2[%c5, %c0_26, %c0_27] : memref<9x128x128xbf16, #tpu.memory_space<vmem>>, vector<1x128x128xbf16>
    %37 = vector.shape_cast %36 : vector<1x128x128xbf16> to vector<128x128xbf16>
    %cst_28 = arith.constant dense<0.000000e+00> : vector<88x128xf32>
    %38 = tpu.matmul %35, %37, %cst_28 {dimension_numbers = #tpu.dot_dimension_numbers<[1], [0], [0], [1], [0, 0, 1, 1], [], []>} : vector<88x128xbf16>, vector<128x128xbf16>, vector<88x128xf32> -> vector<88x128xf32>
    %39 = arith.addf %33, %38 : vector<88x128xf32>
    %c36 = arith.constant 36 : index
    %c0_29 = arith.constant 0 : index
    %40 = vector.load %arg5[%c36, %c0_29] : memref<656x128xf32, #tpu.memory_space<vmem>>, vector<88x128xf32>
    %41 = arith.truncf %40 : vector<88x128xf32> to vector<88x128xbf16>
    %c6 = arith.constant 6 : index
    %c0_30 = arith.constant 0 : index
    %c0_31 = arith.constant 0 : index
    %42 = vector.load %arg2[%c6, %c0_30, %c0_31] : memref<9x128x128xbf16, #tpu.memory_space<vmem>>, vector<1x128x128xbf16>
    %43 = vector.shape_cast %42 : vector<1x128x128xbf16> to vector<128x128xbf16>
    %cst_32 = arith.constant dense<0.000000e+00> : vector<88x128xf32>
    %44 = tpu.matmul %41, %43, %cst_32 {dimension_numbers = #tpu.dot_dimension_numbers<[1], [0], [0], [1], [0, 0, 1, 1], [], []>} : vector<88x128xbf16>, vector<128x128xbf16>, vector<88x128xf32> -> vector<88x128xf32>
    %45 = arith.addf %39, %44 : vector<88x128xf32>
    %c37 = arith.constant 37 : index
    %c0_33 = arith.constant 0 : index
    %46 = vector.load %arg5[%c37, %c0_33] : memref<656x128xf32, #tpu.memory_space<vmem>>, vector<88x128xf32>
    %47 = arith.truncf %46 : vector<88x128xf32> to vector<88x128xbf16>
    %c7 = arith.constant 7 : index
    %c0_34 = arith.constant 0 : index
    %c0_35 = arith.constant 0 : index
    %48 = vector.load %arg2[%c7, %c0_34, %c0_35] : memref<9x128x128xbf16, #tpu.memory_space<vmem>>, vector<1x128x128xbf16>
    %49 = vector.shape_cast %48 : vector<1x128x128xbf16> to vector<128x128xbf16>
    %cst_36 = arith.constant dense<0.000000e+00> : vector<88x128xf32>
    %50 = tpu.matmul %47, %49, %cst_36 {dimension_numbers = #tpu.dot_dimension_numbers<[1], [0], [0], [1], [0, 0, 1, 1], [], []>} : vector<88x128xbf16>, vector<128x128xbf16>, vector<88x128xf32> -> vector<88x128xf32>
    %51 = arith.addf %45, %50 : vector<88x128xf32>
    %c38 = arith.constant 38 : index
    %c0_37 = arith.constant 0 : index
    %52 = vector.load %arg5[%c38, %c0_37] : memref<656x128xf32, #tpu.memory_space<vmem>>, vector<88x128xf32>
    %53 = arith.truncf %52 : vector<88x128xf32> to vector<88x128xbf16>
    %c8 = arith.constant 8 : index
    %c0_38 = arith.constant 0 : index
    %c0_39 = arith.constant 0 : index
    %54 = vector.load %arg2[%c8, %c0_38, %c0_39] : memref<9x128x128xbf16, #tpu.memory_space<vmem>>, vector<1x128x128xbf16>
    %55 = vector.shape_cast %54 : vector<1x128x128xbf16> to vector<128x128xbf16>
    %cst_40 = arith.constant dense<0.000000e+00> : vector<88x128xf32>
    %56 = tpu.matmul %53, %55, %cst_40 {dimension_numbers = #tpu.dot_dimension_numbers<[1], [0], [0], [1], [0, 0, 1, 1], [], []>} : vector<88x128xbf16>, vector<128x128xbf16>, vector<88x128xf32> -> vector<88x128xf32>
    %57 = arith.addf %51, %56 : vector<88x128xf32>
    %c19_41 = arith.constant 19 : index
    %c0_42 = arith.constant 0 : index
    %58 = vector.load %arg5[%c19_41, %c0_42] : memref<656x128xf32, #tpu.memory_space<vmem>>, vector<88x128xf32>
    %59 = arith.addf %57, %58 : vector<88x128xf32>
    %60 = vector.broadcast %4 : vector<1x128xf32> to vector<88x128xf32>
    %61 = arith.addf %59, %60 : vector<88x128xf32>
    %cst_43 = arith.constant 1.000000e-01 : f32
    %62 = vector.broadcast %cst_43 : f32 to vector<88x128xf32>
    %63 = arith.mulf %62, %61 : vector<88x128xf32>
    %64 = arith.maximumf %61, %63 : vector<88x128xf32>
    %c0_44 = arith.constant 0 : index
    %c0_45 = arith.constant 0 : index
    %65 = vector.load %arg4[%c0_44, %c0_45] : memref<616x128xf32, #tpu.memory_space<vmem>>, vector<88x128xf32>
    tpu.vector_store %arg4[%c0_44, %c0_45], %64 {strides = array<i32>} : memref<616x128xf32, #tpu.memory_space<vmem>>, vector<88x128xf32>,
    %c88 = arith.constant 88 : index
    %c0_46 = arith.constant 0 : index
    %66 = vector.load %arg5[%c88, %c0_46] : memref<656x128xf32, #tpu.memory_space<vmem>>, vector<88x128xf32>
    %67 = arith.truncf %66 : vector<88x128xf32> to vector<88x128xbf16>
    %c0_47 = arith.constant 0 : index
    %c0_48 = arith.constant 0 : index
    %c0_49 = arith.constant 0 : index
    %68 = vector.load %arg2[%c0_47, %c0_48, %c0_49] : memref<9x128x128xbf16, #tpu.memory_space<vmem>>, vector<1x128x128xbf16>
    %69 = vector.shape_cast %68 : vector<1x128x128xbf16> to vector<128x128xbf16>
    %cst_50 = arith.constant dense<0.000000e+00> : vector<88x128xf32>
    %70 = tpu.matmul %67, %69, %cst_50 {dimension_numbers = #tpu.dot_dimension_numbers<[1], [0], [0], [1], [0, 0, 1, 1], [], []>} : vector<88x128xbf16>, vector<128x128xbf16>, vector<88x128xf32> -> vector<88x128xf32>
    %c89 = arith.constant 89 : index
    %c0_51 = arith.constant 0 : index
    %71 = vector.load %arg5[%c89, %c0_51] : memref<656x128xf32, #tpu.memory_space<vmem>>, vector<88x128xf32>
    %72 = arith.truncf %71 : vector<88x128xf32> to vector<88x128xbf16>
    %c1_52 = arith.constant 1 : index
    %c0_53 = arith.constant 0 : index
    %c0_54 = arith.constant 0 : index
    %73 = vector.load %arg2[%c1_52, %c0_53, %c0_54] : memref<9x128x128xbf16, #tpu.memory_space<vmem>>, vector<1x128x128xbf16>
    %74 = vector.shape_cast %73 : vector<1x128x128xbf16> to vector<128x128xbf16>
    %cst_55 = arith.constant dense<0.000000e+00> : vector<88x128xf32>
    %75 = tpu.matmul %72, %74, %cst_55 {dimension_numbers = #tpu.dot_dimension_numbers<[1], [0], [0], [1], [0, 0, 1, 1], [], []>} : vector<88x128xbf16>, vector<128x128xbf16>, vector<88x128xf32> -> vector<88x128xf32>
    %76 = arith.addf %70, %75 : vector<88x128xf32>
    %c90 = arith.constant 90 : index
    %c0_56 = arith.constant 0 : index
    %77 = vector.load %arg5[%c90, %c0_56] : memref<656x128xf32, #tpu.memory_space<vmem>>, vector<88x128xf32>
    %78 = arith.truncf %77 : vector<88x128xf32> to vector<88x128xbf16>
    %c2_57 = arith.constant 2 : index
    %c0_58 = arith.constant 0 : index
    %c0_59 = arith.constant 0 : index
    %79 = vector.load %arg2[%c2_57, %c0_58, %c0_59] : memref<9x128x128xbf16, #tpu.memory_space<vmem>>, vector<1x128x128xbf16>
    %80 = vector.shape_cast %79 : vector<1x128x128xbf16> to vector<128x128xbf16>
    %cst_60 = arith.constant dense<0.000000e+00> : vector<88x128xf32>
    %81 = tpu.matmul %78, %80, %cst_60 {dimension_numbers = #tpu.dot_dimension_numbers<[1], [0], [0], [1], [0, 0, 1, 1], [], []>} : vector<88x128xbf16>, vector<128x128xbf16>, vector<88x128xf32> -> vector<88x128xf32>
    %82 = arith.addf %76, %81 : vector<88x128xf32>
    %c106 = arith.constant 106 : index
    %c0_61 = arith.constant 0 : index
    %83 = vector.load %arg5[%c106, %c0_61] : memref<656x128xf32, #tpu.memory_space<vmem>>, vector<88x128xf32>
    %84 = arith.truncf %83 : vector<88x128xf32> to vector<88x128xbf16>
    %c3_62 = arith.constant 3 : index
    %c0_63 = arith.constant 0 : index
    %c0_64 = arith.constant 0 : index
    %85 = vector.load %arg2[%c3_62, %c0_63, %c0_64] : memref<9x128x128xbf16, #tpu.memory_space<vmem>>, vector<1x128x128xbf16>
    %86 = vector.shape_cast %85 : vector<1x128x128xbf16> to vector<128x128xbf16>
    %cst_65 = arith.constant dense<0.000000e+00> : vector<88x128xf32>
    %87 = tpu.matmul %84, %86, %cst_65 {dimension_numbers = #tpu.dot_dimension_numbers<[1], [0], [0], [1], [0, 0, 1, 1], [], []>} : vector<88x128xbf16>, vector<128x128xbf16>, vector<88x128xf32> -> vector<88x128xf32>
    %88 = arith.addf %82, %87 : vector<88x128xf32>
    %c107 = arith.constant 107 : index
    %c0_66 = arith.constant 0 : index
    %89 = vector.load %arg5[%c107, %c0_66] : memref<656x128xf32, #tpu.memory_space<vmem>>, vector<88x128xf32>
    %90 = arith.truncf %89 : vector<88x128xf32> to vector<88x128xbf16>
    %c4_67 = arith.constant 4 : index
    %c0_68 = arith.constant 0 : index
    %c0_69 = arith.constant 0 : index
    %91 = vector.load %arg2[%c4_67, %c0_68, %c0_69] : memref<9x128x128xbf16, #tpu.memory_space<vmem>>, vector<1x128x128xbf16>
    %92 = vector.shape_cast %91 : vector<1x128x128xbf16> to vector<128x128xbf16>
    %cst_70 = arith.constant dense<0.000000e+00> : vector<88x128xf32>
    %93 = tpu.matmul %90, %92, %cst_70 {dimension_numbers = #tpu.dot_dimension_numbers<[1], [0], [0], [1], [0, 0, 1, 1], [], []>} : vector<88x128xbf16>, vector<128x128xbf16>, vector<88x128xf32> -> vector<88x128xf32>
    %94 = arith.addf %88, %93 : vector<88x128xf32>
    %c108 = arith.constant 108 : index
    %c0_71 = arith.constant 0 : index
    %95 = vector.load %arg5[%c108, %c0_71] : memref<656x128xf32, #tpu.memory_space<vmem>>, vector<88x128xf32>
    %96 = arith.truncf %95 : vector<88x128xf32> to vector<88x128xbf16>
    %c5_72 = arith.constant 5 : index
    %c0_73 = arith.constant 0 : index
    %c0_74 = arith.constant 0 : index
    %97 = vector.load %arg2[%c5_72, %c0_73, %c0_74] : memref<9x128x128xbf16, #tpu.memory_space<vmem>>, vector<1x128x128xbf16>
    %98 = vector.shape_cast %97 : vector<1x128x128xbf16> to vector<128x128xbf16>
    %cst_75 = arith.constant dense<0.000000e+00> : vector<88x128xf32>
    %99 = tpu.matmul %96, %98, %cst_75 {dimension_numbers = #tpu.dot_dimension_numbers<[1], [0], [0], [1], [0, 0, 1, 1], [], []>} : vector<88x128xbf16>, vector<128x128xbf16>, vector<88x128xf32> -> vector<88x128xf32>
    %100 = arith.addf %94, %99 : vector<88x128xf32>
    %c124 = arith.constant 124 : index
    %c0_76 = arith.constant 0 : index
    %101 = vector.load %arg5[%c124, %c0_76] : memref<656x128xf32, #tpu.memory_space<vmem>>, vector<88x128xf32>
    %102 = arith.truncf %101 : vector<88x128xf32> to vector<88x128xbf16>
    %c6_77 = arith.constant 6 : index
    %c0_78 = arith.constant 0 : index
    %c0_79 = arith.constant 0 : index
    %103 = vector.load %arg2[%c6_77, %c0_78, %c0_79] : memref<9x128x128xbf16, #tpu.memory_space<vmem>>, vector<1x128x128xbf16>
    %104 = vector.shape_cast %103 : vector<1x128x128xbf16> to vector<128x128xbf16>
    %cst_80 = arith.constant dense<0.000000e+00> : vector<88x128xf32>
    %105 = tpu.matmul %102, %104, %cst_80 {dimension_numbers = #tpu.dot_dimension_numbers<[1], [0], [0], [1], [0, 0, 1, 1], [], []>} : vector<88x128xbf16>, vector<128x128xbf16>, vector<88x128xf32> -> vector<88x128xf32>
    %106 = arith.addf %100, %105 : vector<88x128xf32>
    %c125 = arith.constant 125 : index
    %c0_81 = arith.constant 0 : index
    %107 = vector.load %arg5[%c125, %c0_81] : memref<656x128xf32, #tpu.memory_space<vmem>>, vector<88x128xf32>
    %108 = arith.truncf %107 : vector<88x128xf32> to vector<88x128xbf16>
    %c7_82 = arith.constant 7 : index
    %c0_83 = arith.constant 0 : index
    %c0_84 = arith.constant 0 : index
    %109 = vector.load %arg2[%c7_82, %c0_83, %c0_84] : memref<9x128x128xbf16, #tpu.memory_space<vmem>>, vector<1x128x128xbf16>
    %110 = vector.shape_cast %109 : vector<1x128x128xbf16> to vector<128x128xbf16>
    %cst_85 = arith.constant dense<0.000000e+00> : vector<88x128xf32>
    %111 = tpu.matmul %108, %110, %cst_85 {dimension_numbers = #tpu.dot_dimension_numbers<[1], [0], [0], [1], [0, 0, 1, 1], [], []>} : vector<88x128xbf16>, vector<128x128xbf16>, vector<88x128xf32> -> vector<88x128xf32>
    %112 = arith.addf %106, %111 : vector<88x128xf32>
    %c126 = arith.constant 126 : index
    %c0_86 = arith.constant 0 : index
    %113 = vector.load %arg5[%c126, %c0_86] : memref<656x128xf32, #tpu.memory_space<vmem>>, vector<88x128xf32>
    %114 = arith.truncf %113 : vector<88x128xf32> to vector<88x128xbf16>
    %c8_87 = arith.constant 8 : index
    %c0_88 = arith.constant 0 : index
    %c0_89 = arith.constant 0 : index
    %115 = vector.load %arg2[%c8_87, %c0_88, %c0_89] : memref<9x128x128xbf16, #tpu.memory_space<vmem>>, vector<1x128x128xbf16>
    %116 = vector.shape_cast %115 : vector<1x128x128xbf16> to vector<128x128xbf16>
    %cst_90 = arith.constant dense<0.000000e+00> : vector<88x128xf32>
    %117 = tpu.matmul %114, %116, %cst_90 {dimension_numbers = #tpu.dot_dimension_numbers<[1], [0], [0], [1], [0, 0, 1, 1], [], []>} : vector<88x128xbf16>, vector<128x128xbf16>, vector<88x128xf32> -> vector<88x128xf32>
    %118 = arith.addf %112, %117 : vector<88x128xf32>
    %c107_91 = arith.constant 107 : index
    %c0_92 = arith.constant 0 : index
    %119 = vector.load %arg5[%c107_91, %c0_92] : memref<656x128xf32, #tpu.memory_space<vmem>>, vector<88x128xf32>
    %120 = arith.addf %118, %119 : vector<88x128xf32>
    %121 = vector.broadcast %4 : vector<1x128xf32> to vector<88x128xf32>
    %122 = arith.addf %120, %121 : vector<88x128xf32>
    %cst_93 = arith.constant 1.000000e-01 : f32
    %123 = vector.broadcast %cst_93 : f32 to vector<88x128xf32>
    %124 = arith.mulf %123, %122 : vector<88x128xf32>
    %125 = arith.maximumf %122, %124 : vector<88x128xf32>
    %c88_94 = arith.constant 88 : index
    %c0_95 = arith.constant 0 : index
    %126 = vector.load %arg4[%c88_94, %c0_95] : memref<616x128xf32, #tpu.memory_space<vmem>>, vector<88x128xf32>
    tpu.vector_store %arg4[%c88_94, %c0_95], %125 {strides = array<i32>} : memref<616x128xf32, #tpu.memory_space<vmem>>, vector<88x128xf32>,
    %c176 = arith.constant 176 : index
    %c0_96 = arith.constant 0 : index
    %127 = vector.load %arg5[%c176, %c0_96] : memref<656x128xf32, #tpu.memory_space<vmem>>, vector<88x128xf32>
    %128 = arith.truncf %127 : vector<88x128xf32> to vector<88x128xbf16>
    %c0_97 = arith.constant 0 : index
    %c0_98 = arith.constant 0 : index
    %c0_99 = arith.constant 0 : index
    %129 = vector.load %arg2[%c0_97, %c0_98, %c0_99] : memref<9x128x128xbf16, #tpu.memory_space<vmem>>, vector<1x128x128xbf16>
    %130 = vector.shape_cast %129 : vector<1x128x128xbf16> to vector<128x128xbf16>
    %cst_100 = arith.constant dense<0.000000e+00> : vector<88x128xf32>
    %131 = tpu.matmul %128, %130, %cst_100 {dimension_numbers = #tpu.dot_dimension_numbers<[1], [0], [0], [1], [0, 0, 1, 1], [], []>} : vector<88x128xbf16>, vector<128x128xbf16>, vector<88x128xf32> -> vector<88x128xf32>
    %c177 = arith.constant 177 : index
    %c0_101 = arith.constant 0 : index
    %132 = vector.load %arg5[%c177, %c0_101] : memref<656x128xf32, #tpu.memory_space<vmem>>, vector<88x128xf32>
    %133 = arith.truncf %132 : vector<88x128xf32> to vector<88x128xbf16>
    %c1_102 = arith.constant 1 : index
    %c0_103 = arith.constant 0 : index
    %c0_104 = arith.constant 0 : index
    %134 = vector.load %arg2[%c1_102, %c0_103, %c0_104] : memref<9x128x128xbf16, #tpu.memory_space<vmem>>, vector<1x128x128xbf16>
    %135 = vector.shape_cast %134 : vector<1x128x128xbf16> to vector<128x128xbf16>
    %cst_105 = arith.constant dense<0.000000e+00> : vector<88x128xf32>
    %136 = tpu.matmul %133, %135, %cst_105 {dimension_numbers = #tpu.dot_dimension_numbers<[1], [0], [0], [1], [0, 0, 1, 1], [], []>} : vector<88x128xbf16>, vector<128x128xbf16>, vector<88x128xf32> -> vector<88x128xf32>
    %137 = arith.addf %131, %136 : vector<88x128xf32>
    %c178 = arith.constant 178 : index
    %c0_106 = arith.constant 0 : index
    %138 = vector.load %arg5[%c178, %c0_106] : memref<656x128xf32, #tpu.memory_space<vmem>>, vector<88x128xf32>
    %139 = arith.truncf %138 : vector<88x128xf32> to vector<88x128xbf16>
    %c2_107 = arith.constant 2 : index
    %c0_108 = arith.constant 0 : index
    %c0_109 = arith.constant 0 : index
    %140 = vector.load %arg2[%c2_107, %c0_108, %c0_109] : memref<9x128x128xbf16, #tpu.memory_space<vmem>>, vector<1x128x128xbf16>
    %141 = vector.shape_cast %140 : vector<1x128x128xbf16> to vector<128x128xbf16>
    %cst_110 = arith.constant dense<0.000000e+00> : vector<88x128xf32>
    %142 = tpu.matmul %139, %141, %cst_110 {dimension_numbers = #tpu.dot_dimension_numbers<[1], [0], [0], [1], [0, 0, 1, 1], [], []>} : vector<88x128xbf16>, vector<128x128xbf16>, vector<88x128xf32> -> vector<88x128xf32>
    %143 = arith.addf %137, %142 : vector<88x128xf32>
    %c194 = arith.constant 194 : index
    %c0_111 = arith.constant 0 : index
    %144 = vector.load %arg5[%c194, %c0_111] : memref<656x128xf32, #tpu.memory_space<vmem>>, vector<88x128xf32>
    %145 = arith.truncf %144 : vector<88x128xf32> to vector<88x128xbf16>
    %c3_112 = arith.constant 3 : index
    %c0_113 = arith.constant 0 : index
    %c0_114 = arith.constant 0 : index
    %146 = vector.load %arg2[%c3_112, %c0_113, %c0_114] : memref<9x128x128xbf16, #tpu.memory_space<vmem>>, vector<1x128x128xbf16>
    %147 = vector.shape_cast %146 : vector<1x128x128xbf16> to vector<128x128xbf16>
    %cst_115 = arith.constant dense<0.000000e+00> : vector<88x128xf32>
    %148 = tpu.matmul %145, %147, %cst_115 {dimension_numbers = #tpu.dot_dimension_numbers<[1], [0], [0], [1], [0, 0, 1, 1], [], []>} : vector<88x128xbf16>, vector<128x128xbf16>, vector<88x128xf32> -> vector<88x128xf32>
    %149 = arith.addf %143, %148 : vector<88x128xf32>
    %c195 = arith.constant 195 : index
    %c0_116 = arith.constant 0 : index
    %150 = vector.load %arg5[%c195, %c0_116] : memref<656x128xf32, #tpu.memory_space<vmem>>, vector<88x128xf32>
    %151 = arith.truncf %150 : vector<88x128xf32> to vector<88x128xbf16>
    %c4_117 = arith.constant 4 : index
    %c0_118 = arith.constant 0 : index
    %c0_119 = arith.constant 0 : index
    %152 = vector.load %arg2[%c4_117, %c0_118, %c0_119] : memref<9x128x128xbf16, #tpu.memory_space<vmem>>, vector<1x128x128xbf16>
    %153 = vector.shape_cast %152 : vector<1x128x128xbf16> to vector<128x128xbf16>
    %cst_120 = arith.constant dense<0.000000e+00> : vector<88x128xf32>
    %154 = tpu.matmul %151, %153, %cst_120 {dimension_numbers = #tpu.dot_dimension_numbers<[1], [0], [0], [1], [0, 0, 1, 1], [], []>} : vector<88x128xbf16>, vector<128x128xbf16>, vector<88x128xf32> -> vector<88x128xf32>
    %155 = arith.addf %149, %154 : vector<88x128xf32>
    %c196 = arith.constant 196 : index
    %c0_121 = arith.constant 0 : index
    %156 = vector.load %arg5[%c196, %c0_121] : memref<656x128xf32, #tpu.memory_space<vmem>>, vector<88x128xf32>
    %157 = arith.truncf %156 : vector<88x128xf32> to vector<88x128xbf16>
    %c5_122 = arith.constant 5 : index
    %c0_123 = arith.constant 0 : index
    %c0_124 = arith.constant 0 : index
    %158 = vector.load %arg2[%c5_122, %c0_123, %c0_124] : memref<9x128x128xbf16, #tpu.memory_space<vmem>>, vector<1x128x128xbf16>
    %159 = vector.shape_cast %158 : vector<1x128x128xbf16> to vector<128x128xbf16>
    %cst_125 = arith.constant dense<0.000000e+00> : vector<88x128xf32>
    %160 = tpu.matmul %157, %159, %cst_125 {dimension_numbers = #tpu.dot_dimension_numbers<[1], [0], [0], [1], [0, 0, 1, 1], [], []>} : vector<88x128xbf16>, vector<128x128xbf16>, vector<88x128xf32> -> vector<88x128xf32>
    %161 = arith.addf %155, %160 : vector<88x128xf32>
    %c212 = arith.constant 212 : index
    %c0_126 = arith.constant 0 : index
    %162 = vector.load %arg5[%c212, %c0_126] : memref<656x128xf32, #tpu.memory_space<vmem>>, vector<88x128xf32>
    %163 = arith.truncf %162 : vector<88x128xf32> to vector<88x128xbf16>
    %c6_127 = arith.constant 6 : index
    %c0_128 = arith.constant 0 : index
    %c0_129 = arith.constant 0 : index
    %164 = vector.load %arg2[%c6_127, %c0_128, %c0_129] : memref<9x128x128xbf16, #tpu.memory_space<vmem>>, vector<1x128x128xbf16>
    %165 = vector.shape_cast %164 : vector<1x128x128xbf16> to vector<128x128xbf16>
    %cst_130 = arith.constant dense<0.000000e+00> : vector<88x128xf32>
    %166 = tpu.matmul %163, %165, %cst_130 {dimension_numbers = #tpu.dot_dimension_numbers<[1], [0], [0], [1], [0, 0, 1, 1], [], []>} : vector<88x128xbf16>, vector<128x128xbf16>, vector<88x128xf32> -> vector<88x128xf32>
    %167 = arith.addf %161, %166 : vector<88x128xf32>
    %c213 = arith.constant 213 : index
    %c0_131 = arith.constant 0 : index
    %168 = vector.load %arg5[%c213, %c0_131] : memref<656x128xf32, #tpu.memory_space<vmem>>, vector<88x128xf32>
    %169 = arith.truncf %168 : vector<88x128xf32> to vector<88x128xbf16>
    %c7_132 = arith.constant 7 : index
    %c0_133 = arith.constant 0 : index
    %c0_134 = arith.constant 0 : index
    %170 = vector.load %arg2[%c7_132, %c0_133, %c0_134] : memref<9x128x128xbf16, #tpu.memory_space<vmem>>, vector<1x128x128xbf16>
    %171 = vector.shape_cast %170 : vector<1x128x128xbf16> to vector<128x128xbf16>
    %cst_135 = arith.constant dense<0.000000e+00> : vector<88x128xf32>
    %172 = tpu.matmul %169, %171, %cst_135 {dimension_numbers = #tpu.dot_dimension_numbers<[1], [0], [0], [1], [0, 0, 1, 1], [], []>} : vector<88x128xbf16>, vector<128x128xbf16>, vector<88x128xf32> -> vector<88x128xf32>
    %173 = arith.addf %167, %172 : vector<88x128xf32>
    %c214 = arith.constant 214 : index
    %c0_136 = arith.constant 0 : index
    %174 = vector.load %arg5[%c214, %c0_136] : memref<656x128xf32, #tpu.memory_space<vmem>>, vector<88x128xf32>
    %175 = arith.truncf %174 : vector<88x128xf32> to vector<88x128xbf16>
    %c8_137 = arith.constant 8 : index
    %c0_138 = arith.constant 0 : index
    %c0_139 = arith.constant 0 : index
    %176 = vector.load %arg2[%c8_137, %c0_138, %c0_139] : memref<9x128x128xbf16, #tpu.memory_space<vmem>>, vector<1x128x128xbf16>
    %177 = vector.shape_cast %176 : vector<1x128x128xbf16> to vector<128x128xbf16>
    %cst_140 = arith.constant dense<0.000000e+00> : vector<88x128xf32>
    %178 = tpu.matmul %175, %177, %cst_140 {dimension_numbers = #tpu.dot_dimension_numbers<[1], [0], [0], [1], [0, 0, 1, 1], [], []>} : vector<88x128xbf16>, vector<128x128xbf16>, vector<88x128xf32> -> vector<88x128xf32>
    %179 = arith.addf %173, %178 : vector<88x128xf32>
    %c195_141 = arith.constant 195 : index
    %c0_142 = arith.constant 0 : index
    %180 = vector.load %arg5[%c195_141, %c0_142] : memref<656x128xf32, #tpu.memory_space<vmem>>, vector<88x128xf32>
    %181 = arith.addf %179, %180 : vector<88x128xf32>
    %182 = vector.broadcast %4 : vector<1x128xf32> to vector<88x128xf32>
    %183 = arith.addf %181, %182 : vector<88x128xf32>
    %cst_143 = arith.constant 1.000000e-01 : f32
    %184 = vector.broadcast %cst_143 : f32 to vector<88x128xf32>
    %185 = arith.mulf %184, %183 : vector<88x128xf32>
    %186 = arith.maximumf %183, %185 : vector<88x128xf32>
    %c176_144 = arith.constant 176 : index
    %c0_145 = arith.constant 0 : index
    %187 = vector.load %arg4[%c176_144, %c0_145] : memref<616x128xf32, #tpu.memory_space<vmem>>, vector<88x128xf32>
    tpu.vector_store %arg4[%c176_144, %c0_145], %186 {strides = array<i32>} : memref<616x128xf32, #tpu.memory_space<vmem>>, vector<88x128xf32>,
    %c264 = arith.constant 264 : index
    %c0_146 = arith.constant 0 : index
    %188 = vector.load %arg5[%c264, %c0_146] : memref<656x128xf32, #tpu.memory_space<vmem>>, vector<88x128xf32>
    %189 = arith.truncf %188 : vector<88x128xf32> to vector<88x128xbf16>
    %c0_147 = arith.constant 0 : index
    %c0_148 = arith.constant 0 : index
    %c0_149 = arith.constant 0 : index
    %190 = vector.load %arg2[%c0_147, %c0_148, %c0_149] : memref<9x128x128xbf16, #tpu.memory_space<vmem>>, vector<1x128x128xbf16>
    %191 = vector.shape_cast %190 : vector<1x128x128xbf16> to vector<128x128xbf16>
    %cst_150 = arith.constant dense<0.000000e+00> : vector<88x128xf32>
    %192 = tpu.matmul %189, %191, %cst_150 {dimension_numbers = #tpu.dot_dimension_numbers<[1], [0], [0], [1], [0, 0, 1, 1], [], []>} : vector<88x128xbf16>, vector<128x128xbf16>, vector<88x128xf32> -> vector<88x128xf32>
    %c265 = arith.constant 265 : index
    %c0_151 = arith.constant 0 : index
    %193 = vector.load %arg5[%c265, %c0_151] : memref<656x128xf32, #tpu.memory_space<vmem>>, vector<88x128xf32>
    %194 = arith.truncf %193 : vector<88x128xf32> to vector<88x128xbf16>
    %c1_152 = arith.constant 1 : index
    %c0_153 = arith.constant 0 : index
    %c0_154 = arith.constant 0 : index
    %195 = vector.load %arg2[%c1_152, %c0_153, %c0_154] : memref<9x128x128xbf16, #tpu.memory_space<vmem>>, vector<1x128x128xbf16>
    %196 = vector.shape_cast %195 : vector<1x128x128xbf16> to vector<128x128xbf16>
    %cst_155 = arith.constant dense<0.000000e+00> : vector<88x128xf32>
    %197 = tpu.matmul %194, %196, %cst_155 {dimension_numbers = #tpu.dot_dimension_numbers<[1], [0], [0], [1], [0, 0, 1, 1], [], []>} : vector<88x128xbf16>, vector<128x128xbf16>, vector<88x128xf32> -> vector<88x128xf32>
    %198 = arith.addf %192, %197 : vector<88x128xf32>
    %c266 = arith.constant 266 : index
    %c0_156 = arith.constant 0 : index
    %199 = vector.load %arg5[%c266, %c0_156] : memref<656x128xf32, #tpu.memory_space<vmem>>, vector<88x128xf32>
    %200 = arith.truncf %199 : vector<88x128xf32> to vector<88x128xbf16>
    %c2_157 = arith.constant 2 : index
    %c0_158 = arith.constant 0 : index
    %c0_159 = arith.constant 0 : index
    %201 = vector.load %arg2[%c2_157, %c0_158, %c0_159] : memref<9x128x128xbf16, #tpu.memory_space<vmem>>, vector<1x128x128xbf16>
    %202 = vector.shape_cast %201 : vector<1x128x128xbf16> to vector<128x128xbf16>
    %cst_160 = arith.constant dense<0.000000e+00> : vector<88x128xf32>
    %203 = tpu.matmul %200, %202, %cst_160 {dimension_numbers = #tpu.dot_dimension_numbers<[1], [0], [0], [1], [0, 0, 1, 1], [], []>} : vector<88x128xbf16>, vector<128x128xbf16>, vector<88x128xf32> -> vector<88x128xf32>
    %204 = arith.addf %198, %203 : vector<88x128xf32>
    %c282 = arith.constant 282 : index
    %c0_161 = arith.constant 0 : index
    %205 = vector.load %arg5[%c282, %c0_161] : memref<656x128xf32, #tpu.memory_space<vmem>>, vector<88x128xf32>
    %206 = arith.truncf %205 : vector<88x128xf32> to vector<88x128xbf16>
    %c3_162 = arith.constant 3 : index
    %c0_163 = arith.constant 0 : index
    %c0_164 = arith.constant 0 : index
    %207 = vector.load %arg2[%c3_162, %c0_163, %c0_164] : memref<9x128x128xbf16, #tpu.memory_space<vmem>>, vector<1x128x128xbf16>
    %208 = vector.shape_cast %207 : vector<1x128x128xbf16> to vector<128x128xbf16>
    %cst_165 = arith.constant dense<0.000000e+00> : vector<88x128xf32>
    %209 = tpu.matmul %206, %208, %cst_165 {dimension_numbers = #tpu.dot_dimension_numbers<[1], [0], [0], [1], [0, 0, 1, 1], [], []>} : vector<88x128xbf16>, vector<128x128xbf16>, vector<88x128xf32> -> vector<88x128xf32>
    %210 = arith.addf %204, %209 : vector<88x128xf32>
    %c283 = arith.constant 283 : index
    %c0_166 = arith.constant 0 : index
    %211 = vector.load %arg5[%c283, %c0_166] : memref<656x128xf32, #tpu.memory_space<vmem>>, vector<88x128xf32>
    %212 = arith.truncf %211 : vector<88x128xf32> to vector<88x128xbf16>
    %c4_167 = arith.constant 4 : index
    %c0_168 = arith.constant 0 : index
    %c0_169 = arith.constant 0 : index
    %213 = vector.load %arg2[%c4_167, %c0_168, %c0_169] : memref<9x128x128xbf16, #tpu.memory_space<vmem>>, vector<1x128x128xbf16>
    %214 = vector.shape_cast %213 : vector<1x128x128xbf16> to vector<128x128xbf16>
    %cst_170 = arith.constant dense<0.000000e+00> : vector<88x128xf32>
    %215 = tpu.matmul %212, %214, %cst_170 {dimension_numbers = #tpu.dot_dimension_numbers<[1], [0], [0], [1], [0, 0, 1, 1], [], []>} : vector<88x128xbf16>, vector<128x128xbf16>, vector<88x128xf32> -> vector<88x128xf32>
    %216 = arith.addf %210, %215 : vector<88x128xf32>
    %c284 = arith.constant 284 : index
    %c0_171 = arith.constant 0 : index
    %217 = vector.load %arg5[%c284, %c0_171] : memref<656x128xf32, #tpu.memory_space<vmem>>, vector<88x128xf32>
    %218 = arith.truncf %217 : vector<88x128xf32> to vector<88x128xbf16>
    %c5_172 = arith.constant 5 : index
    %c0_173 = arith.constant 0 : index
    %c0_174 = arith.constant 0 : index
    %219 = vector.load %arg2[%c5_172, %c0_173, %c0_174] : memref<9x128x128xbf16, #tpu.memory_space<vmem>>, vector<1x128x128xbf16>
    %220 = vector.shape_cast %219 : vector<1x128x128xbf16> to vector<128x128xbf16>
    %cst_175 = arith.constant dense<0.000000e+00> : vector<88x128xf32>
    %221 = tpu.matmul %218, %220, %cst_175 {dimension_numbers = #tpu.dot_dimension_numbers<[1], [0], [0], [1], [0, 0, 1, 1], [], []>} : vector<88x128xbf16>, vector<128x128xbf16>, vector<88x128xf32> -> vector<88x128xf32>
    %222 = arith.addf %216, %221 : vector<88x128xf32>
    %c300 = arith.constant 300 : index
    %c0_176 = arith.constant 0 : index
    %223 = vector.load %arg5[%c300, %c0_176] : memref<656x128xf32, #tpu.memory_space<vmem>>, vector<88x128xf32>
    %224 = arith.truncf %223 : vector<88x128xf32> to vector<88x128xbf16>
    %c6_177 = arith.constant 6 : index
    %c0_178 = arith.constant 0 : index
    %c0_179 = arith.constant 0 : index
    %225 = vector.load %arg2[%c6_177, %c0_178, %c0_179] : memref<9x128x128xbf16, #tpu.memory_space<vmem>>, vector<1x128x128xbf16>
    %226 = vector.shape_cast %225 : vector<1x128x128xbf16> to vector<128x128xbf16>
    %cst_180 = arith.constant dense<0.000000e+00> : vector<88x128xf32>
    %227 = tpu.matmul %224, %226, %cst_180 {dimension_numbers = #tpu.dot_dimension_numbers<[1], [0], [0], [1], [0, 0, 1, 1], [], []>} : vector<88x128xbf16>, vector<128x128xbf16>, vector<88x128xf32> -> vector<88x128xf32>
    %228 = arith.addf %222, %227 : vector<88x128xf32>
    %c301 = arith.constant 301 : index
    %c0_181 = arith.constant 0 : index
    %229 = vector.load %arg5[%c301, %c0_181] : memref<656x128xf32, #tpu.memory_space<vmem>>, vector<88x128xf32>
    %230 = arith.truncf %229 : vector<88x128xf32> to vector<88x128xbf16>
    %c7_182 = arith.constant 7 : index
    %c0_183 = arith.constant 0 : index
    %c0_184 = arith.constant 0 : index
    %231 = vector.load %arg2[%c7_182, %c0_183, %c0_184] : memref<9x128x128xbf16, #tpu.memory_space<vmem>>, vector<1x128x128xbf16>
    %232 = vector.shape_cast %231 : vector<1x128x128xbf16> to vector<128x128xbf16>
    %cst_185 = arith.constant dense<0.000000e+00> : vector<88x128xf32>
    %233 = tpu.matmul %230, %232, %cst_185 {dimension_numbers = #tpu.dot_dimension_numbers<[1], [0], [0], [1], [0, 0, 1, 1], [], []>} : vector<88x128xbf16>, vector<128x128xbf16>, vector<88x128xf32> -> vector<88x128xf32>
    %234 = arith.addf %228, %233 : vector<88x128xf32>
    %c302 = arith.constant 302 : index
    %c0_186 = arith.constant 0 : index
    %235 = vector.load %arg5[%c302, %c0_186] : memref<656x128xf32, #tpu.memory_space<vmem>>, vector<88x128xf32>
    %236 = arith.truncf %235 : vector<88x128xf32> to vector<88x128xbf16>
    %c8_187 = arith.constant 8 : index
    %c0_188 = arith.constant 0 : index
    %c0_189 = arith.constant 0 : index
    %237 = vector.load %arg2[%c8_187, %c0_188, %c0_189] : memref<9x128x128xbf16, #tpu.memory_space<vmem>>, vector<1x128x128xbf16>
    %238 = vector.shape_cast %237 : vector<1x128x128xbf16> to vector<128x128xbf16>
    %cst_190 = arith.constant dense<0.000000e+00> : vector<88x128xf32>
    %239 = tpu.matmul %236, %238, %cst_190 {dimension_numbers = #tpu.dot_dimension_numbers<[1], [0], [0], [1], [0, 0, 1, 1], [], []>} : vector<88x128xbf16>, vector<128x128xbf16>, vector<88x128xf32> -> vector<88x128xf32>
    %240 = arith.addf %234, %239 : vector<88x128xf32>
    %c283_191 = arith.constant 283 : index
    %c0_192 = arith.constant 0 : index
    %241 = vector.load %arg5[%c283_191, %c0_192] : memref<656x128xf32, #tpu.memory_space<vmem>>, vector<88x128xf32>
    %242 = arith.addf %240, %241 : vector<88x128xf32>
    %243 = vector.broadcast %4 : vector<1x128xf32> to vector<88x128xf32>
    %244 = arith.addf %242, %243 : vector<88x128xf32>
    %cst_193 = arith.constant 1.000000e-01 : f32
    %245 = vector.broadcast %cst_193 : f32 to vector<88x128xf32>
    %246 = arith.mulf %245, %244 : vector<88x128xf32>
    %247 = arith.maximumf %244, %246 : vector<88x128xf32>
    %c264_194 = arith.constant 264 : index
    %c0_195 = arith.constant 0 : index
    %248 = vector.load %arg4[%c264_194, %c0_195] : memref<616x128xf32, #tpu.memory_space<vmem>>, vector<88x128xf32>
    tpu.vector_store %arg4[%c264_194, %c0_195], %247 {strides = array<i32>} : memref<616x128xf32, #tpu.memory_space<vmem>>, vector<88x128xf32>,
    %c352 = arith.constant 352 : index
    %c0_196 = arith.constant 0 : index
    %249 = vector.load %arg5[%c352, %c0_196] : memref<656x128xf32, #tpu.memory_space<vmem>>, vector<88x128xf32>
    %250 = arith.truncf %249 : vector<88x128xf32> to vector<88x128xbf16>
    %c0_197 = arith.constant 0 : index
    %c0_198 = arith.constant 0 : index
    %c0_199 = arith.constant 0 : index
    %251 = vector.load %arg2[%c0_197, %c0_198, %c0_199] : memref<9x128x128xbf16, #tpu.memory_space<vmem>>, vector<1x128x128xbf16>
    %252 = vector.shape_cast %251 : vector<1x128x128xbf16> to vector<128x128xbf16>
    %cst_200 = arith.constant dense<0.000000e+00> : vector<88x128xf32>
    %253 = tpu.matmul %250, %252, %cst_200 {dimension_numbers = #tpu.dot_dimension_numbers<[1], [0], [0], [1], [0, 0, 1, 1], [], []>} : vector<88x128xbf16>, vector<128x128xbf16>, vector<88x128xf32> -> vector<88x128xf32>
    %c353 = arith.constant 353 : index
    %c0_201 = arith.constant 0 : index
    %254 = vector.load %arg5[%c353, %c0_201] : memref<656x128xf32, #tpu.memory_space<vmem>>, vector<88x128xf32>
    %255 = arith.truncf %254 : vector<88x128xf32> to vector<88x128xbf16>
    %c1_202 = arith.constant 1 : index
    %c0_203 = arith.constant 0 : index
    %c0_204 = arith.constant 0 : index
    %256 = vector.load %arg2[%c1_202, %c0_203, %c0_204] : memref<9x128x128xbf16, #tpu.memory_space<vmem>>, vector<1x128x128xbf16>
    %257 = vector.shape_cast %256 : vector<1x128x128xbf16> to vector<128x128xbf16>
    %cst_205 = arith.constant dense<0.000000e+00> : vector<88x128xf32>
    %258 = tpu.matmul %255, %257, %cst_205 {dimension_numbers = #tpu.dot_dimension_numbers<[1], [0], [0], [1], [0, 0, 1, 1], [], []>} : vector<88x128xbf16>, vector<128x128xbf16>, vector<88x128xf32> -> vector<88x128xf32>
    %259 = arith.addf %253, %258 : vector<88x128xf32>
    %c354 = arith.constant 354 : index
    %c0_206 = arith.constant 0 : index
    %260 = vector.load %arg5[%c354, %c0_206] : memref<656x128xf32, #tpu.memory_space<vmem>>, vector<88x128xf32>
    %261 = arith.truncf %260 : vector<88x128xf32> to vector<88x128xbf16>
    %c2_207 = arith.constant 2 : index
    %c0_208 = arith.constant 0 : index
    %c0_209 = arith.constant 0 : index
    %262 = vector.load %arg2[%c2_207, %c0_208, %c0_209] : memref<9x128x128xbf16, #tpu.memory_space<vmem>>, vector<1x128x128xbf16>
    %263 = vector.shape_cast %262 : vector<1x128x128xbf16> to vector<128x128xbf16>
    %cst_210 = arith.constant dense<0.000000e+00> : vector<88x128xf32>
    %264 = tpu.matmul %261, %263, %cst_210 {dimension_numbers = #tpu.dot_dimension_numbers<[1], [0], [0], [1], [0, 0, 1, 1], [], []>} : vector<88x128xbf16>, vector<128x128xbf16>, vector<88x128xf32> -> vector<88x128xf32>
    %265 = arith.addf %259, %264 : vector<88x128xf32>
    %c370 = arith.constant 370 : index
    %c0_211 = arith.constant 0 : index
    %266 = vector.load %arg5[%c370, %c0_211] : memref<656x128xf32, #tpu.memory_space<vmem>>, vector<88x128xf32>
    %267 = arith.truncf %266 : vector<88x128xf32> to vector<88x128xbf16>
    %c3_212 = arith.constant 3 : index
    %c0_213 = arith.constant 0 : index
    %c0_214 = arith.constant 0 : index
    %268 = vector.load %arg2[%c3_212, %c0_213, %c0_214] : memref<9x128x128xbf16, #tpu.memory_space<vmem>>, vector<1x128x128xbf16>
    %269 = vector.shape_cast %268 : vector<1x128x128xbf16> to vector<128x128xbf16>
    %cst_215 = arith.constant dense<0.000000e+00> : vector<88x128xf32>
    %270 = tpu.matmul %267, %269, %cst_215 {dimension_numbers = #tpu.dot_dimension_numbers<[1], [0], [0], [1], [0, 0, 1, 1], [], []>} : vector<88x128xbf16>, vector<128x128xbf16>, vector<88x128xf32> -> vector<88x128xf32>
    %271 = arith.addf %265, %270 : vector<88x128xf32>
    %c371 = arith.constant 371 : index
    %c0_216 = arith.constant 0 : index
    %272 = vector.load %arg5[%c371, %c0_216] : memref<656x128xf32, #tpu.memory_space<vmem>>, vector<88x128xf32>
    %273 = arith.truncf %272 : vector<88x128xf32> to vector<88x128xbf16>
    %c4_217 = arith.constant 4 : index
    %c0_218 = arith.constant 0 : index
    %c0_219 = arith.constant 0 : index
    %274 = vector.load %arg2[%c4_217, %c0_218, %c0_219] : memref<9x128x128xbf16, #tpu.memory_space<vmem>>, vector<1x128x128xbf16>
    %275 = vector.shape_cast %274 : vector<1x128x128xbf16> to vector<128x128xbf16>
    %cst_220 = arith.constant dense<0.000000e+00> : vector<88x128xf32>
    %276 = tpu.matmul %273, %275, %cst_220 {dimension_numbers = #tpu.dot_dimension_numbers<[1], [0], [0], [1], [0, 0, 1, 1], [], []>} : vector<88x128xbf16>, vector<128x128xbf16>, vector<88x128xf32> -> vector<88x128xf32>
    %277 = arith.addf %271, %276 : vector<88x128xf32>
    %c372 = arith.constant 372 : index
    %c0_221 = arith.constant 0 : index
    %278 = vector.load %arg5[%c372, %c0_221] : memref<656x128xf32, #tpu.memory_space<vmem>>, vector<88x128xf32>
    %279 = arith.truncf %278 : vector<88x128xf32> to vector<88x128xbf16>
    %c5_222 = arith.constant 5 : index
    %c0_223 = arith.constant 0 : index
    %c0_224 = arith.constant 0 : index
    %280 = vector.load %arg2[%c5_222, %c0_223, %c0_224] : memref<9x128x128xbf16, #tpu.memory_space<vmem>>, vector<1x128x128xbf16>
    %281 = vector.shape_cast %280 : vector<1x128x128xbf16> to vector<128x128xbf16>
    %cst_225 = arith.constant dense<0.000000e+00> : vector<88x128xf32>
    %282 = tpu.matmul %279, %281, %cst_225 {dimension_numbers = #tpu.dot_dimension_numbers<[1], [0], [0], [1], [0, 0, 1, 1], [], []>} : vector<88x128xbf16>, vector<128x128xbf16>, vector<88x128xf32> -> vector<88x128xf32>
    %283 = arith.addf %277, %282 : vector<88x128xf32>
    %c388 = arith.constant 388 : index
    %c0_226 = arith.constant 0 : index
    %284 = vector.load %arg5[%c388, %c0_226] : memref<656x128xf32, #tpu.memory_space<vmem>>, vector<88x128xf32>
    %285 = arith.truncf %284 : vector<88x128xf32> to vector<88x128xbf16>
    %c6_227 = arith.constant 6 : index
    %c0_228 = arith.constant 0 : index
    %c0_229 = arith.constant 0 : index
    %286 = vector.load %arg2[%c6_227, %c0_228, %c0_229] : memref<9x128x128xbf16, #tpu.memory_space<vmem>>, vector<1x128x128xbf16>
    %287 = vector.shape_cast %286 : vector<1x128x128xbf16> to vector<128x128xbf16>
    %cst_230 = arith.constant dense<0.000000e+00> : vector<88x128xf32>
    %288 = tpu.matmul %285, %287, %cst_230 {dimension_numbers = #tpu.dot_dimension_numbers<[1], [0], [0], [1], [0, 0, 1, 1], [], []>} : vector<88x128xbf16>, vector<128x128xbf16>, vector<88x128xf32> -> vector<88x128xf32>
    %289 = arith.addf %283, %288 : vector<88x128xf32>
    %c389 = arith.constant 389 : index
    %c0_231 = arith.constant 0 : index
    %290 = vector.load %arg5[%c389, %c0_231] : memref<656x128xf32, #tpu.memory_space<vmem>>, vector<88x128xf32>
    %291 = arith.truncf %290 : vector<88x128xf32> to vector<88x128xbf16>
    %c7_232 = arith.constant 7 : index
    %c0_233 = arith.constant 0 : index
    %c0_234 = arith.constant 0 : index
    %292 = vector.load %arg2[%c7_232, %c0_233, %c0_234] : memref<9x128x128xbf16, #tpu.memory_space<vmem>>, vector<1x128x128xbf16>
    %293 = vector.shape_cast %292 : vector<1x128x128xbf16> to vector<128x128xbf16>
    %cst_235 = arith.constant dense<0.000000e+00> : vector<88x128xf32>
    %294 = tpu.matmul %291, %293, %cst_235 {dimension_numbers = #tpu.dot_dimension_numbers<[1], [0], [0], [1], [0, 0, 1, 1], [], []>} : vector<88x128xbf16>, vector<128x128xbf16>, vector<88x128xf32> -> vector<88x128xf32>
    %295 = arith.addf %289, %294 : vector<88x128xf32>
    %c390 = arith.constant 390 : index
    %c0_236 = arith.constant 0 : index
    %296 = vector.load %arg5[%c390, %c0_236] : memref<656x128xf32, #tpu.memory_space<vmem>>, vector<88x128xf32>
    %297 = arith.truncf %296 : vector<88x128xf32> to vector<88x128xbf16>
    %c8_237 = arith.constant 8 : index
    %c0_238 = arith.constant 0 : index
    %c0_239 = arith.constant 0 : index
    %298 = vector.load %arg2[%c8_237, %c0_238, %c0_239] : memref<9x128x128xbf16, #tpu.memory_space<vmem>>, vector<1x128x128xbf16>
    %299 = vector.shape_cast %298 : vector<1x128x128xbf16> to vector<128x128xbf16>
    %cst_240 = arith.constant dense<0.000000e+00> : vector<88x128xf32>
    %300 = tpu.matmul %297, %299, %cst_240 {dimension_numbers = #tpu.dot_dimension_numbers<[1], [0], [0], [1], [0, 0, 1, 1], [], []>} : vector<88x128xbf16>, vector<128x128xbf16>, vector<88x128xf32> -> vector<88x128xf32>
    %301 = arith.addf %295, %300 : vector<88x128xf32>
    %c371_241 = arith.constant 371 : index
    %c0_242 = arith.constant 0 : index
    %302 = vector.load %arg5[%c371_241, %c0_242] : memref<656x128xf32, #tpu.memory_space<vmem>>, vector<88x128xf32>
    %303 = arith.addf %301, %302 : vector<88x128xf32>
    %304 = vector.broadcast %4 : vector<1x128xf32> to vector<88x128xf32>
    %305 = arith.addf %303, %304 : vector<88x128xf32>
    %cst_243 = arith.constant 1.000000e-01 : f32
    %306 = vector.broadcast %cst_243 : f32 to vector<88x128xf32>
    %307 = arith.mulf %306, %305 : vector<88x128xf32>
    %308 = arith.maximumf %305, %307 : vector<88x128xf32>
    %c352_244 = arith.constant 352 : index
    %c0_245 = arith.constant 0 : index
    %309 = vector.load %arg4[%c352_244, %c0_245] : memref<616x128xf32, #tpu.memory_space<vmem>>, vector<88x128xf32>
    tpu.vector_store %arg4[%c352_244, %c0_245], %308 {strides = array<i32>} : memref<616x128xf32, #tpu.memory_space<vmem>>, vector<88x128xf32>,
    %c440 = arith.constant 440 : index
    %c0_246 = arith.constant 0 : index
    %310 = vector.load %arg5[%c440, %c0_246] : memref<656x128xf32, #tpu.memory_space<vmem>>, vector<88x128xf32>
    %311 = arith.truncf %310 : vector<88x128xf32> to vector<88x128xbf16>
    %c0_247 = arith.constant 0 : index
    %c0_248 = arith.constant 0 : index
    %c0_249 = arith.constant 0 : index
    %312 = vector.load %arg2[%c0_247, %c0_248, %c0_249] : memref<9x128x128xbf16, #tpu.memory_space<vmem>>, vector<1x128x128xbf16>
    %313 = vector.shape_cast %312 : vector<1x128x128xbf16> to vector<128x128xbf16>
    %cst_250 = arith.constant dense<0.000000e+00> : vector<88x128xf32>
    %314 = tpu.matmul %311, %313, %cst_250 {dimension_numbers = #tpu.dot_dimension_numbers<[1], [0], [0], [1], [0, 0, 1, 1], [], []>} : vector<88x128xbf16>, vector<128x128xbf16>, vector<88x128xf32> -> vector<88x128xf32>
    %c441 = arith.constant 441 : index
    %c0_251 = arith.constant 0 : index
    %315 = vector.load %arg5[%c441, %c0_251] : memref<656x128xf32, #tpu.memory_space<vmem>>, vector<88x128xf32>
    %316 = arith.truncf %315 : vector<88x128xf32> to vector<88x128xbf16>
    %c1_252 = arith.constant 1 : index
    %c0_253 = arith.constant 0 : index
    %c0_254 = arith.constant 0 : index
    %317 = vector.load %arg2[%c1_252, %c0_253, %c0_254] : memref<9x128x128xbf16, #tpu.memory_space<vmem>>, vector<1x128x128xbf16>
    %318 = vector.shape_cast %317 : vector<1x128x128xbf16> to vector<128x128xbf16>
    %cst_255 = arith.constant dense<0.000000e+00> : vector<88x128xf32>
    %319 = tpu.matmul %316, %318, %cst_255 {dimension_numbers = #tpu.dot_dimension_numbers<[1], [0], [0], [1], [0, 0, 1, 1], [], []>} : vector<88x128xbf16>, vector<128x128xbf16>, vector<88x128xf32> -> vector<88x128xf32>
    %320 = arith.addf %314, %319 : vector<88x128xf32>
    %c442 = arith.constant 442 : index
    %c0_256 = arith.constant 0 : index
    %321 = vector.load %arg5[%c442, %c0_256] : memref<656x128xf32, #tpu.memory_space<vmem>>, vector<88x128xf32>
    %322 = arith.truncf %321 : vector<88x128xf32> to vector<88x128xbf16>
    %c2_257 = arith.constant 2 : index
    %c0_258 = arith.constant 0 : index
    %c0_259 = arith.constant 0 : index
    %323 = vector.load %arg2[%c2_257, %c0_258, %c0_259] : memref<9x128x128xbf16, #tpu.memory_space<vmem>>, vector<1x128x128xbf16>
    %324 = vector.shape_cast %323 : vector<1x128x128xbf16> to vector<128x128xbf16>
    %cst_260 = arith.constant dense<0.000000e+00> : vector<88x128xf32>
    %325 = tpu.matmul %322, %324, %cst_260 {dimension_numbers = #tpu.dot_dimension_numbers<[1], [0], [0], [1], [0, 0, 1, 1], [], []>} : vector<88x128xbf16>, vector<128x128xbf16>, vector<88x128xf32> -> vector<88x128xf32>
    %326 = arith.addf %320, %325 : vector<88x128xf32>
    %c458 = arith.constant 458 : index
    %c0_261 = arith.constant 0 : index
    %327 = vector.load %arg5[%c458, %c0_261] : memref<656x128xf32, #tpu.memory_space<vmem>>, vector<88x128xf32>
    %328 = arith.truncf %327 : vector<88x128xf32> to vector<88x128xbf16>
    %c3_262 = arith.constant 3 : index
    %c0_263 = arith.constant 0 : index
    %c0_264 = arith.constant 0 : index
    %329 = vector.load %arg2[%c3_262, %c0_263, %c0_264] : memref<9x128x128xbf16, #tpu.memory_space<vmem>>, vector<1x128x128xbf16>
    %330 = vector.shape_cast %329 : vector<1x128x128xbf16> to vector<128x128xbf16>
    %cst_265 = arith.constant dense<0.000000e+00> : vector<88x128xf32>
    %331 = tpu.matmul %328, %330, %cst_265 {dimension_numbers = #tpu.dot_dimension_numbers<[1], [0], [0], [1], [0, 0, 1, 1], [], []>} : vector<88x128xbf16>, vector<128x128xbf16>, vector<88x128xf32> -> vector<88x128xf32>
    %332 = arith.addf %326, %331 : vector<88x128xf32>
    %c459 = arith.constant 459 : index
    %c0_266 = arith.constant 0 : index
    %333 = vector.load %arg5[%c459, %c0_266] : memref<656x128xf32, #tpu.memory_space<vmem>>, vector<88x128xf32>
    %334 = arith.truncf %333 : vector<88x128xf32> to vector<88x128xbf16>
    %c4_267 = arith.constant 4 : index
    %c0_268 = arith.constant 0 : index
    %c0_269 = arith.constant 0 : index
    %335 = vector.load %arg2[%c4_267, %c0_268, %c0_269] : memref<9x128x128xbf16, #tpu.memory_space<vmem>>, vector<1x128x128xbf16>
    %336 = vector.shape_cast %335 : vector<1x128x128xbf16> to vector<128x128xbf16>
    %cst_270 = arith.constant dense<0.000000e+00> : vector<88x128xf32>
    %337 = tpu.matmul %334, %336, %cst_270 {dimension_numbers = #tpu.dot_dimension_numbers<[1], [0], [0], [1], [0, 0, 1, 1], [], []>} : vector<88x128xbf16>, vector<128x128xbf16>, vector<88x128xf32> -> vector<88x128xf32>
    %338 = arith.addf %332, %337 : vector<88x128xf32>
    %c460 = arith.constant 460 : index
    %c0_271 = arith.constant 0 : index
    %339 = vector.load %arg5[%c460, %c0_271] : memref<656x128xf32, #tpu.memory_space<vmem>>, vector<88x128xf32>
    %340 = arith.truncf %339 : vector<88x128xf32> to vector<88x128xbf16>
    %c5_272 = arith.constant 5 : index
    %c0_273 = arith.constant 0 : index
    %c0_274 = arith.constant 0 : index
    %341 = vector.load %arg2[%c5_272, %c0_273, %c0_274] : memref<9x128x128xbf16, #tpu.memory_space<vmem>>, vector<1x128x128xbf16>
    %342 = vector.shape_cast %341 : vector<1x128x128xbf16> to vector<128x128xbf16>
    %cst_275 = arith.constant dense<0.000000e+00> : vector<88x128xf32>
    %343 = tpu.matmul %340, %342, %cst_275 {dimension_numbers = #tpu.dot_dimension_numbers<[1], [0], [0], [1], [0, 0, 1, 1], [], []>} : vector<88x128xbf16>, vector<128x128xbf16>, vector<88x128xf32> -> vector<88x128xf32>
    %344 = arith.addf %338, %343 : vector<88x128xf32>
    %c476 = arith.constant 476 : index
    %c0_276 = arith.constant 0 : index
    %345 = vector.load %arg5[%c476, %c0_276] : memref<656x128xf32, #tpu.memory_space<vmem>>, vector<88x128xf32>
    %346 = arith.truncf %345 : vector<88x128xf32> to vector<88x128xbf16>
    %c6_277 = arith.constant 6 : index
    %c0_278 = arith.constant 0 : index
    %c0_279 = arith.constant 0 : index
    %347 = vector.load %arg2[%c6_277, %c0_278, %c0_279] : memref<9x128x128xbf16, #tpu.memory_space<vmem>>, vector<1x128x128xbf16>
    %348 = vector.shape_cast %347 : vector<1x128x128xbf16> to vector<128x128xbf16>
    %cst_280 = arith.constant dense<0.000000e+00> : vector<88x128xf32>
    %349 = tpu.matmul %346, %348, %cst_280 {dimension_numbers = #tpu.dot_dimension_numbers<[1], [0], [0], [1], [0, 0, 1, 1], [], []>} : vector<88x128xbf16>, vector<128x128xbf16>, vector<88x128xf32> -> vector<88x128xf32>
    %350 = arith.addf %344, %349 : vector<88x128xf32>
    %c477 = arith.constant 477 : index
    %c0_281 = arith.constant 0 : index
    %351 = vector.load %arg5[%c477, %c0_281] : memref<656x128xf32, #tpu.memory_space<vmem>>, vector<88x128xf32>
    %352 = arith.truncf %351 : vector<88x128xf32> to vector<88x128xbf16>
    %c7_282 = arith.constant 7 : index
    %c0_283 = arith.constant 0 : index
    %c0_284 = arith.constant 0 : index
    %353 = vector.load %arg2[%c7_282, %c0_283, %c0_284] : memref<9x128x128xbf16, #tpu.memory_space<vmem>>, vector<1x128x128xbf16>
    %354 = vector.shape_cast %353 : vector<1x128x128xbf16> to vector<128x128xbf16>
    %cst_285 = arith.constant dense<0.000000e+00> : vector<88x128xf32>
    %355 = tpu.matmul %352, %354, %cst_285 {dimension_numbers = #tpu.dot_dimension_numbers<[1], [0], [0], [1], [0, 0, 1, 1], [], []>} : vector<88x128xbf16>, vector<128x128xbf16>, vector<88x128xf32> -> vector<88x128xf32>
    %356 = arith.addf %350, %355 : vector<88x128xf32>
    %c478 = arith.constant 478 : index
    %c0_286 = arith.constant 0 : index
    %357 = vector.load %arg5[%c478, %c0_286] : memref<656x128xf32, #tpu.memory_space<vmem>>, vector<88x128xf32>
    %358 = arith.truncf %357 : vector<88x128xf32> to vector<88x128xbf16>
    %c8_287 = arith.constant 8 : index
    %c0_288 = arith.constant 0 : index
    %c0_289 = arith.constant 0 : index
    %359 = vector.load %arg2[%c8_287, %c0_288, %c0_289] : memref<9x128x128xbf16, #tpu.memory_space<vmem>>, vector<1x128x128xbf16>
    %360 = vector.shape_cast %359 : vector<1x128x128xbf16> to vector<128x128xbf16>
    %cst_290 = arith.constant dense<0.000000e+00> : vector<88x128xf32>
    %361 = tpu.matmul %358, %360, %cst_290 {dimension_numbers = #tpu.dot_dimension_numbers<[1], [0], [0], [1], [0, 0, 1, 1], [], []>} : vector<88x128xbf16>, vector<128x128xbf16>, vector<88x128xf32> -> vector<88x128xf32>
    %362 = arith.addf %356, %361 : vector<88x128xf32>
    %c459_291 = arith.constant 459 : index
    %c0_292 = arith.constant 0 : index
    %363 = vector.load %arg5[%c459_291, %c0_292] : memref<656x128xf32, #tpu.memory_space<vmem>>, vector<88x128xf32>
    %364 = arith.addf %362, %363 : vector<88x128xf32>
    %365 = vector.broadcast %4 : vector<1x128xf32> to vector<88x128xf32>
    %366 = arith.addf %364, %365 : vector<88x128xf32>
    %cst_293 = arith.constant 1.000000e-01 : f32
    %367 = vector.broadcast %cst_293 : f32 to vector<88x128xf32>
    %368 = arith.mulf %367, %366 : vector<88x128xf32>
    %369 = arith.maximumf %366, %368 : vector<88x128xf32>
    %c440_294 = arith.constant 440 : index
    %c0_295 = arith.constant 0 : index
    %370 = vector.load %arg4[%c440_294, %c0_295] : memref<616x128xf32, #tpu.memory_space<vmem>>, vector<88x128xf32>
    tpu.vector_store %arg4[%c440_294, %c0_295], %369 {strides = array<i32>} : memref<616x128xf32, #tpu.memory_space<vmem>>, vector<88x128xf32>,
    %c528 = arith.constant 528 : index
    %c0_296 = arith.constant 0 : index
    %371 = vector.load %arg5[%c528, %c0_296] : memref<656x128xf32, #tpu.memory_space<vmem>>, vector<88x128xf32>
    %372 = arith.truncf %371 : vector<88x128xf32> to vector<88x128xbf16>
    %c0_297 = arith.constant 0 : index
    %c0_298 = arith.constant 0 : index
    %c0_299 = arith.constant 0 : index
    %373 = vector.load %arg2[%c0_297, %c0_298, %c0_299] : memref<9x128x128xbf16, #tpu.memory_space<vmem>>, vector<1x128x128xbf16>
    %374 = vector.shape_cast %373 : vector<1x128x128xbf16> to vector<128x128xbf16>
    %cst_300 = arith.constant dense<0.000000e+00> : vector<88x128xf32>
    %375 = tpu.matmul %372, %374, %cst_300 {dimension_numbers = #tpu.dot_dimension_numbers<[1], [0], [0], [1], [0, 0, 1, 1], [], []>} : vector<88x128xbf16>, vector<128x128xbf16>, vector<88x128xf32> -> vector<88x128xf32>
    %c529 = arith.constant 529 : index
    %c0_301 = arith.constant 0 : index
    %376 = vector.load %arg5[%c529, %c0_301] : memref<656x128xf32, #tpu.memory_space<vmem>>, vector<88x128xf32>
    %377 = arith.truncf %376 : vector<88x128xf32> to vector<88x128xbf16>
    %c1_302 = arith.constant 1 : index
    %c0_303 = arith.constant 0 : index
    %c0_304 = arith.constant 0 : index
    %378 = vector.load %arg2[%c1_302, %c0_303, %c0_304] : memref<9x128x128xbf16, #tpu.memory_space<vmem>>, vector<1x128x128xbf16>
    %379 = vector.shape_cast %378 : vector<1x128x128xbf16> to vector<128x128xbf16>
    %cst_305 = arith.constant dense<0.000000e+00> : vector<88x128xf32>
    %380 = tpu.matmul %377, %379, %cst_305 {dimension_numbers = #tpu.dot_dimension_numbers<[1], [0], [0], [1], [0, 0, 1, 1], [], []>} : vector<88x128xbf16>, vector<128x128xbf16>, vector<88x128xf32> -> vector<88x128xf32>
    %381 = arith.addf %375, %380 : vector<88x128xf32>
    %c530 = arith.constant 530 : index
    %c0_306 = arith.constant 0 : index
    %382 = vector.load %arg5[%c530, %c0_306] : memref<656x128xf32, #tpu.memory_space<vmem>>, vector<88x128xf32>
    %383 = arith.truncf %382 : vector<88x128xf32> to vector<88x128xbf16>
    %c2_307 = arith.constant 2 : index
    %c0_308 = arith.constant 0 : index
    %c0_309 = arith.constant 0 : index
    %384 = vector.load %arg2[%c2_307, %c0_308, %c0_309] : memref<9x128x128xbf16, #tpu.memory_space<vmem>>, vector<1x128x128xbf16>
    %385 = vector.shape_cast %384 : vector<1x128x128xbf16> to vector<128x128xbf16>
    %cst_310 = arith.constant dense<0.000000e+00> : vector<88x128xf32>
    %386 = tpu.matmul %383, %385, %cst_310 {dimension_numbers = #tpu.dot_dimension_numbers<[1], [0], [0], [1], [0, 0, 1, 1], [], []>} : vector<88x128xbf16>, vector<128x128xbf16>, vector<88x128xf32> -> vector<88x128xf32>
    %387 = arith.addf %381, %386 : vector<88x128xf32>
    %c546 = arith.constant 546 : index
    %c0_311 = arith.constant 0 : index
    %388 = vector.load %arg5[%c546, %c0_311] : memref<656x128xf32, #tpu.memory_space<vmem>>, vector<88x128xf32>
    %389 = arith.truncf %388 : vector<88x128xf32> to vector<88x128xbf16>
    %c3_312 = arith.constant 3 : index
    %c0_313 = arith.constant 0 : index
    %c0_314 = arith.constant 0 : index
    %390 = vector.load %arg2[%c3_312, %c0_313, %c0_314] : memref<9x128x128xbf16, #tpu.memory_space<vmem>>, vector<1x128x128xbf16>
    %391 = vector.shape_cast %390 : vector<1x128x128xbf16> to vector<128x128xbf16>
    %cst_315 = arith.constant dense<0.000000e+00> : vector<88x128xf32>
    %392 = tpu.matmul %389, %391, %cst_315 {dimension_numbers = #tpu.dot_dimension_numbers<[1], [0], [0], [1], [0, 0, 1, 1], [], []>} : vector<88x128xbf16>, vector<128x128xbf16>, vector<88x128xf32> -> vector<88x128xf32>
    %393 = arith.addf %387, %392 : vector<88x128xf32>
    %c547 = arith.constant 547 : index
    %c0_316 = arith.constant 0 : index
    %394 = vector.load %arg5[%c547, %c0_316] : memref<656x128xf32, #tpu.memory_space<vmem>>, vector<88x128xf32>
    %395 = arith.truncf %394 : vector<88x128xf32> to vector<88x128xbf16>
    %c4_317 = arith.constant 4 : index
    %c0_318 = arith.constant 0 : index
    %c0_319 = arith.constant 0 : index
    %396 = vector.load %arg2[%c4_317, %c0_318, %c0_319] : memref<9x128x128xbf16, #tpu.memory_space<vmem>>, vector<1x128x128xbf16>
    %397 = vector.shape_cast %396 : vector<1x128x128xbf16> to vector<128x128xbf16>
    %cst_320 = arith.constant dense<0.000000e+00> : vector<88x128xf32>
    %398 = tpu.matmul %395, %397, %cst_320 {dimension_numbers = #tpu.dot_dimension_numbers<[1], [0], [0], [1], [0, 0, 1, 1], [], []>} : vector<88x128xbf16>, vector<128x128xbf16>, vector<88x128xf32> -> vector<88x128xf32>
    %399 = arith.addf %393, %398 : vector<88x128xf32>
    %c548 = arith.constant 548 : index
    %c0_321 = arith.constant 0 : index
    %400 = vector.load %arg5[%c548, %c0_321] : memref<656x128xf32, #tpu.memory_space<vmem>>, vector<88x128xf32>
    %401 = arith.truncf %400 : vector<88x128xf32> to vector<88x128xbf16>
    %c5_322 = arith.constant 5 : index
    %c0_323 = arith.constant 0 : index
    %c0_324 = arith.constant 0 : index
    %402 = vector.load %arg2[%c5_322, %c0_323, %c0_324] : memref<9x128x128xbf16, #tpu.memory_space<vmem>>, vector<1x128x128xbf16>
    %403 = vector.shape_cast %402 : vector<1x128x128xbf16> to vector<128x128xbf16>
    %cst_325 = arith.constant dense<0.000000e+00> : vector<88x128xf32>
    %404 = tpu.matmul %401, %403, %cst_325 {dimension_numbers = #tpu.dot_dimension_numbers<[1], [0], [0], [1], [0, 0, 1, 1], [], []>} : vector<88x128xbf16>, vector<128x128xbf16>, vector<88x128xf32> -> vector<88x128xf32>
    %405 = arith.addf %399, %404 : vector<88x128xf32>
    %c564 = arith.constant 564 : index
    %c0_326 = arith.constant 0 : index
    %406 = vector.load %arg5[%c564, %c0_326] : memref<656x128xf32, #tpu.memory_space<vmem>>, vector<88x128xf32>
    %407 = arith.truncf %406 : vector<88x128xf32> to vector<88x128xbf16>
    %c6_327 = arith.constant 6 : index
    %c0_328 = arith.constant 0 : index
    %c0_329 = arith.constant 0 : index
    %408 = vector.load %arg2[%c6_327, %c0_328, %c0_329] : memref<9x128x128xbf16, #tpu.memory_space<vmem>>, vector<1x128x128xbf16>
    %409 = vector.shape_cast %408 : vector<1x128x128xbf16> to vector<128x128xbf16>
    %cst_330 = arith.constant dense<0.000000e+00> : vector<88x128xf32>
    %410 = tpu.matmul %407, %409, %cst_330 {dimension_numbers = #tpu.dot_dimension_numbers<[1], [0], [0], [1], [0, 0, 1, 1], [], []>} : vector<88x128xbf16>, vector<128x128xbf16>, vector<88x128xf32> -> vector<88x128xf32>
    %411 = arith.addf %405, %410 : vector<88x128xf32>
    %c565 = arith.constant 565 : index
    %c0_331 = arith.constant 0 : index
    %412 = vector.load %arg5[%c565, %c0_331] : memref<656x128xf32, #tpu.memory_space<vmem>>, vector<88x128xf32>
    %413 = arith.truncf %412 : vector<88x128xf32> to vector<88x128xbf16>
    %c7_332 = arith.constant 7 : index
    %c0_333 = arith.constant 0 : index
    %c0_334 = arith.constant 0 : index
    %414 = vector.load %arg2[%c7_332, %c0_333, %c0_334] : memref<9x128x128xbf16, #tpu.memory_space<vmem>>, vector<1x128x128xbf16>
    %415 = vector.shape_cast %414 : vector<1x128x128xbf16> to vector<128x128xbf16>
    %cst_335 = arith.constant dense<0.000000e+00> : vector<88x128xf32>
    %416 = tpu.matmul %413, %415, %cst_335 {dimension_numbers = #tpu.dot_dimension_numbers<[1], [0], [0], [1], [0, 0, 1, 1], [], []>} : vector<88x128xbf16>, vector<128x128xbf16>, vector<88x128xf32> -> vector<88x128xf32>
    %417 = arith.addf %411, %416 : vector<88x128xf32>
    %c566 = arith.constant 566 : index
    %c0_336 = arith.constant 0 : index
    %418 = vector.load %arg5[%c566, %c0_336] : memref<656x128xf32, #tpu.memory_space<vmem>>, vector<88x128xf32>
    %419 = arith.truncf %418 : vector<88x128xf32> to vector<88x128xbf16>
    %c8_337 = arith.constant 8 : index
    %c0_338 = arith.constant 0 : index
    %c0_339 = arith.constant 0 : index
    %420 = vector.load %arg2[%c8_337, %c0_338, %c0_339] : memref<9x128x128xbf16, #tpu.memory_space<vmem>>, vector<1x128x128xbf16>
    %421 = vector.shape_cast %420 : vector<1x128x128xbf16> to vector<128x128xbf16>
    %cst_340 = arith.constant dense<0.000000e+00> : vector<88x128xf32>
    %422 = tpu.matmul %419, %421, %cst_340 {dimension_numbers = #tpu.dot_dimension_numbers<[1], [0], [0], [1], [0, 0, 1, 1], [], []>} : vector<88x128xbf16>, vector<128x128xbf16>, vector<88x128xf32> -> vector<88x128xf32>
    %423 = arith.addf %417, %422 : vector<88x128xf32>
    %c547_341 = arith.constant 547 : index
    %c0_342 = arith.constant 0 : index
    %424 = vector.load %arg5[%c547_341, %c0_342] : memref<656x128xf32, #tpu.memory_space<vmem>>, vector<88x128xf32>
    %425 = arith.addf %423, %424 : vector<88x128xf32>
    %426 = vector.broadcast %4 : vector<1x128xf32> to vector<88x128xf32>
    %427 = arith.addf %425, %426 : vector<88x128xf32>
    %cst_343 = arith.constant 1.000000e-01 : f32
    %428 = vector.broadcast %cst_343 : f32 to vector<88x128xf32>
    %429 = arith.mulf %428, %427 : vector<88x128xf32>
    %430 = arith.maximumf %427, %429 : vector<88x128xf32>
    %c528_344 = arith.constant 528 : index
    %c0_345 = arith.constant 0 : index
    %431 = vector.load %arg4[%c528_344, %c0_345] : memref<616x128xf32, #tpu.memory_space<vmem>>, vector<88x128xf32>
    tpu.vector_store %arg4[%c528_344, %c0_345], %430 {strides = array<i32>} : memref<616x128xf32, #tpu.memory_space<vmem>>, vector<88x128xf32>,
    return
  }
  func.func @transform_1(%arg0: i32) -> (i32, i32, i32) {
    %c0_i32 = arith.constant 0 : i32
    %c0_i32_0 = arith.constant 0 : i32
    %c0_i32_1 = arith.constant 0 : i32
    %c0_i32_2 = arith.constant 0 : i32
    return %c0_i32, %c0_i32_0, %c0_i32_1 : i32, i32, i32
  }
  func.func @transform_2(%arg0: i32) -> (i32, i32) {
    %c0_i32 = arith.constant 0 : i32
    %c0_i32_0 = arith.constant 0 : i32
    %c0_i32_1 = arith.constant 0 : i32
    return %c0_i32, %c0_i32_0 : i32, i32
  }
  func.func @transform_3(%arg0: i32) -> (i32, i32) {
    %c0_i32 = arith.constant 0 : i32
    %c0_i32_0 = arith.constant 0 : i32
    return %arg0, %c0_i32 : i32, i32
  }
}

</mosaic_0001>

<llo_original>
// kernel: conv_res_block.1
$region0: #{conv_res_block.1}
  #allocation0 [shape = 'u32[]', space=smem, size = 0x4, offset = 0x4, fixed_abs, tag = 'smem constant byte address 0x4 - core index']
  #allocation1 [shape = 'u32[144,128]{1,0:T(1,128)}', space=vmem, size = 0x12000, scoped, tag = 'internal scratch']
  #allocation2 [shape = 'f32[656,128]{1,0:T(8,128)}', space=vmem, size = 0x52000, scoped, tag = 'scratch operand']
  #allocation3 [shape = 's32[1]{0}', space=sflag, size = 0x4, scoped, tag = 'scratch operand']
  #allocation4 [shape = 's32[]', space=sflag, size = 0x4, offset = 0, fixed_abs, tag = 'sflag constant byte address 0x0 - dummy sync flag']
  %s0 = inlined_call_operand.vmem [shape: f32[972,128], index: 0, kind: input, shape index: {}]
  %s1 = inlined_call_operand.vmem [shape: bf16[9,128,128], index: 1, kind: input, shape index: {}]
  %s2 = inlined_call_operand.vmem [shape: f32[1,128], index: 2, kind: input, shape index: {}]
  %s3 = inlined_call_operand.vmem [shape: f32[616,128], index: 3, kind: output, shape index: {}]
  %s4 = sld [smem:[#allocation0]]
  $region52: #{conv_res_block.1} parent=0
    _
  %s6 = ssub.s32 1, %s4
  %s7 = scalar_select 0, %s6, %s4
  // Predicated region
  $region2: #{conv_res_block.1} parent=0 // pred_check
    _
  $region3: #{conv_res_block.1} parent=0 // pred_check_branch
    %9 = sbr.rel (0) target = $region5
  $region4: #{conv_res_block.1} parent=0 // pred_region
    _
  $region5: #{conv_res_block.1} parent=0 // pred_fallthru
    _
  // Predicated region
  $region6: #{conv_res_block.1} parent=0 // pred_check
    _
  $region7: #{conv_res_block.1} parent=0 // pred_check_branch
    %11 = sbr.rel (0) target = $region9
  $region8: #{conv_res_block.1} parent=0 // pred_region
    _
  $region9: #{conv_res_block.1} parent=0 // pred_fallthru
    _
  %s13 = smul.u32 0, 616
  %s14 = scalar_lea.vmem %s0, %s13
  %p16 = scmp.lt.u32.totalorder 656, 8
  %p17 = pneg %p16
  // Predicated region
  $region10: #{conv_res_block.1} parent=0 // pred_check
    _
  $region11: #{conv_res_block.1} parent=0 // pred_check_branch
    %19 = sbr.rel (%p16) target = $region13
  $region12: #{conv_res_block.1} parent=0 // pred_region
    %s35 = sand.u32 656, 7
    %p36 = scmp.eq.s32.totalorder %s35, 0
    // Predicated region
    $region25: #{conv_res_block.1} parent=12 // pred_check
      %p37 = pneg %p36
    $region26: #{conv_res_block.1} parent=12 // pred_check_branch
      %39 = sbr.rel (%p37) target = $region28
    $region27: #{conv_res_block.1} parent=12 // pred_region
      loop: start=0, step=1, limit=1
      $region29: #{conv_res_block.1} parent=27 // loop_pre_header
        _
      $region30: #{conv_res_block.1} parent=27 // loop_header
        %s41 = sphi 0, %s45
        %p42 = scmp.ge.s32.totalorder %s41, 1
        %s46 = sphi %s14, %s14
        %s47 = sphi [#allocation2], [#allocation2]
      $region31: #{conv_res_block.1} parent=27 // loop_header_branch
        %44 = sbr.rel (%p42) target = $region35
      $region32: #{conv_res_block.1} parent=27 // loop_body
        %v48 = vld [vmem:[%s46] sm:$0xff]
        %49 = vst [vmem:[%s47] sm:$0xff] %v48
        %v50 = vld [vmem:[%s46 + $0x8] sm:$0xff]
        %51 = vst [vmem:[%s47 + $0x8] sm:$0xff] %v50
        %v52 = vld [vmem:[%s46 + $0x10] sm:$0xff]
        %53 = vst [vmem:[%s47 + $0x10] sm:$0xff] %v52
        %v54 = vld [vmem:[%s46 + $0x18] sm:$0xff]
        %55 = vst [vmem:[%s47 + $0x18] sm:$0xff] %v54
        %v56 = vld [vmem:[%s46 + $0x20] sm:$0xff]
        %57 = vst [vmem:[%s47 + $0x20] sm:$0xff] %v56
        %v58 = vld [vmem:[%s46 + $0x28] sm:$0xff]
        %59 = vst [vmem:[%s47 + $0x28] sm:$0xff] %v58
        %v60 = vld [vmem:[%s46 + $0x30] sm:$0xff]
        %61 = vst [vmem:[%s47 + $0x30] sm:$0xff] %v60
        %v62 = vld [vmem:[%s46 + $0x38] sm:$0xff]
        %63 = vst [vmem:[%s47 + $0x38] sm:$0xff] %v62
        %v64 = vld [vmem:[%s46 + $0x40] sm:$0xff]
        %65 = vst [vmem:[%s47 + $0x40] sm:$0xff] %v64
        %v66 = vld [vmem:[%s46 + $0x48] sm:$0xff]
        %67 = vst [vmem:[%s47 + $0x48] sm:$0xff] %v66
        %v68 = vld [vmem:[%s46 + $0x50] sm:$0xff]
        %69 = vst [vmem:[%s47 + $0x50] sm:$0xff] %v68
        %v70 = vld [vmem:[%s46 + $0x58] sm:$0xff]
        %71 = vst [vmem:[%s47 + $0x58] sm:$0xff] %v70
        %v72 = vld [vmem:[%s46 + $0x60] sm:$0xff]
        %73 = vst [vmem:[%s47 + $0x60] sm:$0xff] %v72
        %v74 = vld [vmem:[%s46 + $0x68] sm:$0xff]
        %75 = vst [vmem:[%s47 + $0x68] sm:$0xff] %v74
        %v76 = vld [vmem:[%s46 + $0x70] sm:$0xff]
        %77 = vst [vmem:[%s47 + $0x70] sm:$0xff] %v76
        %v78 = vld [vmem:[%s46 + $0x78] sm:$0xff]
        %79 = vst [vmem:[%s47 + $0x78] sm:$0xff] %v78
        %v80 = vld [vmem:[%s46 + $0x80] sm:$0xff]
        %81 = vst [vmem:[%s47 + $0x80] sm:$0xff] %v80
        %v82 = vld [vmem:[%s46 + $0x88] sm:$0xff]
        %83 = vst [vmem:[%s47 + $0x88] sm:$0xff] %v82
        %v84 = vld [vmem:[%s46 + $0x90] sm:$0xff]
        %85 = vst [vmem:[%s47 + $0x90] sm:$0xff] %v84
        %v86 = vld [vmem:[%s46 + $0x98] sm:$0xff]
        %87 = vst [vmem:[%s47 + $0x98] sm:$0xff] %v86
        %v88 = vld [vmem:[%s46 + $0xa0] sm:$0xff]
        %89 = vst [vmem:[%s47 + $0xa0] sm:$0xff] %v88
        %v90 = vld [vmem:[%s46 + $0xa8] sm:$0xff]
        %91 = vst [vmem:[%s47 + $0xa8] sm:$0xff] %v90
        %v92 = vld [vmem:[%s46 + $0xb0] sm:$0xff]
        %93 = vst [vmem:[%s47 + $0xb0] sm:$0xff] %v92
        %v94 = vld [vmem:[%s46 + $0xb8] sm:$0xff]
        %95 = vst [vmem:[%s47 + $0xb8] sm:$0xff] %v94
        %v96 = vld [vmem:[%s46 + $0xc0] sm:$0xff]
        %97 = vst [vmem:[%s47 + $0xc0] sm:$0xff] %v96
        %v98 = vld [vmem:[%s46 + $0xc8] sm:$0xff]
        %99 = vst [vmem:[%s47 + $0xc8] sm:$0xff] %v98
        %v100 = vld [vmem:[%s46 + $0xd0] sm:$0xff]
        %101 = vst [vmem:[%s47 + $0xd0] sm:$0xff] %v100
        %v102 = vld [vmem:[%s46 + $0xd8] sm:$0xff]
        %103 = vst [vmem:[%s47 + $0xd8] sm:$0xff] %v102
        %v104 = vld [vmem:[%s46 + $0xe0] sm:$0xff]
        %105 = vst [vmem:[%s47 + $0xe0] sm:$0xff] %v104
        %v106 = vld [vmem:[%s46 + $0xe8] sm:$0xff]
        %107 = vst [vmem:[%s47 + $0xe8] sm:$0xff] %v106
        %v108 = vld [vmem:[%s46 + $0xf0] sm:$0xff]
        %109 = vst [vmem:[%s47 + $0xf0] sm:$0xff] %v108
        %v110 = vld [vmem:[%s46 + $0xf8] sm:$0xff]
        %111 = vst [vmem:[%s47 + $0xf8] sm:$0xff] %v110
        %v112 = vld [vmem:[%s46 + $0x100] sm:$0xff]
        %113 = vst [vmem:[%s47 + $0x100] sm:$0xff] %v112
        %v114 = vld [vmem:[%s46 + $0x108] sm:$0xff]
        %115 = vst [vmem:[%s47 + $0x108] sm:$0xff] %v114
        %v116 = vld [vmem:[%s46 + $0x110] sm:$0xff]
        %117 = vst [vmem:[%s47 + $0x110] sm:$0xff] %v116
        %v118 = vld [vmem:[%s46 + $0x118] sm:$0xff]
        %119 = vst [vmem:[%s47 + $0x118] sm:$0xff] %v118
        %v120 = vld [vmem:[%s46 + $0x120] sm:$0xff]
        %121 = vst [vmem:[%s47 + $0x120] sm:$0xff] %v120
        %v122 = vld [vmem:[%s46 + $0x128] sm:$0xff]
        %123 = vst [vmem:[%s47 + $0x128] sm:$0xff] %v122
        %v124 = vld [vmem:[%s46 + $0x130] sm:$0xff]
        %125 = vst [vmem:[%s47 + $0x130] sm:$0xff] %v124
        %v126 = vld [vmem:[%s46 + $0x138] sm:$0xff]
        %127 = vst [vmem:[%s47 + $0x138] sm:$0xff] %v126
        %v128 = vld [vmem:[%s46 + $0x140] sm:$0xff]
        %129 = vst [vmem:[%s47 + $0x140] sm:$0xff] %v128
        %v130 = vld [vmem:[%s46 + $0x148] sm:$0xff]
        %131 = vst [vmem:[%s47 + $0x148] sm:$0xff] %v130
        %v132 = vld [vmem:[%s46 + $0x150] sm:$0xff]
        %133 = vst [vmem:[%s47 + $0x150] sm:$0xff] %v132
        %v134 = vld [vmem:[%s46 + $0x158] sm:$0xff]
        %135 = vst [vmem:[%s47 + $0x158] sm:$0xff] %v134
        %v136 = vld [vmem:[%s46 + $0x160] sm:$0xff]
        %137 = vst [vmem:[%s47 + $0x160] sm:$0xff] %v136
        %v138 = vld [vmem:[%s46 + $0x168] sm:$0xff]
        %139 = vst [vmem:[%s47 + $0x168] sm:$0xff] %v138
        %v140 = vld [vmem:[%s46 + $0x170] sm:$0xff]
        %141 = vst [vmem:[%s47 + $0x170] sm:$0xff] %v140
        %v142 = vld [vmem:[%s46 + $0x178] sm:$0xff]
        %143 = vst [vmem:[%s47 + $0x178] sm:$0xff] %v142
        %v144 = vld [vmem:[%s46 + $0x180] sm:$0xff]
        %145 = vst [vmem:[%s47 + $0x180] sm:$0xff] %v144
        %v146 = vld [vmem:[%s46 + $0x188] sm:$0xff]
        %147 = vst [vmem:[%s47 + $0x188] sm:$0xff] %v146
        %v148 = vld [vmem:[%s46 + $0x190] sm:$0xff]
        %149 = vst [vmem:[%s47 + $0x190] sm:$0xff] %v148
        %v150 = vld [vmem:[%s46 + $0x198] sm:$0xff]
        %151 = vst [vmem:[%s47 + $0x198] sm:$0xff] %v150
        %v152 = vld [vmem:[%s46 + $0x1a0] sm:$0xff]
        %153 = vst [vmem:[%s47 + $0x1a0] sm:$0xff] %v152
        %v154 = vld [vmem:[%s46 + $0x1a8] sm:$0xff]
        %155 = vst [vmem:[%s47 + $0x1a8] sm:$0xff] %v154
        %v156 = vld [vmem:[%s46 + $0x1b0] sm:$0xff]
        %157 = vst [vmem:[%s47 + $0x1b0] sm:$0xff] %v156
        %v158 = vld [vmem:[%s46 + $0x1b8] sm:$0xff]
        %159 = vst [vmem:[%s47 + $0x1b8] sm:$0xff] %v158
        %v160 = vld [vmem:[%s46 + $0x1c0] sm:$0xff]
        %161 = vst [vmem:[%s47 + $0x1c0] sm:$0xff] %v160
        %v162 = vld [vmem:[%s46 + $0x1c8] sm:$0xff]
        %163 = vst [vmem:[%s47 + $0x1c8] sm:$0xff] %v162
        %v164 = vld [vmem:[%s46 + $0x1d0] sm:$0xff]
        %165 = vst [vmem:[%s47 + $0x1d0] sm:$0xff] %v164
        %v166 = vld [vmem:[%s46 + $0x1d8] sm:$0xff]
        %167 = vst [vmem:[%s47 + $0x1d8] sm:$0xff] %v166
        %v168 = vld [vmem:[%s46 + $0x1e0] sm:$0xff]
        %169 = vst [vmem:[%s47 + $0x1e0] sm:$0xff] %v168
        %v170 = vld [vmem:[%s46 + $0x1e8] sm:$0xff]
        %171 = vst [vmem:[%s47 + $0x1e8] sm:$0xff] %v170
        %v172 = vld [vmem:[%s46 + $0x1f0] sm:$0xff]
        %173 = vst [vmem:[%s47 + $0x1f0] sm:$0xff] %v172
        %v174 = vld [vmem:[%s46 + $0x1f8] sm:$0xff]
        %175 = vst [vmem:[%s47 + $0x1f8] sm:$0xff] %v174
        %v176 = vld [vmem:[%s46 + $0x200] sm:$0xff]
        %177 = vst [vmem:[%s47 + $0x200] sm:$0xff] %v176
        %v178 = vld [vmem:[%s46 + $0x208] sm:$0xff]
        %179 = vst [vmem:[%s47 + $0x208] sm:$0xff] %v178
        %v180 = vld [vmem:[%s46 + $0x210] sm:$0xff]
        %181 = vst [vmem:[%s47 + $0x210] sm:$0xff] %v180
        %v182 = vld [vmem:[%s46 + $0x218] sm:$0xff]
        %183 = vst [vmem:[%s47 + $0x218] sm:$0xff] %v182
        %v184 = vld [vmem:[%s46 + $0x220] sm:$0xff]
        %185 = vst [vmem:[%s47 + $0x220] sm:$0xff] %v184
        %v186 = vld [vmem:[%s46 + $0x228] sm:$0xff]
        %187 = vst [vmem:[%s47 + $0x228] sm:$0xff] %v186
        %v188 = vld [vmem:[%s46 + $0x230] sm:$0xff]
        %189 = vst [vmem:[%s47 + $0x230] sm:$0xff] %v188
        %v190 = vld [vmem:[%s46 + $0x238] sm:$0xff]
        %191 = vst [vmem:[%s47 + $0x238] sm:$0xff] %v190
        %v192 = vld [vmem:[%s46 + $0x240] sm:$0xff]
        %193 = vst [vmem:[%s47 + $0x240] sm:$0xff] %v192
        %v194 = vld [vmem:[%s46 + $0x248] sm:$0xff]
        %195 = vst [vmem:[%s47 + $0x248] sm:$0xff] %v194
        %v196 = vld [vmem:[%s46 + $0x250] sm:$0xff]
        %197 = vst [vmem:[%s47 + $0x250] sm:$0xff] %v196
        %v198 = vld [vmem:[%s46 + $0x258] sm:$0xff]
        %199 = vst [vmem:[%s47 + $0x258] sm:$0xff] %v198
        %v200 = vld [vmem:[%s46 + $0x260] sm:$0xff]
        %201 = vst [vmem:[%s47 + $0x260] sm:$0xff] %v200
        %v202 = vld [vmem:[%s46 + $0x268] sm:$0xff]
        %203 = vst [vmem:[%s47 + $0x268] sm:$0xff] %v202
        %v204 = vld [vmem:[%s46 + $0x270] sm:$0xff]
        %205 = vst [vmem:[%s47 + $0x270] sm:$0xff] %v204
        %v206 = vld [vmem:[%s46 + $0x278] sm:$0xff]
        %207 = vst [vmem:[%s47 + $0x278] sm:$0xff] %v206
        %v208 = vld [vmem:[%s46 + $0x280] sm:$0xff]
        %209 = vst [vmem:[%s47 + $0x280] sm:$0xff] %v208
        %v210 = vld [vmem:[%s46 + $0x288] sm:$0xff]
        %211 = vst [vmem:[%s47 + $0x288] sm:$0xff] %v210
      $region33: #{conv_res_block.1} parent=27 // loop_footer
        %s45 = sadd.s32 1, %s41
      $region34: #{conv_res_block.1} parent=27 // loop_footer_branch
        %40 = sbr.rel target = $region30
      $region35: #{conv_res_block.1} parent=27 // loop_exit
        _
    $region28: #{conv_res_block.1} parent=12 // pred_fallthru
      _
    %p212 = pneg %p36
    // Predicated region
    $region36: #{conv_res_block.1} parent=12 // pred_check
      _
    $region37: #{conv_res_block.1} parent=12 // pred_check_branch
      %214 = sbr.rel (%p36) target = $region39
    $region38: #{conv_res_block.1} parent=12 // pred_region
      %s215 = sand.u32 656, 7
    $region39: #{conv_res_block.1} parent=12 // pred_fallthru
      _
  $region13: #{conv_res_block.1} parent=0 // pred_fallthru
    _
  // Predicated region
  $region14: #{conv_res_block.1} parent=0 // pred_check
    %p20 = pneg %p16
  $region15: #{conv_res_block.1} parent=0 // pred_check_branch
    %22 = sbr.rel (%p20) target = $region17
  $region16: #{conv_res_block.1} parent=0 // pred_region
    %s23 = sshll.u32 1, 656
    %s24 = ssub.s32 %s23, 1
    loop: start=0, step=1, limit=1
    $region18: #{conv_res_block.1} parent=16 // loop_pre_header
      _
    $region19: #{conv_res_block.1} parent=16 // loop_header
      %s26 = sphi 0, %s30
      %p27 = scmp.ge.s32.totalorder %s26, 1
      %s31 = sphi %s14, %s14
      %s32 = sphi [#allocation2], [#allocation2]
    $region20: #{conv_res_block.1} parent=16 // loop_header_branch
      %29 = sbr.rel (%p27) target = $region24
    $region21: #{conv_res_block.1} parent=16 // loop_body
      %v33 = vld [vmem:[%s31] sm:%s24]
      %34 = vst [vmem:[%s32] sm:%s24] %v33
    $region22: #{conv_res_block.1} parent=16 // loop_footer
      %s30 = sadd.s32 1, %s26
    $region23: #{conv_res_block.1} parent=16 // loop_footer_branch
      %25 = sbr.rel target = $region19
    $region24: #{conv_res_block.1} parent=16 // loop_exit
      _
  $region17: #{conv_res_block.1} parent=0 // pred_fallthru
    _
  // Predicated region
  $region40: #{conv_res_block.1} parent=0 // pred_check
    _
  $region41: #{conv_res_block.1} parent=0 // pred_check_branch
    %218 = sbr.rel (0) target = $region43
  $region42: #{conv_res_block.1} parent=0 // pred_region
    %219 = vsyncadd [#allocation3], 10496
  $region43: #{conv_res_block.1} parent=0 // pred_fallthru
    _
  %s220 = smul.u32 656, 1
  %s221 = sshll.u32 %s220, 4
  %222 = dma.done [#allocation3], %s221
  %v223 = vld [vmem:[%s2] sm:$0x1]
  %v224 = vld [vmem:[#allocation2] sm:$0xff]
  %v225 = vld [vmem:[#allocation2 + $0x8] sm:$0xff]
  %v226 = vld [vmem:[#allocation2 + $0x10] sm:$0xff]
  %v227 = vld [vmem:[#allocation2 + $0x18] sm:$0xff]
  %v228 = vld [vmem:[#allocation2 + $0x20] sm:$0xff]
  %v229 = vld [vmem:[#allocation2 + $0x28] sm:$0xff]
  %v230 = vld [vmem:[#allocation2 + $0x30] sm:$0xff]
  %v231 = vld [vmem:[#allocation2 + $0x38] sm:$0xff]
  %v232 = vld [vmem:[#allocation2 + $0x40] sm:$0xff]
  %v233 = vld [vmem:[#allocation2 + $0x48] sm:$0xff]
  %v234 = vld [vmem:[#allocation2 + $0x50] sm:$0xff]
  %v235 = vpack.c.bf16 %v225, %v224
  %v236 = vpack.c.bf16 %v227, %v226
  %v237 = vpack.c.bf16 %v229, %v228
  %v238 = vpack.c.bf16 %v231, %v230
  %v239 = vpack.c.bf16 %v233, %v232
  %v240 = vpack.c.bf16 %v234, %v234
  %v241 = vld [vmem:[%s1] sm:$0xf]
  %v242 = vld [vmem:[%s1 + $0x4] sm:$0xf]
  %v243 = vld [vmem:[%s1 + $0x8] sm:$0xf]
  %v244 = vld [vmem:[%s1 + $0xc] sm:$0xf]
  %v245 = vld [vmem:[%s1 + $0x10] sm:$0xf]
  %v246 = vld [vmem:[%s1 + $0x14] sm:$0xf]
  %v247 = vld [vmem:[%s1 + $0x18] sm:$0xf]
  %v248 = vld [vmem:[%s1 + $0x1c] sm:$0xf]
  %v249 = vld [vmem:[%s1 + $0x20] sm:$0xf]
  %v250 = vld [vmem:[%s1 + $0x24] sm:$0xf]
  %v251 = vld [vmem:[%s1 + $0x28] sm:$0xf]
  %v252 = vld [vmem:[%s1 + $0x2c] sm:$0xf]
  %v253 = vld [vmem:[%s1 + $0x30] sm:$0xf]
  %v254 = vld [vmem:[%s1 + $0x34] sm:$0xf]
  %v255 = vld [vmem:[%s1 + $0x38] sm:$0xf]
  %v256 = vld [vmem:[%s1 + $0x3c] sm:$0xf]
  %v257 = vld [vmem:[#allocation2 + $0x1] sm:$0xff]
  %v258 = vld [vmem:[#allocation2 + $0x9] sm:$0xff]
  %v259 = vld [vmem:[#allocation2 + $0x11] sm:$0xff]
  %v260 = vld [vmem:[#allocation2 + $0x19] sm:$0xff]
  %v261 = vld [vmem:[#allocation2 + $0x21] sm:$0xff]
  %v262 = vld [vmem:[#allocation2 + $0x29] sm:$0xff]
  %v263 = vld [vmem:[#allocation2 + $0x31] sm:$0xff]
  %v264 = vld [vmem:[#allocation2 + $0x39] sm:$0xff]
  %v265 = vld [vmem:[#allocation2 + $0x41] sm:$0xff]
  %v266 = vld [vmem:[#allocation2 + $0x49] sm:$0xff]
  %v267 = vld [vmem:[#allocation2 + $0x51] sm:$0xff]
  %v268 = vpack.c.bf16 %v258, %v257
  %v269 = vpack.c.bf16 %v260, %v259
  %v270 = vpack.c.bf16 %v262, %v261
  %v271 = vpack.c.bf16 %v264, %v263
  %v272 = vpack.c.bf16 %v266, %v265
  %v273 = vpack.c.bf16 %v267, %v267
  %s274 = scalar_lea.vmem %s1, 64
  %v275 = vld [vmem:[%s274] sm:$0xf]
  %v276 = vld [vmem:[%s274 + $0x4] sm:$0xf]
  %v277 = vld [vmem:[%s274 + $0x8] sm:$0xf]
  %v278 = vld [vmem:[%s274 + $0xc] sm:$0xf]
  %v279 = vld [vmem:[%s274 + $0x10] sm:$0xf]
  %v280 = vld [vmem:[%s274 + $0x14] sm:$0xf]
  %v281 = vld [vmem:[%s274 + $0x18] sm:$0xf]
  %v282 = vld [vmem:[%s274 + $0x1c] sm:$0xf]
  %v283 = vld [vmem:[%s274 + $0x20] sm:$0xf]
  %v284 = vld [vmem:[%s274 + $0x24] sm:$0xf]
  %v285 = vld [vmem:[%s274 + $0x28] sm:$0xf]
  %v286 = vld [vmem:[%s274 + $0x2c] sm:$0xf]
  %v287 = vld [vmem:[%s274 + $0x30] sm:$0xf]
  %v288 = vld [vmem:[%s274 + $0x34] sm:$0xf]
  %v289 = vld [vmem:[%s274 + $0x38] sm:$0xf]
  %v290 = vld [vmem:[%s274 + $0x3c] sm:$0xf]
  %v307 = vunpack.c.l.b16 %v275
  %v308 = vunpack.c.l.b16 %v276
  %v309 = vunpack.c.l.b16 %v277
  %v310 = vunpack.c.l.b16 %v278
  %v311 = vunpack.c.l.b16 %v279
  %v312 = vunpack.c.l.b16 %v280
  %v313 = vunpack.c.l.b16 %v281
  %v314 = vunpack.c.l.b16 %v282
  %v315 = vunpack.c.l.b16 %v283
  %v316 = vunpack.c.l.b16 %v284
  %v317 = vunpack.c.l.b16 %v285
  %v318 = vunpack.c.l.b16 %v286
  %v319 = vunpack.c.l.b16 %v287
  %v320 = vunpack.c.l.b16 %v288
  %v321 = vunpack.c.l.b16 %v289
  %v322 = vunpack.c.l.b16 %v290
  %v323 = vpack.c.b16 %v308, %v307
  %v324 = vpack.c.b16 %v310, %v309
  %v325 = vpack.c.b16 %v312, %v311
  %v326 = vpack.c.b16 %v314, %v313
  %v327 = vpack.c.b16 %v316, %v315
  %v328 = vpack.c.b16 %v318, %v317
  %v329 = vpack.c.b16 %v320, %v319
  %v330 = vpack.c.b16 %v322, %v321
  %339 = vmatprep.subr.bf16.mxu0 0
  %340 = vmatpush1.bf16.msra.mxu0 %v330
  %341 = vmatprep.subr.bf16.mxu0 0
  %342 = vmatpush1.bf16.msra.mxu0 %v329
  %343 = vmatprep.subr.bf16.mxu0 0
  %344 = vmatpush1.bf16.msra.mxu0 %v328
  %345 = vmatprep.subr.bf16.mxu0 0
  %346 = vmatpush1.bf16.msra.mxu0 %v327
  %347 = vmatprep.subr.bf16.mxu0 0
  %348 = vmatpush1.bf16.msra.mxu0 %v326
  %349 = vmatprep.subr.bf16.mxu0 0
  %350 = vmatpush1.bf16.msra.mxu0 %v325
  %351 = vmatprep.subr.bf16.mxu0 0
  %352 = vmatpush1.bf16.msra.mxu0 %v324
  %353 = vmatprep.subr.bf16.mxu0 0
  %354 = vmatpush1.bf16.msra.mxu0 %v323
  %355 = vmatprep.subr.bf16.mxu0 0
  %356 = vmatpush2.bf16.msra.mxu0 0
  %357 = vmatprep.subr.bf16.mxu0 0
  %358 = vmatpush2.bf16.msra.mxu0 0
  %359 = vmatprep.subr.bf16.mxu0 0
  %360 = vmatpush2.bf16.msra.mxu0 0
  %361 = vmatprep.subr.bf16.mxu0 0
  %362 = vmatpush2.bf16.msra.mxu0 0
  %363 = vmatprep.subr.bf16.mxu0 0
  %364 = vmatpush2.bf16.msra.mxu0 0
  %365 = vmatprep.subr.bf16.mxu0 0
  %366 = vmatpush2.bf16.msra.mxu0 0
  %367 = vmatprep.subr.bf16.mxu0 0
  %368 = vmatpush2.bf16.msra.mxu0 0
  %369 = vmatprep.subr.bf16.mxu0 0
  %370 = vmatpush2.bf16.msra.mxu0 0
  %371 = vmatprep.mubr.bf16.mxu0 0
  %372 = vmatmul.mubr.bf16.gmra.mxu0 %v268
  %v373 = vpop.f32.mrf.mxu0
  %v374 = vadd.f32 0.0, %v373
  %v375 = vpop.f32.mrf.mxu0
  %v376 = vpop.f32.mrf.mxu0
  %v377 = vadd.f32 0.0, %v376
  %v378 = vpop.f32.mrf.mxu0
  %379 = vmatprep.mubr.bf16.mxu0 0
  %380 = vmatmul.mubr.bf16.gmra.mxu0 %v269
  %v381 = vpop.f32.mrf.mxu0
  %v382 = vadd.f32 0.0, %v381
  %v383 = vpop.f32.mrf.mxu0
  %v384 = vpop.f32.mrf.mxu0
  %v385 = vadd.f32 0.0, %v384
  %v386 = vpop.f32.mrf.mxu0
  %387 = vmatprep.mubr.bf16.mxu0 0
  %388 = vmatmul.mubr.bf16.gmra.mxu0 %v270
  %v389 = vpop.f32.mrf.mxu0
  %v390 = vadd.f32 0.0, %v389
  %v391 = vpop.f32.mrf.mxu0
  %v392 = vpop.f32.mrf.mxu0
  %v393 = vadd.f32 0.0, %v392
  %v394 = vpop.f32.mrf.mxu0
  %395 = vmatprep.mubr.bf16.mxu0 0
  %396 = vmatmul.mubr.bf16.gmra.mxu0 %v271
  %v397 = vpop.f32.mrf.mxu0
  %v398 = vadd.f32 0.0, %v397
  %v399 = vpop.f32.mrf.mxu0
  %v400 = vpop.f32.mrf.mxu0
  %v401 = vadd.f32 0.0, %v400
  %v402 = vpop.f32.mrf.mxu0
  %403 = vmatprep.mubr.bf16.mxu0 0
  %404 = vmatmul.mubr.bf16.gmra.mxu0 %v272
  %v405 = vpop.f32.mrf.mxu0
  %v406 = vadd.f32 0.0, %v405
  %v407 = vpop.f32.mrf.mxu0
  %v408 = vpop.f32.mrf.mxu0
  %v409 = vadd.f32 0.0, %v408
  %v410 = vpop.f32.mrf.mxu0
  %411 = vmatprep.mubr.bf16.mxu0 0
  %412 = vmatmul.mubr.bf16.gmra.mxu0 %v273
  %v413 = vpop.f32.mrf.mxu0
  %v414 = vadd.f32 0.0, %v413
  %v415 = vpop.f32.mrf.mxu0
  %v416 = vpop.f32.mrf.mxu0
  %v417 = vpop.f32.mrf.mxu0
  %418 = vdwg.mxu0
  %v435 = vunpack.c.l.b16 %v241
  %v436 = vunpack.c.l.b16 %v242
  %v437 = vunpack.c.l.b16 %v243
  %v438 = vunpack.c.l.b16 %v244
  %v439 = vunpack.c.l.b16 %v245
  %v440 = vunpack.c.l.b16 %v246
  %v441 = vunpack.c.l.b16 %v247
  %v442 = vunpack.c.l.b16 %v248
  %v443 = vunpack.c.l.b16 %v249
  %v444 = vunpack.c.l.b16 %v250
  %v445 = vunpack.c.l.b16 %v251
  %v446 = vunpack.c.l.b16 %v252
  %v447 = vunpack.c.l.b16 %v253
  %v448 = vunpack.c.l.b16 %v254
  %v449 = vunpack.c.l.b16 %v255
  %v450 = vunpack.c.l.b16 %v256
  %v451 = vpack.c.b16 %v436, %v435
  %v452 = vpack.c.b16 %v438, %v437
  %v453 = vpack.c.b16 %v440, %v439
  %v454 = vpack.c.b16 %v442, %v441
  %v455 = vpack.c.b16 %v444, %v443
  %v456 = vpack.c.b16 %v446, %v445
  %v457 = vpack.c.b16 %v448, %v447
  %v458 = vpack.c.b16 %v450, %v449
  %467 = vmatprep.subr.bf16.mxu0 0
  %468 = vmatpush1.bf16.msra.mxu0 %v458
  %469 = vmatprep.subr.bf16.mxu0 0
  %470 = vmatpush1.bf16.msra.mxu0 %v457
  %471 = vmatprep.subr.bf16.mxu0 0
  %472 = vmatpush1.bf16.msra.mxu0 %v456
  %473 = vmatprep.subr.bf16.mxu0 0
  %474 = vmatpush1.bf16.msra.mxu0 %v455
  %475 = vmatprep.subr.bf16.mxu0 0
  %476 = vmatpush1.bf16.msra.mxu0 %v454
  %477 = vmatprep.subr.bf16.mxu0 0
  %478 = vmatpush1.bf16.msra.mxu0 %v453
  %479 = vmatprep.subr.bf16.mxu0 0
  %480 = vmatpush1.bf16.msra.mxu0 %v452
  %481 = vmatprep.subr.bf16.mxu0 0
  %482 = vmatpush1.bf16.msra.mxu0 %v451
  %483 = vmatprep.subr.bf16.mxu0 0
  %484 = vmatpush2.bf16.msra.mxu0 0
  %485 = vmatprep.subr.bf16.mxu0 0
  %486 = vmatpush2.bf16.msra.mxu0 0
  %487 = vmatprep.subr.bf16.mxu0 0
  %488 = vmatpush2.bf16.msra.mxu0 0
  %489 = vmatprep.subr.bf16.mxu0 0
  %490 = vmatpush2.bf16.msra.mxu0 0
  %491 = vmatprep.subr.bf16.mxu0 0
  %492 = vmatpush2.bf16.msra.mxu0 0
  %493 = vmatprep.subr.bf16.mxu0 0
  %494 = vmatpush2.bf16.msra.mxu0 0
  %495 = vmatprep.subr.bf16.mxu0 0
  %496 = vmatpush2.bf16.msra.mxu0 0
  %497 = vmatprep.subr.bf16.mxu0 0
  %498 = vmatpush2.bf16.msra.mxu0 0
  %499 = vmatprep.mubr.bf16.mxu0 0
  %500 = vmatmul.mubr.bf16.gmra.mxu0 %v235
  %v501 = vpop.f32.mrf.mxu0
  %v502 = vadd.f32 %v374, %v501
  %v503 = vpop.f32.mrf.mxu0
  %v504 = vpop.f32.mrf.mxu0
  %v505 = vadd.f32 %v377, %v504
  %v506 = vpop.f32.mrf.mxu0
  %507 = vmatprep.mubr.bf16.mxu0 0
  %508 = vmatmul.mubr.bf16.gmra.mxu0 %v236
  %v509 = vpop.f32.mrf.mxu0
  %v510 = vadd.f32 %v382, %v509
  %v511 = vpop.f32.mrf.mxu0
  %v512 = vpop.f32.mrf.mxu0
  %v513 = vadd.f32 %v385, %v512
  %v514 = vpop.f32.mrf.mxu0
  %515 = vmatprep.mubr.bf16.mxu0 0
  %516 = vmatmul.mubr.bf16.gmra.mxu0 %v237
  %v517 = vpop.f32.mrf.mxu0
  %v518 = vadd.f32 %v390, %v517
  %v519 = vpop.f32.mrf.mxu0
  %v520 = vpop.f32.mrf.mxu0
  %v521 = vadd.f32 %v393, %v520
  %v522 = vpop.f32.mrf.mxu0
  %523 = vmatprep.mubr.bf16.mxu0 0
  %524 = vmatmul.mubr.bf16.gmra.mxu0 %v238
  %v525 = vpop.f32.mrf.mxu0
  %v526 = vadd.f32 %v398, %v525
  %v527 = vpop.f32.mrf.mxu0
  %v528 = vpop.f32.mrf.mxu0
  %v529 = vadd.f32 %v401, %v528
  %v530 = vpop.f32.mrf.mxu0
  %531 = vmatprep.mubr.bf16.mxu0 0
  %532 = vmatmul.mubr.bf16.gmra.mxu0 %v239
  %v533 = vpop.f32.mrf.mxu0
  %v534 = vadd.f32 %v406, %v533
  %v535 = vpop.f32.mrf.mxu0
  %v536 = vpop.f32.mrf.mxu0
  %v537 = vadd.f32 %v409, %v536
  %v538 = vpop.f32.mrf.mxu0
  %539 = vmatprep.mubr.bf16.mxu0 0
  %540 = vmatmul.mubr.bf16.gmra.mxu0 %v240
  %v541 = vpop.f32.mrf.mxu0
  %v542 = vadd.f32 %v414, %v541
  %v543 = vpop.f32.mrf.mxu0
  %v544 = vpop.f32.mrf.mxu0
  %v545 = vpop.f32.mrf.mxu0
  %546 = vdwg.mxu0
  %v547 = vld [vmem:[#allocation2 + $0x2] sm:$0xff]
  %v548 = vld [vmem:[#allocation2 + $0xa] sm:$0xff]
  %v549 = vld [vmem:[#allocation2 + $0x12] sm:$0xff]
  %v550 = vld [vmem:[#allocation2 + $0x1a] sm:$0xff]
  %v551 = vld [vmem:[#allocation2 + $0x22] sm:$0xff]
  %v552 = vld [vmem:[#allocation2 + $0x2a] sm:$0xff]
  %v553 = vld [vmem:[#allocation2 + $0x32] sm:$0xff]
  %v554 = vld [vmem:[#allocation2 + $0x3a] sm:$0xff]
  %v555 = vld [vmem:[#allocation2 + $0x42] sm:$0xff]
  %v556 = vld [vmem:[#allocation2 + $0x4a] sm:$0xff]
  %v557 = vld [vmem:[#allocation2 + $0x52] sm:$0xff]
  %v558 = vpack.c.bf16 %v548, %v547
  %v559 = vpack.c.bf16 %v550, %v549
  %v560 = vpack.c.bf16 %v552, %v551
  %v561 = vpack.c.bf16 %v554, %v553
  %v562 = vpack.c.bf16 %v556, %v555
  %v563 = vpack.c.bf16 %v557, %v557
  %s564 = scalar_lea.vmem %s1, 128
  %v565 = vld [vmem:[%s564] sm:$0xf]
  %v566 = vld [vmem:[%s564 + $0x4] sm:$0xf]
  %v567 = vld [vmem:[%s564 + $0x8] sm:$0xf]
  %v568 = vld [vmem:[%s564 + $0xc] sm:$0xf]
  %v569 = vld [vmem:[%s564 + $0x10] sm:$0xf]
  %v570 = vld [vmem:[%s564 + $0x14] sm:$0xf]
  %v571 = vld [vmem:[%s564 + $0x18] sm:$0xf]
  %v572 = vld [vmem:[%s564 + $0x1c] sm:$0xf]
  %v573 = vld [vmem:[%s564 + $0x20] sm:$0xf]
  %v574 = vld [vmem:[%s564 + $0x24] sm:$0xf]
  %v575 = vld [vmem:[%s564 + $0x28] sm:$0xf]
  %v576 = vld [vmem:[%s564 + $0x2c] sm:$0xf]
  %v577 = vld [vmem:[%s564 + $0x30] sm:$0xf]
  %v578 = vld [vmem:[%s564 + $0x34] sm:$0xf]
  %v579 = vld [vmem:[%s564 + $0x38] sm:$0xf]
  %v580 = vld [vmem:[%s564 + $0x3c] sm:$0xf]
  %v597 = vunpack.c.l.b16 %v565
  %v598 = vunpack.c.l.b16 %v566
  %v599 = vunpack.c.l.b16 %v567
  %v600 = vunpack.c.l.b16 %v568
  %v601 = vunpack.c.l.b16 %v569
  %v602 = vunpack.c.l.b16 %v570
  %v603 = vunpack.c.l.b16 %v571
  %v604 = vunpack.c.l.b16 %v572
  %v605 = vunpack.c.l.b16 %v573
  %v606 = vunpack.c.l.b16 %v574
  %v607 = vunpack.c.l.b16 %v575
  %v608 = vunpack.c.l.b16 %v576
  %v609 = vunpack.c.l.b16 %v577
  %v610 = vunpack.c.l.b16 %v578
  %v611 = vunpack.c.l.b16 %v579
  %v612 = vunpack.c.l.b16 %v580
  %v613 = vpack.c.b16 %v598, %v597
  %v614 = vpack.c.b16 %v600, %v599
  %v615 = vpack.c.b16 %v602, %v601
  %v616 = vpack.c.b16 %v604, %v603
  %v617 = vpack.c.b16 %v606, %v605
  %v618 = vpack.c.b16 %v608, %v607
  %v619 = vpack.c.b16 %v610, %v609
  %v620 = vpack.c.b16 %v612, %v611
  %629 = vmatprep.subr.bf16.mxu0 0
  %630 = vmatpush1.bf16.msra.mxu0 %v620
  %631 = vmatprep.subr.bf16.mxu0 0
  %632 = vmatpush1.bf16.msra.mxu0 %v619
  %633 = vmatprep.subr.bf16.mxu0 0
  %634 = vmatpush1.bf16.msra.mxu0 %v618
  %635 = vmatprep.subr.bf16.mxu0 0
  %636 = vmatpush1.bf16.msra.mxu0 %v617
  %637 = vmatprep.subr.bf16.mxu0 0
  %638 = vmatpush1.bf16.msra.mxu0 %v616
  %639 = vmatprep.subr.bf16.mxu0 0
  %640 = vmatpush1.bf16.msra.mxu0 %v615
  %641 = vmatprep.subr.bf16.mxu0 0
  %642 = vmatpush1.bf16.msra.mxu0 %v614
  %643 = vmatprep.subr.bf16.mxu0 0
  %644 = vmatpush1.bf16.msra.mxu0 %v613
  %645 = vmatprep.subr.bf16.mxu0 0
  %646 = vmatpush2.bf16.msra.mxu0 0
  %647 = vmatprep.subr.bf16.mxu0 0
  %648 = vmatpush2.bf16.msra.mxu0 0
  %649 = vmatprep.subr.bf16.mxu0 0
  %650 = vmatpush2.bf16.msra.mxu0 0
  %651 = vmatprep.subr.bf16.mxu0 0
  %652 = vmatpush2.bf16.msra.mxu0 0
  %653 = vmatprep.subr.bf16.mxu0 0
  %654 = vmatpush2.bf16.msra.mxu0 0
  %655 = vmatprep.subr.bf16.mxu0 0
  %656 = vmatpush2.bf16.msra.mxu0 0
  %657 = vmatprep.subr.bf16.mxu0 0
  %658 = vmatpush2.bf16.msra.mxu0 0
  %659 = vmatprep.subr.bf16.mxu0 0
  %660 = vmatpush2.bf16.msra.mxu0 0
  %661 = vmatprep.mubr.bf16.mxu0 0
  %662 = vmatmul.mubr.bf16.gmra.mxu0 %v558
  %v663 = vpop.f32.mrf.mxu0
  %v664 = vadd.f32 0.0, %v663
  %v665 = vpop.f32.mrf.mxu0
  %v666 = vpop.f32.mrf.mxu0
  %v667 = vadd.f32 0.0, %v666
  %v668 = vpop.f32.mrf.mxu0
  %669 = vmatprep.mubr.bf16.mxu0 0
  %670 = vmatmul.mubr.bf16.gmra.mxu0 %v559
  %v671 = vpop.f32.mrf.mxu0
  %v672 = vadd.f32 0.0, %v671
  %v673 = vpop.f32.mrf.mxu0
  %v674 = vpop.f32.mrf.mxu0
  %v675 = vadd.f32 0.0, %v674
  %v676 = vpop.f32.mrf.mxu0
  %677 = vmatprep.mubr.bf16.mxu0 0
  %678 = vmatmul.mubr.bf16.gmra.mxu0 %v560
  %v679 = vpop.f32.mrf.mxu0
  %v680 = vadd.f32 0.0, %v679
  %v681 = vpop.f32.mrf.mxu0
  %v682 = vpop.f32.mrf.mxu0
  %v683 = vadd.f32 0.0, %v682
  %v684 = vpop.f32.mrf.mxu0
  %685 = vmatprep.mubr.bf16.mxu0 0
  %686 = vmatmul.mubr.bf16.gmra.mxu0 %v561
  %v687 = vpop.f32.mrf.mxu0
  %v688 = vadd.f32 0.0, %v687
  %v689 = vpop.f32.mrf.mxu0
  %v690 = vpop.f32.mrf.mxu0
  %v691 = vadd.f32 0.0, %v690
  %v692 = vpop.f32.mrf.mxu0
  %693 = vmatprep.mubr.bf16.mxu0 0
  %694 = vmatmul.mubr.bf16.gmra.mxu0 %v562
  %v695 = vpop.f32.mrf.mxu0
  %v696 = vadd.f32 0.0, %v695
  %v697 = vpop.f32.mrf.mxu0
  %v698 = vpop.f32.mrf.mxu0
  %v699 = vadd.f32 0.0, %v698
  %v700 = vpop.f32.mrf.mxu0
  %701 = vmatprep.mubr.bf16.mxu0 0
  %702 = vmatmul.mubr.bf16.gmra.mxu0 %v563
  %v703 = vpop.f32.mrf.mxu0
  %v704 = vadd.f32 0.0, %v703
  %v705 = vpop.f32.mrf.mxu0
  %v706 = vpop.f32.mrf.mxu0
  %v707 = vpop.f32.mrf.mxu0
  %708 = vdwg.mxu0
  %v709 = vadd.f32 %v502, %v664
  %v710 = vadd.f32 %v505, %v667
  %v711 = vadd.f32 %v510, %v672
  %v712 = vadd.f32 %v513, %v675
  %v713 = vadd.f32 %v518, %v680
  %v714 = vadd.f32 %v521, %v683
  %v715 = vadd.f32 %v526, %v688
  %v716 = vadd.f32 %v529, %v691
  %v717 = vadd.f32 %v534, %v696
  %v718 = vadd.f32 %v537, %v699
  %v719 = vadd.f32 %v542, %v704
  %v720 = vld [vmem:[#allocation2 + $0x12] sm:$0xff]
  %v721 = vld [vmem:[#allocation2 + $0x1a] sm:$0xff]
  %v722 = vld [vmem:[#allocation2 + $0x22] sm:$0xff]
  %v723 = vld [vmem:[#allocation2 + $0x2a] sm:$0xff]
  %v724 = vld [vmem:[#allocation2 + $0x32] sm:$0xff]
  %v725 = vld [vmem:[#allocation2 + $0x3a] sm:$0xff]
  %v726 = vld [vmem:[#allocation2 + $0x42] sm:$0xff]
  %v727 = vld [vmem:[#allocation2 + $0x4a] sm:$0xff]
  %v728 = vld [vmem:[#allocation2 + $0x52] sm:$0xff]
  %v729 = vld [vmem:[#allocation2 + $0x5a] sm:$0xff]
  %v730 = vld [vmem:[#allocation2 + $0x62] sm:$0xff]
  %v731 = vpack.c.bf16 %v721, %v720
  %v732 = vpack.c.bf16 %v723, %v722
  %v733 = vpack.c.bf16 %v725, %v724
  %v734 = vpack.c.bf16 %v727, %v726
  %v735 = vpack.c.bf16 %v729, %v728
  %v736 = vpack.c.bf16 %v730, %v730
  %s737 = scalar_lea.vmem %s1, 192
  %v738 = vld [vmem:[%s737] sm:$0xf]
  %v739 = vld [vmem:[%s737 + $0x4] sm:$0xf]
  %v740 = vld [vmem:[%s737 + $0x8] sm:$0xf]
  %v741 = vld [vmem:[%s737 + $0xc] sm:$0xf]
  %v742 = vld [vmem:[%s737 + $0x10] sm:$0xf]
  %v743 = vld [vmem:[%s737 + $0x14] sm:$0xf]
  %v744 = vld [vmem:[%s737 + $0x18] sm:$0xf]
  %v745 = vld [vmem:[%s737 + $0x1c] sm:$0xf]
  %v746 = vld [vmem:[%s737 + $0x20] sm:$0xf]
  %v747 = vld [vmem:[%s737 + $0x24] sm:$0xf]
  %v748 = vld [vmem:[%s737 + $0x28] sm:$0xf]
  %v749 = vld [vmem:[%s737 + $0x2c] sm:$0xf]
  %v750 = vld [vmem:[%s737 + $0x30] sm:$0xf]
  %v751 = vld [vmem:[%s737 + $0x34] sm:$0xf]
  %v752 = vld [vmem:[%s737 + $0x38] sm:$0xf]
  %v753 = vld [vmem:[%s737 + $0x3c] sm:$0xf]
  %v770 = vunpack.c.l.b16 %v738
  %v771 = vunpack.c.l.b16 %v739
  %v772 = vunpack.c.l.b16 %v740
  %v773 = vunpack.c.l.b16 %v741
  %v774 = vunpack.c.l.b16 %v742
  %v775 = vunpack.c.l.b16 %v743
  %v776 = vunpack.c.l.b16 %v744
  %v777 = vunpack.c.l.b16 %v745
  %v778 = vunpack.c.l.b16 %v746
  %v779 = vunpack.c.l.b16 %v747
  %v780 = vunpack.c.l.b16 %v748
  %v781 = vunpack.c.l.b16 %v749
  %v782 = vunpack.c.l.b16 %v750
  %v783 = vunpack.c.l.b16 %v751
  %v784 = vunpack.c.l.b16 %v752
  %v785 = vunpack.c.l.b16 %v753
  %v786 = vpack.c.b16 %v771, %v770
  %v787 = vpack.c.b16 %v773, %v772
  %v788 = vpack.c.b16 %v775, %v774
  %v789 = vpack.c.b16 %v777, %v776
  %v790 = vpack.c.b16 %v779, %v778
  %v791 = vpack.c.b16 %v781, %v780
  %v792 = vpack.c.b16 %v783, %v782
  %v793 = vpack.c.b16 %v785, %v784
  %802 = vmatprep.subr.bf16.mxu0 0
  %803 = vmatpush1.bf16.msra.mxu0 %v793
  %804 = vmatprep.subr.bf16.mxu0 0
  %805 = vmatpush1.bf16.msra.mxu0 %v792
  %806 = vmatprep.subr.bf16.mxu0 0
  %807 = vmatpush1.bf16.msra.mxu0 %v791
  %808 = vmatprep.subr.bf16.mxu0 0
  %809 = vmatpush1.bf16.msra.mxu0 %v790
  %810 = vmatprep.subr.bf16.mxu0 0
  %811 = vmatpush1.bf16.msra.mxu0 %v789
  %812 = vmatprep.subr.bf16.mxu0 0
  %813 = vmatpush1.bf16.msra.mxu0 %v788
  %814 = vmatprep.subr.bf16.mxu0 0
  %815 = vmatpush1.bf16.msra.mxu0 %v787
  %816 = vmatprep.subr.bf16.mxu0 0
  %817 = vmatpush1.bf16.msra.mxu0 %v786
  %818 = vmatprep.subr.bf16.mxu0 0
  %819 = vmatpush2.bf16.msra.mxu0 0
  %820 = vmatprep.subr.bf16.mxu0 0
  %821 = vmatpush2.bf16.msra.mxu0 0
  %822 = vmatprep.subr.bf16.mxu0 0
  %823 = vmatpush2.bf16.msra.mxu0 0
  %824 = vmatprep.subr.bf16.mxu0 0
  %825 = vmatpush2.bf16.msra.mxu0 0
  %826 = vmatprep.subr.bf16.mxu0 0
  %827 = vmatpush2.bf16.msra.mxu0 0
  %828 = vmatprep.subr.bf16.mxu0 0
  %829 = vmatpush2.bf16.msra.mxu0 0
  %830 = vmatprep.subr.bf16.mxu0 0
  %831 = vmatpush2.bf16.msra.mxu0 0
  %832 = vmatprep.subr.bf16.mxu0 0
  %833 = vmatpush2.bf16.msra.mxu0 0
  %834 = vmatprep.mubr.bf16.mxu0 0
  %835 = vmatmul.mubr.bf16.gmra.mxu0 %v731
  %v836 = vpop.f32.mrf.mxu0
  %v837 = vadd.f32 0.0, %v836
  %v838 = vpop.f32.mrf.mxu0
  %v839 = vpop.f32.mrf.mxu0
  %v840 = vadd.f32 0.0, %v839
  %v841 = vpop.f32.mrf.mxu0
  %842 = vmatprep.mubr.bf16.mxu0 0
  %843 = vmatmul.mubr.bf16.gmra.mxu0 %v732
  %v844 = vpop.f32.mrf.mxu0
  %v845 = vadd.f32 0.0, %v844
  %v846 = vpop.f32.mrf.mxu0
  %v847 = vpop.f32.mrf.mxu0
  %v848 = vadd.f32 0.0, %v847
  %v849 = vpop.f32.mrf.mxu0
  %850 = vmatprep.mubr.bf16.mxu0 0
  %851 = vmatmul.mubr.bf16.gmra.mxu0 %v733
  %v852 = vpop.f32.mrf.mxu0
  %v853 = vadd.f32 0.0, %v852
  %v854 = vpop.f32.mrf.mxu0
  %v855 = vpop.f32.mrf.mxu0
  %v856 = vadd.f32 0.0, %v855
  %v857 = vpop.f32.mrf.mxu0
  %858 = vmatprep.mubr.bf16.mxu0 0
  %859 = vmatmul.mubr.bf16.gmra.mxu0 %v734
  %v860 = vpop.f32.mrf.mxu0
  %v861 = vadd.f32 0.0, %v860
  %v862 = vpop.f32.mrf.mxu0
  %v863 = vpop.f32.mrf.mxu0
  %v864 = vadd.f32 0.0, %v863
  %v865 = vpop.f32.mrf.mxu0
  %866 = vmatprep.mubr.bf16.mxu0 0
  %867 = vmatmul.mubr.bf16.gmra.mxu0 %v735
  %v868 = vpop.f32.mrf.mxu0
  %v869 = vadd.f32 0.0, %v868
  %v870 = vpop.f32.mrf.mxu0
  %v871 = vpop.f32.mrf.mxu0
  %v872 = vadd.f32 0.0, %v871
  %v873 = vpop.f32.mrf.mxu0
  %874 = vmatprep.mubr.bf16.mxu0 0
  %875 = vmatmul.mubr.bf16.gmra.mxu0 %v736
  %v876 = vpop.f32.mrf.mxu0
  %v877 = vadd.f32 0.0, %v876
  %v878 = vpop.f32.mrf.mxu0
  %v879 = vpop.f32.mrf.mxu0
  %v880 = vpop.f32.mrf.mxu0
  %881 = vdwg.mxu0
  %v882 = vadd.f32 %v709, %v837
  %v883 = vadd.f32 %v710, %v840
  %v884 = vadd.f32 %v711, %v845
  %v885 = vadd.f32 %v712, %v848
  %v886 = vadd.f32 %v713, %v853
  %v887 = vadd.f32 %v714, %v856
  %v888 = vadd.f32 %v715, %v861
  %v889 = vadd.f32 %v716, %v864
  %v890 = vadd.f32 %v717, %v869
  %v891 = vadd.f32 %v718, %v872
  %v892 = vadd.f32 %v719, %v877
  %v893 = vld [vmem:[#allocation2 + $0x13] sm:$0xff]
  %v894 = vld [vmem:[#allocation2 + $0x1b] sm:$0xff]
  %v895 = vld [vmem:[#allocation2 + $0x23] sm:$0xff]
  %v896 = vld [vmem:[#allocation2 + $0x2b] sm:$0xff]
  %v897 = vld [vmem:[#allocation2 + $0x33] sm:$0xff]
  %v898 = vld [vmem:[#allocation2 + $0x3b] sm:$0xff]
  %v899 = vld [vmem:[#allocation2 + $0x43] sm:$0xff]
  %v900 = vld [vmem:[#allocation2 + $0x4b] sm:$0xff]
  %v901 = vld [vmem:[#allocation2 + $0x53] sm:$0xff]
  %v902 = vld [vmem:[#allocation2 + $0x5b] sm:$0xff]
  %v903 = vld [vmem:[#allocation2 + $0x63] sm:$0xff]
  %v904 = vpack.c.bf16 %v894, %v893
  %v905 = vpack.c.bf16 %v896, %v895
  %v906 = vpack.c.bf16 %v898, %v897
  %v907 = vpack.c.bf16 %v900, %v899
  %v908 = vpack.c.bf16 %v902, %v901
  %v909 = vpack.c.bf16 %v903, %v903
  %s910 = scalar_lea.vmem %s1, 256
  %v911 = vld [vmem:[%s910] sm:$0xf]
  %v912 = vld [vmem:[%s910 + $0x4] sm:$0xf]
  %v913 = vld [vmem:[%s910 + $0x8] sm:$0xf]
  %v914 = vld [vmem:[%s910 + $0xc] sm:$0xf]
  %v915 = vld [vmem:[%s910 + $0x10] sm:$0xf]
  %v916 = vld [vmem:[%s910 + $0x14] sm:$0xf]
  %v917 = vld [vmem:[%s910 + $0x18] sm:$0xf]
  %v918 = vld [vmem:[%s910 + $0x1c] sm:$0xf]
  %v919 = vld [vmem:[%s910 + $0x20] sm:$0xf]
  %v920 = vld [vmem:[%s910 + $0x24] sm:$0xf]
  %v921 = vld [vmem:[%s910 + $0x28] sm:$0xf]
  %v922 = vld [vmem:[%s910 + $0x2c] sm:$0xf]
  %v923 = vld [vmem:[%s910 + $0x30] sm:$0xf]
  %v924 = vld [vmem:[%s910 + $0x34] sm:$0xf]
  %v925 = vld [vmem:[%s910 + $0x38] sm:$0xf]
  %v926 = vld [vmem:[%s910 + $0x3c] sm:$0xf]
  %v943 = vunpack.c.l.b16 %v911
  %v944 = vunpack.c.l.b16 %v912
  %v945 = vunpack.c.l.b16 %v913
  %v946 = vunpack.c.l.b16 %v914
  %v947 = vunpack.c.l.b16 %v915
  %v948 = vunpack.c.l.b16 %v916
  %v949 = vunpack.c.l.b16 %v917
  %v950 = vunpack.c.l.b16 %v918
  %v951 = vunpack.c.l.b16 %v919
  %v952 = vunpack.c.l.b16 %v920
  %v953 = vunpack.c.l.b16 %v921
  %v954 = vunpack.c.l.b16 %v922
  %v955 = vunpack.c.l.b16 %v923
  %v956 = vunpack.c.l.b16 %v924
  %v957 = vunpack.c.l.b16 %v925
  %v958 = vunpack.c.l.b16 %v926
  %v959 = vpack.c.b16 %v944, %v943
  %v960 = vpack.c.b16 %v946, %v945
  %v961 = vpack.c.b16 %v948, %v947
  %v962 = vpack.c.b16 %v950, %v949
  %v963 = vpack.c.b16 %v952, %v951
  %v964 = vpack.c.b16 %v954, %v953
  %v965 = vpack.c.b16 %v956, %v955
  %v966 = vpack.c.b16 %v958, %v957
  %975 = vmatprep.subr.bf16.mxu0 0
  %976 = vmatpush1.bf16.msra.mxu0 %v966
  %977 = vmatprep.subr.bf16.mxu0 0
  %978 = vmatpush1.bf16.msra.mxu0 %v965
  %979 = vmatprep.subr.bf16.mxu0 0
  %980 = vmatpush1.bf16.msra.mxu0 %v964
  %981 = vmatprep.subr.bf16.mxu0 0
  %982 = vmatpush1.bf16.msra.mxu0 %v963
  %983 = vmatprep.subr.bf16.mxu0 0
  %984 = vmatpush1.bf16.msra.mxu0 %v962
  %985 = vmatprep.subr.bf16.mxu0 0
  %986 = vmatpush1.bf16.msra.mxu0 %v961
  %987 = vmatprep.subr.bf16.mxu0 0
  %988 = vmatpush1.bf16.msra.mxu0 %v960
  %989 = vmatprep.subr.bf16.mxu0 0
  %990 = vmatpush1.bf16.msra.mxu0 %v959
  %991 = vmatprep.subr.bf16.mxu0 0
  %992 = vmatpush2.bf16.msra.mxu0 0
  %993 = vmatprep.subr.bf16.mxu0 0
  %994 = vmatpush2.bf16.msra.mxu0 0
  %995 = vmatprep.subr.bf16.mxu0 0
  %996 = vmatpush2.bf16.msra.mxu0 0
  %997 = vmatprep.subr.bf16.mxu0 0
  %998 = vmatpush2.bf16.msra.mxu0 0
  %999 = vmatprep.subr.bf16.mxu0 0
  %1000 = vmatpush2.bf16.msra.mxu0 0
  %1001 = vmatprep.subr.bf16.mxu0 0
  %1002 = vmatpush2.bf16.msra.mxu0 0
  %1003 = vmatprep.subr.bf16.mxu0 0
  %1004 = vmatpush2.bf16.msra.mxu0 0
  %1005 = vmatprep.subr.bf16.mxu0 0
  %1006 = vmatpush2.bf16.msra.mxu0 0
  %1007 = vmatprep.mubr.bf16.mxu0 0
  %1008 = vmatmul.mubr.bf16.gmra.mxu0 %v904
  %v1009 = vpop.f32.mrf.mxu0
  %v1010 = vadd.f32 0.0, %v1009
  %v1011 = vpop.f32.mrf.mxu0
  %v1012 = vpop.f32.mrf.mxu0
  %v1013 = vadd.f32 0.0, %v1012
  %v1014 = vpop.f32.mrf.mxu0
  %1015 = vmatprep.mubr.bf16.mxu0 0
  %1016 = vmatmul.mubr.bf16.gmra.mxu0 %v905
  %v1017 = vpop.f32.mrf.mxu0
  %v1018 = vadd.f32 0.0, %v1017
  %v1019 = vpop.f32.mrf.mxu0
  %v1020 = vpop.f32.mrf.mxu0
  %v1021 = vadd.f32 0.0, %v1020
  %v1022 = vpop.f32.mrf.mxu0
  %1023 = vmatprep.mubr.bf16.mxu0 0
  %1024 = vmatmul.mubr.bf16.gmra.mxu0 %v906
  %v1025 = vpop.f32.mrf.mxu0
  %v1026 = vadd.f32 0.0, %v1025
  %v1027 = vpop.f32.mrf.mxu0
  %v1028 = vpop.f32.mrf.mxu0
  %v1029 = vadd.f32 0.0, %v1028
  %v1030 = vpop.f32.mrf.mxu0
  %1031 = vmatprep.mubr.bf16.mxu0 0
  %1032 = vmatmul.mubr.bf16.gmra.mxu0 %v907
  %v1033 = vpop.f32.mrf.mxu0
  %v1034 = vadd.f32 0.0, %v1033
  %v1035 = vpop.f32.mrf.mxu0
  %v1036 = vpop.f32.mrf.mxu0
  %v1037 = vadd.f32 0.0, %v1036
  %v1038 = vpop.f32.mrf.mxu0
  %1039 = vmatprep.mubr.bf16.mxu0 0
  %1040 = vmatmul.mubr.bf16.gmra.mxu0 %v908
  %v1041 = vpop.f32.mrf.mxu0
  %v1042 = vadd.f32 0.0, %v1041
  %v1043 = vpop.f32.mrf.mxu0
  %v1044 = vpop.f32.mrf.mxu0
  %v1045 = vadd.f32 0.0, %v1044
  %v1046 = vpop.f32.mrf.mxu0
  %1047 = vmatprep.mubr.bf16.mxu0 0
  %1048 = vmatmul.mubr.bf16.gmra.mxu0 %v909
  %v1049 = vpop.f32.mrf.mxu0
  %v1050 = vadd.f32 0.0, %v1049
  %v1051 = vpop.f32.mrf.mxu0
  %v1052 = vpop.f32.mrf.mxu0
  %v1053 = vpop.f32.mrf.mxu0
  %1054 = vdwg.mxu0
  %v1055 = vadd.f32 %v882, %v1010
  %v1056 = vadd.f32 %v883, %v1013
  %v1057 = vadd.f32 %v884, %v1018
  %v1058 = vadd.f32 %v885, %v1021
  %v1059 = vadd.f32 %v886, %v1026
  %v1060 = vadd.f32 %v887, %v1029
  %v1061 = vadd.f32 %v888, %v1034
  %v1062 = vadd.f32 %v889, %v1037
  %v1063 = vadd.f32 %v890, %v1042
  %v1064 = vadd.f32 %v891, %v1045
  %v1065 = vadd.f32 %v892, %v1050
  %v1066 = vld [vmem:[#allocation2 + $0x14] sm:$0xff]
  %v1067 = vld [vmem:[#allocation2 + $0x1c] sm:$0xff]
  %v1068 = vld [vmem:[#allocation2 + $0x24] sm:$0xff]
  %v1069 = vld [vmem:[#allocation2 + $0x2c] sm:$0xff]
  %v1070 = vld [vmem:[#allocation2 + $0x34] sm:$0xff]
  %v1071 = vld [vmem:[#allocation2 + $0x3c] sm:$0xff]
  %v1072 = vld [vmem:[#allocation2 + $0x44] sm:$0xff]
  %v1073 = vld [vmem:[#allocation2 + $0x4c] sm:$0xff]
  %v1074 = vld [vmem:[#allocation2 + $0x54] sm:$0xff]
  %v1075 = vld [vmem:[#allocation2 + $0x5c] sm:$0xff]
  %v1076 = vld [vmem:[#allocation2 + $0x64] sm:$0xff]
  %v1077 = vpack.c.bf16 %v1067, %v1066
  %v1078 = vpack.c.bf16 %v1069, %v1068
  %v1079 = vpack.c.bf16 %v1071, %v1070
  %v1080 = vpack.c.bf16 %v1073, %v1072
  %v1081 = vpack.c.bf16 %v1075, %v1074
  %v1082 = vpack.c.bf16 %v1076, %v1076
  %s1083 = scalar_lea.vmem %s1, 320
  %v1084 = vld [vmem:[%s1083] sm:$0xf]
  %v1085 = vld [vmem:[%s1083 + $0x4] sm:$0xf]
  %v1086 = vld [vmem:[%s1083 + $0x8] sm:$0xf]
  %v1087 = vld [vmem:[%s1083 + $0xc] sm:$0xf]
  %v1088 = vld [vmem:[%s1083 + $0x10] sm:$0xf]
  %v1089 = vld [vmem:[%s1083 + $0x14] sm:$0xf]
  %v1090 = vld [vmem:[%s1083 + $0x18] sm:$0xf]
  %v1091 = vld [vmem:[%s1083 + $0x1c] sm:$0xf]
  %v1092 = vld [vmem:[%s1083 + $0x20] sm:$0xf]
  %v1093 = vld [vmem:[%s1083 + $0x24] sm:$0xf]
  %v1094 = vld [vmem:[%s1083 + $0x28] sm:$0xf]
  %v1095 = vld [vmem:[%s1083 + $0x2c] sm:$0xf]
  %v1096 = vld [vmem:[%s1083 + $0x30] sm:$0xf]
  %v1097 = vld [vmem:[%s1083 + $0x34] sm:$0xf]
  %v1098 = vld [vmem:[%s1083 + $0x38] sm:$0xf]
  %v1099 = vld [vmem:[%s1083 + $0x3c] sm:$0xf]
  %v1116 = vunpack.c.l.b16 %v1084
  %v1117 = vunpack.c.l.b16 %v1085
  %v1118 = vunpack.c.l.b16 %v1086
  %v1119 = vunpack.c.l.b16 %v1087
  %v1120 = vunpack.c.l.b16 %v1088
  %v1121 = vunpack.c.l.b16 %v1089
  %v1122 = vunpack.c.l.b16 %v1090
  %v1123 = vunpack.c.l.b16 %v1091
  %v1124 = vunpack.c.l.b16 %v1092
  %v1125 = vunpack.c.l.b16 %v1093
  %v1126 = vunpack.c.l.b16 %v1094
  %v1127 = vunpack.c.l.b16 %v1095
  %v1128 = vunpack.c.l.b16 %v1096
  %v1129 = vunpack.c.l.b16 %v1097
  %v1130 = vunpack.c.l.b16 %v1098
  %v1131 = vunpack.c.l.b16 %v1099
  %v1132 = vpack.c.b16 %v1117, %v1116
  %v1133 = vpack.c.b16 %v1119, %v1118
  %v1134 = vpack.c.b16 %v1121, %v1120
  %v1135 = vpack.c.b16 %v1123, %v1122
  %v1136 = vpack.c.b16 %v1125, %v1124
  %v1137 = vpack.c.b16 %v1127, %v1126
  %v1138 = vpack.c.b16 %v1129, %v1128
  %v1139 = vpack.c.b16 %v1131, %v1130
  %1148 = vmatprep.subr.bf16.mxu0 0
  %1149 = vmatpush1.bf16.msra.mxu0 %v1139
  %1150 = vmatprep.subr.bf16.mxu0 0
  %1151 = vmatpush1.bf16.msra.mxu0 %v1138
  %1152 = vmatprep.subr.bf16.mxu0 0
  %1153 = vmatpush1.bf16.msra.mxu0 %v1137
  %1154 = vmatprep.subr.bf16.mxu0 0
  %1155 = vmatpush1.bf16.msra.mxu0 %v1136
  %1156 = vmatprep.subr.bf16.mxu0 0
  %1157 = vmatpush1.bf16.msra.mxu0 %v1135
  %1158 = vmatprep.subr.bf16.mxu0 0
  %1159 = vmatpush1.bf16.msra.mxu0 %v1134
  %1160 = vmatprep.subr.bf16.mxu0 0
  %1161 = vmatpush1.bf16.msra.mxu0 %v1133
  %1162 = vmatprep.subr.bf16.mxu0 0
  %1163 = vmatpush1.bf16.msra.mxu0 %v1132
  %1164 = vmatprep.subr.bf16.mxu0 0
  %1165 = vmatpush2.bf16.msra.mxu0 0
  %1166 = vmatprep.subr.bf16.mxu0 0
  %1167 = vmatpush2.bf16.msra.mxu0 0
  %1168 = vmatprep.subr.bf16.mxu0 0
  %1169 = vmatpush2.bf16.msra.mxu0 0
  %1170 = vmatprep.subr.bf16.mxu0 0
  %1171 = vmatpush2.bf16.msra.mxu0 0
  %1172 = vmatprep.subr.bf16.mxu0 0
  %1173 = vmatpush2.bf16.msra.mxu0 0
  %1174 = vmatprep.subr.bf16.mxu0 0
  %1175 = vmatpush2.bf16.msra.mxu0 0
  %1176 = vmatprep.subr.bf16.mxu0 0
  %1177 = vmatpush2.bf16.msra.mxu0 0
  %1178 = vmatprep.subr.bf16.mxu0 0
  %1179 = vmatpush2.bf16.msra.mxu0 0
  %1180 = vmatprep.mubr.bf16.mxu0 0
  %1181 = vmatmul.mubr.bf16.gmra.mxu0 %v1077
  %v1182 = vpop.f32.mrf.mxu0
  %v1183 = vadd.f32 0.0, %v1182
  %v1184 = vpop.f32.mrf.mxu0
  %v1185 = vpop.f32.mrf.mxu0
  %v1186 = vadd.f32 0.0, %v1185
  %v1187 = vpop.f32.mrf.mxu0
  %1188 = vmatprep.mubr.bf16.mxu0 0
  %1189 = vmatmul.mubr.bf16.gmra.mxu0 %v1078
  %v1190 = vpop.f32.mrf.mxu0
  %v1191 = vadd.f32 0.0, %v1190
  %v1192 = vpop.f32.mrf.mxu0
  %v1193 = vpop.f32.mrf.mxu0
  %v1194 = vadd.f32 0.0, %v1193
  %v1195 = vpop.f32.mrf.mxu0
  %1196 = vmatprep.mubr.bf16.mxu0 0
  %1197 = vmatmul.mubr.bf16.gmra.mxu0 %v1079
  %v1198 = vpop.f32.mrf.mxu0
  %v1199 = vadd.f32 0.0, %v1198
  %v1200 = vpop.f32.mrf.mxu0
  %v1201 = vpop.f32.mrf.mxu0
  %v1202 = vadd.f32 0.0, %v1201
  %v1203 = vpop.f32.mrf.mxu0
  %1204 = vmatprep.mubr.bf16.mxu0 0
  %1205 = vmatmul.mubr.bf16.gmra.mxu0 %v1080
  %v1206 = vpop.f32.mrf.mxu0
  %v1207 = vadd.f32 0.0, %v1206
  %v1208 = vpop.f32.mrf.mxu0
  %v1209 = vpop.f32.mrf.mxu0
  %v1210 = vadd.f32 0.0, %v1209
  %v1211 = vpop.f32.mrf.mxu0
  %1212 = vmatprep.mubr.bf16.mxu0 0
  %1213 = vmatmul.mubr.bf16.gmra.mxu0 %v1081
  %v1214 = vpop.f32.mrf.mxu0
  %v1215 = vadd.f32 0.0, %v1214
  %v1216 = vpop.f32.mrf.mxu0
  %v1217 = vpop.f32.mrf.mxu0
  %v1218 = vadd.f32 0.0, %v1217
  %v1219 = vpop.f32.mrf.mxu0
  %1220 = vmatprep.mubr.bf16.mxu0 0
  %1221 = vmatmul.mubr.bf16.gmra.mxu0 %v1082
  %v1222 = vpop.f32.mrf.mxu0
  %v1223 = vadd.f32 0.0, %v1222
  %v1224 = vpop.f32.mrf.mxu0
  %v1225 = vpop.f32.mrf.mxu0
  %v1226 = vpop.f32.mrf.mxu0
  %1227 = vdwg.mxu0
  %v1228 = vadd.f32 %v1055, %v1183
  %v1229 = vadd.f32 %v1056, %v1186
  %v1230 = vadd.f32 %v1057, %v1191
  %v1231 = vadd.f32 %v1058, %v1194
  %v1232 = vadd.f32 %v1059, %v1199
  %v1233 = vadd.f32 %v1060, %v1202
  %v1234 = vadd.f32 %v1061, %v1207
  %v1235 = vadd.f32 %v1062, %v1210
  %v1236 = vadd.f32 %v1063, %v1215
  %v1237 = vadd.f32 %v1064, %v1218
  %v1238 = vadd.f32 %v1065, %v1223
  %v1239 = vld [vmem:[#allocation2 + $0x24] sm:$0xff]
  %v1240 = vld [vmem:[#allocation2 + $0x2c] sm:$0xff]
  %v1241 = vld [vmem:[#allocation2 + $0x34] sm:$0xff]
  %v1242 = vld [vmem:[#allocation2 + $0x3c] sm:$0xff]
  %v1243 = vld [vmem:[#allocation2 + $0x44] sm:$0xff]
  %v1244 = vld [vmem:[#allocation2 + $0x4c] sm:$0xff]
  %v1245 = vld [vmem:[#allocation2 + $0x54] sm:$0xff]
  %v1246 = vld [vmem:[#allocation2 + $0x5c] sm:$0xff]
  %v1247 = vld [vmem:[#allocation2 + $0x64] sm:$0xff]
  %v1248 = vld [vmem:[#allocation2 + $0x6c] sm:$0xff]
  %v1249 = vld [vmem:[#allocation2 + $0x74] sm:$0xff]
  %v1250 = vpack.c.bf16 %v1240, %v1239
  %v1251 = vpack.c.bf16 %v1242, %v1241
  %v1252 = vpack.c.bf16 %v1244, %v1243
  %v1253 = vpack.c.bf16 %v1246, %v1245
  %v1254 = vpack.c.bf16 %v1248, %v1247
  %v1255 = vpack.c.bf16 %v1249, %v1249
  %s1256 = scalar_lea.vmem %s1, 384
  %v1257 = vld [vmem:[%s1256] sm:$0xf]
  %v1258 = vld [vmem:[%s1256 + $0x4] sm:$0xf]
  %v1259 = vld [vmem:[%s1256 + $0x8] sm:$0xf]
  %v1260 = vld [vmem:[%s1256 + $0xc] sm:$0xf]
  %v1261 = vld [vmem:[%s1256 + $0x10] sm:$0xf]
  %v1262 = vld [vmem:[%s1256 + $0x14] sm:$0xf]
  %v1263 = vld [vmem:[%s1256 + $0x18] sm:$0xf]
  %v1264 = vld [vmem:[%s1256 + $0x1c] sm:$0xf]
  %v1265 = vld [vmem:[%s1256 + $0x20] sm:$0xf]
  %v1266 = vld [vmem:[%s1256 + $0x24] sm:$0xf]
  %v1267 = vld [vmem:[%s1256 + $0x28] sm:$0xf]
  %v1268 = vld [vmem:[%s1256 + $0x2c] sm:$0xf]
  %v1269 = vld [vmem:[%s1256 + $0x30] sm:$0xf]
  %v1270 = vld [vmem:[%s1256 + $0x34] sm:$0xf]
  %v1271 = vld [vmem:[%s1256 + $0x38] sm:$0xf]
  %v1272 = vld [vmem:[%s1256 + $0x3c] sm:$0xf]
  %v1289 = vunpack.c.l.b16 %v1257
  %v1290 = vunpack.c.l.b16 %v1258
  %v1291 = vunpack.c.l.b16 %v1259
  %v1292 = vunpack.c.l.b16 %v1260
  %v1293 = vunpack.c.l.b16 %v1261
  %v1294 = vunpack.c.l.b16 %v1262
  %v1295 = vunpack.c.l.b16 %v1263
  %v1296 = vunpack.c.l.b16 %v1264
  %v1297 = vunpack.c.l.b16 %v1265
  %v1298 = vunpack.c.l.b16 %v1266
  %v1299 = vunpack.c.l.b16 %v1267
  %v1300 = vunpack.c.l.b16 %v1268
  %v1301 = vunpack.c.l.b16 %v1269
  %v1302 = vunpack.c.l.b16 %v1270
  %v1303 = vunpack.c.l.b16 %v1271
  %v1304 = vunpack.c.l.b16 %v1272
  %v1305 = vpack.c.b16 %v1290, %v1289
  %v1306 = vpack.c.b16 %v1292, %v1291
  %v1307 = vpack.c.b16 %v1294, %v1293
  %v1308 = vpack.c.b16 %v1296, %v1295
  %v1309 = vpack.c.b16 %v1298, %v1297
  %v1310 = vpack.c.b16 %v1300, %v1299
  %v1311 = vpack.c.b16 %v1302, %v1301
  %v1312 = vpack.c.b16 %v1304, %v1303
  %1321 = vmatprep.subr.bf16.mxu0 0
  %1322 = vmatpush1.bf16.msra.mxu0 %v1312
  %1323 = vmatprep.subr.bf16.mxu0 0
  %1324 = vmatpush1.bf16.msra.mxu0 %v1311
  %1325 = vmatprep.subr.bf16.mxu0 0
  %1326 = vmatpush1.bf16.msra.mxu0 %v1310
  %1327 = vmatprep.subr.bf16.mxu0 0
  %1328 = vmatpush1.bf16.msra.mxu0 %v1309
  %1329 = vmatprep.subr.bf16.mxu0 0
  %1330 = vmatpush1.bf16.msra.mxu0 %v1308
  %1331 = vmatprep.subr.bf16.mxu0 0
  %1332 = vmatpush1.bf16.msra.mxu0 %v1307
  %1333 = vmatprep.subr.bf16.mxu0 0
  %1334 = vmatpush1.bf16.msra.mxu0 %v1306
  %1335 = vmatprep.subr.bf16.mxu0 0
  %1336 = vmatpush1.bf16.msra.mxu0 %v1305
  %1337 = vmatprep.subr.bf16.mxu0 0
  %1338 = vmatpush2.bf16.msra.mxu0 0
  %1339 = vmatprep.subr.bf16.mxu0 0
  %1340 = vmatpush2.bf16.msra.mxu0 0
  %1341 = vmatprep.subr.bf16.mxu0 0
  %1342 = vmatpush2.bf16.msra.mxu0 0
  %1343 = vmatprep.subr.bf16.mxu0 0
  %1344 = vmatpush2.bf16.msra.mxu0 0
  %1345 = vmatprep.subr.bf16.mxu0 0
  %1346 = vmatpush2.bf16.msra.mxu0 0
  %1347 = vmatprep.subr.bf16.mxu0 0
  %1348 = vmatpush2.bf16.msra.mxu0 0
  %1349 = vmatprep.subr.bf16.mxu0 0
  %1350 = vmatpush2.bf16.msra.mxu0 0
  %1351 = vmatprep.subr.bf16.mxu0 0
  %1352 = vmatpush2.bf16.msra.mxu0 0
  %1353 = vmatprep.mubr.bf16.mxu0 0
  %1354 = vmatmul.mubr.bf16.gmra.mxu0 %v1250
  %v1355 = vpop.f32.mrf.mxu0
  %v1356 = vadd.f32 0.0, %v1355
  %v1357 = vpop.f32.mrf.mxu0
  %v1358 = vpop.f32.mrf.mxu0
  %v1359 = vadd.f32 0.0, %v1358
  %v1360 = vpop.f32.mrf.mxu0
  %1361 = vmatprep.mubr.bf16.mxu0 0
  %1362 = vmatmul.mubr.bf16.gmra.mxu0 %v1251
  %v1363 = vpop.f32.mrf.mxu0
  %v1364 = vadd.f32 0.0, %v1363
  %v1365 = vpop.f32.mrf.mxu0
  %v1366 = vpop.f32.mrf.mxu0
  %v1367 = vadd.f32 0.0, %v1366
  %v1368 = vpop.f32.mrf.mxu0
  %1369 = vmatprep.mubr.bf16.mxu0 0
  %1370 = vmatmul.mubr.bf16.gmra.mxu0 %v1252
  %v1371 = vpop.f32.mrf.mxu0
  %v1372 = vadd.f32 0.0, %v1371
  %v1373 = vpop.f32.mrf.mxu0
  %v1374 = vpop.f32.mrf.mxu0
  %v1375 = vadd.f32 0.0, %v1374
  %v1376 = vpop.f32.mrf.mxu0
  %1377 = vmatprep.mubr.bf16.mxu0 0
  %1378 = vmatmul.mubr.bf16.gmra.mxu0 %v1253
  %v1379 = vpop.f32.mrf.mxu0
  %v1380 = vadd.f32 0.0, %v1379
  %v1381 = vpop.f32.mrf.mxu0
  %v1382 = vpop.f32.mrf.mxu0
  %v1383 = vadd.f32 0.0, %v1382
  %v1384 = vpop.f32.mrf.mxu0
  %1385 = vmatprep.mubr.bf16.mxu0 0
  %1386 = vmatmul.mubr.bf16.gmra.mxu0 %v1254
  %v1387 = vpop.f32.mrf.mxu0
  %v1388 = vadd.f32 0.0, %v1387
  %v1389 = vpop.f32.mrf.mxu0
  %v1390 = vpop.f32.mrf.mxu0
  %v1391 = vadd.f32 0.0, %v1390
  %v1392 = vpop.f32.mrf.mxu0
  %1393 = vmatprep.mubr.bf16.mxu0 0
  %1394 = vmatmul.mubr.bf16.gmra.mxu0 %v1255
  %v1395 = vpop.f32.mrf.mxu0
  %v1396 = vadd.f32 0.0, %v1395
  %v1397 = vpop.f32.mrf.mxu0
  %v1398 = vpop.f32.mrf.mxu0
  %v1399 = vpop.f32.mrf.mxu0
  %1400 = vdwg.mxu0
  %v1401 = vadd.f32 %v1228, %v1356
  %v1402 = vadd.f32 %v1229, %v1359
  %v1403 = vadd.f32 %v1230, %v1364
  %v1404 = vadd.f32 %v1231, %v1367
  %v1405 = vadd.f32 %v1232, %v1372
  %v1406 = vadd.f32 %v1233, %v1375
  %v1407 = vadd.f32 %v1234, %v1380
  %v1408 = vadd.f32 %v1235, %v1383
  %v1409 = vadd.f32 %v1236, %v1388
  %v1410 = vadd.f32 %v1237, %v1391
  %v1411 = vadd.f32 %v1238, %v1396
  %v1412 = vld [vmem:[#allocation2 + $0x25] sm:$0xff]
  %v1413 = vld [vmem:[#allocation2 + $0x2d] sm:$0xff]
  %v1414 = vld [vmem:[#allocation2 + $0x35] sm:$0xff]
  %v1415 = vld [vmem:[#allocation2 + $0x3d] sm:$0xff]
  %v1416 = vld [vmem:[#allocation2 + $0x45] sm:$0xff]
  %v1417 = vld [vmem:[#allocation2 + $0x4d] sm:$0xff]
  %v1418 = vld [vmem:[#allocation2 + $0x55] sm:$0xff]
  %v1419 = vld [vmem:[#allocation2 + $0x5d] sm:$0xff]
  %v1420 = vld [vmem:[#allocation2 + $0x65] sm:$0xff]
  %v1421 = vld [vmem:[#allocation2 + $0x6d] sm:$0xff]
  %v1422 = vld [vmem:[#allocation2 + $0x75] sm:$0xff]
  %v1423 = vpack.c.bf16 %v1413, %v1412
  %v1424 = vpack.c.bf16 %v1415, %v1414
  %v1425 = vpack.c.bf16 %v1417, %v1416
  %v1426 = vpack.c.bf16 %v1419, %v1418
  %v1427 = vpack.c.bf16 %v1421, %v1420
  %v1428 = vpack.c.bf16 %v1422, %v1422
  %s1429 = scalar_lea.vmem %s1, 448
  %v1430 = vld [vmem:[%s1429] sm:$0xf]
  %v1431 = vld [vmem:[%s1429 + $0x4] sm:$0xf]
  %v1432 = vld [vmem:[%s1429 + $0x8] sm:$0xf]
  %v1433 = vld [vmem:[%s1429 + $0xc] sm:$0xf]
  %v1434 = vld [vmem:[%s1429 + $0x10] sm:$0xf]
  %v1435 = vld [vmem:[%s1429 + $0x14] sm:$0xf]
  %v1436 = vld [vmem:[%s1429 + $0x18] sm:$0xf]
  %v1437 = vld [vmem:[%s1429 + $0x1c] sm:$0xf]
  %v1438 = vld [vmem:[%s1429 + $0x20] sm:$0xf]
  %v1439 = vld [vmem:[%s1429 + $0x24] sm:$0xf]
  %v1440 = vld [vmem:[%s1429 + $0x28] sm:$0xf]
  %v1441 = vld [vmem:[%s1429 + $0x2c] sm:$0xf]
  %v1442 = vld [vmem:[%s1429 + $0x30] sm:$0xf]
  %v1443 = vld [vmem:[%s1429 + $0x34] sm:$0xf]
  %v1444 = vld [vmem:[%s1429 + $0x38] sm:$0xf]
  %v1445 = vld [vmem:[%s1429 + $0x3c] sm:$0xf]
  %v1462 = vunpack.c.l.b16 %v1430
  %v1463 = vunpack.c.l.b16 %v1431
  %v1464 = vunpack.c.l.b16 %v1432
  %v1465 = vunpack.c.l.b16 %v1433
  %v1466 = vunpack.c.l.b16 %v1434
  %v1467 = vunpack.c.l.b16 %v1435
  %v1468 = vunpack.c.l.b16 %v1436
  %v1469 = vunpack.c.l.b16 %v1437
  %v1470 = vunpack.c.l.b16 %v1438
  %v1471 = vunpack.c.l.b16 %v1439
  %v1472 = vunpack.c.l.b16 %v1440
  %v1473 = vunpack.c.l.b16 %v1441
  %v1474 = vunpack.c.l.b16 %v1442
  %v1475 = vunpack.c.l.b16 %v1443
  %v1476 = vunpack.c.l.b16 %v1444
  %v1477 = vunpack.c.l.b16 %v1445
  %v1478 = vpack.c.b16 %v1463, %v1462
  %v1479 = vpack.c.b16 %v1465, %v1464
  %v1480 = vpack.c.b16 %v1467, %v1466
  %v1481 = vpack.c.b16 %v1469, %v1468
  %v1482 = vpack.c.b16 %v1471, %v1470
  %v1483 = vpack.c.b16 %v1473, %v1472
  %v1484 = vpack.c.b16 %v1475, %v1474
  %v1485 = vpack.c.b16 %v1477, %v1476
  %1494 = vmatprep.subr.bf16.mxu0 0
  %1495 = vmatpush1.bf16.msra.mxu0 %v1485
  %1496 = vmatprep.subr.bf16.mxu0 0
  %1497 = vmatpush1.bf16.msra.mxu0 %v1484
  %1498 = vmatprep.subr.bf16.mxu0 0
  %1499 = vmatpush1.bf16.msra.mxu0 %v1483
  %1500 = vmatprep.subr.bf16.mxu0 0
  %1501 = vmatpush1.bf16.msra.mxu0 %v1482
  %1502 = vmatprep.subr.bf16.mxu0 0
  %1503 = vmatpush1.bf16.msra.mxu0 %v1481
  %1504 = vmatprep.subr.bf16.mxu0 0
  %1505 = vmatpush1.bf16.msra.mxu0 %v1480
  %1506 = vmatprep.subr.bf16.mxu0 0
  %1507 = vmatpush1.bf16.msra.mxu0 %v1479
  %1508 = vmatprep.subr.bf16.mxu0 0
  %1509 = vmatpush1.bf16.msra.mxu0 %v1478
  %1510 = vmatprep.subr.bf16.mxu0 0
  %1511 = vmatpush2.bf16.msra.mxu0 0
  %1512 = vmatprep.subr.bf16.mxu0 0
  %1513 = vmatpush2.bf16.msra.mxu0 0
  %1514 = vmatprep.subr.bf16.mxu0 0
  %1515 = vmatpush2.bf16.msra.mxu0 0
  %1516 = vmatprep.subr.bf16.mxu0 0
  %1517 = vmatpush2.bf16.msra.mxu0 0
  %1518 = vmatprep.subr.bf16.mxu0 0
  %1519 = vmatpush2.bf16.msra.mxu0 0
  %1520 = vmatprep.subr.bf16.mxu0 0
  %1521 = vmatpush2.bf16.msra.mxu0 0
  %1522 = vmatprep.subr.bf16.mxu0 0
  %1523 = vmatpush2.bf16.msra.mxu0 0
  %1524 = vmatprep.subr.bf16.mxu0 0
  %1525 = vmatpush2.bf16.msra.mxu0 0
  %1526 = vmatprep.mubr.bf16.mxu0 0
  %1527 = vmatmul.mubr.bf16.gmra.mxu0 %v1423
  %v1528 = vpop.f32.mrf.mxu0
  %v1529 = vadd.f32 0.0, %v1528
  %v1530 = vpop.f32.mrf.mxu0
  %v1531 = vpop.f32.mrf.mxu0
  %v1532 = vadd.f32 0.0, %v1531
  %v1533 = vpop.f32.mrf.mxu0
  %1534 = vmatprep.mubr.bf16.mxu0 0
  %1535 = vmatmul.mubr.bf16.gmra.mxu0 %v1424
  %v1536 = vpop.f32.mrf.mxu0
  %v1537 = vadd.f32 0.0, %v1536
  %v1538 = vpop.f32.mrf.mxu0
  %v1539 = vpop.f32.mrf.mxu0
  %v1540 = vadd.f32 0.0, %v1539
  %v1541 = vpop.f32.mrf.mxu0
  %1542 = vmatprep.mubr.bf16.mxu0 0
  %1543 = vmatmul.mubr.bf16.gmra.mxu0 %v1425
  %v1544 = vpop.f32.mrf.mxu0
  %v1545 = vadd.f32 0.0, %v1544
  %v1546 = vpop.f32.mrf.mxu0
  %v1547 = vpop.f32.mrf.mxu0
  %v1548 = vadd.f32 0.0, %v1547
  %v1549 = vpop.f32.mrf.mxu0
  %1550 = vmatprep.mubr.bf16.mxu0 0
  %1551 = vmatmul.mubr.bf16.gmra.mxu0 %v1426
  %v1552 = vpop.f32.mrf.mxu0
  %v1553 = vadd.f32 0.0, %v1552
  %v1554 = vpop.f32.mrf.mxu0
  %v1555 = vpop.f32.mrf.mxu0
  %v1556 = vadd.f32 0.0, %v1555
  %v1557 = vpop.f32.mrf.mxu0
  %1558 = vmatprep.mubr.bf16.mxu0 0
  %1559 = vmatmul.mubr.bf16.gmra.mxu0 %v1427
  %v1560 = vpop.f32.mrf.mxu0
  %v1561 = vadd.f32 0.0, %v1560
  %v1562 = vpop.f32.mrf.mxu0
  %v1563 = vpop.f32.mrf.mxu0
  %v1564 = vadd.f32 0.0, %v1563
  %v1565 = vpop.f32.mrf.mxu0
  %1566 = vmatprep.mubr.bf16.mxu0 0
  %1567 = vmatmul.mubr.bf16.gmra.mxu0 %v1428
  %v1568 = vpop.f32.mrf.mxu0
  %v1569 = vadd.f32 0.0, %v1568
  %v1570 = vpop.f32.mrf.mxu0
  %v1571 = vpop.f32.mrf.mxu0
  %v1572 = vpop.f32.mrf.mxu0
  %1573 = vdwg.mxu0
  %v1574 = vadd.f32 %v1401, %v1529
  %v1575 = vadd.f32 %v1402, %v1532
  %v1576 = vadd.f32 %v1403, %v1537
  %v1577 = vadd.f32 %v1404, %v1540
  %v1578 = vadd.f32 %v1405, %v1545
  %v1579 = vadd.f32 %v1406, %v1548
  %v1580 = vadd.f32 %v1407, %v1553
  %v1581 = vadd.f32 %v1408, %v1556
  %v1582 = vadd.f32 %v1409, %v1561
  %v1583 = vadd.f32 %v1410, %v1564
  %v1584 = vadd.f32 %v1411, %v1569
  %v1585 = vld [vmem:[#allocation2 + $0x26] sm:$0xff]
  %v1586 = vld [vmem:[#allocation2 + $0x2e] sm:$0xff]
  %v1587 = vld [vmem:[#allocation2 + $0x36] sm:$0xff]
  %v1588 = vld [vmem:[#allocation2 + $0x3e] sm:$0xff]
  %v1589 = vld [vmem:[#allocation2 + $0x46] sm:$0xff]
  %v1590 = vld [vmem:[#allocation2 + $0x4e] sm:$0xff]
  %v1591 = vld [vmem:[#allocation2 + $0x56] sm:$0xff]
  %v1592 = vld [vmem:[#allocation2 + $0x5e] sm:$0xff]
  %v1593 = vld [vmem:[#allocation2 + $0x66] sm:$0xff]
  %v1594 = vld [vmem:[#allocation2 + $0x6e] sm:$0xff]
  %v1595 = vld [vmem:[#allocation2 + $0x76] sm:$0xff]
  %v1596 = vpack.c.bf16 %v1586, %v1585
  %v1597 = vpack.c.bf16 %v1588, %v1587
  %v1598 = vpack.c.bf16 %v1590, %v1589
  %v1599 = vpack.c.bf16 %v1592, %v1591
  %v1600 = vpack.c.bf16 %v1594, %v1593
  %v1601 = vpack.c.bf16 %v1595, %v1595
  %s1602 = scalar_lea.vmem %s1, 512
  %v1603 = vld [vmem:[%s1602] sm:$0xf]
  %v1604 = vld [vmem:[%s1602 + $0x4] sm:$0xf]
  %v1605 = vld [vmem:[%s1602 + $0x8] sm:$0xf]
  %v1606 = vld [vmem:[%s1602 + $0xc] sm:$0xf]
  %v1607 = vld [vmem:[%s1602 + $0x10] sm:$0xf]
  %v1608 = vld [vmem:[%s1602 + $0x14] sm:$0xf]
  %v1609 = vld [vmem:[%s1602 + $0x18] sm:$0xf]
  %v1610 = vld [vmem:[%s1602 + $0x1c] sm:$0xf]
  %v1611 = vld [vmem:[%s1602 + $0x20] sm:$0xf]
  %v1612 = vld [vmem:[%s1602 + $0x24] sm:$0xf]
  %v1613 = vld [vmem:[%s1602 + $0x28] sm:$0xf]
  %v1614 = vld [vmem:[%s1602 + $0x2c] sm:$0xf]
  %v1615 = vld [vmem:[%s1602 + $0x30] sm:$0xf]
  %v1616 = vld [vmem:[%s1602 + $0x34] sm:$0xf]
  %v1617 = vld [vmem:[%s1602 + $0x38] sm:$0xf]
  %v1618 = vld [vmem:[%s1602 + $0x3c] sm:$0xf]
  %v1635 = vunpack.c.l.b16 %v1603
  %v1636 = vunpack.c.l.b16 %v1604
  %v1637 = vunpack.c.l.b16 %v1605
  %v1638 = vunpack.c.l.b16 %v1606
  %v1639 = vunpack.c.l.b16 %v1607
  %v1640 = vunpack.c.l.b16 %v1608
  %v1641 = vunpack.c.l.b16 %v1609
  %v1642 = vunpack.c.l.b16 %v1610
  %v1643 = vunpack.c.l.b16 %v1611
  %v1644 = vunpack.c.l.b16 %v1612
  %v1645 = vunpack.c.l.b16 %v1613
  %v1646 = vunpack.c.l.b16 %v1614
  %v1647 = vunpack.c.l.b16 %v1615
  %v1648 = vunpack.c.l.b16 %v1616
  %v1649 = vunpack.c.l.b16 %v1617
  %v1650 = vunpack.c.l.b16 %v1618
  %v1651 = vpack.c.b16 %v1636, %v1635
  %v1652 = vpack.c.b16 %v1638, %v1637
  %v1653 = vpack.c.b16 %v1640, %v1639
  %v1654 = vpack.c.b16 %v1642, %v1641
  %v1655 = vpack.c.b16 %v1644, %v1643
  %v1656 = vpack.c.b16 %v1646, %v1645
  %v1657 = vpack.c.b16 %v1648, %v1647
  %v1658 = vpack.c.b16 %v1650, %v1649
  %1667 = vmatprep.subr.bf16.mxu0 0
  %1668 = vmatpush1.bf16.msra.mxu0 %v1658
  %1669 = vmatprep.subr.bf16.mxu0 0
  %1670 = vmatpush1.bf16.msra.mxu0 %v1657
  %1671 = vmatprep.subr.bf16.mxu0 0
  %1672 = vmatpush1.bf16.msra.mxu0 %v1656
  %1673 = vmatprep.subr.bf16.mxu0 0
  %1674 = vmatpush1.bf16.msra.mxu0 %v1655
  %1675 = vmatprep.subr.bf16.mxu0 0
  %1676 = vmatpush1.bf16.msra.mxu0 %v1654
  %1677 = vmatprep.subr.bf16.mxu0 0
  %1678 = vmatpush1.bf16.msra.mxu0 %v1653
  %1679 = vmatprep.subr.bf16.mxu0 0
  %1680 = vmatpush1.bf16.msra.mxu0 %v1652
  %1681 = vmatprep.subr.bf16.mxu0 0
  %1682 = vmatpush1.bf16.msra.mxu0 %v1651
  %1683 = vmatprep.subr.bf16.mxu0 0
  %1684 = vmatpush2.bf16.msra.mxu0 0
  %1685 = vmatprep.subr.bf16.mxu0 0
  %1686 = vmatpush2.bf16.msra.mxu0 0
  %1687 = vmatprep.subr.bf16.mxu0 0
  %1688 = vmatpush2.bf16.msra.mxu0 0
  %1689 = vmatprep.subr.bf16.mxu0 0
  %1690 = vmatpush2.bf16.msra.mxu0 0
  %1691 = vmatprep.subr.bf16.mxu0 0
  %1692 = vmatpush2.bf16.msra.mxu0 0
  %1693 = vmatprep.subr.bf16.mxu0 0
  %1694 = vmatpush2.bf16.msra.mxu0 0
  %1695 = vmatprep.subr.bf16.mxu0 0
  %1696 = vmatpush2.bf16.msra.mxu0 0
  %1697 = vmatprep.subr.bf16.mxu0 0
  %1698 = vmatpush2.bf16.msra.mxu0 0
  %1699 = vmatprep.mubr.bf16.mxu0 0
  %1700 = vmatmul.mubr.bf16.gmra.mxu0 %v1596
  %v1701 = vpop.f32.mrf.mxu0
  %v1702 = vadd.f32 0.0, %v1701
  %v1703 = vpop.f32.mrf.mxu0
  %v1704 = vpop.f32.mrf.mxu0
  %v1705 = vadd.f32 0.0, %v1704
  %v1706 = vpop.f32.mrf.mxu0
  %1707 = vmatprep.mubr.bf16.mxu0 0
  %1708 = vmatmul.mubr.bf16.gmra.mxu0 %v1597
  %v1709 = vpop.f32.mrf.mxu0
  %v1710 = vadd.f32 0.0, %v1709
  %v1711 = vpop.f32.mrf.mxu0
  %v1712 = vpop.f32.mrf.mxu0
  %v1713 = vadd.f32 0.0, %v1712
  %v1714 = vpop.f32.mrf.mxu0
  %1715 = vmatprep.mubr.bf16.mxu0 0
  %1716 = vmatmul.mubr.bf16.gmra.mxu0 %v1598
  %v1717 = vpop.f32.mrf.mxu0
  %v1718 = vadd.f32 0.0, %v1717
  %v1719 = vpop.f32.mrf.mxu0
  %v1720 = vpop.f32.mrf.mxu0
  %v1721 = vadd.f32 0.0, %v1720
  %v1722 = vpop.f32.mrf.mxu0
  %1723 = vmatprep.mubr.bf16.mxu0 0
  %1724 = vmatmul.mubr.bf16.gmra.mxu0 %v1599
  %v1725 = vpop.f32.mrf.mxu0
  %v1726 = vadd.f32 0.0, %v1725
  %v1727 = vpop.f32.mrf.mxu0
  %v1728 = vpop.f32.mrf.mxu0
  %v1729 = vadd.f32 0.0, %v1728
  %v1730 = vpop.f32.mrf.mxu0
  %1731 = vmatprep.mubr.bf16.mxu0 0
  %1732 = vmatmul.mubr.bf16.gmra.mxu0 %v1600
  %v1733 = vpop.f32.mrf.mxu0
  %v1734 = vadd.f32 0.0, %v1733
  %v1735 = vpop.f32.mrf.mxu0
  %v1736 = vpop.f32.mrf.mxu0
  %v1737 = vadd.f32 0.0, %v1736
  %v1738 = vpop.f32.mrf.mxu0
  %1739 = vmatprep.mubr.bf16.mxu0 0
  %1740 = vmatmul.mubr.bf16.gmra.mxu0 %v1601
  %v1741 = vpop.f32.mrf.mxu0
  %v1742 = vadd.f32 0.0, %v1741
  %v1743 = vpop.f32.mrf.mxu0
  %v1744 = vpop.f32.mrf.mxu0
  %v1745 = vpop.f32.mrf.mxu0
  %1746 = vdwg.mxu0
  %v1747 = vadd.f32 %v1574, %v1702
  %v1748 = vadd.f32 %v1575, %v1705
  %v1749 = vadd.f32 %v1576, %v1710
  %v1750 = vadd.f32 %v1577, %v1713
  %v1751 = vadd.f32 %v1578, %v1718
  %v1752 = vadd.f32 %v1579, %v1721
  %v1753 = vadd.f32 %v1580, %v1726
  %v1754 = vadd.f32 %v1581, %v1729
  %v1755 = vadd.f32 %v1582, %v1734
  %v1756 = vadd.f32 %v1583, %v1737
  %v1757 = vadd.f32 %v1584, %v1742
  %v1758 = vadd.f32 %v1747, %v893
  %v1759 = vadd.f32 %v1748, %v894
  %v1760 = vadd.f32 %v1749, %v895
  %v1761 = vadd.f32 %v1750, %v896
  %v1762 = vadd.f32 %v1751, %v897
  %v1763 = vadd.f32 %v1752, %v898
  %v1764 = vadd.f32 %v1753, %v899
  %v1765 = vadd.f32 %v1754, %v900
  %v1766 = vadd.f32 %v1755, %v901
  %v1767 = vadd.f32 %v1756, %v902
  %v1768 = vadd.f32 %v1757, %v903
  %v1770 = vlaneseq
  %v1771 = vshrl.u32 %v1770, 7
  %v1772 = vsub.s32 0, %v1771
  %v1773 = vrot.slane %v223, %v1772
  %v1775 = vadd.f32 %v1758, %v1773
  %v1776 = vadd.f32 %v1759, %v1773
  %v1777 = vadd.f32 %v1760, %v1773
  %v1778 = vadd.f32 %v1761, %v1773
  %v1779 = vadd.f32 %v1762, %v1773
  %v1780 = vadd.f32 %v1763, %v1773
  %v1781 = vadd.f32 %v1764, %v1773
  %v1782 = vadd.f32 %v1765, %v1773
  %v1783 = vadd.f32 %v1766, %v1773
  %v1784 = vadd.f32 %v1767, %v1773
  %v1785 = vadd.f32 %v1768, %v1773
  %v1786 = vmul.f32 %v1775, 0.1
  %v1787 = vmul.f32 %v1776, 0.1
  %v1788 = vmul.f32 %v1777, 0.1
  %v1789 = vmul.f32 %v1778, 0.1
  %v1790 = vmul.f32 %v1779, 0.1
  %v1791 = vmul.f32 %v1780, 0.1
  %v1792 = vmul.f32 %v1781, 0.1
  %v1793 = vmul.f32 %v1782, 0.1
  %v1794 = vmul.f32 %v1783, 0.1
  %v1795 = vmul.f32 %v1784, 0.1
  %v1796 = vmul.f32 %v1785, 0.1
  %v1797 = vmax.f32 %v1775, %v1786
  %v1798 = vmax.f32 %v1776, %v1787
  %v1799 = vmax.f32 %v1777, %v1788
  %v1800 = vmax.f32 %v1778, %v1789
  %v1801 = vmax.f32 %v1779, %v1790
  %v1802 = vmax.f32 %v1780, %v1791
  %v1803 = vmax.f32 %v1781, %v1792
  %v1804 = vmax.f32 %v1782, %v1793
  %v1805 = vmax.f32 %v1783, %v1794
  %v1806 = vmax.f32 %v1784, %v1795
  %v1807 = vmax.f32 %v1785, %v1796
  %1808 = vst [vmem:[%s3] sm:$0xff] %v1797
  %1809 = vst [vmem:[%s3 + $0x8] sm:$0xff] %v1798
  %1810 = vst [vmem:[%s3 + $0x10] sm:$0xff] %v1799
  %1811 = vst [vmem:[%s3 + $0x18] sm:$0xff] %v1800
  %1812 = vst [vmem:[%s3 + $0x20] sm:$0xff] %v1801
  %1813 = vst [vmem:[%s3 + $0x28] sm:$0xff] %v1802
  %1814 = vst [vmem:[%s3 + $0x30] sm:$0xff] %v1803
  %1815 = vst [vmem:[%s3 + $0x38] sm:$0xff] %v1804
  %1816 = vst [vmem:[%s3 + $0x40] sm:$0xff] %v1805
  %1817 = vst [vmem:[%s3 + $0x48] sm:$0xff] %v1806
  %1818 = vst [vmem:[%s3 + $0x50] sm:$0xff] %v1807
  %v1819 = vld [vmem:[#allocation2 + $0x58] sm:$0xff]
  %v1820 = vld [vmem:[#allocation2 + $0x60] sm:$0xff]
  %v1821 = vld [vmem:[#allocation2 + $0x68] sm:$0xff]
  %v1822 = vld [vmem:[#allocation2 + $0x70] sm:$0xff]
  %v1823 = vld [vmem:[#allocation2 + $0x78] sm:$0xff]
  %v1824 = vld [vmem:[#allocation2 + $0x80] sm:$0xff]
  %v1825 = vld [vmem:[#allocation2 + $0x88] sm:$0xff]
  %v1826 = vld [vmem:[#allocation2 + $0x90] sm:$0xff]
  %v1827 = vld [vmem:[#allocation2 + $0x98] sm:$0xff]
  %v1828 = vld [vmem:[#allocation2 + $0xa0] sm:$0xff]
  %v1829 = vld [vmem:[#allocation2 + $0xa8] sm:$0xff]
  %v1830 = vpack.c.bf16 %v1820, %v1819
  %v1831 = vpack.c.bf16 %v1822, %v1821
  %v1832 = vpack.c.bf16 %v1824, %v1823
  %v1833 = vpack.c.bf16 %v1826, %v1825
  %v1834 = vpack.c.bf16 %v1828, %v1827
  %v1835 = vpack.c.bf16 %v1829, %v1829
  %v1836 = vld [vmem:[%s1] sm:$0xf]
  %v1837 = vld [vmem:[%s1 + $0x4] sm:$0xf]
  %v1838 = vld [vmem:[%s1 + $0x8] sm:$0xf]
  %v1839 = vld [vmem:[%s1 + $0xc] sm:$0xf]
  %v1840 = vld [vmem:[%s1 + $0x10] sm:$0xf]
  %v1841 = vld [vmem:[%s1 + $0x14] sm:$0xf]
  %v1842 = vld [vmem:[%s1 + $0x18] sm:$0xf]
  %v1843 = vld [vmem:[%s1 + $0x1c] sm:$0xf]
  %v1844 = vld [vmem:[%s1 + $0x20] sm:$0xf]
  %v1845 = vld [vmem:[%s1 + $0x24] sm:$0xf]
  %v1846 = vld [vmem:[%s1 + $0x28] sm:$0xf]
  %v1847 = vld [vmem:[%s1 + $0x2c] sm:$0xf]
  %v1848 = vld [vmem:[%s1 + $0x30] sm:$0xf]
  %v1849 = vld [vmem:[%s1 + $0x34] sm:$0xf]
  %v1850 = vld [vmem:[%s1 + $0x38] sm:$0xf]
  %v1851 = vld [vmem:[%s1 + $0x3c] sm:$0xf]
  %v1852 = vld [vmem:[#allocation2 + $0x59] sm:$0xff]
  %v1853 = vld [vmem:[#allocation2 + $0x61] sm:$0xff]
  %v1854 = vld [vmem:[#allocation2 + $0x69] sm:$0xff]
  %v1855 = vld [vmem:[#allocation2 + $0x71] sm:$0xff]
  %v1856 = vld [vmem:[#allocation2 + $0x79] sm:$0xff]
  %v1857 = vld [vmem:[#allocation2 + $0x81] sm:$0xff]
  %v1858 = vld [vmem:[#allocation2 + $0x89] sm:$0xff]
  %v1859 = vld [vmem:[#allocation2 + $0x91] sm:$0xff]
  %v1860 = vld [vmem:[#allocation2 + $0x99] sm:$0xff]
  %v1861 = vld [vmem:[#allocation2 + $0xa1] sm:$0xff]
  %v1862 = vld [vmem:[#allocation2 + $0xa9] sm:$0xff]
  %v1863 = vpack.c.bf16 %v1853, %v1852
  %v1864 = vpack.c.bf16 %v1855, %v1854
  %v1865 = vpack.c.bf16 %v1857, %v1856
  %v1866 = vpack.c.bf16 %v1859, %v1858
  %v1867 = vpack.c.bf16 %v1861, %v1860
  %v1868 = vpack.c.bf16 %v1862, %v1862
  %v1869 = vld [vmem:[%s274] sm:$0xf]
  %v1870 = vld [vmem:[%s274 + $0x4] sm:$0xf]
  %v1871 = vld [vmem:[%s274 + $0x8] sm:$0xf]
  %v1872 = vld [vmem:[%s274 + $0xc] sm:$0xf]
  %v1873 = vld [vmem:[%s274 + $0x10] sm:$0xf]
  %v1874 = vld [vmem:[%s274 + $0x14] sm:$0xf]
  %v1875 = vld [vmem:[%s274 + $0x18] sm:$0xf]
  %v1876 = vld [vmem:[%s274 + $0x1c] sm:$0xf]
  %v1877 = vld [vmem:[%s274 + $0x20] sm:$0xf]
  %v1878 = vld [vmem:[%s274 + $0x24] sm:$0xf]
  %v1879 = vld [vmem:[%s274 + $0x28] sm:$0xf]
  %v1880 = vld [vmem:[%s274 + $0x2c] sm:$0xf]
  %v1881 = vld [vmem:[%s274 + $0x30] sm:$0xf]
  %v1882 = vld [vmem:[%s274 + $0x34] sm:$0xf]
  %v1883 = vld [vmem:[%s274 + $0x38] sm:$0xf]
  %v1884 = vld [vmem:[%s274 + $0x3c] sm:$0xf]
  %v1901 = vunpack.c.l.b16 %v1869
  %v1902 = vunpack.c.l.b16 %v1870
  %v1903 = vunpack.c.l.b16 %v1871
  %v1904 = vunpack.c.l.b16 %v1872
  %v1905 = vunpack.c.l.b16 %v1873
  %v1906 = vunpack.c.l.b16 %v1874
  %v1907 = vunpack.c.l.b16 %v1875
  %v1908 = vunpack.c.l.b16 %v1876
  %v1909 = vunpack.c.l.b16 %v1877
  %v1910 = vunpack.c.l.b16 %v1878
  %v1911 = vunpack.c.l.b16 %v1879
  %v1912 = vunpack.c.l.b16 %v1880
  %v1913 = vunpack.c.l.b16 %v1881
  %v1914 = vunpack.c.l.b16 %v1882
  %v1915 = vunpack.c.l.b16 %v1883
  %v1916 = vunpack.c.l.b16 %v1884
  %v1917 = vpack.c.b16 %v1902, %v1901
  %v1918 = vpack.c.b16 %v1904, %v1903
  %v1919 = vpack.c.b16 %v1906, %v1905
  %v1920 = vpack.c.b16 %v1908, %v1907
  %v1921 = vpack.c.b16 %v1910, %v1909
  %v1922 = vpack.c.b16 %v1912, %v1911
  %v1923 = vpack.c.b16 %v1914, %v1913
  %v1924 = vpack.c.b16 %v1916, %v1915
  %1933 = vmatprep.subr.bf16.mxu0 0
  %1934 = vmatpush1.bf16.msra.mxu0 %v1924
  %1935 = vmatprep.subr.bf16.mxu0 0
  %1936 = vmatpush1.bf16.msra.mxu0 %v1923
  %1937 = vmatprep.subr.bf16.mxu0 0
  %1938 = vmatpush1.bf16.msra.mxu0 %v1922
  %1939 = vmatprep.subr.bf16.mxu0 0
  %1940 = vmatpush1.bf16.msra.mxu0 %v1921
  %1941 = vmatprep.subr.bf16.mxu0 0
  %1942 = vmatpush1.bf16.msra.mxu0 %v1920
  %1943 = vmatprep.subr.bf16.mxu0 0
  %1944 = vmatpush1.bf16.msra.mxu0 %v1919
  %1945 = vmatprep.subr.bf16.mxu0 0
  %1946 = vmatpush1.bf16.msra.mxu0 %v1918
  %1947 = vmatprep.subr.bf16.mxu0 0
  %1948 = vmatpush1.bf16.msra.mxu0 %v1917
  %1949 = vmatprep.subr.bf16.mxu0 0
  %1950 = vmatpush2.bf16.msra.mxu0 0
  %1951 = vmatprep.subr.bf16.mxu0 0
  %1952 = vmatpush2.bf16.msra.mxu0 0
  %1953 = vmatprep.subr.bf16.mxu0 0
  %1954 = vmatpush2.bf16.msra.mxu0 0
  %1955 = vmatprep.subr.bf16.mxu0 0
  %1956 = vmatpush2.bf16.msra.mxu0 0
  %1957 = vmatprep.subr.bf16.mxu0 0
  %1958 = vmatpush2.bf16.msra.mxu0 0
  %1959 = vmatprep.subr.bf16.mxu0 0
  %1960 = vmatpush2.bf16.msra.mxu0 0
  %1961 = vmatprep.subr.bf16.mxu0 0
  %1962 = vmatpush2.bf16.msra.mxu0 0
  %1963 = vmatprep.subr.bf16.mxu0 0
  %1964 = vmatpush2.bf16.msra.mxu0 0
  %1965 = vmatprep.mubr.bf16.mxu0 0
  %1966 = vmatmul.mubr.bf16.gmra.mxu0 %v1863
  %v1967 = vpop.f32.mrf.mxu0
  %v1968 = vadd.f32 0.0, %v1967
  %v1969 = vpop.f32.mrf.mxu0
  %v1970 = vpop.f32.mrf.mxu0
  %v1971 = vadd.f32 0.0, %v1970
  %v1972 = vpop.f32.mrf.mxu0
  %1973 = vmatprep.mubr.bf16.mxu0 0
  %1974 = vmatmul.mubr.bf16.gmra.mxu0 %v1864
  %v1975 = vpop.f32.mrf.mxu0
  %v1976 = vadd.f32 0.0, %v1975
  %v1977 = vpop.f32.mrf.mxu0
  %v1978 = vpop.f32.mrf.mxu0
  %v1979 = vadd.f32 0.0, %v1978
  %v1980 = vpop.f32.mrf.mxu0
  %1981 = vmatprep.mubr.bf16.mxu0 0
  %1982 = vmatmul.mubr.bf16.gmra.mxu0 %v1865
  %v1983 = vpop.f32.mrf.mxu0
  %v1984 = vadd.f32 0.0, %v1983
  %v1985 = vpop.f32.mrf.mxu0
  %v1986 = vpop.f32.mrf.mxu0
  %v1987 = vadd.f32 0.0, %v1986
  %v1988 = vpop.f32.mrf.mxu0
  %1989 = vmatprep.mubr.bf16.mxu0 0
  %1990 = vmatmul.mubr.bf16.gmra.mxu0 %v1866
  %v1991 = vpop.f32.mrf.mxu0
  %v1992 = vadd.f32 0.0, %v1991
  %v1993 = vpop.f32.mrf.mxu0
  %v1994 = vpop.f32.mrf.mxu0
  %v1995 = vadd.f32 0.0, %v1994
  %v1996 = vpop.f32.mrf.mxu0
  %1997 = vmatprep.mubr.bf16.mxu0 0
  %1998 = vmatmul.mubr.bf16.gmra.mxu0 %v1867
  %v1999 = vpop.f32.mrf.mxu0
  %v2000 = vadd.f32 0.0, %v1999
  %v2001 = vpop.f32.mrf.mxu0
  %v2002 = vpop.f32.mrf.mxu0
  %v2003 = vadd.f32 0.0, %v2002
  %v2004 = vpop.f32.mrf.mxu0
  %2005 = vmatprep.mubr.bf16.mxu0 0
  %2006 = vmatmul.mubr.bf16.gmra.mxu0 %v1868
  %v2007 = vpop.f32.mrf.mxu0
  %v2008 = vadd.f32 0.0, %v2007
  %v2009 = vpop.f32.mrf.mxu0
  %v2010 = vpop.f32.mrf.mxu0
  %v2011 = vpop.f32.mrf.mxu0
  %2012 = vdwg.mxu0
  %v2029 = vunpack.c.l.b16 %v1836
  %v2030 = vunpack.c.l.b16 %v1837
  %v2031 = vunpack.c.l.b16 %v1838
  %v2032 = vunpack.c.l.b16 %v1839
  %v2033 = vunpack.c.l.b16 %v1840
  %v2034 = vunpack.c.l.b16 %v1841
  %v2035 = vunpack.c.l.b16 %v1842
  %v2036 = vunpack.c.l.b16 %v1843
  %v2037 = vunpack.c.l.b16 %v1844
  %v2038 = vunpack.c.l.b16 %v1845
  %v2039 = vunpack.c.l.b16 %v1846
  %v2040 = vunpack.c.l.b16 %v1847
  %v2041 = vunpack.c.l.b16 %v1848
  %v2042 = vunpack.c.l.b16 %v1849
  %v2043 = vunpack.c.l.b16 %v1850
  %v2044 = vunpack.c.l.b16 %v1851
  %v2045 = vpack.c.b16 %v2030, %v2029
  %v2046 = vpack.c.b16 %v2032, %v2031
  %v2047 = vpack.c.b16 %v2034, %v2033
  %v2048 = vpack.c.b16 %v2036, %v2035
  %v2049 = vpack.c.b16 %v2038, %v2037
  %v2050 = vpack.c.b16 %v2040, %v2039
  %v2051 = vpack.c.b16 %v2042, %v2041
  %v2052 = vpack.c.b16 %v2044, %v2043
  %2061 = vmatprep.subr.bf16.mxu0 0
  %2062 = vmatpush1.bf16.msra.mxu0 %v2052
  %2063 = vmatprep.subr.bf16.mxu0 0
  %2064 = vmatpush1.bf16.msra.mxu0 %v2051
  %2065 = vmatprep.subr.bf16.mxu0 0
  %2066 = vmatpush1.bf16.msra.mxu0 %v2050
  %2067 = vmatprep.subr.bf16.mxu0 0
  %2068 = vmatpush1.bf16.msra.mxu0 %v2049
  %2069 = vmatprep.subr.bf16.mxu0 0
  %2070 = vmatpush1.bf16.msra.mxu0 %v2048
  %2071 = vmatprep.subr.bf16.mxu0 0
  %2072 = vmatpush1.bf16.msra.mxu0 %v2047
  %2073 = vmatprep.subr.bf16.mxu0 0
  %2074 = vmatpush1.bf16.msra.mxu0 %v2046
  %2075 = vmatprep.subr.bf16.mxu0 0
  %2076 = vmatpush1.bf16.msra.mxu0 %v2045
  %2077 = vmatprep.subr.bf16.mxu0 0
  %2078 = vmatpush2.bf16.msra.mxu0 0
  %2079 = vmatprep.subr.bf16.mxu0 0
  %2080 = vmatpush2.bf16.msra.mxu0 0
  %2081 = vmatprep.subr.bf16.mxu0 0
  %2082 = vmatpush2.bf16.msra.mxu0 0
  %2083 = vmatprep.subr.bf16.mxu0 0
  %2084 = vmatpush2.bf16.msra.mxu0 0
  %2085 = vmatprep.subr.bf16.mxu0 0
  %2086 = vmatpush2.bf16.msra.mxu0 0
  %2087 = vmatprep.subr.bf16.mxu0 0
  %2088 = vmatpush2.bf16.msra.mxu0 0
  %2089 = vmatprep.subr.bf16.mxu0 0
  %2090 = vmatpush2.bf16.msra.mxu0 0
  %2091 = vmatprep.subr.bf16.mxu0 0
  %2092 = vmatpush2.bf16.msra.mxu0 0
  %2093 = vmatprep.mubr.bf16.mxu0 0
  %2094 = vmatmul.mubr.bf16.gmra.mxu0 %v1830
  %v2095 = vpop.f32.mrf.mxu0
  %v2096 = vadd.f32 %v1968, %v2095
  %v2097 = vpop.f32.mrf.mxu0
  %v2098 = vpop.f32.mrf.mxu0
  %v2099 = vadd.f32 %v1971, %v2098
  %v2100 = vpop.f32.mrf.mxu0
  %2101 = vmatprep.mubr.bf16.mxu0 0
  %2102 = vmatmul.mubr.bf16.gmra.mxu0 %v1831
  %v2103 = vpop.f32.mrf.mxu0
  %v2104 = vadd.f32 %v1976, %v2103
  %v2105 = vpop.f32.mrf.mxu0
  %v2106 = vpop.f32.mrf.mxu0
  %v2107 = vadd.f32 %v1979, %v2106
  %v2108 = vpop.f32.mrf.mxu0
  %2109 = vmatprep.mubr.bf16.mxu0 0
  %2110 = vmatmul.mubr.bf16.gmra.mxu0 %v1832
  %v2111 = vpop.f32.mrf.mxu0
  %v2112 = vadd.f32 %v1984, %v2111
  %v2113 = vpop.f32.mrf.mxu0
  %v2114 = vpop.f32.mrf.mxu0
  %v2115 = vadd.f32 %v1987, %v2114
  %v2116 = vpop.f32.mrf.mxu0
  %2117 = vmatprep.mubr.bf16.mxu0 0
  %2118 = vmatmul.mubr.bf16.gmra.mxu0 %v1833
  %v2119 = vpop.f32.mrf.mxu0
  %v2120 = vadd.f32 %v1992, %v2119
  %v2121 = vpop.f32.mrf.mxu0
  %v2122 = vpop.f32.mrf.mxu0
  %v2123 = vadd.f32 %v1995, %v2122
  %v2124 = vpop.f32.mrf.mxu0
  %2125 = vmatprep.mubr.bf16.mxu0 0
  %2126 = vmatmul.mubr.bf16.gmra.mxu0 %v1834
  %v2127 = vpop.f32.mrf.mxu0
  %v2128 = vadd.f32 %v2000, %v2127
  %v2129 = vpop.f32.mrf.mxu0
  %v2130 = vpop.f32.mrf.mxu0
  %v2131 = vadd.f32 %v2003, %v2130
  %v2132 = vpop.f32.mrf.mxu0
  %2133 = vmatprep.mubr.bf16.mxu0 0
  %2134 = vmatmul.mubr.bf16.gmra.mxu0 %v1835
  %v2135 = vpop.f32.mrf.mxu0
  %v2136 = vadd.f32 %v2008, %v2135
  %v2137 = vpop.f32.mrf.mxu0
  %v2138 = vpop.f32.mrf.mxu0
  %v2139 = vpop.f32.mrf.mxu0
  %2140 = vdwg.mxu0
  %v2141 = vld [vmem:[#allocation2 + $0x5a] sm:$0xff]
  %v2142 = vld [vmem:[#allocation2 + $0x62] sm:$0xff]
  %v2143 = vld [vmem:[#allocation2 + $0x6a] sm:$0xff]
  %v2144 = vld [vmem:[#allocation2 + $0x72] sm:$0xff]
  %v2145 = vld [vmem:[#allocation2 + $0x7a] sm:$0xff]
  %v2146 = vld [vmem:[#allocation2 + $0x82] sm:$0xff]
  %v2147 = vld [vmem:[#allocation2 + $0x8a] sm:$0xff]
  %v2148 = vld [vmem:[#allocation2 + $0x92] sm:$0xff]
  %v2149 = vld [vmem:[#allocation2 + $0x9a] sm:$0xff]
  %v2150 = vld [vmem:[#allocation2 + $0xa2] sm:$0xff]
  %v2151 = vld [vmem:[#allocation2 + $0xaa] sm:$0xff]
  %v2152 = vpack.c.bf16 %v2142, %v2141
  %v2153 = vpack.c.bf16 %v2144, %v2143
  %v2154 = vpack.c.bf16 %v2146, %v2145
  %v2155 = vpack.c.bf16 %v2148, %v2147
  %v2156 = vpack.c.bf16 %v2150, %v2149
  %v2157 = vpack.c.bf16 %v2151, %v2151
  %v2158 = vld [vmem:[%s564] sm:$0xf]
  %v2159 = vld [vmem:[%s564 + $0x4] sm:$0xf]
  %v2160 = vld [vmem:[%s564 + $0x8] sm:$0xf]
  %v2161 = vld [vmem:[%s564 + $0xc] sm:$0xf]
  %v2162 = vld [vmem:[%s564 + $0x10] sm:$0xf]
  %v2163 = vld [vmem:[%s564 + $0x14] sm:$0xf]
  %v2164 = vld [vmem:[%s564 + $0x18] sm:$0xf]
  %v2165 = vld [vmem:[%s564 + $0x1c] sm:$0xf]
  %v2166 = vld [vmem:[%s564 + $0x20] sm:$0xf]
  %v2167 = vld [vmem:[%s564 + $0x24] sm:$0xf]
  %v2168 = vld [vmem:[%s564 + $0x28] sm:$0xf]
  %v2169 = vld [vmem:[%s564 + $0x2c] sm:$0xf]
  %v2170 = vld [vmem:[%s564 + $0x30] sm:$0xf]
  %v2171 = vld [vmem:[%s564 + $0x34] sm:$0xf]
  %v2172 = vld [vmem:[%s564 + $0x38] sm:$0xf]
  %v2173 = vld [vmem:[%s564 + $0x3c] sm:$0xf]
  %v2190 = vunpack.c.l.b16 %v2158
  %v2191 = vunpack.c.l.b16 %v2159
  %v2192 = vunpack.c.l.b16 %v2160
  %v2193 = vunpack.c.l.b16 %v2161
  %v2194 = vunpack.c.l.b16 %v2162
  %v2195 = vunpack.c.l.b16 %v2163
  %v2196 = vunpack.c.l.b16 %v2164
  %v2197 = vunpack.c.l.b16 %v2165
  %v2198 = vunpack.c.l.b16 %v2166
  %v2199 = vunpack.c.l.b16 %v2167
  %v2200 = vunpack.c.l.b16 %v2168
  %v2201 = vunpack.c.l.b16 %v2169
  %v2202 = vunpack.c.l.b16 %v2170
  %v2203 = vunpack.c.l.b16 %v2171
  %v2204 = vunpack.c.l.b16 %v2172
  %v2205 = vunpack.c.l.b16 %v2173
  %v2206 = vpack.c.b16 %v2191, %v2190
  %v2207 = vpack.c.b16 %v2193, %v2192
  %v2208 = vpack.c.b16 %v2195, %v2194
  %v2209 = vpack.c.b16 %v2197, %v2196
  %v2210 = vpack.c.b16 %v2199, %v2198
  %v2211 = vpack.c.b16 %v2201, %v2200
  %v2212 = vpack.c.b16 %v2203, %v2202
  %v2213 = vpack.c.b16 %v2205, %v2204
  %2222 = vmatprep.subr.bf16.mxu0 0
  %2223 = vmatpush1.bf16.msra.mxu0 %v2213
  %2224 = vmatprep.subr.bf16.mxu0 0
  %2225 = vmatpush1.bf16.msra.mxu0 %v2212
  %2226 = vmatprep.subr.bf16.mxu0 0
  %2227 = vmatpush1.bf16.msra.mxu0 %v2211
  %2228 = vmatprep.subr.bf16.mxu0 0
  %2229 = vmatpush1.bf16.msra.mxu0 %v2210
  %2230 = vmatprep.subr.bf16.mxu0 0
  %2231 = vmatpush1.bf16.msra.mxu0 %v2209
  %2232 = vmatprep.subr.bf16.mxu0 0
  %2233 = vmatpush1.bf16.msra.mxu0 %v2208
  %2234 = vmatprep.subr.bf16.mxu0 0
  %2235 = vmatpush1.bf16.msra.mxu0 %v2207
  %2236 = vmatprep.subr.bf16.mxu0 0
  %2237 = vmatpush1.bf16.msra.mxu0 %v2206
  %2238 = vmatprep.subr.bf16.mxu0 0
  %2239 = vmatpush2.bf16.msra.mxu0 0
  %2240 = vmatprep.subr.bf16.mxu0 0
  %2241 = vmatpush2.bf16.msra.mxu0 0
  %2242 = vmatprep.subr.bf16.mxu0 0
  %2243 = vmatpush2.bf16.msra.mxu0 0
  %2244 = vmatprep.subr.bf16.mxu0 0
  %2245 = vmatpush2.bf16.msra.mxu0 0
  %2246 = vmatprep.subr.bf16.mxu0 0
  %2247 = vmatpush2.bf16.msra.mxu0 0
  %2248 = vmatprep.subr.bf16.mxu0 0
  %2249 = vmatpush2.bf16.msra.mxu0 0
  %2250 = vmatprep.subr.bf16.mxu0 0
  %2251 = vmatpush2.bf16.msra.mxu0 0
  %2252 = vmatprep.subr.bf16.mxu0 0
  %2253 = vmatpush2.bf16.msra.mxu0 0
  %2254 = vmatprep.mubr.bf16.mxu0 0
  %2255 = vmatmul.mubr.bf16.gmra.mxu0 %v2152
  %v2256 = vpop.f32.mrf.mxu0
  %v2257 = vadd.f32 0.0, %v2256
  %v2258 = vpop.f32.mrf.mxu0
  %v2259 = vpop.f32.mrf.mxu0
  %v2260 = vadd.f32 0.0, %v2259
  %v2261 = vpop.f32.mrf.mxu0
  %2262 = vmatprep.mubr.bf16.mxu0 0
  %2263 = vmatmul.mubr.bf16.gmra.mxu0 %v2153
  %v2264 = vpop.f32.mrf.mxu0
  %v2265 = vadd.f32 0.0, %v2264
  %v2266 = vpop.f32.mrf.mxu0
  %v2267 = vpop.f32.mrf.mxu0
  %v2268 = vadd.f32 0.0, %v2267
  %v2269 = vpop.f32.mrf.mxu0
  %2270 = vmatprep.mubr.bf16.mxu0 0
  %2271 = vmatmul.mubr.bf16.gmra.mxu0 %v2154
  %v2272 = vpop.f32.mrf.mxu0
  %v2273 = vadd.f32 0.0, %v2272
  %v2274 = vpop.f32.mrf.mxu0
  %v2275 = vpop.f32.mrf.mxu0
  %v2276 = vadd.f32 0.0, %v2275
  %v2277 = vpop.f32.mrf.mxu0
  %2278 = vmatprep.mubr.bf16.mxu0 0
  %2279 = vmatmul.mubr.bf16.gmra.mxu0 %v2155
  %v2280 = vpop.f32.mrf.mxu0
  %v2281 = vadd.f32 0.0, %v2280
  %v2282 = vpop.f32.mrf.mxu0
  %v2283 = vpop.f32.mrf.mxu0
  %v2284 = vadd.f32 0.0, %v2283
  %v2285 = vpop.f32.mrf.mxu0
  %2286 = vmatprep.mubr.bf16.mxu0 0
  %2287 = vmatmul.mubr.bf16.gmra.mxu0 %v2156
  %v2288 = vpop.f32.mrf.mxu0
  %v2289 = vadd.f32 0.0, %v2288
  %v2290 = vpop.f32.mrf.mxu0
  %v2291 = vpop.f32.mrf.mxu0
  %v2292 = vadd.f32 0.0, %v2291
  %v2293 = vpop.f32.mrf.mxu0
  %2294 = vmatprep.mubr.bf16.mxu0 0
  %2295 = vmatmul.mubr.bf16.gmra.mxu0 %v2157
  %v2296 = vpop.f32.mrf.mxu0
  %v2297 = vadd.f32 0.0, %v2296
  %v2298 = vpop.f32.mrf.mxu0
  %v2299 = vpop.f32.mrf.mxu0
  %v2300 = vpop.f32.mrf.mxu0
  %2301 = vdwg.mxu0
  %v2302 = vadd.f32 %v2096, %v2257
  %v2303 = vadd.f32 %v2099, %v2260
  %v2304 = vadd.f32 %v2104, %v2265
  %v2305 = vadd.f32 %v2107, %v2268
  %v2306 = vadd.f32 %v2112, %v2273
  %v2307 = vadd.f32 %v2115, %v2276
  %v2308 = vadd.f32 %v2120, %v2281
  %v2309 = vadd.f32 %v2123, %v2284
  %v2310 = vadd.f32 %v2128, %v2289
  %v2311 = vadd.f32 %v2131, %v2292
  %v2312 = vadd.f32 %v2136, %v2297
  %v2313 = vld [vmem:[#allocation2 + $0x6a] sm:$0xff]
  %v2314 = vld [vmem:[#allocation2 + $0x72] sm:$0xff]
  %v2315 = vld [vmem:[#allocation2 + $0x7a] sm:$0xff]
  %v2316 = vld [vmem:[#allocation2 + $0x82] sm:$0xff]
  %v2317 = vld [vmem:[#allocation2 + $0x8a] sm:$0xff]
  %v2318 = vld [vmem:[#allocation2 + $0x92] sm:$0xff]
  %v2319 = vld [vmem:[#allocation2 + $0x9a] sm:$0xff]
  %v2320 = vld [vmem:[#allocation2 + $0xa2] sm:$0xff]
  %v2321 = vld [vmem:[#allocation2 + $0xaa] sm:$0xff]
  %v2322 = vld [vmem:[#allocation2 + $0xb2] sm:$0xff]
  %v2323 = vld [vmem:[#allocation2 + $0xba] sm:$0xff]
  %v2324 = vpack.c.bf16 %v2314, %v2313
  %v2325 = vpack.c.bf16 %v2316, %v2315
  %v2326 = vpack.c.bf16 %v2318, %v2317
  %v2327 = vpack.c.bf16 %v2320, %v2319
  %v2328 = vpack.c.bf16 %v2322, %v2321
  %v2329 = vpack.c.bf16 %v2323, %v2323
  %v2330 = vld [vmem:[%s737] sm:$0xf]
  %v2331 = vld [vmem:[%s737 + $0x4] sm:$0xf]
  %v2332 = vld [vmem:[%s737 + $0x8] sm:$0xf]
  %v2333 = vld [vmem:[%s737 + $0xc] sm:$0xf]
  %v2334 = vld [vmem:[%s737 + $0x10] sm:$0xf]
  %v2335 = vld [vmem:[%s737 + $0x14] sm:$0xf]
  %v2336 = vld [vmem:[%s737 + $0x18] sm:$0xf]
  %v2337 = vld [vmem:[%s737 + $0x1c] sm:$0xf]
  %v2338 = vld [vmem:[%s737 + $0x20] sm:$0xf]
  %v2339 = vld [vmem:[%s737 + $0x24] sm:$0xf]
  %v2340 = vld [vmem:[%s737 + $0x28] sm:$0xf]
  %v2341 = vld [vmem:[%s737 + $0x2c] sm:$0xf]
  %v2342 = vld [vmem:[%s737 + $0x30] sm:$0xf]
  %v2343 = vld [vmem:[%s737 + $0x34] sm:$0xf]
  %v2344 = vld [vmem:[%s737 + $0x38] sm:$0xf]
  %v2345 = vld [vmem:[%s737 + $0x3c] sm:$0xf]
  %v2362 = vunpack.c.l.b16 %v2330
  %v2363 = vunpack.c.l.b16 %v2331
  %v2364 = vunpack.c.l.b16 %v2332
  %v2365 = vunpack.c.l.b16 %v2333
  %v2366 = vunpack.c.l.b16 %v2334
  %v2367 = vunpack.c.l.b16 %v2335
  %v2368 = vunpack.c.l.b16 %v2336
  %v2369 = vunpack.c.l.b16 %v2337
  %v2370 = vunpack.c.l.b16 %v2338
  %v2371 = vunpack.c.l.b16 %v2339
  %v2372 = vunpack.c.l.b16 %v2340
  %v2373 = vunpack.c.l.b16 %v2341
  %v2374 = vunpack.c.l.b16 %v2342
  %v2375 = vunpack.c.l.b16 %v2343
  %v2376 = vunpack.c.l.b16 %v2344
  %v2377 = vunpack.c.l.b16 %v2345
  %v2378 = vpack.c.b16 %v2363, %v2362
  %v2379 = vpack.c.b16 %v2365, %v2364
  %v2380 = vpack.c.b16 %v2367, %v2366
  %v2381 = vpack.c.b16 %v2369, %v2368
  %v2382 = vpack.c.b16 %v2371, %v2370
  %v2383 = vpack.c.b16 %v2373, %v2372
  %v2384 = vpack.c.b16 %v2375, %v2374
  %v2385 = vpack.c.b16 %v2377, %v2376
  %2394 = vmatprep.subr.bf16.mxu0 0
  %2395 = vmatpush1.bf16.msra.mxu0 %v2385
  %2396 = vmatprep.subr.bf16.mxu0 0
  %2397 = vmatpush1.bf16.msra.mxu0 %v2384
  %2398 = vmatprep.subr.bf16.mxu0 0
  %2399 = vmatpush1.bf16.msra.mxu0 %v2383
  %2400 = vmatprep.subr.bf16.mxu0 0
  %2401 = vmatpush1.bf16.msra.mxu0 %v2382
  %2402 = vmatprep.subr.bf16.mxu0 0
  %2403 = vmatpush1.bf16.msra.mxu0 %v2381
  %2404 = vmatprep.subr.bf16.mxu0 0
  %2405 = vmatpush1.bf16.msra.mxu0 %v2380
  %2406 = vmatprep.subr.bf16.mxu0 0
  %2407 = vmatpush1.bf16.msra.mxu0 %v2379
  %2408 = vmatprep.subr.bf16.mxu0 0
  %2409 = vmatpush1.bf16.msra.mxu0 %v2378
  %2410 = vmatprep.subr.bf16.mxu0 0
  %2411 = vmatpush2.bf16.msra.mxu0 0
  %2412 = vmatprep.subr.bf16.mxu0 0
  %2413 = vmatpush2.bf16.msra.mxu0 0
  %2414 = vmatprep.subr.bf16.mxu0 0
  %2415 = vmatpush2.bf16.msra.mxu0 0
  %2416 = vmatprep.subr.bf16.mxu0 0
  %2417 = vmatpush2.bf16.msra.mxu0 0
  %2418 = vmatprep.subr.bf16.mxu0 0
  %2419 = vmatpush2.bf16.msra.mxu0 0
  %2420 = vmatprep.subr.bf16.mxu0 0
  %2421 = vmatpush2.bf16.msra.mxu0 0
  %2422 = vmatprep.subr.bf16.mxu0 0
  %2423 = vmatpush2.bf16.msra.mxu0 0
  %2424 = vmatprep.subr.bf16.mxu0 0
  %2425 = vmatpush2.bf16.msra.mxu0 0
  %2426 = vmatprep.mubr.bf16.mxu0 0
  %2427 = vmatmul.mubr.bf16.gmra.mxu0 %v2324
  %v2428 = vpop.f32.mrf.mxu0
  %v2429 = vadd.f32 0.0, %v2428
  %v2430 = vpop.f32.mrf.mxu0
  %v2431 = vpop.f32.mrf.mxu0
  %v2432 = vadd.f32 0.0, %v2431
  %v2433 = vpop.f32.mrf.mxu0
  %2434 = vmatprep.mubr.bf16.mxu0 0
  %2435 = vmatmul.mubr.bf16.gmra.mxu0 %v2325
  %v2436 = vpop.f32.mrf.mxu0
  %v2437 = vadd.f32 0.0, %v2436
  %v2438 = vpop.f32.mrf.mxu0
  %v2439 = vpop.f32.mrf.mxu0
  %v2440 = vadd.f32 0.0, %v2439
  %v2441 = vpop.f32.mrf.mxu0
  %2442 = vmatprep.mubr.bf16.mxu0 0
  %2443 = vmatmul.mubr.bf16.gmra.mxu0 %v2326
  %v2444 = vpop.f32.mrf.mxu0
  %v2445 = vadd.f32 0.0, %v2444
  %v2446 = vpop.f32.mrf.mxu0
  %v2447 = vpop.f32.mrf.mxu0
  %v2448 = vadd.f32 0.0, %v2447
  %v2449 = vpop.f32.mrf.mxu0
  %2450 = vmatprep.mubr.bf16.mxu0 0
  %2451 = vmatmul.mubr.bf16.gmra.mxu0 %v2327
  %v2452 = vpop.f32.mrf.mxu0
  %v2453 = vadd.f32 0.0, %v2452
  %v2454 = vpop.f32.mrf.mxu0
  %v2455 = vpop.f32.mrf.mxu0
  %v2456 = vadd.f32 0.0, %v2455
  %v2457 = vpop.f32.mrf.mxu0
  %2458 = vmatprep.mubr.bf16.mxu0 0
  %2459 = vmatmul.mubr.bf16.gmra.mxu0 %v2328
  %v2460 = vpop.f32.mrf.mxu0
  %v2461 = vadd.f32 0.0, %v2460
  %v2462 = vpop.f32.mrf.mxu0
  %v2463 = vpop.f32.mrf.mxu0
  %v2464 = vadd.f32 0.0, %v2463
  %v2465 = vpop.f32.mrf.mxu0
  %2466 = vmatprep.mubr.bf16.mxu0 0
  %2467 = vmatmul.mubr.bf16.gmra.mxu0 %v2329
  %v2468 = vpop.f32.mrf.mxu0
  %v2469 = vadd.f32 0.0, %v2468
  %v2470 = vpop.f32.mrf.mxu0
  %v2471 = vpop.f32.mrf.mxu0
  %v2472 = vpop.f32.mrf.mxu0
  %2473 = vdwg.mxu0
  %v2474 = vadd.f32 %v2302, %v2429
  %v2475 = vadd.f32 %v2303, %v2432
  %v2476 = vadd.f32 %v2304, %v2437
  %v2477 = vadd.f32 %v2305, %v2440
  %v2478 = vadd.f32 %v2306, %v2445
  %v2479 = vadd.f32 %v2307, %v2448
  %v2480 = vadd.f32 %v2308, %v2453
  %v2481 = vadd.f32 %v2309, %v2456
  %v2482 = vadd.f32 %v2310, %v2461
  %v2483 = vadd.f32 %v2311, %v2464
  %v2484 = vadd.f32 %v2312, %v2469
  %v2485 = vld [vmem:[#allocation2 + $0x6b] sm:$0xff]
  %v2486 = vld [vmem:[#allocation2 + $0x73] sm:$0xff]
  %v2487 = vld [vmem:[#allocation2 + $0x7b] sm:$0xff]
  %v2488 = vld [vmem:[#allocation2 + $0x83] sm:$0xff]
  %v2489 = vld [vmem:[#allocation2 + $0x8b] sm:$0xff]
  %v2490 = vld [vmem:[#allocation2 + $0x93] sm:$0xff]
  %v2491 = vld [vmem:[#allocation2 + $0x9b] sm:$0xff]
  %v2492 = vld [vmem:[#allocation2 + $0xa3] sm:$0xff]
  %v2493 = vld [vmem:[#allocation2 + $0xab] sm:$0xff]
  %v2494 = vld [vmem:[#allocation2 + $0xb3] sm:$0xff]
  %v2495 = vld [vmem:[#allocation2 + $0xbb] sm:$0xff]
  %v2496 = vpack.c.bf16 %v2486, %v2485
  %v2497 = vpack.c.bf16 %v2488, %v2487
  %v2498 = vpack.c.bf16 %v2490, %v2489
  %v2499 = vpack.c.bf16 %v2492, %v2491
  %v2500 = vpack.c.bf16 %v2494, %v2493
  %v2501 = vpack.c.bf16 %v2495, %v2495
  %v2502 = vld [vmem:[%s910] sm:$0xf]
  %v2503 = vld [vmem:[%s910 + $0x4] sm:$0xf]
  %v2504 = vld [vmem:[%s910 + $0x8] sm:$0xf]
  %v2505 = vld [vmem:[%s910 + $0xc] sm:$0xf]
  %v2506 = vld [vmem:[%s910 + $0x10] sm:$0xf]
  %v2507 = vld [vmem:[%s910 + $0x14] sm:$0xf]
  %v2508 = vld [vmem:[%s910 + $0x18] sm:$0xf]
  %v2509 = vld [vmem:[%s910 + $0x1c] sm:$0xf]
  %v2510 = vld [vmem:[%s910 + $0x20] sm:$0xf]
  %v2511 = vld [vmem:[%s910 + $0x24] sm:$0xf]
  %v2512 = vld [vmem:[%s910 + $0x28] sm:$0xf]
  %v2513 = vld [vmem:[%s910 + $0x2c] sm:$0xf]
  %v2514 = vld [vmem:[%s910 + $0x30] sm:$0xf]
  %v2515 = vld [vmem:[%s910 + $0x34] sm:$0xf]
  %v2516 = vld [vmem:[%s910 + $0x38] sm:$0xf]
  %v2517 = vld [vmem:[%s910 + $0x3c] sm:$0xf]
  %v2534 = vunpack.c.l.b16 %v2502
  %v2535 = vunpack.c.l.b16 %v2503
  %v2536 = vunpack.c.l.b16 %v2504
  %v2537 = vunpack.c.l.b16 %v2505
  %v2538 = vunpack.c.l.b16 %v2506
  %v2539 = vunpack.c.l.b16 %v2507
  %v2540 = vunpack.c.l.b16 %v2508
  %v2541 = vunpack.c.l.b16 %v2509
  %v2542 = vunpack.c.l.b16 %v2510
  %v2543 = vunpack.c.l.b16 %v2511
  %v2544 = vunpack.c.l.b16 %v2512
  %v2545 = vunpack.c.l.b16 %v2513
  %v2546 = vunpack.c.l.b16 %v2514
  %v2547 = vunpack.c.l.b16 %v2515
  %v2548 = vunpack.c.l.b16 %v2516
  %v2549 = vunpack.c.l.b16 %v2517
  %v2550 = vpack.c.b16 %v2535, %v2534
  %v2551 = vpack.c.b16 %v2537, %v2536
  %v2552 = vpack.c.b16 %v2539, %v2538
  %v2553 = vpack.c.b16 %v2541, %v2540
  %v2554 = vpack.c.b16 %v2543, %v2542
  %v2555 = vpack.c.b16 %v2545, %v2544
  %v2556 = vpack.c.b16 %v2547, %v2546
  %v2557 = vpack.c.b16 %v2549, %v2548
  %2566 = vmatprep.subr.bf16.mxu0 0
  %2567 = vmatpush1.bf16.msra.mxu0 %v2557
  %2568 = vmatprep.subr.bf16.mxu0 0
  %2569 = vmatpush1.bf16.msra.mxu0 %v2556
  %2570 = vmatprep.subr.bf16.mxu0 0
  %2571 = vmatpush1.bf16.msra.mxu0 %v2555
  %2572 = vmatprep.subr.bf16.mxu0 0
  %2573 = vmatpush1.bf16.msra.mxu0 %v2554
  %2574 = vmatprep.subr.bf16.mxu0 0
  %2575 = vmatpush1.bf16.msra.mxu0 %v2553
  %2576 = vmatprep.subr.bf16.mxu0 0
  %2577 = vmatpush1.bf16.msra.mxu0 %v2552
  %2578 = vmatprep.subr.bf16.mxu0 0
  %2579 = vmatpush1.bf16.msra.mxu0 %v2551
  %2580 = vmatprep.subr.bf16.mxu0 0
  %2581 = vmatpush1.bf16.msra.mxu0 %v2550
  %2582 = vmatprep.subr.bf16.mxu0 0
  %2583 = vmatpush2.bf16.msra.mxu0 0
  %2584 = vmatprep.subr.bf16.mxu0 0
  %2585 = vmatpush2.bf16.msra.mxu0 0
  %2586 = vmatprep.subr.bf16.mxu0 0
  %2587 = vmatpush2.bf16.msra.mxu0 0
  %2588 = vmatprep.subr.bf16.mxu0 0
  %2589 = vmatpush2.bf16.msra.mxu0 0
  %2590 = vmatprep.subr.bf16.mxu0 0
  %2591 = vmatpush2.bf16.msra.mxu0 0
  %2592 = vmatprep.subr.bf16.mxu0 0
  %2593 = vmatpush2.bf16.msra.mxu0 0
  %2594 = vmatprep.subr.bf16.mxu0 0
  %2595 = vmatpush2.bf16.msra.mxu0 0
  %2596 = vmatprep.subr.bf16.mxu0 0
  %2597 = vmatpush2.bf16.msra.mxu0 0
  %2598 = vmatprep.mubr.bf16.mxu0 0
  %2599 = vmatmul.mubr.bf16.gmra.mxu0 %v2496
  %v2600 = vpop.f32.mrf.mxu0
  %v2601 = vadd.f32 0.0, %v2600
  %v2602 = vpop.f32.mrf.mxu0
  %v2603 = vpop.f32.mrf.mxu0
  %v2604 = vadd.f32 0.0, %v2603
  %v2605 = vpop.f32.mrf.mxu0
  %2606 = vmatprep.mubr.bf16.mxu0 0
  %2607 = vmatmul.mubr.bf16.gmra.mxu0 %v2497
  %v2608 = vpop.f32.mrf.mxu0
  %v2609 = vadd.f32 0.0, %v2608
  %v2610 = vpop.f32.mrf.mxu0
  %v2611 = vpop.f32.mrf.mxu0
  %v2612 = vadd.f32 0.0, %v2611
  %v2613 = vpop.f32.mrf.mxu0
  %2614 = vmatprep.mubr.bf16.mxu0 0
  %2615 = vmatmul.mubr.bf16.gmra.mxu0 %v2498
  %v2616 = vpop.f32.mrf.mxu0
  %v2617 = vadd.f32 0.0, %v2616
  %v2618 = vpop.f32.mrf.mxu0
  %v2619 = vpop.f32.mrf.mxu0
  %v2620 = vadd.f32 0.0, %v2619
  %v2621 = vpop.f32.mrf.mxu0
  %2622 = vmatprep.mubr.bf16.mxu0 0
  %2623 = vmatmul.mubr.bf16.gmra.mxu0 %v2499
  %v2624 = vpop.f32.mrf.mxu0
  %v2625 = vadd.f32 0.0, %v2624
  %v2626 = vpop.f32.mrf.mxu0
  %v2627 = vpop.f32.mrf.mxu0
  %v2628 = vadd.f32 0.0, %v2627
  %v2629 = vpop.f32.mrf.mxu0
  %2630 = vmatprep.mubr.bf16.mxu0 0
  %2631 = vmatmul.mubr.bf16.gmra.mxu0 %v2500
  %v2632 = vpop.f32.mrf.mxu0
  %v2633 = vadd.f32 0.0, %v2632
  %v2634 = vpop.f32.mrf.mxu0
  %v2635 = vpop.f32.mrf.mxu0
  %v2636 = vadd.f32 0.0, %v2635
  %v2637 = vpop.f32.mrf.mxu0
  %2638 = vmatprep.mubr.bf16.mxu0 0
  %2639 = vmatmul.mubr.bf16.gmra.mxu0 %v2501
  %v2640 = vpop.f32.mrf.mxu0
  %v2641 = vadd.f32 0.0, %v2640
  %v2642 = vpop.f32.mrf.mxu0
  %v2643 = vpop.f32.mrf.mxu0
  %v2644 = vpop.f32.mrf.mxu0
  %2645 = vdwg.mxu0
  %v2646 = vadd.f32 %v2474, %v2601
  %v2647 = vadd.f32 %v2475, %v2604
  %v2648 = vadd.f32 %v2476, %v2609
  %v2649 = vadd.f32 %v2477, %v2612
  %v2650 = vadd.f32 %v2478, %v2617
  %v2651 = vadd.f32 %v2479, %v2620
  %v2652 = vadd.f32 %v2480, %v2625
  %v2653 = vadd.f32 %v2481, %v2628
  %v2654 = vadd.f32 %v2482, %v2633
  %v2655 = vadd.f32 %v2483, %v2636
  %v2656 = vadd.f32 %v2484, %v2641
  %v2657 = vld [vmem:[#allocation2 + $0x6c] sm:$0xff]
  %v2658 = vld [vmem:[#allocation2 + $0x74] sm:$0xff]
  %v2659 = vld [vmem:[#allocation2 + $0x7c] sm:$0xff]
  %v2660 = vld [vmem:[#allocation2 + $0x84] sm:$0xff]
  %v2661 = vld [vmem:[#allocation2 + $0x8c] sm:$0xff]
  %v2662 = vld [vmem:[#allocation2 + $0x94] sm:$0xff]
  %v2663 = vld [vmem:[#allocation2 + $0x9c] sm:$0xff]
  %v2664 = vld [vmem:[#allocation2 + $0xa4] sm:$0xff]
  %v2665 = vld [vmem:[#allocation2 + $0xac] sm:$0xff]
  %v2666 = vld [vmem:[#allocation2 + $0xb4] sm:$0xff]
  %v2667 = vld [vmem:[#allocation2 + $0xbc] sm:$0xff]
  %v2668 = vpack.c.bf16 %v2658, %v2657
  %v2669 = vpack.c.bf16 %v2660, %v2659
  %v2670 = vpack.c.bf16 %v2662, %v2661
  %v2671 = vpack.c.bf16 %v2664, %v2663
  %v2672 = vpack.c.bf16 %v2666, %v2665
  %v2673 = vpack.c.bf16 %v2667, %v2667
  %v2674 = vld [vmem:[%s1083] sm:$0xf]
  %v2675 = vld [vmem:[%s1083 + $0x4] sm:$0xf]
  %v2676 = vld [vmem:[%s1083 + $0x8] sm:$0xf]
  %v2677 = vld [vmem:[%s1083 + $0xc] sm:$0xf]
  %v2678 = vld [vmem:[%s1083 + $0x10] sm:$0xf]
  %v2679 = vld [vmem:[%s1083 + $0x14] sm:$0xf]
  %v2680 = vld [vmem:[%s1083 + $0x18] sm:$0xf]
  %v2681 = vld [vmem:[%s1083 + $0x1c] sm:$0xf]
  %v2682 = vld [vmem:[%s1083 + $0x20] sm:$0xf]
  %v2683 = vld [vmem:[%s1083 + $0x24] sm:$0xf]
  %v2684 = vld [vmem:[%s1083 + $0x28] sm:$0xf]
  %v2685 = vld [vmem:[%s1083 + $0x2c] sm:$0xf]
  %v2686 = vld [vmem:[%s1083 + $0x30] sm:$0xf]
  %v2687 = vld [vmem:[%s1083 + $0x34] sm:$0xf]
  %v2688 = vld [vmem:[%s1083 + $0x38] sm:$0xf]
  %v2689 = vld [vmem:[%s1083 + $0x3c] sm:$0xf]
  %v2706 = vunpack.c.l.b16 %v2674
  %v2707 = vunpack.c.l.b16 %v2675
  %v2708 = vunpack.c.l.b16 %v2676
  %v2709 = vunpack.c.l.b16 %v2677
  %v2710 = vunpack.c.l.b16 %v2678
  %v2711 = vunpack.c.l.b16 %v2679
  %v2712 = vunpack.c.l.b16 %v2680
  %v2713 = vunpack.c.l.b16 %v2681
  %v2714 = vunpack.c.l.b16 %v2682
  %v2715 = vunpack.c.l.b16 %v2683
  %v2716 = vunpack.c.l.b16 %v2684
  %v2717 = vunpack.c.l.b16 %v2685
  %v2718 = vunpack.c.l.b16 %v2686
  %v2719 = vunpack.c.l.b16 %v2687
  %v2720 = vunpack.c.l.b16 %v2688
  %v2721 = vunpack.c.l.b16 %v2689
  %v2722 = vpack.c.b16 %v2707, %v2706
  %v2723 = vpack.c.b16 %v2709, %v2708
  %v2724 = vpack.c.b16 %v2711, %v2710
  %v2725 = vpack.c.b16 %v2713, %v2712
  %v2726 = vpack.c.b16 %v2715, %v2714
  %v2727 = vpack.c.b16 %v2717, %v2716
  %v2728 = vpack.c.b16 %v2719, %v2718
  %v2729 = vpack.c.b16 %v2721, %v2720
  %2738 = vmatprep.subr.bf16.mxu0 0
  %2739 = vmatpush1.bf16.msra.mxu0 %v2729
  %2740 = vmatprep.subr.bf16.mxu0 0
  %2741 = vmatpush1.bf16.msra.mxu0 %v2728
  %2742 = vmatprep.subr.bf16.mxu0 0
  %2743 = vmatpush1.bf16.msra.mxu0 %v2727
  %2744 = vmatprep.subr.bf16.mxu0 0
  %2745 = vmatpush1.bf16.msra.mxu0 %v2726
  %2746 = vmatprep.subr.bf16.mxu0 0
  %2747 = vmatpush1.bf16.msra.mxu0 %v2725
  %2748 = vmatprep.subr.bf16.mxu0 0
  %2749 = vmatpush1.bf16.msra.mxu0 %v2724
  %2750 = vmatprep.subr.bf16.mxu0 0
  %2751 = vmatpush1.bf16.msra.mxu0 %v2723
  %2752 = vmatprep.subr.bf16.mxu0 0
  %2753 = vmatpush1.bf16.msra.mxu0 %v2722
  %2754 = vmatprep.subr.bf16.mxu0 0
  %2755 = vmatpush2.bf16.msra.mxu0 0
  %2756 = vmatprep.subr.bf16.mxu0 0
  %2757 = vmatpush2.bf16.msra.mxu0 0
  %2758 = vmatprep.subr.bf16.mxu0 0
  %2759 = vmatpush2.bf16.msra.mxu0 0
  %2760 = vmatprep.subr.bf16.mxu0 0
  %2761 = vmatpush2.bf16.msra.mxu0 0
  %2762 = vmatprep.subr.bf16.mxu0 0
  %2763 = vmatpush2.bf16.msra.mxu0 0
  %2764 = vmatprep.subr.bf16.mxu0 0
  %2765 = vmatpush2.bf16.msra.mxu0 0
  %2766 = vmatprep.subr.bf16.mxu0 0
  %2767 = vmatpush2.bf16.msra.mxu0 0
  %2768 = vmatprep.subr.bf16.mxu0 0
  %2769 = vmatpush2.bf16.msra.mxu0 0
  %2770 = vmatprep.mubr.bf16.mxu0 0
  %2771 = vmatmul.mubr.bf16.gmra.mxu0 %v2668
  %v2772 = vpop.f32.mrf.mxu0
  %v2773 = vadd.f32 0.0, %v2772
  %v2774 = vpop.f32.mrf.mxu0
  %v2775 = vpop.f32.mrf.mxu0
  %v2776 = vadd.f32 0.0, %v2775
  %v2777 = vpop.f32.mrf.mxu0
  %2778 = vmatprep.mubr.bf16.mxu0 0
  %2779 = vmatmul.mubr.bf16.gmra.mxu0 %v2669
  %v2780 = vpop.f32.mrf.mxu0
  %v2781 = vadd.f32 0.0, %v2780
  %v2782 = vpop.f32.mrf.mxu0
  %v2783 = vpop.f32.mrf.mxu0
  %v2784 = vadd.f32 0.0, %v2783
  %v2785 = vpop.f32.mrf.mxu0
  %2786 = vmatprep.mubr.bf16.mxu0 0
  %2787 = vmatmul.mubr.bf16.gmra.mxu0 %v2670
  %v2788 = vpop.f32.mrf.mxu0
  %v2789 = vadd.f32 0.0, %v2788
  %v2790 = vpop.f32.mrf.mxu0
  %v2791 = vpop.f32.mrf.mxu0
  %v2792 = vadd.f32 0.0, %v2791
  %v2793 = vpop.f32.mrf.mxu0
  %2794 = vmatprep.mubr.bf16.mxu0 0
  %2795 = vmatmul.mubr.bf16.gmra.mxu0 %v2671
  %v2796 = vpop.f32.mrf.mxu0
  %v2797 = vadd.f32 0.0, %v2796
  %v2798 = vpop.f32.mrf.mxu0
  %v2799 = vpop.f32.mrf.mxu0
  %v2800 = vadd.f32 0.0, %v2799
  %v2801 = vpop.f32.mrf.mxu0
  %2802 = vmatprep.mubr.bf16.mxu0 0
  %2803 = vmatmul.mubr.bf16.gmra.mxu0 %v2672
  %v2804 = vpop.f32.mrf.mxu0
  %v2805 = vadd.f32 0.0, %v2804
  %v2806 = vpop.f32.mrf.mxu0
  %v2807 = vpop.f32.mrf.mxu0
  %v2808 = vadd.f32 0.0, %v2807
  %v2809 = vpop.f32.mrf.mxu0
  %2810 = vmatprep.mubr.bf16.mxu0 0
  %2811 = vmatmul.mubr.bf16.gmra.mxu0 %v2673
  %v2812 = vpop.f32.mrf.mxu0
  %v2813 = vadd.f32 0.0, %v2812
  %v2814 = vpop.f32.mrf.mxu0
  %v2815 = vpop.f32.mrf.mxu0
  %v2816 = vpop.f32.mrf.mxu0
  %2817 = vdwg.mxu0
  %v2818 = vadd.f32 %v2646, %v2773
  %v2819 = vadd.f32 %v2647, %v2776
  %v2820 = vadd.f32 %v2648, %v2781
  %v2821 = vadd.f32 %v2649, %v2784
  %v2822 = vadd.f32 %v2650, %v2789
  %v2823 = vadd.f32 %v2651, %v2792
  %v2824 = vadd.f32 %v2652, %v2797
  %v2825 = vadd.f32 %v2653, %v2800
  %v2826 = vadd.f32 %v2654, %v2805
  %v2827 = vadd.f32 %v2655, %v2808
  %v2828 = vadd.f32 %v2656, %v2813
  %v2829 = vld [vmem:[#allocation2 + $0x7c] sm:$0xff]
  %v2830 = vld [vmem:[#allocation2 + $0x84] sm:$0xff]
  %v2831 = vld [vmem:[#allocation2 + $0x8c] sm:$0xff]
  %v2832 = vld [vmem:[#allocation2 + $0x94] sm:$0xff]
  %v2833 = vld [vmem:[#allocation2 + $0x9c] sm:$0xff]
  %v2834 = vld [vmem:[#allocation2 + $0xa4] sm:$0xff]
  %v2835 = vld [vmem:[#allocation2 + $0xac] sm:$0xff]
  %v2836 = vld [vmem:[#allocation2 + $0xb4] sm:$0xff]
  %v2837 = vld [vmem:[#allocation2 + $0xbc] sm:$0xff]
  %v2838 = vld [vmem:[#allocation2 + $0xc4] sm:$0xff]
  %v2839 = vld [vmem:[#allocation2 + $0xcc] sm:$0xff]
  %v2840 = vpack.c.bf16 %v2830, %v2829
  %v2841 = vpack.c.bf16 %v2832, %v2831
  %v2842 = vpack.c.bf16 %v2834, %v2833
  %v2843 = vpack.c.bf16 %v2836, %v2835
  %v2844 = vpack.c.bf16 %v2838, %v2837
  %v2845 = vpack.c.bf16 %v2839, %v2839
  %v2846 = vld [vmem:[%s1256] sm:$0xf]
  %v2847 = vld [vmem:[%s1256 + $0x4] sm:$0xf]
  %v2848 = vld [vmem:[%s1256 + $0x8] sm:$0xf]
  %v2849 = vld [vmem:[%s1256 + $0xc] sm:$0xf]
  %v2850 = vld [vmem:[%s1256 + $0x10] sm:$0xf]
  %v2851 = vld [vmem:[%s1256 + $0x14] sm:$0xf]
  %v2852 = vld [vmem:[%s1256 + $0x18] sm:$0xf]
  %v2853 = vld [vmem:[%s1256 + $0x1c] sm:$0xf]
  %v2854 = vld [vmem:[%s1256 + $0x20] sm:$0xf]
  %v2855 = vld [vmem:[%s1256 + $0x24] sm:$0xf]
  %v2856 = vld [vmem:[%s1256 + $0x28] sm:$0xf]
  %v2857 = vld [vmem:[%s1256 + $0x2c] sm:$0xf]
  %v2858 = vld [vmem:[%s1256 + $0x30] sm:$0xf]
  %v2859 = vld [vmem:[%s1256 + $0x34] sm:$0xf]
  %v2860 = vld [vmem:[%s1256 + $0x38] sm:$0xf]
  %v2861 = vld [vmem:[%s1256 + $0x3c] sm:$0xf]
  %v2878 = vunpack.c.l.b16 %v2846
  %v2879 = vunpack.c.l.b16 %v2847
  %v2880 = vunpack.c.l.b16 %v2848
  %v2881 = vunpack.c.l.b16 %v2849
  %v2882 = vunpack.c.l.b16 %v2850
  %v2883 = vunpack.c.l.b16 %v2851
  %v2884 = vunpack.c.l.b16 %v2852
  %v2885 = vunpack.c.l.b16 %v2853
  %v2886 = vunpack.c.l.b16 %v2854
  %v2887 = vunpack.c.l.b16 %v2855
  %v2888 = vunpack.c.l.b16 %v2856
  %v2889 = vunpack.c.l.b16 %v2857
  %v2890 = vunpack.c.l.b16 %v2858
  %v2891 = vunpack.c.l.b16 %v2859
  %v2892 = vunpack.c.l.b16 %v2860
  %v2893 = vunpack.c.l.b16 %v2861
  %v2894 = vpack.c.b16 %v2879, %v2878
  %v2895 = vpack.c.b16 %v2881, %v2880
  %v2896 = vpack.c.b16 %v2883, %v2882
  %v2897 = vpack.c.b16 %v2885, %v2884
  %v2898 = vpack.c.b16 %v2887, %v2886
  %v2899 = vpack.c.b16 %v2889, %v2888
  %v2900 = vpack.c.b16 %v2891, %v2890
  %v2901 = vpack.c.b16 %v2893, %v2892
  %2910 = vmatprep.subr.bf16.mxu0 0
  %2911 = vmatpush1.bf16.msra.mxu0 %v2901
  %2912 = vmatprep.subr.bf16.mxu0 0
  %2913 = vmatpush1.bf16.msra.mxu0 %v2900
  %2914 = vmatprep.subr.bf16.mxu0 0
  %2915 = vmatpush1.bf16.msra.mxu0 %v2899
  %2916 = vmatprep.subr.bf16.mxu0 0
  %2917 = vmatpush1.bf16.msra.mxu0 %v2898
  %2918 = vmatprep.subr.bf16.mxu0 0
  %2919 = vmatpush1.bf16.msra.mxu0 %v2897
  %2920 = vmatprep.subr.bf16.mxu0 0
  %2921 = vmatpush1.bf16.msra.mxu0 %v2896
  %2922 = vmatprep.subr.bf16.mxu0 0
  %2923 = vmatpush1.bf16.msra.mxu0 %v2895
  %2924 = vmatprep.subr.bf16.mxu0 0
  %2925 = vmatpush1.bf16.msra.mxu0 %v2894
  %2926 = vmatprep.subr.bf16.mxu0 0
  %2927 = vmatpush2.bf16.msra.mxu0 0
  %2928 = vmatprep.subr.bf16.mxu0 0
  %2929 = vmatpush2.bf16.msra.mxu0 0
  %2930 = vmatprep.subr.bf16.mxu0 0
  %2931 = vmatpush2.bf16.msra.mxu0 0
  %2932 = vmatprep.subr.bf16.mxu0 0
  %2933 = vmatpush2.bf16.msra.mxu0 0
  %2934 = vmatprep.subr.bf16.mxu0 0
  %2935 = vmatpush2.bf16.msra.mxu0 0
  %2936 = vmatprep.subr.bf16.mxu0 0
  %2937 = vmatpush2.bf16.msra.mxu0 0
  %2938 = vmatprep.subr.bf16.mxu0 0
  %2939 = vmatpush2.bf16.msra.mxu0 0
  %2940 = vmatprep.subr.bf16.mxu0 0
  %2941 = vmatpush2.bf16.msra.mxu0 0
  %2942 = vmatprep.mubr.bf16.mxu0 0
  %2943 = vmatmul.mubr.bf16.gmra.mxu0 %v2840
  %v2944 = vpop.f32.mrf.mxu0
  %v2945 = vadd.f32 0.0, %v2944
  %v2946 = vpop.f32.mrf.mxu0
  %v2947 = vpop.f32.mrf.mxu0
  %v2948 = vadd.f32 0.0, %v2947
  %v2949 = vpop.f32.mrf.mxu0
  %2950 = vmatprep.mubr.bf16.mxu0 0
  %2951 = vmatmul.mubr.bf16.gmra.mxu0 %v2841
  %v2952 = vpop.f32.mrf.mxu0
  %v2953 = vadd.f32 0.0, %v2952
  %v2954 = vpop.f32.mrf.mxu0
  %v2955 = vpop.f32.mrf.mxu0
  %v2956 = vadd.f32 0.0, %v2955
  %v2957 = vpop.f32.mrf.mxu0
  %2958 = vmatprep.mubr.bf16.mxu0 0
  %2959 = vmatmul.mubr.bf16.gmra.mxu0 %v2842
  %v2960 = vpop.f32.mrf.mxu0
  %v2961 = vadd.f32 0.0, %v2960
  %v2962 = vpop.f32.mrf.mxu0
  %v2963 = vpop.f32.mrf.mxu0
  %v2964 = vadd.f32 0.0, %v2963
  %v2965 = vpop.f32.mrf.mxu0
  %2966 = vmatprep.mubr.bf16.mxu0 0
  %2967 = vmatmul.mubr.bf16.gmra.mxu0 %v2843
  %v2968 = vpop.f32.mrf.mxu0
  %v2969 = vadd.f32 0.0, %v2968
  %v2970 = vpop.f32.mrf.mxu0
  %v2971 = vpop.f32.mrf.mxu0
  %v2972 = vadd.f32 0.0, %v2971
  %v2973 = vpop.f32.mrf.mxu0
  %2974 = vmatprep.mubr.bf16.mxu0 0
  %2975 = vmatmul.mubr.bf16.gmra.mxu0 %v2844
  %v2976 = vpop.f32.mrf.mxu0
  %v2977 = vadd.f32 0.0, %v2976
  %v2978 = vpop.f32.mrf.mxu0
  %v2979 = vpop.f32.mrf.mxu0
  %v2980 = vadd.f32 0.0, %v2979
  %v2981 = vpop.f32.mrf.mxu0
  %2982 = vmatprep.mubr.bf16.mxu0 0
  %2983 = vmatmul.mubr.bf16.gmra.mxu0 %v2845
  %v2984 = vpop.f32.mrf.mxu0
  %v2985 = vadd.f32 0.0, %v2984
  %v2986 = vpop.f32.mrf.mxu0
  %v2987 = vpop.f32.mrf.mxu0
  %v2988 = vpop.f32.mrf.mxu0
  %2989 = vdwg.mxu0
  %v2990 = vadd.f32 %v2818, %v2945
  %v2991 = vadd.f32 %v2819, %v2948
  %v2992 = vadd.f32 %v2820, %v2953
  %v2993 = vadd.f32 %v2821, %v2956
  %v2994 = vadd.f32 %v2822, %v2961
  %v2995 = vadd.f32 %v2823, %v2964
  %v2996 = vadd.f32 %v2824, %v2969
  %v2997 = vadd.f32 %v2825, %v2972
  %v2998 = vadd.f32 %v2826, %v2977
  %v2999 = vadd.f32 %v2827, %v2980
  %v3000 = vadd.f32 %v2828, %v2985
  %v3001 = vld [vmem:[#allocation2 + $0x7d] sm:$0xff]
  %v3002 = vld [vmem:[#allocation2 + $0x85] sm:$0xff]
  %v3003 = vld [vmem:[#allocation2 + $0x8d] sm:$0xff]
  %v3004 = vld [vmem:[#allocation2 + $0x95] sm:$0xff]
  %v3005 = vld [vmem:[#allocation2 + $0x9d] sm:$0xff]
  %v3006 = vld [vmem:[#allocation2 + $0xa5] sm:$0xff]
  %v3007 = vld [vmem:[#allocation2 + $0xad] sm:$0xff]
  %v3008 = vld [vmem:[#allocation2 + $0xb5] sm:$0xff]
  %v3009 = vld [vmem:[#allocation2 + $0xbd] sm:$0xff]
  %v3010 = vld [vmem:[#allocation2 + $0xc5] sm:$0xff]
  %v3011 = vld [vmem:[#allocation2 + $0xcd] sm:$0xff]
  %v3012 = vpack.c.bf16 %v3002, %v3001
  %v3013 = vpack.c.bf16 %v3004, %v3003
  %v3014 = vpack.c.bf16 %v3006, %v3005
  %v3015 = vpack.c.bf16 %v3008, %v3007
  %v3016 = vpack.c.bf16 %v3010, %v3009
  %v3017 = vpack.c.bf16 %v3011, %v3011
  %v3018 = vld [vmem:[%s1429] sm:$0xf]
  %v3019 = vld [vmem:[%s1429 + $0x4] sm:$0xf]
  %v3020 = vld [vmem:[%s1429 + $0x8] sm:$0xf]
  %v3021 = vld [vmem:[%s1429 + $0xc] sm:$0xf]
  %v3022 = vld [vmem:[%s1429 + $0x10] sm:$0xf]
  %v3023 = vld [vmem:[%s1429 + $0x14] sm:$0xf]
  %v3024 = vld [vmem:[%s1429 + $0x18] sm:$0xf]
  %v3025 = vld [vmem:[%s1429 + $0x1c] sm:$0xf]
  %v3026 = vld [vmem:[%s1429 + $0x20] sm:$0xf]
  %v3027 = vld [vmem:[%s1429 + $0x24] sm:$0xf]
  %v3028 = vld [vmem:[%s1429 + $0x28] sm:$0xf]
  %v3029 = vld [vmem:[%s1429 + $0x2c] sm:$0xf]
  %v3030 = vld [vmem:[%s1429 + $0x30] sm:$0xf]
  %v3031 = vld [vmem:[%s1429 + $0x34] sm:$0xf]
  %v3032 = vld [vmem:[%s1429 + $0x38] sm:$0xf]
  %v3033 = vld [vmem:[%s1429 + $0x3c] sm:$0xf]
  %v3050 = vunpack.c.l.b16 %v3018
  %v3051 = vunpack.c.l.b16 %v3019
  %v3052 = vunpack.c.l.b16 %v3020
  %v3053 = vunpack.c.l.b16 %v3021
  %v3054 = vunpack.c.l.b16 %v3022
  %v3055 = vunpack.c.l.b16 %v3023
  %v3056 = vunpack.c.l.b16 %v3024
  %v3057 = vunpack.c.l.b16 %v3025
  %v3058 = vunpack.c.l.b16 %v3026
  %v3059 = vunpack.c.l.b16 %v3027
  %v3060 = vunpack.c.l.b16 %v3028
  %v3061 = vunpack.c.l.b16 %v3029
  %v3062 = vunpack.c.l.b16 %v3030
  %v3063 = vunpack.c.l.b16 %v3031
  %v3064 = vunpack.c.l.b16 %v3032
  %v3065 = vunpack.c.l.b16 %v3033
  %v3066 = vpack.c.b16 %v3051, %v3050
  %v3067 = vpack.c.b16 %v3053, %v3052
  %v3068 = vpack.c.b16 %v3055, %v3054
  %v3069 = vpack.c.b16 %v3057, %v3056
  %v3070 = vpack.c.b16 %v3059, %v3058
  %v3071 = vpack.c.b16 %v3061, %v3060
  %v3072 = vpack.c.b16 %v3063, %v3062
  %v3073 = vpack.c.b16 %v3065, %v3064
  %3082 = vmatprep.subr.bf16.mxu0 0
  %3083 = vmatpush1.bf16.msra.mxu0 %v3073
  %3084 = vmatprep.subr.bf16.mxu0 0
  %3085 = vmatpush1.bf16.msra.mxu0 %v3072
  %3086 = vmatprep.subr.bf16.mxu0 0
  %3087 = vmatpush1.bf16.msra.mxu0 %v3071
  %3088 = vmatprep.subr.bf16.mxu0 0
  %3089 = vmatpush1.bf16.msra.mxu0 %v3070
  %3090 = vmatprep.subr.bf16.mxu0 0
  %3091 = vmatpush1.bf16.msra.mxu0 %v3069
  %3092 = vmatprep.subr.bf16.mxu0 0
  %3093 = vmatpush1.bf16.msra.mxu0 %v3068
  %3094 = vmatprep.subr.bf16.mxu0 0
  %3095 = vmatpush1.bf16.msra.mxu0 %v3067
  %3096 = vmatprep.subr.bf16.mxu0 0
  %3097 = vmatpush1.bf16.msra.mxu0 %v3066
  %3098 = vmatprep.subr.bf16.mxu0 0
  %3099 = vmatpush2.bf16.msra.mxu0 0
  %3100 = vmatprep.subr.bf16.mxu0 0
  %3101 = vmatpush2.bf16.msra.mxu0 0
  %3102 = vmatprep.subr.bf16.mxu0 0
  %3103 = vmatpush2.bf16.msra.mxu0 0
  %3104 = vmatprep.subr.bf16.mxu0 0
  %3105 = vmatpush2.bf16.msra.mxu0 0
  %3106 = vmatprep.subr.bf16.mxu0 0
  %3107 = vmatpush2.bf16.msra.mxu0 0
  %3108 = vmatprep.subr.bf16.mxu0 0
  %3109 = vmatpush2.bf16.msra.mxu0 0
  %3110 = vmatprep.subr.bf16.mxu0 0
  %3111 = vmatpush2.bf16.msra.mxu0 0
  %3112 = vmatprep.subr.bf16.mxu0 0
  %3113 = vmatpush2.bf16.msra.mxu0 0
  %3114 = vmatprep.mubr.bf16.mxu0 0
  %3115 = vmatmul.mubr.bf16.gmra.mxu0 %v3012
  %v3116 = vpop.f32.mrf.mxu0
  %v3117 = vadd.f32 0.0, %v3116
  %v3118 = vpop.f32.mrf.mxu0
  %v3119 = vpop.f32.mrf.mxu0
  %v3120 = vadd.f32 0.0, %v3119
  %v3121 = vpop.f32.mrf.mxu0
  %3122 = vmatprep.mubr.bf16.mxu0 0
  %3123 = vmatmul.mubr.bf16.gmra.mxu0 %v3013
  %v3124 = vpop.f32.mrf.mxu0
  %v3125 = vadd.f32 0.0, %v3124
  %v3126 = vpop.f32.mrf.mxu0
  %v3127 = vpop.f32.mrf.mxu0
  %v3128 = vadd.f32 0.0, %v3127
  %v3129 = vpop.f32.mrf.mxu0
  %3130 = vmatprep.mubr.bf16.mxu0 0
  %3131 = vmatmul.mubr.bf16.gmra.mxu0 %v3014
  %v3132 = vpop.f32.mrf.mxu0
  %v3133 = vadd.f32 0.0, %v3132
  %v3134 = vpop.f32.mrf.mxu0
  %v3135 = vpop.f32.mrf.mxu0
  %v3136 = vadd.f32 0.0, %v3135
  %v3137 = vpop.f32.mrf.mxu0
  %3138 = vmatprep.mubr.bf16.mxu0 0
  %3139 = vmatmul.mubr.bf16.gmra.mxu0 %v3015
  %v3140 = vpop.f32.mrf.mxu0
  %v3141 = vadd.f32 0.0, %v3140
  %v3142 = vpop.f32.mrf.mxu0
  %v3143 = vpop.f32.mrf.mxu0
  %v3144 = vadd.f32 0.0, %v3143
  %v3145 = vpop.f32.mrf.mxu0
  %3146 = vmatprep.mubr.bf16.mxu0 0
  %3147 = vmatmul.mubr.bf16.gmra.mxu0 %v3016
  %v3148 = vpop.f32.mrf.mxu0
  %v3149 = vadd.f32 0.0, %v3148
  %v3150 = vpop.f32.mrf.mxu0
  %v3151 = vpop.f32.mrf.mxu0
  %v3152 = vadd.f32 0.0, %v3151
  %v3153 = vpop.f32.mrf.mxu0
  %3154 = vmatprep.mubr.bf16.mxu0 0
  %3155 = vmatmul.mubr.bf16.gmra.mxu0 %v3017
  %v3156 = vpop.f32.mrf.mxu0
  %v3157 = vadd.f32 0.0, %v3156
  %v3158 = vpop.f32.mrf.mxu0
  %v3159 = vpop.f32.mrf.mxu0
  %v3160 = vpop.f32.mrf.mxu0
  %3161 = vdwg.mxu0
  %v3162 = vadd.f32 %v2990, %v3117
  %v3163 = vadd.f32 %v2991, %v3120
  %v3164 = vadd.f32 %v2992, %v3125
  %v3165 = vadd.f32 %v2993, %v3128
  %v3166 = vadd.f32 %v2994, %v3133
  %v3167 = vadd.f32 %v2995, %v3136
  %v3168 = vadd.f32 %v2996, %v3141
  %v3169 = vadd.f32 %v2997, %v3144
  %v3170 = vadd.f32 %v2998, %v3149
  %v3171 = vadd.f32 %v2999, %v3152
  %v3172 = vadd.f32 %v3000, %v3157
  %v3173 = vld [vmem:[#allocation2 + $0x7e] sm:$0xff]
  %v3174 = vld [vmem:[#allocation2 + $0x86] sm:$0xff]
  %v3175 = vld [vmem:[#allocation2 + $0x8e] sm:$0xff]
  %v3176 = vld [vmem:[#allocation2 + $0x96] sm:$0xff]
  %v3177 = vld [vmem:[#allocation2 + $0x9e] sm:$0xff]
  %v3178 = vld [vmem:[#allocation2 + $0xa6] sm:$0xff]
  %v3179 = vld [vmem:[#allocation2 + $0xae] sm:$0xff]
  %v3180 = vld [vmem:[#allocation2 + $0xb6] sm:$0xff]
  %v3181 = vld [vmem:[#allocation2 + $0xbe] sm:$0xff]
  %v3182 = vld [vmem:[#allocation2 + $0xc6] sm:$0xff]
  %v3183 = vld [vmem:[#allocation2 + $0xce] sm:$0xff]
  %v3184 = vpack.c.bf16 %v3174, %v3173
  %v3185 = vpack.c.bf16 %v3176, %v3175
  %v3186 = vpack.c.bf16 %v3178, %v3177
  %v3187 = vpack.c.bf16 %v3180, %v3179
  %v3188 = vpack.c.bf16 %v3182, %v3181
  %v3189 = vpack.c.bf16 %v3183, %v3183
  %v3190 = vld [vmem:[%s1602] sm:$0xf]
  %v3191 = vld [vmem:[%s1602 + $0x4] sm:$0xf]
  %v3192 = vld [vmem:[%s1602 + $0x8] sm:$0xf]
  %v3193 = vld [vmem:[%s1602 + $0xc] sm:$0xf]
  %v3194 = vld [vmem:[%s1602 + $0x10] sm:$0xf]
  %v3195 = vld [vmem:[%s1602 + $0x14] sm:$0xf]
  %v3196 = vld [vmem:[%s1602 + $0x18] sm:$0xf]
  %v3197 = vld [vmem:[%s1602 + $0x1c] sm:$0xf]
  %v3198 = vld [vmem:[%s1602 + $0x20] sm:$0xf]
  %v3199 = vld [vmem:[%s1602 + $0x24] sm:$0xf]
  %v3200 = vld [vmem:[%s1602 + $0x28] sm:$0xf]
  %v3201 = vld [vmem:[%s1602 + $0x2c] sm:$0xf]
  %v3202 = vld [vmem:[%s1602 + $0x30] sm:$0xf]
  %v3203 = vld [vmem:[%s1602 + $0x34] sm:$0xf]
  %v3204 = vld [vmem:[%s1602 + $0x38] sm:$0xf]
  %v3205 = vld [vmem:[%s1602 + $0x3c] sm:$0xf]
  %v3222 = vunpack.c.l.b16 %v3190
  %v3223 = vunpack.c.l.b16 %v3191
  %v3224 = vunpack.c.l.b16 %v3192
  %v3225 = vunpack.c.l.b16 %v3193
  %v3226 = vunpack.c.l.b16 %v3194
  %v3227 = vunpack.c.l.b16 %v3195
  %v3228 = vunpack.c.l.b16 %v3196
  %v3229 = vunpack.c.l.b16 %v3197
  %v3230 = vunpack.c.l.b16 %v3198
  %v3231 = vunpack.c.l.b16 %v3199
  %v3232 = vunpack.c.l.b16 %v3200
  %v3233 = vunpack.c.l.b16 %v3201
  %v3234 = vunpack.c.l.b16 %v3202
  %v3235 = vunpack.c.l.b16 %v3203
  %v3236 = vunpack.c.l.b16 %v3204
  %v3237 = vunpack.c.l.b16 %v3205
  %v3238 = vpack.c.b16 %v3223, %v3222
  %v3239 = vpack.c.b16 %v3225, %v3224
  %v3240 = vpack.c.b16 %v3227, %v3226
  %v3241 = vpack.c.b16 %v3229, %v3228
  %v3242 = vpack.c.b16 %v3231, %v3230
  %v3243 = vpack.c.b16 %v3233, %v3232
  %v3244 = vpack.c.b16 %v3235, %v3234
  %v3245 = vpack.c.b16 %v3237, %v3236
  %3254 = vmatprep.subr.bf16.mxu0 0
  %3255 = vmatpush1.bf16.msra.mxu0 %v3245
  %3256 = vmatprep.subr.bf16.mxu0 0
  %3257 = vmatpush1.bf16.msra.mxu0 %v3244
  %3258 = vmatprep.subr.bf16.mxu0 0
  %3259 = vmatpush1.bf16.msra.mxu0 %v3243
  %3260 = vmatprep.subr.bf16.mxu0 0
  %3261 = vmatpush1.bf16.msra.mxu0 %v3242
  %3262 = vmatprep.subr.bf16.mxu0 0
  %3263 = vmatpush1.bf16.msra.mxu0 %v3241
  %3264 = vmatprep.subr.bf16.mxu0 0
  %3265 = vmatpush1.bf16.msra.mxu0 %v3240
  %3266 = vmatprep.subr.bf16.mxu0 0
  %3267 = vmatpush1.bf16.msra.mxu0 %v3239
  %3268 = vmatprep.subr.bf16.mxu0 0
  %3269 = vmatpush1.bf16.msra.mxu0 %v3238
  %3270 = vmatprep.subr.bf16.mxu0 0
  %3271 = vmatpush2.bf16.msra.mxu0 0
  %3272 = vmatprep.subr.bf16.mxu0 0
  %3273 = vmatpush2.bf16.msra.mxu0 0
  %3274 = vmatprep.subr.bf16.mxu0 0
  %3275 = vmatpush2.bf16.msra.mxu0 0
  %3276 = vmatprep.subr.bf16.mxu0 0
  %3277 = vmatpush2.bf16.msra.mxu0 0
  %3278 = vmatprep.subr.bf16.mxu0 0
  %3279 = vmatpush2.bf16.msra.mxu0 0
  %3280 = vmatprep.subr.bf16.mxu0 0
  %3281 = vmatpush2.bf16.msra.mxu0 0
  %3282 = vmatprep.subr.bf16.mxu0 0
  %3283 = vmatpush2.bf16.msra.mxu0 0
  %3284 = vmatprep.subr.bf16.mxu0 0
  %3285 = vmatpush2.bf16.msra.mxu0 0
  %3286 = vmatprep.mubr.bf16.mxu0 0
  %3287 = vmatmul.mubr.bf16.gmra.mxu0 %v3184
  %v3288 = vpop.f32.mrf.mxu0
  %v3289 = vadd.f32 0.0, %v3288
  %v3290 = vpop.f32.mrf.mxu0
  %v3291 = vpop.f32.mrf.mxu0
  %v3292 = vadd.f32 0.0, %v3291
  %v3293 = vpop.f32.mrf.mxu0
  %3294 = vmatprep.mubr.bf16.mxu0 0
  %3295 = vmatmul.mubr.bf16.gmra.mxu0 %v3185
  %v3296 = vpop.f32.mrf.mxu0
  %v3297 = vadd.f32 0.0, %v3296
  %v3298 = vpop.f32.mrf.mxu0
  %v3299 = vpop.f32.mrf.mxu0
  %v3300 = vadd.f32 0.0, %v3299
  %v3301 = vpop.f32.mrf.mxu0
  %3302 = vmatprep.mubr.bf16.mxu0 0
  %3303 = vmatmul.mubr.bf16.gmra.mxu0 %v3186
  %v3304 = vpop.f32.mrf.mxu0
  %v3305 = vadd.f32 0.0, %v3304
  %v3306 = vpop.f32.mrf.mxu0
  %v3307 = vpop.f32.mrf.mxu0
  %v3308 = vadd.f32 0.0, %v3307
  %v3309 = vpop.f32.mrf.mxu0
  %3310 = vmatprep.mubr.bf16.mxu0 0
  %3311 = vmatmul.mubr.bf16.gmra.mxu0 %v3187
  %v3312 = vpop.f32.mrf.mxu0
  %v3313 = vadd.f32 0.0, %v3312
  %v3314 = vpop.f32.mrf.mxu0
  %v3315 = vpop.f32.mrf.mxu0
  %v3316 = vadd.f32 0.0, %v3315
  %v3317 = vpop.f32.mrf.mxu0
  %3318 = vmatprep.mubr.bf16.mxu0 0
  %3319 = vmatmul.mubr.bf16.gmra.mxu0 %v3188
  %v3320 = vpop.f32.mrf.mxu0
  %v3321 = vadd.f32 0.0, %v3320
  %v3322 = vpop.f32.mrf.mxu0
  %v3323 = vpop.f32.mrf.mxu0
  %v3324 = vadd.f32 0.0, %v3323
  %v3325 = vpop.f32.mrf.mxu0
  %3326 = vmatprep.mubr.bf16.mxu0 0
  %3327 = vmatmul.mubr.bf16.gmra.mxu0 %v3189
  %v3328 = vpop.f32.mrf.mxu0
  %v3329 = vadd.f32 0.0, %v3328
  %v3330 = vpop.f32.mrf.mxu0
  %v3331 = vpop.f32.mrf.mxu0
  %v3332 = vpop.f32.mrf.mxu0
  %3333 = vdwg.mxu0
  %v3334 = vadd.f32 %v3162, %v3289
  %v3335 = vadd.f32 %v3163, %v3292
  %v3336 = vadd.f32 %v3164, %v3297
  %v3337 = vadd.f32 %v3165, %v3300
  %v3338 = vadd.f32 %v3166, %v3305
  %v3339 = vadd.f32 %v3167, %v3308
  %v3340 = vadd.f32 %v3168, %v3313
  %v3341 = vadd.f32 %v3169, %v3316
  %v3342 = vadd.f32 %v3170, %v3321
  %v3343 = vadd.f32 %v3171, %v3324
  %v3344 = vadd.f32 %v3172, %v3329
  %v3345 = vadd.f32 %v3334, %v2485
  %v3346 = vadd.f32 %v3335, %v2486
  %v3347 = vadd.f32 %v3336, %v2487
  %v3348 = vadd.f32 %v3337, %v2488
  %v3349 = vadd.f32 %v3338, %v2489
  %v3350 = vadd.f32 %v3339, %v2490
  %v3351 = vadd.f32 %v3340, %v2491
  %v3352 = vadd.f32 %v3341, %v2492
  %v3353 = vadd.f32 %v3342, %v2493
  %v3354 = vadd.f32 %v3343, %v2494
  %v3355 = vadd.f32 %v3344, %v2495
  %v3356 = vadd.f32 %v3345, %v1773
  %v3357 = vadd.f32 %v3346, %v1773
  %v3358 = vadd.f32 %v3347, %v1773
  %v3359 = vadd.f32 %v3348, %v1773
  %v3360 = vadd.f32 %v3349, %v1773
  %v3361 = vadd.f32 %v3350, %v1773
  %v3362 = vadd.f32 %v3351, %v1773
  %v3363 = vadd.f32 %v3352, %v1773
  %v3364 = vadd.f32 %v3353, %v1773
  %v3365 = vadd.f32 %v3354, %v1773
  %v3366 = vadd.f32 %v3355, %v1773
  %v3367 = vmul.f32 %v3356, 0.1
  %v3368 = vmul.f32 %v3357, 0.1
  %v3369 = vmul.f32 %v3358, 0.1
  %v3370 = vmul.f32 %v3359, 0.1
  %v3371 = vmul.f32 %v3360, 0.1
  %v3372 = vmul.f32 %v3361, 0.1
  %v3373 = vmul.f32 %v3362, 0.1
  %v3374 = vmul.f32 %v3363, 0.1
  %v3375 = vmul.f32 %v3364, 0.1
  %v3376 = vmul.f32 %v3365, 0.1
  %v3377 = vmul.f32 %v3366, 0.1
  %v3378 = vmax.f32 %v3356, %v3367
  %v3379 = vmax.f32 %v3357, %v3368
  %v3380 = vmax.f32 %v3358, %v3369
  %v3381 = vmax.f32 %v3359, %v3370
  %v3382 = vmax.f32 %v3360, %v3371
  %v3383 = vmax.f32 %v3361, %v3372
  %v3384 = vmax.f32 %v3362, %v3373
  %v3385 = vmax.f32 %v3363, %v3374
  %v3386 = vmax.f32 %v3364, %v3375
  %v3387 = vmax.f32 %v3365, %v3376
  %v3388 = vmax.f32 %v3366, %v3377
  %3389 = vst [vmem:[%s3 + $0x58] sm:$0xff] %v3378
  %3390 = vst [vmem:[%s3 + $0x60] sm:$0xff] %v3379
  %3391 = vst [vmem:[%s3 + $0x68] sm:$0xff] %v3380
  %3392 = vst [vmem:[%s3 + $0x70] sm:$0xff] %v3381
  %3393 = vst [vmem:[%s3 + $0x78] sm:$0xff] %v3382
  %3394 = vst [vmem:[%s3 + $0x80] sm:$0xff] %v3383
  %3395 = vst [vmem:[%s3 + $0x88] sm:$0xff] %v3384
  %3396 = vst [vmem:[%s3 + $0x90] sm:$0xff] %v3385
  %3397 = vst [vmem:[%s3 + $0x98] sm:$0xff] %v3386
  %3398 = vst [vmem:[%s3 + $0xa0] sm:$0xff] %v3387
  %3399 = vst [vmem:[%s3 + $0xa8] sm:$0xff] %v3388
  %v3400 = vld [vmem:[#allocation2 + $0xb0] sm:$0xff]
  %v3401 = vld [vmem:[#allocation2 + $0xb8] sm:$0xff]
  %v3402 = vld [vmem:[#allocation2 + $0xc0] sm:$0xff]
  %v3403 = vld [vmem:[#allocation2 + $0xc8] sm:$0xff]
  %v3404 = vld [vmem:[#allocation2 + $0xd0] sm:$0xff]
  %v3405 = vld [vmem:[#allocation2 + $0xd8] sm:$0xff]
  %v3406 = vld [vmem:[#allocation2 + $0xe0] sm:$0xff]
  %v3407 = vld [vmem:[#allocation2 + $0xe8] sm:$0xff]
  %v3408 = vld [vmem:[#allocation2 + $0xf0] sm:$0xff]
  %v3409 = vld [vmem:[#allocation2 + $0xf8] sm:$0xff]
  %v3410 = vld [vmem:[#allocation2 + $0x100] sm:$0xff]
  %v3411 = vpack.c.bf16 %v3401, %v3400
  %v3412 = vpack.c.bf16 %v3403, %v3402
  %v3413 = vpack.c.bf16 %v3405, %v3404
  %v3414 = vpack.c.bf16 %v3407, %v3406
  %v3415 = vpack.c.bf16 %v3409, %v3408
  %v3416 = vpack.c.bf16 %v3410, %v3410
  %v3417 = vld [vmem:[%s1] sm:$0xf]
  %v3418 = vld [vmem:[%s1 + $0x4] sm:$0xf]
  %v3419 = vld [vmem:[%s1 + $0x8] sm:$0xf]
  %v3420 = vld [vmem:[%s1 + $0xc] sm:$0xf]
  %v3421 = vld [vmem:[%s1 + $0x10] sm:$0xf]
  %v3422 = vld [vmem:[%s1 + $0x14] sm:$0xf]
  %v3423 = vld [vmem:[%s1 + $0x18] sm:$0xf]
  %v3424 = vld [vmem:[%s1 + $0x1c] sm:$0xf]
  %v3425 = vld [vmem:[%s1 + $0x20] sm:$0xf]
  %v3426 = vld [vmem:[%s1 + $0x24] sm:$0xf]
  %v3427 = vld [vmem:[%s1 + $0x28] sm:$0xf]
  %v3428 = vld [vmem:[%s1 + $0x2c] sm:$0xf]
  %v3429 = vld [vmem:[%s1 + $0x30] sm:$0xf]
  %v3430 = vld [vmem:[%s1 + $0x34] sm:$0xf]
  %v3431 = vld [vmem:[%s1 + $0x38] sm:$0xf]
  %v3432 = vld [vmem:[%s1 + $0x3c] sm:$0xf]
  %v3433 = vld [vmem:[#allocation2 + $0xb1] sm:$0xff]
  %v3434 = vld [vmem:[#allocation2 + $0xb9] sm:$0xff]
  %v3435 = vld [vmem:[#allocation2 + $0xc1] sm:$0xff]
  %v3436 = vld [vmem:[#allocation2 + $0xc9] sm:$0xff]
  %v3437 = vld [vmem:[#allocation2 + $0xd1] sm:$0xff]
  %v3438 = vld [vmem:[#allocation2 + $0xd9] sm:$0xff]
  %v3439 = vld [vmem:[#allocation2 + $0xe1] sm:$0xff]
  %v3440 = vld [vmem:[#allocation2 + $0xe9] sm:$0xff]
  %v3441 = vld [vmem:[#allocation2 + $0xf1] sm:$0xff]
  %v3442 = vld [vmem:[#allocation2 + $0xf9] sm:$0xff]
  %v3443 = vld [vmem:[#allocation2 + $0x101] sm:$0xff]
  %v3444 = vpack.c.bf16 %v3434, %v3433
  %v3445 = vpack.c.bf16 %v3436, %v3435
  %v3446 = vpack.c.bf16 %v3438, %v3437
  %v3447 = vpack.c.bf16 %v3440, %v3439
  %v3448 = vpack.c.bf16 %v3442, %v3441
  %v3449 = vpack.c.bf16 %v3443, %v3443
  %v3450 = vld [vmem:[%s274] sm:$0xf]
  %v3451 = vld [vmem:[%s274 + $0x4] sm:$0xf]
  %v3452 = vld [vmem:[%s274 + $0x8] sm:$0xf]
  %v3453 = vld [vmem:[%s274 + $0xc] sm:$0xf]
  %v3454 = vld [vmem:[%s274 + $0x10] sm:$0xf]
  %v3455 = vld [vmem:[%s274 + $0x14] sm:$0xf]
  %v3456 = vld [vmem:[%s274 + $0x18] sm:$0xf]
  %v3457 = vld [vmem:[%s274 + $0x1c] sm:$0xf]
  %v3458 = vld [vmem:[%s274 + $0x20] sm:$0xf]
  %v3459 = vld [vmem:[%s274 + $0x24] sm:$0xf]
  %v3460 = vld [vmem:[%s274 + $0x28] sm:$0xf]
  %v3461 = vld [vmem:[%s274 + $0x2c] sm:$0xf]
  %v3462 = vld [vmem:[%s274 + $0x30] sm:$0xf]
  %v3463 = vld [vmem:[%s274 + $0x34] sm:$0xf]
  %v3464 = vld [vmem:[%s274 + $0x38] sm:$0xf]
  %v3465 = vld [vmem:[%s274 + $0x3c] sm:$0xf]
  %v3482 = vunpack.c.l.b16 %v3450
  %v3483 = vunpack.c.l.b16 %v3451
  %v3484 = vunpack.c.l.b16 %v3452
  %v3485 = vunpack.c.l.b16 %v3453
  %v3486 = vunpack.c.l.b16 %v3454
  %v3487 = vunpack.c.l.b16 %v3455
  %v3488 = vunpack.c.l.b16 %v3456
  %v3489 = vunpack.c.l.b16 %v3457
  %v3490 = vunpack.c.l.b16 %v3458
  %v3491 = vunpack.c.l.b16 %v3459
  %v3492 = vunpack.c.l.b16 %v3460
  %v3493 = vunpack.c.l.b16 %v3461
  %v3494 = vunpack.c.l.b16 %v3462
  %v3495 = vunpack.c.l.b16 %v3463
  %v3496 = vunpack.c.l.b16 %v3464
  %v3497 = vunpack.c.l.b16 %v3465
  %v3498 = vpack.c.b16 %v3483, %v3482
  %v3499 = vpack.c.b16 %v3485, %v3484
  %v3500 = vpack.c.b16 %v3487, %v3486
  %v3501 = vpack.c.b16 %v3489, %v3488
  %v3502 = vpack.c.b16 %v3491, %v3490
  %v3503 = vpack.c.b16 %v3493, %v3492
  %v3504 = vpack.c.b16 %v3495, %v3494
  %v3505 = vpack.c.b16 %v3497, %v3496
  %3514 = vmatprep.subr.bf16.mxu0 0
  %3515 = vmatpush1.bf16.msra.mxu0 %v3505
  %3516 = vmatprep.subr.bf16.mxu0 0
  %3517 = vmatpush1.bf16.msra.mxu0 %v3504
  %3518 = vmatprep.subr.bf16.mxu0 0
  %3519 = vmatpush1.bf16.msra.mxu0 %v3503
  %3520 = vmatprep.subr.bf16.mxu0 0
  %3521 = vmatpush1.bf16.msra.mxu0 %v3502
  %3522 = vmatprep.subr.bf16.mxu0 0
  %3523 = vmatpush1.bf16.msra.mxu0 %v3501
  %3524 = vmatprep.subr.bf16.mxu0 0
  %3525 = vmatpush1.bf16.msra.mxu0 %v3500
  %3526 = vmatprep.subr.bf16.mxu0 0
  %3527 = vmatpush1.bf16.msra.mxu0 %v3499
  %3528 = vmatprep.subr.bf16.mxu0 0
  %3529 = vmatpush1.bf16.msra.mxu0 %v3498
  %3530 = vmatprep.subr.bf16.mxu0 0
  %3531 = vmatpush2.bf16.msra.mxu0 0
  %3532 = vmatprep.subr.bf16.mxu0 0
  %3533 = vmatpush2.bf16.msra.mxu0 0
  %3534 = vmatprep.subr.bf16.mxu0 0
  %3535 = vmatpush2.bf16.msra.mxu0 0
  %3536 = vmatprep.subr.bf16.mxu0 0
  %3537 = vmatpush2.bf16.msra.mxu0 0
  %3538 = vmatprep.subr.bf16.mxu0 0
  %3539 = vmatpush2.bf16.msra.mxu0 0
  %3540 = vmatprep.subr.bf16.mxu0 0
  %3541 = vmatpush2.bf16.msra.mxu0 0
  %3542 = vmatprep.subr.bf16.mxu0 0
  %3543 = vmatpush2.bf16.msra.mxu0 0
  %3544 = vmatprep.subr.bf16.mxu0 0
  %3545 = vmatpush2.bf16.msra.mxu0 0
  %3546 = vmatprep.mubr.bf16.mxu0 0
  %3547 = vmatmul.mubr.bf16.gmra.mxu0 %v3444
  %v3548 = vpop.f32.mrf.mxu0
  %v3549 = vadd.f32 0.0, %v3548
  %v3550 = vpop.f32.mrf.mxu0
  %v3551 = vpop.f32.mrf.mxu0
  %v3552 = vadd.f32 0.0, %v3551
  %v3553 = vpop.f32.mrf.mxu0
  %3554 = vmatprep.mubr.bf16.mxu0 0
  %3555 = vmatmul.mubr.bf16.gmra.mxu0 %v3445
  %v3556 = vpop.f32.mrf.mxu0
  %v3557 = vadd.f32 0.0, %v3556
  %v3558 = vpop.f32.mrf.mxu0
  %v3559 = vpop.f32.mrf.mxu0
  %v3560 = vadd.f32 0.0, %v3559
  %v3561 = vpop.f32.mrf.mxu0
  %3562 = vmatprep.mubr.bf16.mxu0 0
  %3563 = vmatmul.mubr.bf16.gmra.mxu0 %v3446
  %v3564 = vpop.f32.mrf.mxu0
  %v3565 = vadd.f32 0.0, %v3564
  %v3566 = vpop.f32.mrf.mxu0
  %v3567 = vpop.f32.mrf.mxu0
  %v3568 = vadd.f32 0.0, %v3567
  %v3569 = vpop.f32.mrf.mxu0
  %3570 = vmatprep.mubr.bf16.mxu0 0
  %3571 = vmatmul.mubr.bf16.gmra.mxu0 %v3447
  %v3572 = vpop.f32.mrf.mxu0
  %v3573 = vadd.f32 0.0, %v3572
  %v3574 = vpop.f32.mrf.mxu0
  %v3575 = vpop.f32.mrf.mxu0
  %v3576 = vadd.f32 0.0, %v3575
  %v3577 = vpop.f32.mrf.mxu0
  %3578 = vmatprep.mubr.bf16.mxu0 0
  %3579 = vmatmul.mubr.bf16.gmra.mxu0 %v3448
  %v3580 = vpop.f32.mrf.mxu0
  %v3581 = vadd.f32 0.0, %v3580
  %v3582 = vpop.f32.mrf.mxu0
  %v3583 = vpop.f32.mrf.mxu0
  %v3584 = vadd.f32 0.0, %v3583
  %v3585 = vpop.f32.mrf.mxu0
  %3586 = vmatprep.mubr.bf16.mxu0 0
  %3587 = vmatmul.mubr.bf16.gmra.mxu0 %v3449
  %v3588 = vpop.f32.mrf.mxu0
  %v3589 = vadd.f32 0.0, %v3588
  %v3590 = vpop.f32.mrf.mxu0
  %v3591 = vpop.f32.mrf.mxu0
  %v3592 = vpop.f32.mrf.mxu0
  %3593 = vdwg.mxu0
  %v3610 = vunpack.c.l.b16 %v3417
  %v3611 = vunpack.c.l.b16 %v3418
  %v3612 = vunpack.c.l.b16 %v3419
  %v3613 = vunpack.c.l.b16 %v3420
  %v3614 = vunpack.c.l.b16 %v3421
  %v3615 = vunpack.c.l.b16 %v3422
  %v3616 = vunpack.c.l.b16 %v3423
  %v3617 = vunpack.c.l.b16 %v3424
  %v3618 = vunpack.c.l.b16 %v3425
  %v3619 = vunpack.c.l.b16 %v3426
  %v3620 = vunpack.c.l.b16 %v3427
  %v3621 = vunpack.c.l.b16 %v3428
  %v3622 = vunpack.c.l.b16 %v3429
  %v3623 = vunpack.c.l.b16 %v3430
  %v3624 = vunpack.c.l.b16 %v3431
  %v3625 = vunpack.c.l.b16 %v3432
  %v3626 = vpack.c.b16 %v3611, %v3610
  %v3627 = vpack.c.b16 %v3613, %v3612
  %v3628 = vpack.c.b16 %v3615, %v3614
  %v3629 = vpack.c.b16 %v3617, %v3616
  %v3630 = vpack.c.b16 %v3619, %v3618
  %v3631 = vpack.c.b16 %v3621, %v3620
  %v3632 = vpack.c.b16 %v3623, %v3622
  %v3633 = vpack.c.b16 %v3625, %v3624
  %3642 = vmatprep.subr.bf16.mxu0 0
  %3643 = vmatpush1.bf16.msra.mxu0 %v3633
  %3644 = vmatprep.subr.bf16.mxu0 0
  %3645 = vmatpush1.bf16.msra.mxu0 %v3632
  %3646 = vmatprep.subr.bf16.mxu0 0
  %3647 = vmatpush1.bf16.msra.mxu0 %v3631
  %3648 = vmatprep.subr.bf16.mxu0 0
  %3649 = vmatpush1.bf16.msra.mxu0 %v3630
  %3650 = vmatprep.subr.bf16.mxu0 0
  %3651 = vmatpush1.bf16.msra.mxu0 %v3629
  %3652 = vmatprep.subr.bf16.mxu0 0
  %3653 = vmatpush1.bf16.msra.mxu0 %v3628
  %3654 = vmatprep.subr.bf16.mxu0 0
  %3655 = vmatpush1.bf16.msra.mxu0 %v3627
  %3656 = vmatprep.subr.bf16.mxu0 0
  %3657 = vmatpush1.bf16.msra.mxu0 %v3626
  %3658 = vmatprep.subr.bf16.mxu0 0
  %3659 = vmatpush2.bf16.msra.mxu0 0
  %3660 = vmatprep.subr.bf16.mxu0 0
  %3661 = vmatpush2.bf16.msra.mxu0 0
  %3662 = vmatprep.subr.bf16.mxu0 0
  %3663 = vmatpush2.bf16.msra.mxu0 0
  %3664 = vmatprep.subr.bf16.mxu0 0
  %3665 = vmatpush2.bf16.msra.mxu0 0
  %3666 = vmatprep.subr.bf16.mxu0 0
  %3667 = vmatpush2.bf16.msra.mxu0 0
  %3668 = vmatprep.subr.bf16.mxu0 0
  %3669 = vmatpush2.bf16.msra.mxu0 0
  %3670 = vmatprep.subr.bf16.mxu0 0
  %3671 = vmatpush2.bf16.msra.mxu0 0
  %3672 = vmatprep.subr.bf16.mxu0 0
  %3673 = vmatpush2.bf16.msra.mxu0 0
  %3674 = vmatprep.mubr.bf16.mxu0 0
  %3675 = vmatmul.mubr.bf16.gmra.mxu0 %v3411
  %v3676 = vpop.f32.mrf.mxu0
  %v3677 = vadd.f32 %v3549, %v3676
  %v3678 = vpop.f32.mrf.mxu0
  %v3679 = vpop.f32.mrf.mxu0
  %v3680 = vadd.f32 %v3552, %v3679
  %v3681 = vpop.f32.mrf.mxu0
  %3682 = vmatprep.mubr.bf16.mxu0 0
  %3683 = vmatmul.mubr.bf16.gmra.mxu0 %v3412
  %v3684 = vpop.f32.mrf.mxu0
  %v3685 = vadd.f32 %v3557, %v3684
  %v3686 = vpop.f32.mrf.mxu0
  %v3687 = vpop.f32.mrf.mxu0
  %v3688 = vadd.f32 %v3560, %v3687
  %v3689 = vpop.f32.mrf.mxu0
  %3690 = vmatprep.mubr.bf16.mxu0 0
  %3691 = vmatmul.mubr.bf16.gmra.mxu0 %v3413
  %v3692 = vpop.f32.mrf.mxu0
  %v3693 = vadd.f32 %v3565, %v3692
  %v3694 = vpop.f32.mrf.mxu0
  %v3695 = vpop.f32.mrf.mxu0
  %v3696 = vadd.f32 %v3568, %v3695
  %v3697 = vpop.f32.mrf.mxu0
  %3698 = vmatprep.mubr.bf16.mxu0 0
  %3699 = vmatmul.mubr.bf16.gmra.mxu0 %v3414
  %v3700 = vpop.f32.mrf.mxu0
  %v3701 = vadd.f32 %v3573, %v3700
  %v3702 = vpop.f32.mrf.mxu0
  %v3703 = vpop.f32.mrf.mxu0
  %v3704 = vadd.f32 %v3576, %v3703
  %v3705 = vpop.f32.mrf.mxu0
  %3706 = vmatprep.mubr.bf16.mxu0 0
  %3707 = vmatmul.mubr.bf16.gmra.mxu0 %v3415
  %v3708 = vpop.f32.mrf.mxu0
  %v3709 = vadd.f32 %v3581, %v3708
  %v3710 = vpop.f32.mrf.mxu0
  %v3711 = vpop.f32.mrf.mxu0
  %v3712 = vadd.f32 %v3584, %v3711
  %v3713 = vpop.f32.mrf.mxu0
  %3714 = vmatprep.mubr.bf16.mxu0 0
  %3715 = vmatmul.mubr.bf16.gmra.mxu0 %v3416
  %v3716 = vpop.f32.mrf.mxu0
  %v3717 = vadd.f32 %v3589, %v3716
  %v3718 = vpop.f32.mrf.mxu0
  %v3719 = vpop.f32.mrf.mxu0
  %v3720 = vpop.f32.mrf.mxu0
  %3721 = vdwg.mxu0
  %v3722 = vld [vmem:[#allocation2 + $0xb2] sm:$0xff]
  %v3723 = vld [vmem:[#allocation2 + $0xba] sm:$0xff]
  %v3724 = vld [vmem:[#allocation2 + $0xc2] sm:$0xff]
  %v3725 = vld [vmem:[#allocation2 + $0xca] sm:$0xff]
  %v3726 = vld [vmem:[#allocation2 + $0xd2] sm:$0xff]
  %v3727 = vld [vmem:[#allocation2 + $0xda] sm:$0xff]
  %v3728 = vld [vmem:[#allocation2 + $0xe2] sm:$0xff]
  %v3729 = vld [vmem:[#allocation2 + $0xea] sm:$0xff]
  %v3730 = vld [vmem:[#allocation2 + $0xf2] sm:$0xff]
  %v3731 = vld [vmem:[#allocation2 + $0xfa] sm:$0xff]
  %v3732 = vld [vmem:[#allocation2 + $0x102] sm:$0xff]
  %v3733 = vpack.c.bf16 %v3723, %v3722
  %v3734 = vpack.c.bf16 %v3725, %v3724
  %v3735 = vpack.c.bf16 %v3727, %v3726
  %v3736 = vpack.c.bf16 %v3729, %v3728
  %v3737 = vpack.c.bf16 %v3731, %v3730
  %v3738 = vpack.c.bf16 %v3732, %v3732
  %v3739 = vld [vmem:[%s564] sm:$0xf]
  %v3740 = vld [vmem:[%s564 + $0x4] sm:$0xf]
  %v3741 = vld [vmem:[%s564 + $0x8] sm:$0xf]
  %v3742 = vld [vmem:[%s564 + $0xc] sm:$0xf]
  %v3743 = vld [vmem:[%s564 + $0x10] sm:$0xf]
  %v3744 = vld [vmem:[%s564 + $0x14] sm:$0xf]
  %v3745 = vld [vmem:[%s564 + $0x18] sm:$0xf]
  %v3746 = vld [vmem:[%s564 + $0x1c] sm:$0xf]
  %v3747 = vld [vmem:[%s564 + $0x20] sm:$0xf]
  %v3748 = vld [vmem:[%s564 + $0x24] sm:$0xf]
  %v3749 = vld [vmem:[%s564 + $0x28] sm:$0xf]
  %v3750 = vld [vmem:[%s564 + $0x2c] sm:$0xf]
  %v3751 = vld [vmem:[%s564 + $0x30] sm:$0xf]
  %v3752 = vld [vmem:[%s564 + $0x34] sm:$0xf]
  %v3753 = vld [vmem:[%s564 + $0x38] sm:$0xf]
  %v3754 = vld [vmem:[%s564 + $0x3c] sm:$0xf]
  %v3771 = vunpack.c.l.b16 %v3739
  %v3772 = vunpack.c.l.b16 %v3740
  %v3773 = vunpack.c.l.b16 %v3741
  %v3774 = vunpack.c.l.b16 %v3742
  %v3775 = vunpack.c.l.b16 %v3743
  %v3776 = vunpack.c.l.b16 %v3744
  %v3777 = vunpack.c.l.b16 %v3745
  %v3778 = vunpack.c.l.b16 %v3746
  %v3779 = vunpack.c.l.b16 %v3747
  %v3780 = vunpack.c.l.b16 %v3748
  %v3781 = vunpack.c.l.b16 %v3749
  %v3782 = vunpack.c.l.b16 %v3750
  %v3783 = vunpack.c.l.b16 %v3751
  %v3784 = vunpack.c.l.b16 %v3752
  %v3785 = vunpack.c.l.b16 %v3753
  %v3786 = vunpack.c.l.b16 %v3754
  %v3787 = vpack.c.b16 %v3772, %v3771
  %v3788 = vpack.c.b16 %v3774, %v3773
  %v3789 = vpack.c.b16 %v3776, %v3775
  %v3790 = vpack.c.b16 %v3778, %v3777
  %v3791 = vpack.c.b16 %v3780, %v3779
  %v3792 = vpack.c.b16 %v3782, %v3781
  %v3793 = vpack.c.b16 %v3784, %v3783
  %v3794 = vpack.c.b16 %v3786, %v3785
  %3803 = vmatprep.subr.bf16.mxu0 0
  %3804 = vmatpush1.bf16.msra.mxu0 %v3794
  %3805 = vmatprep.subr.bf16.mxu0 0
  %3806 = vmatpush1.bf16.msra.mxu0 %v3793
  %3807 = vmatprep.subr.bf16.mxu0 0
  %3808 = vmatpush1.bf16.msra.mxu0 %v3792
  %3809 = vmatprep.subr.bf16.mxu0 0
  %3810 = vmatpush1.bf16.msra.mxu0 %v3791
  %3811 = vmatprep.subr.bf16.mxu0 0
  %3812 = vmatpush1.bf16.msra.mxu0 %v3790
  %3813 = vmatprep.subr.bf16.mxu0 0
  %3814 = vmatpush1.bf16.msra.mxu0 %v3789
  %3815 = vmatprep.subr.bf16.mxu0 0
  %3816 = vmatpush1.bf16.msra.mxu0 %v3788
  %3817 = vmatprep.subr.bf16.mxu0 0
  %3818 = vmatpush1.bf16.msra.mxu0 %v3787
  %3819 = vmatprep.subr.bf16.mxu0 0
  %3820 = vmatpush2.bf16.msra.mxu0 0
  %3821 = vmatprep.subr.bf16.mxu0 0
  %3822 = vmatpush2.bf16.msra.mxu0 0
  %3823 = vmatprep.subr.bf16.mxu0 0
  %3824 = vmatpush2.bf16.msra.mxu0 0
  %3825 = vmatprep.subr.bf16.mxu0 0
  %3826 = vmatpush2.bf16.msra.mxu0 0
  %3827 = vmatprep.subr.bf16.mxu0 0
  %3828 = vmatpush2.bf16.msra.mxu0 0
  %3829 = vmatprep.subr.bf16.mxu0 0
  %3830 = vmatpush2.bf16.msra.mxu0 0
  %3831 = vmatprep.subr.bf16.mxu0 0
  %3832 = vmatpush2.bf16.msra.mxu0 0
  %3833 = vmatprep.subr.bf16.mxu0 0
  %3834 = vmatpush2.bf16.msra.mxu0 0
  %3835 = vmatprep.mubr.bf16.mxu0 0
  %3836 = vmatmul.mubr.bf16.gmra.mxu0 %v3733
  %v3837 = vpop.f32.mrf.mxu0
  %v3838 = vadd.f32 0.0, %v3837
  %v3839 = vpop.f32.mrf.mxu0
  %v3840 = vpop.f32.mrf.mxu0
  %v3841 = vadd.f32 0.0, %v3840
  %v3842 = vpop.f32.mrf.mxu0
  %3843 = vmatprep.mubr.bf16.mxu0 0
  %3844 = vmatmul.mubr.bf16.gmra.mxu0 %v3734
  %v3845 = vpop.f32.mrf.mxu0
  %v3846 = vadd.f32 0.0, %v3845
  %v3847 = vpop.f32.mrf.mxu0
  %v3848 = vpop.f32.mrf.mxu0
  %v3849 = vadd.f32 0.0, %v3848
  %v3850 = vpop.f32.mrf.mxu0
  %3851 = vmatprep.mubr.bf16.mxu0 0
  %3852 = vmatmul.mubr.bf16.gmra.mxu0 %v3735
  %v3853 = vpop.f32.mrf.mxu0
  %v3854 = vadd.f32 0.0, %v3853
  %v3855 = vpop.f32.mrf.mxu0
  %v3856 = vpop.f32.mrf.mxu0
  %v3857 = vadd.f32 0.0, %v3856
  %v3858 = vpop.f32.mrf.mxu0
  %3859 = vmatprep.mubr.bf16.mxu0 0
  %3860 = vmatmul.mubr.bf16.gmra.mxu0 %v3736
  %v3861 = vpop.f32.mrf.mxu0
  %v3862 = vadd.f32 0.0, %v3861
  %v3863 = vpop.f32.mrf.mxu0
  %v3864 = vpop.f32.mrf.mxu0
  %v3865 = vadd.f32 0.0, %v3864
  %v3866 = vpop.f32.mrf.mxu0
  %3867 = vmatprep.mubr.bf16.mxu0 0
  %3868 = vmatmul.mubr.bf16.gmra.mxu0 %v3737
  %v3869 = vpop.f32.mrf.mxu0
  %v3870 = vadd.f32 0.0, %v3869
  %v3871 = vpop.f32.mrf.mxu0
  %v3872 = vpop.f32.mrf.mxu0
  %v3873 = vadd.f32 0.0, %v3872
  %v3874 = vpop.f32.mrf.mxu0
  %3875 = vmatprep.mubr.bf16.mxu0 0
  %3876 = vmatmul.mubr.bf16.gmra.mxu0 %v3738
  %v3877 = vpop.f32.mrf.mxu0
  %v3878 = vadd.f32 0.0, %v3877
  %v3879 = vpop.f32.mrf.mxu0
  %v3880 = vpop.f32.mrf.mxu0
  %v3881 = vpop.f32.mrf.mxu0
  %3882 = vdwg.mxu0
  %v3883 = vadd.f32 %v3677, %v3838
  %v3884 = vadd.f32 %v3680, %v3841
  %v3885 = vadd.f32 %v3685, %v3846
  %v3886 = vadd.f32 %v3688, %v3849
  %v3887 = vadd.f32 %v3693, %v3854
  %v3888 = vadd.f32 %v3696, %v3857
  %v3889 = vadd.f32 %v3701, %v3862
  %v3890 = vadd.f32 %v3704, %v3865
  %v3891 = vadd.f32 %v3709, %v3870
  %v3892 = vadd.f32 %v3712, %v3873
  %v3893 = vadd.f32 %v3717, %v3878
  %v3894 = vld [vmem:[#allocation2 + $0xc2] sm:$0xff]
  %v3895 = vld [vmem:[#allocation2 + $0xca] sm:$0xff]
  %v3896 = vld [vmem:[#allocation2 + $0xd2] sm:$0xff]
  %v3897 = vld [vmem:[#allocation2 + $0xda] sm:$0xff]
  %v3898 = vld [vmem:[#allocation2 + $0xe2] sm:$0xff]
  %v3899 = vld [vmem:[#allocation2 + $0xea] sm:$0xff]
  %v3900 = vld [vmem:[#allocation2 + $0xf2] sm:$0xff]
  %v3901 = vld [vmem:[#allocation2 + $0xfa] sm:$0xff]
  %v3902 = vld [vmem:[#allocation2 + $0x102] sm:$0xff]
  %v3903 = vld [vmem:[#allocation2 + $0x10a] sm:$0xff]
  %v3904 = vld [vmem:[#allocation2 + $0x112] sm:$0xff]
  %v3905 = vpack.c.bf16 %v3895, %v3894
  %v3906 = vpack.c.bf16 %v3897, %v3896
  %v3907 = vpack.c.bf16 %v3899, %v3898
  %v3908 = vpack.c.bf16 %v3901, %v3900
  %v3909 = vpack.c.bf16 %v3903, %v3902
  %v3910 = vpack.c.bf16 %v3904, %v3904
  %v3911 = vld [vmem:[%s737] sm:$0xf]
  %v3912 = vld [vmem:[%s737 + $0x4] sm:$0xf]
  %v3913 = vld [vmem:[%s737 + $0x8] sm:$0xf]
  %v3914 = vld [vmem:[%s737 + $0xc] sm:$0xf]
  %v3915 = vld [vmem:[%s737 + $0x10] sm:$0xf]
  %v3916 = vld [vmem:[%s737 + $0x14] sm:$0xf]
  %v3917 = vld [vmem:[%s737 + $0x18] sm:$0xf]
  %v3918 = vld [vmem:[%s737 + $0x1c] sm:$0xf]
  %v3919 = vld [vmem:[%s737 + $0x20] sm:$0xf]
  %v3920 = vld [vmem:[%s737 + $0x24] sm:$0xf]
  %v3921 = vld [vmem:[%s737 + $0x28] sm:$0xf]
  %v3922 = vld [vmem:[%s737 + $0x2c] sm:$0xf]
  %v3923 = vld [vmem:[%s737 + $0x30] sm:$0xf]
  %v3924 = vld [vmem:[%s737 + $0x34] sm:$0xf]
  %v3925 = vld [vmem:[%s737 + $0x38] sm:$0xf]
  %v3926 = vld [vmem:[%s737 + $0x3c] sm:$0xf]
  %v3943 = vunpack.c.l.b16 %v3911
  %v3944 = vunpack.c.l.b16 %v3912
  %v3945 = vunpack.c.l.b16 %v3913
  %v3946 = vunpack.c.l.b16 %v3914
  %v3947 = vunpack.c.l.b16 %v3915
  %v3948 = vunpack.c.l.b16 %v3916
  %v3949 = vunpack.c.l.b16 %v3917
  %v3950 = vunpack.c.l.b16 %v3918
  %v3951 = vunpack.c.l.b16 %v3919
  %v3952 = vunpack.c.l.b16 %v3920
  %v3953 = vunpack.c.l.b16 %v3921
  %v3954 = vunpack.c.l.b16 %v3922
  %v3955 = vunpack.c.l.b16 %v3923
  %v3956 = vunpack.c.l.b16 %v3924
  %v3957 = vunpack.c.l.b16 %v3925
  %v3958 = vunpack.c.l.b16 %v3926
  %v3959 = vpack.c.b16 %v3944, %v3943
  %v3960 = vpack.c.b16 %v3946, %v3945
  %v3961 = vpack.c.b16 %v3948, %v3947
  %v3962 = vpack.c.b16 %v3950, %v3949
  %v3963 = vpack.c.b16 %v3952, %v3951
  %v3964 = vpack.c.b16 %v3954, %v3953
  %v3965 = vpack.c.b16 %v3956, %v3955
  %v3966 = vpack.c.b16 %v3958, %v3957
  %3975 = vmatprep.subr.bf16.mxu0 0
  %3976 = vmatpush1.bf16.msra.mxu0 %v3966
  %3977 = vmatprep.subr.bf16.mxu0 0
  %3978 = vmatpush1.bf16.msra.mxu0 %v3965
  %3979 = vmatprep.subr.bf16.mxu0 0
  %3980 = vmatpush1.bf16.msra.mxu0 %v3964
  %3981 = vmatprep.subr.bf16.mxu0 0
  %3982 = vmatpush1.bf16.msra.mxu0 %v3963
  %3983 = vmatprep.subr.bf16.mxu0 0
  %3984 = vmatpush1.bf16.msra.mxu0 %v3962
  %3985 = vmatprep.subr.bf16.mxu0 0
  %3986 = vmatpush1.bf16.msra.mxu0 %v3961
  %3987 = vmatprep.subr.bf16.mxu0 0
  %3988 = vmatpush1.bf16.msra.mxu0 %v3960
  %3989 = vmatprep.subr.bf16.mxu0 0
  %3990 = vmatpush1.bf16.msra.mxu0 %v3959
  %3991 = vmatprep.subr.bf16.mxu0 0
  %3992 = vmatpush2.bf16.msra.mxu0 0
  %3993 = vmatprep.subr.bf16.mxu0 0
  %3994 = vmatpush2.bf16.msra.mxu0 0
  %3995 = vmatprep.subr.bf16.mxu0 0
  %3996 = vmatpush2.bf16.msra.mxu0 0
  %3997 = vmatprep.subr.bf16.mxu0 0
  %3998 = vmatpush2.bf16.msra.mxu0 0
  %3999 = vmatprep.subr.bf16.mxu0 0
  %4000 = vmatpush2.bf16.msra.mxu0 0
  %4001 = vmatprep.subr.bf16.mxu0 0
  %4002 = vmatpush2.bf16.msra.mxu0 0
  %4003 = vmatprep.subr.bf16.mxu0 0
  %4004 = vmatpush2.bf16.msra.mxu0 0
  %4005 = vmatprep.subr.bf16.mxu0 0
  %4006 = vmatpush2.bf16.msra.mxu0 0
  %4007 = vmatprep.mubr.bf16.mxu0 0
  %4008 = vmatmul.mubr.bf16.gmra.mxu0 %v3905
  %v4009 = vpop.f32.mrf.mxu0
  %v4010 = vadd.f32 0.0, %v4009
  %v4011 = vpop.f32.mrf.mxu0
  %v4012 = vpop.f32.mrf.mxu0
  %v4013 = vadd.f32 0.0, %v4012
  %v4014 = vpop.f32.mrf.mxu0
  %4015 = vmatprep.mubr.bf16.mxu0 0
  %4016 = vmatmul.mubr.bf16.gmra.mxu0 %v3906
  %v4017 = vpop.f32.mrf.mxu0
  %v4018 = vadd.f32 0.0, %v4017
  %v4019 = vpop.f32.mrf.mxu0
  %v4020 = vpop.f32.mrf.mxu0
  %v4021 = vadd.f32 0.0, %v4020
  %v4022 = vpop.f32.mrf.mxu0
  %4023 = vmatprep.mubr.bf16.mxu0 0
  %4024 = vmatmul.mubr.bf16.gmra.mxu0 %v3907
  %v4025 = vpop.f32.mrf.mxu0
  %v4026 = vadd.f32 0.0, %v4025
  %v4027 = vpop.f32.mrf.mxu0
  %v4028 = vpop.f32.mrf.mxu0
  %v4029 = vadd.f32 0.0, %v4028
  %v4030 = vpop.f32.mrf.mxu0
  %4031 = vmatprep.mubr.bf16.mxu0 0
  %4032 = vmatmul.mubr.bf16.gmra.mxu0 %v3908
  %v4033 = vpop.f32.mrf.mxu0
  %v4034 = vadd.f32 0.0, %v4033
  %v4035 = vpop.f32.mrf.mxu0
  %v4036 = vpop.f32.mrf.mxu0
  %v4037 = vadd.f32 0.0, %v4036
  %v4038 = vpop.f32.mrf.mxu0
  %4039 = vmatprep.mubr.bf16.mxu0 0
  %4040 = vmatmul.mubr.bf16.gmra.mxu0 %v3909
  %v4041 = vpop.f32.mrf.mxu0
  %v4042 = vadd.f32 0.0, %v4041
  %v4043 = vpop.f32.mrf.mxu0
  %v4044 = vpop.f32.mrf.mxu0
  %v4045 = vadd.f32 0.0, %v4044
  %v4046 = vpop.f32.mrf.mxu0
  %4047 = vmatprep.mubr.bf16.mxu0 0
  %4048 = vmatmul.mubr.bf16.gmra.mxu0 %v3910
  %v4049 = vpop.f32.mrf.mxu0
  %v4050 = vadd.f32 0.0, %v4049
  %v4051 = vpop.f32.mrf.mxu0
  %v4052 = vpop.f32.mrf.mxu0
  %v4053 = vpop.f32.mrf.mxu0
  %4054 = vdwg.mxu0
  %v4055 = vadd.f32 %v3883, %v4010
  %v4056 = vadd.f32 %v3884, %v4013
  %v4057 = vadd.f32 %v3885, %v4018
  %v4058 = vadd.f32 %v3886, %v4021
  %v4059 = vadd.f32 %v3887, %v4026
  %v4060 = vadd.f32 %v3888, %v4029
  %v4061 = vadd.f32 %v3889, %v4034
  %v4062 = vadd.f32 %v3890, %v4037
  %v4063 = vadd.f32 %v3891, %v4042
  %v4064 = vadd.f32 %v3892, %v4045
  %v4065 = vadd.f32 %v3893, %v4050
  %v4066 = vld [vmem:[#allocation2 + $0xc3] sm:$0xff]
  %v4067 = vld [vmem:[#allocation2 + $0xcb] sm:$0xff]
  %v4068 = vld [vmem:[#allocation2 + $0xd3] sm:$0xff]
  %v4069 = vld [vmem:[#allocation2 + $0xdb] sm:$0xff]
  %v4070 = vld [vmem:[#allocation2 + $0xe3] sm:$0xff]
  %v4071 = vld [vmem:[#allocation2 + $0xeb] sm:$0xff]
  %v4072 = vld [vmem:[#allocation2 + $0xf3] sm:$0xff]
  %v4073 = vld [vmem:[#allocation2 + $0xfb] sm:$0xff]
  %v4074 = vld [vmem:[#allocation2 + $0x103] sm:$0xff]
  %v4075 = vld [vmem:[#allocation2 + $0x10b] sm:$0xff]
  %v4076 = vld [vmem:[#allocation2 + $0x113] sm:$0xff]
  %v4077 = vpack.c.bf16 %v4067, %v4066
  %v4078 = vpack.c.bf16 %v4069, %v4068
  %v4079 = vpack.c.bf16 %v4071, %v4070
  %v4080 = vpack.c.bf16 %v4073, %v4072
  %v4081 = vpack.c.bf16 %v4075, %v4074
  %v4082 = vpack.c.bf16 %v4076, %v4076
  %v4083 = vld [vmem:[%s910] sm:$0xf]
  %v4084 = vld [vmem:[%s910 + $0x4] sm:$0xf]
  %v4085 = vld [vmem:[%s910 + $0x8] sm:$0xf]
  %v4086 = vld [vmem:[%s910 + $0xc] sm:$0xf]
  %v4087 = vld [vmem:[%s910 + $0x10] sm:$0xf]
  %v4088 = vld [vmem:[%s910 + $0x14] sm:$0xf]
  %v4089 = vld [vmem:[%s910 + $0x18] sm:$0xf]
  %v4090 = vld [vmem:[%s910 + $0x1c] sm:$0xf]
  %v4091 = vld [vmem:[%s910 + $0x20] sm:$0xf]
  %v4092 = vld [vmem:[%s910 + $0x24] sm:$0xf]
  %v4093 = vld [vmem:[%s910 + $0x28] sm:$0xf]
  %v4094 = vld [vmem:[%s910 + $0x2c] sm:$0xf]
  %v4095 = vld [vmem:[%s910 + $0x30] sm:$0xf]
  %v4096 = vld [vmem:[%s910 + $0x34] sm:$0xf]
  %v4097 = vld [vmem:[%s910 + $0x38] sm:$0xf]
  %v4098 = vld [vmem:[%s910 + $0x3c] sm:$0xf]
  %v4115 = vunpack.c.l.b16 %v4083
  %v4116 = vunpack.c.l.b16 %v4084
  %v4117 = vunpack.c.l.b16 %v4085
  %v4118 = vunpack.c.l.b16 %v4086
  %v4119 = vunpack.c.l.b16 %v4087
  %v4120 = vunpack.c.l.b16 %v4088
  %v4121 = vunpack.c.l.b16 %v4089
  %v4122 = vunpack.c.l.b16 %v4090
  %v4123 = vunpack.c.l.b16 %v4091
  %v4124 = vunpack.c.l.b16 %v4092
  %v4125 = vunpack.c.l.b16 %v4093
  %v4126 = vunpack.c.l.b16 %v4094
  %v4127 = vunpack.c.l.b16 %v4095
  %v4128 = vunpack.c.l.b16 %v4096
  %v4129 = vunpack.c.l.b16 %v4097
  %v4130 = vunpack.c.l.b16 %v4098
  %v4131 = vpack.c.b16 %v4116, %v4115
  %v4132 = vpack.c.b16 %v4118, %v4117
  %v4133 = vpack.c.b16 %v4120, %v4119
  %v4134 = vpack.c.b16 %v4122, %v4121
  %v4135 = vpack.c.b16 %v4124, %v4123
  %v4136 = vpack.c.b16 %v4126, %v4125
  %v4137 = vpack.c.b16 %v4128, %v4127
  %v4138 = vpack.c.b16 %v4130, %v4129
  %4147 = vmatprep.subr.bf16.mxu0 0
  %4148 = vmatpush1.bf16.msra.mxu0 %v4138
  %4149 = vmatprep.subr.bf16.mxu0 0
  %4150 = vmatpush1.bf16.msra.mxu0 %v4137
  %4151 = vmatprep.subr.bf16.mxu0 0
  %4152 = vmatpush1.bf16.msra.mxu0 %v4136
  %4153 = vmatprep.subr.bf16.mxu0 0
  %4154 = vmatpush1.bf16.msra.mxu0 %v4135
  %4155 = vmatprep.subr.bf16.mxu0 0
  %4156 = vmatpush1.bf16.msra.mxu0 %v4134
  %4157 = vmatprep.subr.bf16.mxu0 0
  %4158 = vmatpush1.bf16.msra.mxu0 %v4133
  %4159 = vmatprep.subr.bf16.mxu0 0
  %4160 = vmatpush1.bf16.msra.mxu0 %v4132
  %4161 = vmatprep.subr.bf16.mxu0 0
  %4162 = vmatpush1.bf16.msra.mxu0 %v4131
  %4163 = vmatprep.subr.bf16.mxu0 0
  %4164 = vmatpush2.bf16.msra.mxu0 0
  %4165 = vmatprep.subr.bf16.mxu0 0
  %4166 = vmatpush2.bf16.msra.mxu0 0
  %4167 = vmatprep.subr.bf16.mxu0 0
  %4168 = vmatpush2.bf16.msra.mxu0 0
  %4169 = vmatprep.subr.bf16.mxu0 0
  %4170 = vmatpush2.bf16.msra.mxu0 0
  %4171 = vmatprep.subr.bf16.mxu0 0
  %4172 = vmatpush2.bf16.msra.mxu0 0
  %4173 = vmatprep.subr.bf16.mxu0 0
  %4174 = vmatpush2.bf16.msra.mxu0 0
  %4175 = vmatprep.subr.bf16.mxu0 0
  %4176 = vmatpush2.bf16.msra.mxu0 0
  %4177 = vmatprep.subr.bf16.mxu0 0
  %4178 = vmatpush2.bf16.msra.mxu0 0
  %4179 = vmatprep.mubr.bf16.mxu0 0
  %4180 = vmatmul.mubr.bf16.gmra.mxu0 %v4077
  %v4181 = vpop.f32.mrf.mxu0
  %v4182 = vadd.f32 0.0, %v4181
  %v4183 = vpop.f32.mrf.mxu0
  %v4184 = vpop.f32.mrf.mxu0
  %v4185 = vadd.f32 0.0, %v4184
  %v4186 = vpop.f32.mrf.mxu0
  %4187 = vmatprep.mubr.bf16.mxu0 0
  %4188 = vmatmul.mubr.bf16.gmra.mxu0 %v4078
  %v4189 = vpop.f32.mrf.mxu0
  %v4190 = vadd.f32 0.0, %v4189
  %v4191 = vpop.f32.mrf.mxu0
  %v4192 = vpop.f32.mrf.mxu0
  %v4193 = vadd.f32 0.0, %v4192
  %v4194 = vpop.f32.mrf.mxu0
  %4195 = vmatprep.mubr.bf16.mxu0 0
  %4196 = vmatmul.mubr.bf16.gmra.mxu0 %v4079
  %v4197 = vpop.f32.mrf.mxu0
  %v4198 = vadd.f32 0.0, %v4197
  %v4199 = vpop.f32.mrf.mxu0
  %v4200 = vpop.f32.mrf.mxu0
  %v4201 = vadd.f32 0.0, %v4200
  %v4202 = vpop.f32.mrf.mxu0
  %4203 = vmatprep.mubr.bf16.mxu0 0
  %4204 = vmatmul.mubr.bf16.gmra.mxu0 %v4080
  %v4205 = vpop.f32.mrf.mxu0
  %v4206 = vadd.f32 0.0, %v4205
  %v4207 = vpop.f32.mrf.mxu0
  %v4208 = vpop.f32.mrf.mxu0
  %v4209 = vadd.f32 0.0, %v4208
  %v4210 = vpop.f32.mrf.mxu0
  %4211 = vmatprep.mubr.bf16.mxu0 0
  %4212 = vmatmul.mubr.bf16.gmra.mxu0 %v4081
  %v4213 = vpop.f32.mrf.mxu0
  %v4214 = vadd.f32 0.0, %v4213
  %v4215 = vpop.f32.mrf.mxu0
  %v4216 = vpop.f32.mrf.mxu0
  %v4217 = vadd.f32 0.0, %v4216
  %v4218 = vpop.f32.mrf.mxu0
  %4219 = vmatprep.mubr.bf16.mxu0 0
  %4220 = vmatmul.mubr.bf16.gmra.mxu0 %v4082
  %v4221 = vpop.f32.mrf.mxu0
  %v4222 = vadd.f32 0.0, %v4221
  %v4223 = vpop.f32.mrf.mxu0
  %v4224 = vpop.f32.mrf.mxu0
  %v4225 = vpop.f32.mrf.mxu0
  %4226 = vdwg.mxu0
  %v4227 = vadd.f32 %v4055, %v4182
  %v4228 = vadd.f32 %v4056, %v4185
  %v4229 = vadd.f32 %v4057, %v4190
  %v4230 = vadd.f32 %v4058, %v4193
  %v4231 = vadd.f32 %v4059, %v4198
  %v4232 = vadd.f32 %v4060, %v4201
  %v4233 = vadd.f32 %v4061, %v4206
  %v4234 = vadd.f32 %v4062, %v4209
  %v4235 = vadd.f32 %v4063, %v4214
  %v4236 = vadd.f32 %v4064, %v4217
  %v4237 = vadd.f32 %v4065, %v4222
  %v4238 = vld [vmem:[#allocation2 + $0xc4] sm:$0xff]
  %v4239 = vld [vmem:[#allocation2 + $0xcc] sm:$0xff]
  %v4240 = vld [vmem:[#allocation2 + $0xd4] sm:$0xff]
  %v4241 = vld [vmem:[#allocation2 + $0xdc] sm:$0xff]
  %v4242 = vld [vmem:[#allocation2 + $0xe4] sm:$0xff]
  %v4243 = vld [vmem:[#allocation2 + $0xec] sm:$0xff]
  %v4244 = vld [vmem:[#allocation2 + $0xf4] sm:$0xff]
  %v4245 = vld [vmem:[#allocation2 + $0xfc] sm:$0xff]
  %v4246 = vld [vmem:[#allocation2 + $0x104] sm:$0xff]
  %v4247 = vld [vmem:[#allocation2 + $0x10c] sm:$0xff]
  %v4248 = vld [vmem:[#allocation2 + $0x114] sm:$0xff]
  %v4249 = vpack.c.bf16 %v4239, %v4238
  %v4250 = vpack.c.bf16 %v4241, %v4240
  %v4251 = vpack.c.bf16 %v4243, %v4242
  %v4252 = vpack.c.bf16 %v4245, %v4244
  %v4253 = vpack.c.bf16 %v4247, %v4246
  %v4254 = vpack.c.bf16 %v4248, %v4248
  %v4255 = vld [vmem:[%s1083] sm:$0xf]
  %v4256 = vld [vmem:[%s1083 + $0x4] sm:$0xf]
  %v4257 = vld [vmem:[%s1083 + $0x8] sm:$0xf]
  %v4258 = vld [vmem:[%s1083 + $0xc] sm:$0xf]
  %v4259 = vld [vmem:[%s1083 + $0x10] sm:$0xf]
  %v4260 = vld [vmem:[%s1083 + $0x14] sm:$0xf]
  %v4261 = vld [vmem:[%s1083 + $0x18] sm:$0xf]
  %v4262 = vld [vmem:[%s1083 + $0x1c] sm:$0xf]
  %v4263 = vld [vmem:[%s1083 + $0x20] sm:$0xf]
  %v4264 = vld [vmem:[%s1083 + $0x24] sm:$0xf]
  %v4265 = vld [vmem:[%s1083 + $0x28] sm:$0xf]
  %v4266 = vld [vmem:[%s1083 + $0x2c] sm:$0xf]
  %v4267 = vld [vmem:[%s1083 + $0x30] sm:$0xf]
  %v4268 = vld [vmem:[%s1083 + $0x34] sm:$0xf]
  %v4269 = vld [vmem:[%s1083 + $0x38] sm:$0xf]
  %v4270 = vld [vmem:[%s1083 + $0x3c] sm:$0xf]
  %v4287 = vunpack.c.l.b16 %v4255
  %v4288 = vunpack.c.l.b16 %v4256
  %v4289 = vunpack.c.l.b16 %v4257
  %v4290 = vunpack.c.l.b16 %v4258
  %v4291 = vunpack.c.l.b16 %v4259
  %v4292 = vunpack.c.l.b16 %v4260
  %v4293 = vunpack.c.l.b16 %v4261
  %v4294 = vunpack.c.l.b16 %v4262
  %v4295 = vunpack.c.l.b16 %v4263
  %v4296 = vunpack.c.l.b16 %v4264
  %v4297 = vunpack.c.l.b16 %v4265
  %v4298 = vunpack.c.l.b16 %v4266
  %v4299 = vunpack.c.l.b16 %v4267
  %v4300 = vunpack.c.l.b16 %v4268
  %v4301 = vunpack.c.l.b16 %v4269
  %v4302 = vunpack.c.l.b16 %v4270
  %v4303 = vpack.c.b16 %v4288, %v4287
  %v4304 = vpack.c.b16 %v4290, %v4289
  %v4305 = vpack.c.b16 %v4292, %v4291
  %v4306 = vpack.c.b16 %v4294, %v4293
  %v4307 = vpack.c.b16 %v4296, %v4295
  %v4308 = vpack.c.b16 %v4298, %v4297
  %v4309 = vpack.c.b16 %v4300, %v4299
  %v4310 = vpack.c.b16 %v4302, %v4301
  %4319 = vmatprep.subr.bf16.mxu0 0
  %4320 = vmatpush1.bf16.msra.mxu0 %v4310
  %4321 = vmatprep.subr.bf16.mxu0 0
  %4322 = vmatpush1.bf16.msra.mxu0 %v4309
  %4323 = vmatprep.subr.bf16.mxu0 0
  %4324 = vmatpush1.bf16.msra.mxu0 %v4308
  %4325 = vmatprep.subr.bf16.mxu0 0
  %4326 = vmatpush1.bf16.msra.mxu0 %v4307
  %4327 = vmatprep.subr.bf16.mxu0 0
  %4328 = vmatpush1.bf16.msra.mxu0 %v4306
  %4329 = vmatprep.subr.bf16.mxu0 0
  %4330 = vmatpush1.bf16.msra.mxu0 %v4305
  %4331 = vmatprep.subr.bf16.mxu0 0
  %4332 = vmatpush1.bf16.msra.mxu0 %v4304
  %4333 = vmatprep.subr.bf16.mxu0 0
  %4334 = vmatpush1.bf16.msra.mxu0 %v4303
  %4335 = vmatprep.subr.bf16.mxu0 0
  %4336 = vmatpush2.bf16.msra.mxu0 0
  %4337 = vmatprep.subr.bf16.mxu0 0
  %4338 = vmatpush2.bf16.msra.mxu0 0
  %4339 = vmatprep.subr.bf16.mxu0 0
  %4340 = vmatpush2.bf16.msra.mxu0 0
  %4341 = vmatprep.subr.bf16.mxu0 0
  %4342 = vmatpush2.bf16.msra.mxu0 0
  %4343 = vmatprep.subr.bf16.mxu0 0
  %4344 = vmatpush2.bf16.msra.mxu0 0
  %4345 = vmatprep.subr.bf16.mxu0 0
  %4346 = vmatpush2.bf16.msra.mxu0 0
  %4347 = vmatprep.subr.bf16.mxu0 0
  %4348 = vmatpush2.bf16.msra.mxu0 0
  %4349 = vmatprep.subr.bf16.mxu0 0
  %4350 = vmatpush2.bf16.msra.mxu0 0
  %4351 = vmatprep.mubr.bf16.mxu0 0
  %4352 = vmatmul.mubr.bf16.gmra.mxu0 %v4249
  %v4353 = vpop.f32.mrf.mxu0
  %v4354 = vadd.f32 0.0, %v4353
  %v4355 = vpop.f32.mrf.mxu0
  %v4356 = vpop.f32.mrf.mxu0
  %v4357 = vadd.f32 0.0, %v4356
  %v4358 = vpop.f32.mrf.mxu0
  %4359 = vmatprep.mubr.bf16.mxu0 0
  %4360 = vmatmul.mubr.bf16.gmra.mxu0 %v4250
  %v4361 = vpop.f32.mrf.mxu0
  %v4362 = vadd.f32 0.0, %v4361
  %v4363 = vpop.f32.mrf.mxu0
  %v4364 = vpop.f32.mrf.mxu0
  %v4365 = vadd.f32 0.0, %v4364
  %v4366 = vpop.f32.mrf.mxu0
  %4367 = vmatprep.mubr.bf16.mxu0 0
  %4368 = vmatmul.mubr.bf16.gmra.mxu0 %v4251
  %v4369 = vpop.f32.mrf.mxu0
  %v4370 = vadd.f32 0.0, %v4369
  %v4371 = vpop.f32.mrf.mxu0
  %v4372 = vpop.f32.mrf.mxu0
  %v4373 = vadd.f32 0.0, %v4372
  %v4374 = vpop.f32.mrf.mxu0
  %4375 = vmatprep.mubr.bf16.mxu0 0
  %4376 = vmatmul.mubr.bf16.gmra.mxu0 %v4252
  %v4377 = vpop.f32.mrf.mxu0
  %v4378 = vadd.f32 0.0, %v4377
  %v4379 = vpop.f32.mrf.mxu0
  %v4380 = vpop.f32.mrf.mxu0
  %v4381 = vadd.f32 0.0, %v4380
  %v4382 = vpop.f32.mrf.mxu0
  %4383 = vmatprep.mubr.bf16.mxu0 0
  %4384 = vmatmul.mubr.bf16.gmra.mxu0 %v4253
  %v4385 = vpop.f32.mrf.mxu0
  %v4386 = vadd.f32 0.0, %v4385
  %v4387 = vpop.f32.mrf.mxu0
  %v4388 = vpop.f32.mrf.mxu0
  %v4389 = vadd.f32 0.0, %v4388
  %v4390 = vpop.f32.mrf.mxu0
  %4391 = vmatprep.mubr.bf16.mxu0 0
  %4392 = vmatmul.mubr.bf16.gmra.mxu0 %v4254
  %v4393 = vpop.f32.mrf.mxu0
  %v4394 = vadd.f32 0.0, %v4393
  %v4395 = vpop.f32.mrf.mxu0
  %v4396 = vpop.f32.mrf.mxu0
  %v4397 = vpop.f32.mrf.mxu0
  %4398 = vdwg.mxu0
  %v4399 = vadd.f32 %v4227, %v4354
  %v4400 = vadd.f32 %v4228, %v4357
  %v4401 = vadd.f32 %v4229, %v4362
  %v4402 = vadd.f32 %v4230, %v4365
  %v4403 = vadd.f32 %v4231, %v4370
  %v4404 = vadd.f32 %v4232, %v4373
  %v4405 = vadd.f32 %v4233, %v4378
  %v4406 = vadd.f32 %v4234, %v4381
  %v4407 = vadd.f32 %v4235, %v4386
  %v4408 = vadd.f32 %v4236, %v4389
  %v4409 = vadd.f32 %v4237, %v4394
  %v4410 = vld [vmem:[#allocation2 + $0xd4] sm:$0xff]
  %v4411 = vld [vmem:[#allocation2 + $0xdc] sm:$0xff]
  %v4412 = vld [vmem:[#allocation2 + $0xe4] sm:$0xff]
  %v4413 = vld [vmem:[#allocation2 + $0xec] sm:$0xff]
  %v4414 = vld [vmem:[#allocation2 + $0xf4] sm:$0xff]
  %v4415 = vld [vmem:[#allocation2 + $0xfc] sm:$0xff]
  %v4416 = vld [vmem:[#allocation2 + $0x104] sm:$0xff]
  %v4417 = vld [vmem:[#allocation2 + $0x10c] sm:$0xff]
  %v4418 = vld [vmem:[#allocation2 + $0x114] sm:$0xff]
  %v4419 = vld [vmem:[#allocation2 + $0x11c] sm:$0xff]
  %v4420 = vld [vmem:[#allocation2 + $0x124] sm:$0xff]
  %v4421 = vpack.c.bf16 %v4411, %v4410
  %v4422 = vpack.c.bf16 %v4413, %v4412
  %v4423 = vpack.c.bf16 %v4415, %v4414
  %v4424 = vpack.c.bf16 %v4417, %v4416
  %v4425 = vpack.c.bf16 %v4419, %v4418
  %v4426 = vpack.c.bf16 %v4420, %v4420
  %v4427 = vld [vmem:[%s1256] sm:$0xf]
  %v4428 = vld [vmem:[%s1256 + $0x4] sm:$0xf]
  %v4429 = vld [vmem:[%s1256 + $0x8] sm:$0xf]
  %v4430 = vld [vmem:[%s1256 + $0xc] sm:$0xf]
  %v4431 = vld [vmem:[%s1256 + $0x10] sm:$0xf]
  %v4432 = vld [vmem:[%s1256 + $0x14] sm:$0xf]
  %v4433 = vld [vmem:[%s1256 + $0x18] sm:$0xf]
  %v4434 = vld [vmem:[%s1256 + $0x1c] sm:$0xf]
  %v4435 = vld [vmem:[%s1256 + $0x20] sm:$0xf]
  %v4436 = vld [vmem:[%s1256 + $0x24] sm:$0xf]
  %v4437 = vld [vmem:[%s1256 + $0x28] sm:$0xf]
  %v4438 = vld [vmem:[%s1256 + $0x2c] sm:$0xf]
  %v4439 = vld [vmem:[%s1256 + $0x30] sm:$0xf]
  %v4440 = vld [vmem:[%s1256 + $0x34] sm:$0xf]
  %v4441 = vld [vmem:[%s1256 + $0x38] sm:$0xf]
  %v4442 = vld [vmem:[%s1256 + $0x3c] sm:$0xf]
  %v4459 = vunpack.c.l.b16 %v4427
  %v4460 = vunpack.c.l.b16 %v4428
  %v4461 = vunpack.c.l.b16 %v4429
  %v4462 = vunpack.c.l.b16 %v4430
  %v4463 = vunpack.c.l.b16 %v4431
  %v4464 = vunpack.c.l.b16 %v4432
  %v4465 = vunpack.c.l.b16 %v4433
  %v4466 = vunpack.c.l.b16 %v4434
  %v4467 = vunpack.c.l.b16 %v4435
  %v4468 = vunpack.c.l.b16 %v4436
  %v4469 = vunpack.c.l.b16 %v4437
  %v4470 = vunpack.c.l.b16 %v4438
  %v4471 = vunpack.c.l.b16 %v4439
  %v4472 = vunpack.c.l.b16 %v4440
  %v4473 = vunpack.c.l.b16 %v4441
  %v4474 = vunpack.c.l.b16 %v4442
  %v4475 = vpack.c.b16 %v4460, %v4459
  %v4476 = vpack.c.b16 %v4462, %v4461
  %v4477 = vpack.c.b16 %v4464, %v4463
  %v4478 = vpack.c.b16 %v4466, %v4465
  %v4479 = vpack.c.b16 %v4468, %v4467
  %v4480 = vpack.c.b16 %v4470, %v4469
  %v4481 = vpack.c.b16 %v4472, %v4471
  %v4482 = vpack.c.b16 %v4474, %v4473
  %4491 = vmatprep.subr.bf16.mxu0 0
  %4492 = vmatpush1.bf16.msra.mxu0 %v4482
  %4493 = vmatprep.subr.bf16.mxu0 0
  %4494 = vmatpush1.bf16.msra.mxu0 %v4481
  %4495 = vmatprep.subr.bf16.mxu0 0
  %4496 = vmatpush1.bf16.msra.mxu0 %v4480
  %4497 = vmatprep.subr.bf16.mxu0 0
  %4498 = vmatpush1.bf16.msra.mxu0 %v4479
  %4499 = vmatprep.subr.bf16.mxu0 0
  %4500 = vmatpush1.bf16.msra.mxu0 %v4478
  %4501 = vmatprep.subr.bf16.mxu0 0
  %4502 = vmatpush1.bf16.msra.mxu0 %v4477
  %4503 = vmatprep.subr.bf16.mxu0 0
  %4504 = vmatpush1.bf16.msra.mxu0 %v4476
  %4505 = vmatprep.subr.bf16.mxu0 0
  %4506 = vmatpush1.bf16.msra.mxu0 %v4475
  %4507 = vmatprep.subr.bf16.mxu0 0
  %4508 = vmatpush2.bf16.msra.mxu0 0
  %4509 = vmatprep.subr.bf16.mxu0 0
  %4510 = vmatpush2.bf16.msra.mxu0 0
  %4511 = vmatprep.subr.bf16.mxu0 0
  %4512 = vmatpush2.bf16.msra.mxu0 0
  %4513 = vmatprep.subr.bf16.mxu0 0
  %4514 = vmatpush2.bf16.msra.mxu0 0
  %4515 = vmatprep.subr.bf16.mxu0 0
  %4516 = vmatpush2.bf16.msra.mxu0 0
  %4517 = vmatprep.subr.bf16.mxu0 0
  %4518 = vmatpush2.bf16.msra.mxu0 0
  %4519 = vmatprep.subr.bf16.mxu0 0
  %4520 = vmatpush2.bf16.msra.mxu0 0
  %4521 = vmatprep.subr.bf16.mxu0 0
  %4522 = vmatpush2.bf16.msra.mxu0 0
  %4523 = vmatprep.mubr.bf16.mxu0 0
  %4524 = vmatmul.mubr.bf16.gmra.mxu0 %v4421
  %v4525 = vpop.f32.mrf.mxu0
  %v4526 = vadd.f32 0.0, %v4525
  %v4527 = vpop.f32.mrf.mxu0
  %v4528 = vpop.f32.mrf.mxu0
  %v4529 = vadd.f32 0.0, %v4528
  %v4530 = vpop.f32.mrf.mxu0
  %4531 = vmatprep.mubr.bf16.mxu0 0
  %4532 = vmatmul.mubr.bf16.gmra.mxu0 %v4422
  %v4533 = vpop.f32.mrf.mxu0
  %v4534 = vadd.f32 0.0, %v4533
  %v4535 = vpop.f32.mrf.mxu0
  %v4536 = vpop.f32.mrf.mxu0
  %v4537 = vadd.f32 0.0, %v4536
  %v4538 = vpop.f32.mrf.mxu0
  %4539 = vmatprep.mubr.bf16.mxu0 0
  %4540 = vmatmul.mubr.bf16.gmra.mxu0 %v4423
  %v4541 = vpop.f32.mrf.mxu0
  %v4542 = vadd.f32 0.0, %v4541
  %v4543 = vpop.f32.mrf.mxu0
  %v4544 = vpop.f32.mrf.mxu0
  %v4545 = vadd.f32 0.0, %v4544
  %v4546 = vpop.f32.mrf.mxu0
  %4547 = vmatprep.mubr.bf16.mxu0 0
  %4548 = vmatmul.mubr.bf16.gmra.mxu0 %v4424
  %v4549 = vpop.f32.mrf.mxu0
  %v4550 = vadd.f32 0.0, %v4549
  %v4551 = vpop.f32.mrf.mxu0
  %v4552 = vpop.f32.mrf.mxu0
  %v4553 = vadd.f32 0.0, %v4552
  %v4554 = vpop.f32.mrf.mxu0
  %4555 = vmatprep.mubr.bf16.mxu0 0
  %4556 = vmatmul.mubr.bf16.gmra.mxu0 %v4425
  %v4557 = vpop.f32.mrf.mxu0
  %v4558 = vadd.f32 0.0, %v4557
  %v4559 = vpop.f32.mrf.mxu0
  %v4560 = vpop.f32.mrf.mxu0
  %v4561 = vadd.f32 0.0, %v4560
  %v4562 = vpop.f32.mrf.mxu0
  %4563 = vmatprep.mubr.bf16.mxu0 0
  %4564 = vmatmul.mubr.bf16.gmra.mxu0 %v4426
  %v4565 = vpop.f32.mrf.mxu0
  %v4566 = vadd.f32 0.0, %v4565
  %v4567 = vpop.f32.mrf.mxu0
  %v4568 = vpop.f32.mrf.mxu0
  %v4569 = vpop.f32.mrf.mxu0
  %4570 = vdwg.mxu0
  %v4571 = vadd.f32 %v4399, %v4526
  %v4572 = vadd.f32 %v4400, %v4529
  %v4573 = vadd.f32 %v4401, %v4534
  %v4574 = vadd.f32 %v4402, %v4537
  %v4575 = vadd.f32 %v4403, %v4542
  %v4576 = vadd.f32 %v4404, %v4545
  %v4577 = vadd.f32 %v4405, %v4550
  %v4578 = vadd.f32 %v4406, %v4553
  %v4579 = vadd.f32 %v4407, %v4558
  %v4580 = vadd.f32 %v4408, %v4561
  %v4581 = vadd.f32 %v4409, %v4566
  %v4582 = vld [vmem:[#allocation2 + $0xd5] sm:$0xff]
  %v4583 = vld [vmem:[#allocation2 + $0xdd] sm:$0xff]
  %v4584 = vld [vmem:[#allocation2 + $0xe5] sm:$0xff]
  %v4585 = vld [vmem:[#allocation2 + $0xed] sm:$0xff]
  %v4586 = vld [vmem:[#allocation2 + $0xf5] sm:$0xff]
  %v4587 = vld [vmem:[#allocation2 + $0xfd] sm:$0xff]
  %v4588 = vld [vmem:[#allocation2 + $0x105] sm:$0xff]
  %v4589 = vld [vmem:[#allocation2 + $0x10d] sm:$0xff]
  %v4590 = vld [vmem:[#allocation2 + $0x115] sm:$0xff]
  %v4591 = vld [vmem:[#allocation2 + $0x11d] sm:$0xff]
  %v4592 = vld [vmem:[#allocation2 + $0x125] sm:$0xff]
  %v4593 = vpack.c.bf16 %v4583, %v4582
  %v4594 = vpack.c.bf16 %v4585, %v4584
  %v4595 = vpack.c.bf16 %v4587, %v4586
  %v4596 = vpack.c.bf16 %v4589, %v4588
  %v4597 = vpack.c.bf16 %v4591, %v4590
  %v4598 = vpack.c.bf16 %v4592, %v4592
  %v4599 = vld [vmem:[%s1429] sm:$0xf]
  %v4600 = vld [vmem:[%s1429 + $0x4] sm:$0xf]
  %v4601 = vld [vmem:[%s1429 + $0x8] sm:$0xf]
  %v4602 = vld [vmem:[%s1429 + $0xc] sm:$0xf]
  %v4603 = vld [vmem:[%s1429 + $0x10] sm:$0xf]
  %v4604 = vld [vmem:[%s1429 + $0x14] sm:$0xf]
  %v4605 = vld [vmem:[%s1429 + $0x18] sm:$0xf]
  %v4606 = vld [vmem:[%s1429 + $0x1c] sm:$0xf]
  %v4607 = vld [vmem:[%s1429 + $0x20] sm:$0xf]
  %v4608 = vld [vmem:[%s1429 + $0x24] sm:$0xf]
  %v4609 = vld [vmem:[%s1429 + $0x28] sm:$0xf]
  %v4610 = vld [vmem:[%s1429 + $0x2c] sm:$0xf]
  %v4611 = vld [vmem:[%s1429 + $0x30] sm:$0xf]
  %v4612 = vld [vmem:[%s1429 + $0x34] sm:$0xf]
  %v4613 = vld [vmem:[%s1429 + $0x38] sm:$0xf]
  %v4614 = vld [vmem:[%s1429 + $0x3c] sm:$0xf]
  %v4631 = vunpack.c.l.b16 %v4599
  %v4632 = vunpack.c.l.b16 %v4600
  %v4633 = vunpack.c.l.b16 %v4601
  %v4634 = vunpack.c.l.b16 %v4602
  %v4635 = vunpack.c.l.b16 %v4603
  %v4636 = vunpack.c.l.b16 %v4604
  %v4637 = vunpack.c.l.b16 %v4605
  %v4638 = vunpack.c.l.b16 %v4606
  %v4639 = vunpack.c.l.b16 %v4607
  %v4640 = vunpack.c.l.b16 %v4608
  %v4641 = vunpack.c.l.b16 %v4609
  %v4642 = vunpack.c.l.b16 %v4610
  %v4643 = vunpack.c.l.b16 %v4611
  %v4644 = vunpack.c.l.b16 %v4612
  %v4645 = vunpack.c.l.b16 %v4613
  %v4646 = vunpack.c.l.b16 %v4614
  %v4647 = vpack.c.b16 %v4632, %v4631
  %v4648 = vpack.c.b16 %v4634, %v4633
  %v4649 = vpack.c.b16 %v4636, %v4635
  %v4650 = vpack.c.b16 %v4638, %v4637
  %v4651 = vpack.c.b16 %v4640, %v4639
  %v4652 = vpack.c.b16 %v4642, %v4641
  %v4653 = vpack.c.b16 %v4644, %v4643
  %v4654 = vpack.c.b16 %v4646, %v4645
  %4663 = vmatprep.subr.bf16.mxu0 0
  %4664 = vmatpush1.bf16.msra.mxu0 %v4654
  %4665 = vmatprep.subr.bf16.mxu0 0
  %4666 = vmatpush1.bf16.msra.mxu0 %v4653
  %4667 = vmatprep.subr.bf16.mxu0 0
  %4668 = vmatpush1.bf16.msra.mxu0 %v4652
  %4669 = vmatprep.subr.bf16.mxu0 0
  %4670 = vmatpush1.bf16.msra.mxu0 %v4651
  %4671 = vmatprep.subr.bf16.mxu0 0
  %4672 = vmatpush1.bf16.msra.mxu0 %v4650
  %4673 = vmatprep.subr.bf16.mxu0 0
  %4674 = vmatpush1.bf16.msra.mxu0 %v4649
  %4675 = vmatprep.subr.bf16.mxu0 0
  %4676 = vmatpush1.bf16.msra.mxu0 %v4648
  %4677 = vmatprep.subr.bf16.mxu0 0
  %4678 = vmatpush1.bf16.msra.mxu0 %v4647
  %4679 = vmatprep.subr.bf16.mxu0 0
  %4680 = vmatpush2.bf16.msra.mxu0 0
  %4681 = vmatprep.subr.bf16.mxu0 0
  %4682 = vmatpush2.bf16.msra.mxu0 0
  %4683 = vmatprep.subr.bf16.mxu0 0
  %4684 = vmatpush2.bf16.msra.mxu0 0
  %4685 = vmatprep.subr.bf16.mxu0 0
  %4686 = vmatpush2.bf16.msra.mxu0 0
  %4687 = vmatprep.subr.bf16.mxu0 0
  %4688 = vmatpush2.bf16.msra.mxu0 0
  %4689 = vmatprep.subr.bf16.mxu0 0
  %4690 = vmatpush2.bf16.msra.mxu0 0
  %4691 = vmatprep.subr.bf16.mxu0 0
  %4692 = vmatpush2.bf16.msra.mxu0 0
  %4693 = vmatprep.subr.bf16.mxu0 0
  %4694 = vmatpush2.bf16.msra.mxu0 0
  %4695 = vmatprep.mubr.bf16.mxu0 0
  %4696 = vmatmul.mubr.bf16.gmra.mxu0 %v4593
  %v4697 = vpop.f32.mrf.mxu0
  %v4698 = vadd.f32 0.0, %v4697
  %v4699 = vpop.f32.mrf.mxu0
  %v4700 = vpop.f32.mrf.mxu0
  %v4701 = vadd.f32 0.0, %v4700
  %v4702 = vpop.f32.mrf.mxu0
  %4703 = vmatprep.mubr.bf16.mxu0 0
  %4704 = vmatmul.mubr.bf16.gmra.mxu0 %v4594
  %v4705 = vpop.f32.mrf.mxu0
  %v4706 = vadd.f32 0.0, %v4705
  %v4707 = vpop.f32.mrf.mxu0
  %v4708 = vpop.f32.mrf.mxu0
  %v4709 = vadd.f32 0.0, %v4708
  %v4710 = vpop.f32.mrf.mxu0
  %4711 = vmatprep.mubr.bf16.mxu0 0
  %4712 = vmatmul.mubr.bf16.gmra.mxu0 %v4595
  %v4713 = vpop.f32.mrf.mxu0
  %v4714 = vadd.f32 0.0, %v4713
  %v4715 = vpop.f32.mrf.mxu0
  %v4716 = vpop.f32.mrf.mxu0
  %v4717 = vadd.f32 0.0, %v4716
  %v4718 = vpop.f32.mrf.mxu0
  %4719 = vmatprep.mubr.bf16.mxu0 0
  %4720 = vmatmul.mubr.bf16.gmra.mxu0 %v4596
  %v4721 = vpop.f32.mrf.mxu0
  %v4722 = vadd.f32 0.0, %v4721
  %v4723 = vpop.f32.mrf.mxu0
  %v4724 = vpop.f32.mrf.mxu0
  %v4725 = vadd.f32 0.0, %v4724
  %v4726 = vpop.f32.mrf.mxu0
  %4727 = vmatprep.mubr.bf16.mxu0 0
  %4728 = vmatmul.mubr.bf16.gmra.mxu0 %v4597
  %v4729 = vpop.f32.mrf.mxu0
  %v4730 = vadd.f32 0.0, %v4729
  %v4731 = vpop.f32.mrf.mxu0
  %v4732 = vpop.f32.mrf.mxu0
  %v4733 = vadd.f32 0.0, %v4732
  %v4734 = vpop.f32.mrf.mxu0
  %4735 = vmatprep.mubr.bf16.mxu0 0
  %4736 = vmatmul.mubr.bf16.gmra.mxu0 %v4598
  %v4737 = vpop.f32.mrf.mxu0
  %v4738 = vadd.f32 0.0, %v4737
  %v4739 = vpop.f32.mrf.mxu0
  %v4740 = vpop.f32.mrf.mxu0
  %v4741 = vpop.f32.mrf.mxu0
  %4742 = vdwg.mxu0
  %v4743 = vadd.f32 %v4571, %v4698
  %v4744 = vadd.f32 %v4572, %v4701
  %v4745 = vadd.f32 %v4573, %v4706
  %v4746 = vadd.f32 %v4574, %v4709
  %v4747 = vadd.f32 %v4575, %v4714
  %v4748 = vadd.f32 %v4576, %v4717
  %v4749 = vadd.f32 %v4577, %v4722
  %v4750 = vadd.f32 %v4578, %v4725
  %v4751 = vadd.f32 %v4579, %v4730
  %v4752 = vadd.f32 %v4580, %v4733
  %v4753 = vadd.f32 %v4581, %v4738
  %v4754 = vld [vmem:[#allocation2 + $0xd6] sm:$0xff]
  %v4755 = vld [vmem:[#allocation2 + $0xde] sm:$0xff]
  %v4756 = vld [vmem:[#allocation2 + $0xe6] sm:$0xff]
  %v4757 = vld [vmem:[#allocation2 + $0xee] sm:$0xff]
  %v4758 = vld [vmem:[#allocation2 + $0xf6] sm:$0xff]
  %v4759 = vld [vmem:[#allocation2 + $0xfe] sm:$0xff]
  %v4760 = vld [vmem:[#allocation2 + $0x106] sm:$0xff]
  %v4761 = vld [vmem:[#allocation2 + $0x10e] sm:$0xff]
  %v4762 = vld [vmem:[#allocation2 + $0x116] sm:$0xff]
  %v4763 = vld [vmem:[#allocation2 + $0x11e] sm:$0xff]
  %v4764 = vld [vmem:[#allocation2 + $0x126] sm:$0xff]
  %v4765 = vpack.c.bf16 %v4755, %v4754
  %v4766 = vpack.c.bf16 %v4757, %v4756
  %v4767 = vpack.c.bf16 %v4759, %v4758
  %v4768 = vpack.c.bf16 %v4761, %v4760
  %v4769 = vpack.c.bf16 %v4763, %v4762
  %v4770 = vpack.c.bf16 %v4764, %v4764
  %v4771 = vld [vmem:[%s1602] sm:$0xf]
  %v4772 = vld [vmem:[%s1602 + $0x4] sm:$0xf]
  %v4773 = vld [vmem:[%s1602 + $0x8] sm:$0xf]
  %v4774 = vld [vmem:[%s1602 + $0xc] sm:$0xf]
  %v4775 = vld [vmem:[%s1602 + $0x10] sm:$0xf]
  %v4776 = vld [vmem:[%s1602 + $0x14] sm:$0xf]
  %v4777 = vld [vmem:[%s1602 + $0x18] sm:$0xf]
  %v4778 = vld [vmem:[%s1602 + $0x1c] sm:$0xf]
  %v4779 = vld [vmem:[%s1602 + $0x20] sm:$0xf]
  %v4780 = vld [vmem:[%s1602 + $0x24] sm:$0xf]
  %v4781 = vld [vmem:[%s1602 + $0x28] sm:$0xf]
  %v4782 = vld [vmem:[%s1602 + $0x2c] sm:$0xf]
  %v4783 = vld [vmem:[%s1602 + $0x30] sm:$0xf]
  %v4784 = vld [vmem:[%s1602 + $0x34] sm:$0xf]
  %v4785 = vld [vmem:[%s1602 + $0x38] sm:$0xf]
  %v4786 = vld [vmem:[%s1602 + $0x3c] sm:$0xf]
  %v4803 = vunpack.c.l.b16 %v4771
  %v4804 = vunpack.c.l.b16 %v4772
  %v4805 = vunpack.c.l.b16 %v4773
  %v4806 = vunpack.c.l.b16 %v4774
  %v4807 = vunpack.c.l.b16 %v4775
  %v4808 = vunpack.c.l.b16 %v4776
  %v4809 = vunpack.c.l.b16 %v4777
  %v4810 = vunpack.c.l.b16 %v4778
  %v4811 = vunpack.c.l.b16 %v4779
  %v4812 = vunpack.c.l.b16 %v4780
  %v4813 = vunpack.c.l.b16 %v4781
  %v4814 = vunpack.c.l.b16 %v4782
  %v4815 = vunpack.c.l.b16 %v4783
  %v4816 = vunpack.c.l.b16 %v4784
  %v4817 = vunpack.c.l.b16 %v4785
  %v4818 = vunpack.c.l.b16 %v4786
  %v4819 = vpack.c.b16 %v4804, %v4803
  %v4820 = vpack.c.b16 %v4806, %v4805
  %v4821 = vpack.c.b16 %v4808, %v4807
  %v4822 = vpack.c.b16 %v4810, %v4809
  %v4823 = vpack.c.b16 %v4812, %v4811
  %v4824 = vpack.c.b16 %v4814, %v4813
  %v4825 = vpack.c.b16 %v4816, %v4815
  %v4826 = vpack.c.b16 %v4818, %v4817
  %4835 = vmatprep.subr.bf16.mxu0 0
  %4836 = vmatpush1.bf16.msra.mxu0 %v4826
  %4837 = vmatprep.subr.bf16.mxu0 0
  %4838 = vmatpush1.bf16.msra.mxu0 %v4825
  %4839 = vmatprep.subr.bf16.mxu0 0
  %4840 = vmatpush1.bf16.msra.mxu0 %v4824
  %4841 = vmatprep.subr.bf16.mxu0 0
  %4842 = vmatpush1.bf16.msra.mxu0 %v4823
  %4843 = vmatprep.subr.bf16.mxu0 0
  %4844 = vmatpush1.bf16.msra.mxu0 %v4822
  %4845 = vmatprep.subr.bf16.mxu0 0
  %4846 = vmatpush1.bf16.msra.mxu0 %v4821
  %4847 = vmatprep.subr.bf16.mxu0 0
  %4848 = vmatpush1.bf16.msra.mxu0 %v4820
  %4849 = vmatprep.subr.bf16.mxu0 0
  %4850 = vmatpush1.bf16.msra.mxu0 %v4819
  %4851 = vmatprep.subr.bf16.mxu0 0
  %4852 = vmatpush2.bf16.msra.mxu0 0
  %4853 = vmatprep.subr.bf16.mxu0 0
  %4854 = vmatpush2.bf16.msra.mxu0 0
  %4855 = vmatprep.subr.bf16.mxu0 0
  %4856 = vmatpush2.bf16.msra.mxu0 0
  %4857 = vmatprep.subr.bf16.mxu0 0
  %4858 = vmatpush2.bf16.msra.mxu0 0
  %4859 = vmatprep.subr.bf16.mxu0 0
  %4860 = vmatpush2.bf16.msra.mxu0 0
  %4861 = vmatprep.subr.bf16.mxu0 0
  %4862 = vmatpush2.bf16.msra.mxu0 0
  %4863 = vmatprep.subr.bf16.mxu0 0
  %4864 = vmatpush2.bf16.msra.mxu0 0
  %4865 = vmatprep.subr.bf16.mxu0 0
  %4866 = vmatpush2.bf16.msra.mxu0 0
  %4867 = vmatprep.mubr.bf16.mxu0 0
  %4868 = vmatmul.mubr.bf16.gmra.mxu0 %v4765
  %v4869 = vpop.f32.mrf.mxu0
  %v4870 = vadd.f32 0.0, %v4869
  %v4871 = vpop.f32.mrf.mxu0
  %v4872 = vpop.f32.mrf.mxu0
  %v4873 = vadd.f32 0.0, %v4872
  %v4874 = vpop.f32.mrf.mxu0
  %4875 = vmatprep.mubr.bf16.mxu0 0
  %4876 = vmatmul.mubr.bf16.gmra.mxu0 %v4766
  %v4877 = vpop.f32.mrf.mxu0
  %v4878 = vadd.f32 0.0, %v4877
  %v4879 = vpop.f32.mrf.mxu0
  %v4880 = vpop.f32.mrf.mxu0
  %v4881 = vadd.f32 0.0, %v4880
  %v4882 = vpop.f32.mrf.mxu0
  %4883 = vmatprep.mubr.bf16.mxu0 0
  %4884 = vmatmul.mubr.bf16.gmra.mxu0 %v4767
  %v4885 = vpop.f32.mrf.mxu0
  %v4886 = vadd.f32 0.0, %v4885
  %v4887 = vpop.f32.mrf.mxu0
  %v4888 = vpop.f32.mrf.mxu0
  %v4889 = vadd.f32 0.0, %v4888
  %v4890 = vpop.f32.mrf.mxu0
  %4891 = vmatprep.mubr.bf16.mxu0 0
  %4892 = vmatmul.mubr.bf16.gmra.mxu0 %v4768
  %v4893 = vpop.f32.mrf.mxu0
  %v4894 = vadd.f32 0.0, %v4893
  %v4895 = vpop.f32.mrf.mxu0
  %v4896 = vpop.f32.mrf.mxu0
  %v4897 = vadd.f32 0.0, %v4896
  %v4898 = vpop.f32.mrf.mxu0
  %4899 = vmatprep.mubr.bf16.mxu0 0
  %4900 = vmatmul.mubr.bf16.gmra.mxu0 %v4769
  %v4901 = vpop.f32.mrf.mxu0
  %v4902 = vadd.f32 0.0, %v4901
  %v4903 = vpop.f32.mrf.mxu0
  %v4904 = vpop.f32.mrf.mxu0
  %v4905 = vadd.f32 0.0, %v4904
  %v4906 = vpop.f32.mrf.mxu0
  %4907 = vmatprep.mubr.bf16.mxu0 0
  %4908 = vmatmul.mubr.bf16.gmra.mxu0 %v4770
  %v4909 = vpop.f32.mrf.mxu0
  %v4910 = vadd.f32 0.0, %v4909
  %v4911 = vpop.f32.mrf.mxu0
  %v4912 = vpop.f32.mrf.mxu0
  %v4913 = vpop.f32.mrf.mxu0
  %4914 = vdwg.mxu0
  %v4915 = vadd.f32 %v4743, %v4870
  %v4916 = vadd.f32 %v4744, %v4873
  %v4917 = vadd.f32 %v4745, %v4878
  %v4918 = vadd.f32 %v4746, %v4881
  %v4919 = vadd.f32 %v4747, %v4886
  %v4920 = vadd.f32 %v4748, %v4889
  %v4921 = vadd.f32 %v4749, %v4894
  %v4922 = vadd.f32 %v4750, %v4897
  %v4923 = vadd.f32 %v4751, %v4902
  %v4924 = vadd.f32 %v4752, %v4905
  %v4925 = vadd.f32 %v4753, %v4910
  %v4926 = vadd.f32 %v4915, %v4066
  %v4927 = vadd.f32 %v4916, %v4067
  %v4928 = vadd.f32 %v4917, %v4068
  %v4929 = vadd.f32 %v4918, %v4069
  %v4930 = vadd.f32 %v4919, %v4070
  %v4931 = vadd.f32 %v4920, %v4071
  %v4932 = vadd.f32 %v4921, %v4072
  %v4933 = vadd.f32 %v4922, %v4073
  %v4934 = vadd.f32 %v4923, %v4074
  %v4935 = vadd.f32 %v4924, %v4075
  %v4936 = vadd.f32 %v4925, %v4076
  %v4937 = vadd.f32 %v4926, %v1773
  %v4938 = vadd.f32 %v4927, %v1773
  %v4939 = vadd.f32 %v4928, %v1773
  %v4940 = vadd.f32 %v4929, %v1773
  %v4941 = vadd.f32 %v4930, %v1773
  %v4942 = vadd.f32 %v4931, %v1773
  %v4943 = vadd.f32 %v4932, %v1773
  %v4944 = vadd.f32 %v4933, %v1773
  %v4945 = vadd.f32 %v4934, %v1773
  %v4946 = vadd.f32 %v4935, %v1773
  %v4947 = vadd.f32 %v4936, %v1773
  %v4948 = vmul.f32 %v4937, 0.1
  %v4949 = vmul.f32 %v4938, 0.1
  %v4950 = vmul.f32 %v4939, 0.1
  %v4951 = vmul.f32 %v4940, 0.1
  %v4952 = vmul.f32 %v4941, 0.1
  %v4953 = vmul.f32 %v4942, 0.1
  %v4954 = vmul.f32 %v4943, 0.1
  %v4955 = vmul.f32 %v4944, 0.1
  %v4956 = vmul.f32 %v4945, 0.1
  %v4957 = vmul.f32 %v4946, 0.1
  %v4958 = vmul.f32 %v4947, 0.1
  %v4959 = vmax.f32 %v4937, %v4948
  %v4960 = vmax.f32 %v4938, %v4949
  %v4961 = vmax.f32 %v4939, %v4950
  %v4962 = vmax.f32 %v4940, %v4951
  %v4963 = vmax.f32 %v4941, %v4952
  %v4964 = vmax.f32 %v4942, %v4953
  %v4965 = vmax.f32 %v4943, %v4954
  %v4966 = vmax.f32 %v4944, %v4955
  %v4967 = vmax.f32 %v4945, %v4956
  %v4968 = vmax.f32 %v4946, %v4957
  %v4969 = vmax.f32 %v4947, %v4958
  %4970 = vst [vmem:[%s3 + $0xb0] sm:$0xff] %v4959
  %4971 = vst [vmem:[%s3 + $0xb8] sm:$0xff] %v4960
  %4972 = vst [vmem:[%s3 + $0xc0] sm:$0xff] %v4961
  %4973 = vst [vmem:[%s3 + $0xc8] sm:$0xff] %v4962
  %4974 = vst [vmem:[%s3 + $0xd0] sm:$0xff] %v4963
  %4975 = vst [vmem:[%s3 + $0xd8] sm:$0xff] %v4964
  %4976 = vst [vmem:[%s3 + $0xe0] sm:$0xff] %v4965
  %4977 = vst [vmem:[%s3 + $0xe8] sm:$0xff] %v4966
  %4978 = vst [vmem:[%s3 + $0xf0] sm:$0xff] %v4967
  %4979 = vst [vmem:[%s3 + $0xf8] sm:$0xff] %v4968
  %4980 = vst [vmem:[%s3 + $0x100] sm:$0xff] %v4969
  %v4981 = vld [vmem:[#allocation2 + $0x108] sm:$0xff]
  %v4982 = vld [vmem:[#allocation2 + $0x110] sm:$0xff]
  %v4983 = vld [vmem:[#allocation2 + $0x118] sm:$0xff]
  %v4984 = vld [vmem:[#allocation2 + $0x120] sm:$0xff]
  %v4985 = vld [vmem:[#allocation2 + $0x128] sm:$0xff]
  %v4986 = vld [vmem:[#allocation2 + $0x130] sm:$0xff]
  %v4987 = vld [vmem:[#allocation2 + $0x138] sm:$0xff]
  %v4988 = vld [vmem:[#allocation2 + $0x140] sm:$0xff]
  %v4989 = vld [vmem:[#allocation2 + $0x148] sm:$0xff]
  %v4990 = vld [vmem:[#allocation2 + $0x150] sm:$0xff]
  %v4991 = vld [vmem:[#allocation2 + $0x158] sm:$0xff]
  %v4992 = vpack.c.bf16 %v4982, %v4981
  %v4993 = vpack.c.bf16 %v4984, %v4983
  %v4994 = vpack.c.bf16 %v4986, %v4985
  %v4995 = vpack.c.bf16 %v4988, %v4987
  %v4996 = vpack.c.bf16 %v4990, %v4989
  %v4997 = vpack.c.bf16 %v4991, %v4991
  %v4998 = vld [vmem:[%s1] sm:$0xf]
  %v4999 = vld [vmem:[%s1 + $0x4] sm:$0xf]
  %v5000 = vld [vmem:[%s1 + $0x8] sm:$0xf]
  %v5001 = vld [vmem:[%s1 + $0xc] sm:$0xf]
  %v5002 = vld [vmem:[%s1 + $0x10] sm:$0xf]
  %v5003 = vld [vmem:[%s1 + $0x14] sm:$0xf]
  %v5004 = vld [vmem:[%s1 + $0x18] sm:$0xf]
  %v5005 = vld [vmem:[%s1 + $0x1c] sm:$0xf]
  %v5006 = vld [vmem:[%s1 + $0x20] sm:$0xf]
  %v5007 = vld [vmem:[%s1 + $0x24] sm:$0xf]
  %v5008 = vld [vmem:[%s1 + $0x28] sm:$0xf]
  %v5009 = vld [vmem:[%s1 + $0x2c] sm:$0xf]
  %v5010 = vld [vmem:[%s1 + $0x30] sm:$0xf]
  %v5011 = vld [vmem:[%s1 + $0x34] sm:$0xf]
  %v5012 = vld [vmem:[%s1 + $0x38] sm:$0xf]
  %v5013 = vld [vmem:[%s1 + $0x3c] sm:$0xf]
  %v5014 = vld [vmem:[#allocation2 + $0x109] sm:$0xff]
  %v5015 = vld [vmem:[#allocation2 + $0x111] sm:$0xff]
  %v5016 = vld [vmem:[#allocation2 + $0x119] sm:$0xff]
  %v5017 = vld [vmem:[#allocation2 + $0x121] sm:$0xff]
  %v5018 = vld [vmem:[#allocation2 + $0x129] sm:$0xff]
  %v5019 = vld [vmem:[#allocation2 + $0x131] sm:$0xff]
  %v5020 = vld [vmem:[#allocation2 + $0x139] sm:$0xff]
  %v5021 = vld [vmem:[#allocation2 + $0x141] sm:$0xff]
  %v5022 = vld [vmem:[#allocation2 + $0x149] sm:$0xff]
  %v5023 = vld [vmem:[#allocation2 + $0x151] sm:$0xff]
  %v5024 = vld [vmem:[#allocation2 + $0x159] sm:$0xff]
  %v5025 = vpack.c.bf16 %v5015, %v5014
  %v5026 = vpack.c.bf16 %v5017, %v5016
  %v5027 = vpack.c.bf16 %v5019, %v5018
  %v5028 = vpack.c.bf16 %v5021, %v5020
  %v5029 = vpack.c.bf16 %v5023, %v5022
  %v5030 = vpack.c.bf16 %v5024, %v5024
  %v5031 = vld [vmem:[%s274] sm:$0xf]
  %v5032 = vld [vmem:[%s274 + $0x4] sm:$0xf]
  %v5033 = vld [vmem:[%s274 + $0x8] sm:$0xf]
  %v5034 = vld [vmem:[%s274 + $0xc] sm:$0xf]
  %v5035 = vld [vmem:[%s274 + $0x10] sm:$0xf]
  %v5036 = vld [vmem:[%s274 + $0x14] sm:$0xf]
  %v5037 = vld [vmem:[%s274 + $0x18] sm:$0xf]
  %v5038 = vld [vmem:[%s274 + $0x1c] sm:$0xf]
  %v5039 = vld [vmem:[%s274 + $0x20] sm:$0xf]
  %v5040 = vld [vmem:[%s274 + $0x24] sm:$0xf]
  %v5041 = vld [vmem:[%s274 + $0x28] sm:$0xf]
  %v5042 = vld [vmem:[%s274 + $0x2c] sm:$0xf]
  %v5043 = vld [vmem:[%s274 + $0x30] sm:$0xf]
  %v5044 = vld [vmem:[%s274 + $0x34] sm:$0xf]
  %v5045 = vld [vmem:[%s274 + $0x38] sm:$0xf]
  %v5046 = vld [vmem:[%s274 + $0x3c] sm:$0xf]
  %v5063 = vunpack.c.l.b16 %v5031
  %v5064 = vunpack.c.l.b16 %v5032
  %v5065 = vunpack.c.l.b16 %v5033
  %v5066 = vunpack.c.l.b16 %v5034
  %v5067 = vunpack.c.l.b16 %v5035
  %v5068 = vunpack.c.l.b16 %v5036
  %v5069 = vunpack.c.l.b16 %v5037
  %v5070 = vunpack.c.l.b16 %v5038
  %v5071 = vunpack.c.l.b16 %v5039
  %v5072 = vunpack.c.l.b16 %v5040
  %v5073 = vunpack.c.l.b16 %v5041
  %v5074 = vunpack.c.l.b16 %v5042
  %v5075 = vunpack.c.l.b16 %v5043
  %v5076 = vunpack.c.l.b16 %v5044
  %v5077 = vunpack.c.l.b16 %v5045
  %v5078 = vunpack.c.l.b16 %v5046
  %v5079 = vpack.c.b16 %v5064, %v5063
  %v5080 = vpack.c.b16 %v5066, %v5065
  %v5081 = vpack.c.b16 %v5068, %v5067
  %v5082 = vpack.c.b16 %v5070, %v5069
  %v5083 = vpack.c.b16 %v5072, %v5071
  %v5084 = vpack.c.b16 %v5074, %v5073
  %v5085 = vpack.c.b16 %v5076, %v5075
  %v5086 = vpack.c.b16 %v5078, %v5077
  %5095 = vmatprep.subr.bf16.mxu0 0
  %5096 = vmatpush1.bf16.msra.mxu0 %v5086
  %5097 = vmatprep.subr.bf16.mxu0 0
  %5098 = vmatpush1.bf16.msra.mxu0 %v5085
  %5099 = vmatprep.subr.bf16.mxu0 0
  %5100 = vmatpush1.bf16.msra.mxu0 %v5084
  %5101 = vmatprep.subr.bf16.mxu0 0
  %5102 = vmatpush1.bf16.msra.mxu0 %v5083
  %5103 = vmatprep.subr.bf16.mxu0 0
  %5104 = vmatpush1.bf16.msra.mxu0 %v5082
  %5105 = vmatprep.subr.bf16.mxu0 0
  %5106 = vmatpush1.bf16.msra.mxu0 %v5081
  %5107 = vmatprep.subr.bf16.mxu0 0
  %5108 = vmatpush1.bf16.msra.mxu0 %v5080
  %5109 = vmatprep.subr.bf16.mxu0 0
  %5110 = vmatpush1.bf16.msra.mxu0 %v5079
  %5111 = vmatprep.subr.bf16.mxu0 0
  %5112 = vmatpush2.bf16.msra.mxu0 0
  %5113 = vmatprep.subr.bf16.mxu0 0
  %5114 = vmatpush2.bf16.msra.mxu0 0
  %5115 = vmatprep.subr.bf16.mxu0 0
  %5116 = vmatpush2.bf16.msra.mxu0 0
  %5117 = vmatprep.subr.bf16.mxu0 0
  %5118 = vmatpush2.bf16.msra.mxu0 0
  %5119 = vmatprep.subr.bf16.mxu0 0
  %5120 = vmatpush2.bf16.msra.mxu0 0
  %5121 = vmatprep.subr.bf16.mxu0 0
  %5122 = vmatpush2.bf16.msra.mxu0 0
  %5123 = vmatprep.subr.bf16.mxu0 0
  %5124 = vmatpush2.bf16.msra.mxu0 0
  %5125 = vmatprep.subr.bf16.mxu0 0
  %5126 = vmatpush2.bf16.msra.mxu0 0
  %5127 = vmatprep.mubr.bf16.mxu0 0
  %5128 = vmatmul.mubr.bf16.gmra.mxu0 %v5025
  %v5129 = vpop.f32.mrf.mxu0
  %v5130 = vadd.f32 0.0, %v5129
  %v5131 = vpop.f32.mrf.mxu0
  %v5132 = vpop.f32.mrf.mxu0
  %v5133 = vadd.f32 0.0, %v5132
  %v5134 = vpop.f32.mrf.mxu0
  %5135 = vmatprep.mubr.bf16.mxu0 0
  %5136 = vmatmul.mubr.bf16.gmra.mxu0 %v5026
  %v5137 = vpop.f32.mrf.mxu0
  %v5138 = vadd.f32 0.0, %v5137
  %v5139 = vpop.f32.mrf.mxu0
  %v5140 = vpop.f32.mrf.mxu0
  %v5141 = vadd.f32 0.0, %v5140
  %v5142 = vpop.f32.mrf.mxu0
  %5143 = vmatprep.mubr.bf16.mxu0 0
  %5144 = vmatmul.mubr.bf16.gmra.mxu0 %v5027
  %v5145 = vpop.f32.mrf.mxu0
  %v5146 = vadd.f32 0.0, %v5145
  %v5147 = vpop.f32.mrf.mxu0
  %v5148 = vpop.f32.mrf.mxu0
  %v5149 = vadd.f32 0.0, %v5148
  %v5150 = vpop.f32.mrf.mxu0
  %5151 = vmatprep.mubr.bf16.mxu0 0
  %5152 = vmatmul.mubr.bf16.gmra.mxu0 %v5028
  %v5153 = vpop.f32.mrf.mxu0
  %v5154 = vadd.f32 0.0, %v5153
  %v5155 = vpop.f32.mrf.mxu0
  %v5156 = vpop.f32.mrf.mxu0
  %v5157 = vadd.f32 0.0, %v5156
  %v5158 = vpop.f32.mrf.mxu0
  %5159 = vmatprep.mubr.bf16.mxu0 0
  %5160 = vmatmul.mubr.bf16.gmra.mxu0 %v5029
  %v5161 = vpop.f32.mrf.mxu0
  %v5162 = vadd.f32 0.0, %v5161
  %v5163 = vpop.f32.mrf.mxu0
  %v5164 = vpop.f32.mrf.mxu0
  %v5165 = vadd.f32 0.0, %v5164
  %v5166 = vpop.f32.mrf.mxu0
  %5167 = vmatprep.mubr.bf16.mxu0 0
  %5168 = vmatmul.mubr.bf16.gmra.mxu0 %v5030
  %v5169 = vpop.f32.mrf.mxu0
  %v5170 = vadd.f32 0.0, %v5169
  %v5171 = vpop.f32.mrf.mxu0
  %v5172 = vpop.f32.mrf.mxu0
  %v5173 = vpop.f32.mrf.mxu0
  %5174 = vdwg.mxu0
  %v5191 = vunpack.c.l.b16 %v4998
  %v5192 = vunpack.c.l.b16 %v4999
  %v5193 = vunpack.c.l.b16 %v5000
  %v5194 = vunpack.c.l.b16 %v5001
  %v5195 = vunpack.c.l.b16 %v5002
  %v5196 = vunpack.c.l.b16 %v5003
  %v5197 = vunpack.c.l.b16 %v5004
  %v5198 = vunpack.c.l.b16 %v5005
  %v5199 = vunpack.c.l.b16 %v5006
  %v5200 = vunpack.c.l.b16 %v5007
  %v5201 = vunpack.c.l.b16 %v5008
  %v5202 = vunpack.c.l.b16 %v5009
  %v5203 = vunpack.c.l.b16 %v5010
  %v5204 = vunpack.c.l.b16 %v5011
  %v5205 = vunpack.c.l.b16 %v5012
  %v5206 = vunpack.c.l.b16 %v5013
  %v5207 = vpack.c.b16 %v5192, %v5191
  %v5208 = vpack.c.b16 %v5194, %v5193
  %v5209 = vpack.c.b16 %v5196, %v5195
  %v5210 = vpack.c.b16 %v5198, %v5197
  %v5211 = vpack.c.b16 %v5200, %v5199
  %v5212 = vpack.c.b16 %v5202, %v5201
  %v5213 = vpack.c.b16 %v5204, %v5203
  %v5214 = vpack.c.b16 %v5206, %v5205
  %5223 = vmatprep.subr.bf16.mxu0 0
  %5224 = vmatpush1.bf16.msra.mxu0 %v5214
  %5225 = vmatprep.subr.bf16.mxu0 0
  %5226 = vmatpush1.bf16.msra.mxu0 %v5213
  %5227 = vmatprep.subr.bf16.mxu0 0
  %5228 = vmatpush1.bf16.msra.mxu0 %v5212
  %5229 = vmatprep.subr.bf16.mxu0 0
  %5230 = vmatpush1.bf16.msra.mxu0 %v5211
  %5231 = vmatprep.subr.bf16.mxu0 0
  %5232 = vmatpush1.bf16.msra.mxu0 %v5210
  %5233 = vmatprep.subr.bf16.mxu0 0
  %5234 = vmatpush1.bf16.msra.mxu0 %v5209
  %5235 = vmatprep.subr.bf16.mxu0 0
  %5236 = vmatpush1.bf16.msra.mxu0 %v5208
  %5237 = vmatprep.subr.bf16.mxu0 0
  %5238 = vmatpush1.bf16.msra.mxu0 %v5207
  %5239 = vmatprep.subr.bf16.mxu0 0
  %5240 = vmatpush2.bf16.msra.mxu0 0
  %5241 = vmatprep.subr.bf16.mxu0 0
  %5242 = vmatpush2.bf16.msra.mxu0 0
  %5243 = vmatprep.subr.bf16.mxu0 0
  %5244 = vmatpush2.bf16.msra.mxu0 0
  %5245 = vmatprep.subr.bf16.mxu0 0
  %5246 = vmatpush2.bf16.msra.mxu0 0
  %5247 = vmatprep.subr.bf16.mxu0 0
  %5248 = vmatpush2.bf16.msra.mxu0 0
  %5249 = vmatprep.subr.bf16.mxu0 0
  %5250 = vmatpush2.bf16.msra.mxu0 0
  %5251 = vmatprep.subr.bf16.mxu0 0
  %5252 = vmatpush2.bf16.msra.mxu0 0
  %5253 = vmatprep.subr.bf16.mxu0 0
  %5254 = vmatpush2.bf16.msra.mxu0 0
  %5255 = vmatprep.mubr.bf16.mxu0 0
  %5256 = vmatmul.mubr.bf16.gmra.mxu0 %v4992
  %v5257 = vpop.f32.mrf.mxu0
  %v5258 = vadd.f32 %v5130, %v5257
  %v5259 = vpop.f32.mrf.mxu0
  %v5260 = vpop.f32.mrf.mxu0
  %v5261 = vadd.f32 %v5133, %v5260
  %v5262 = vpop.f32.mrf.mxu0
  %5263 = vmatprep.mubr.bf16.mxu0 0
  %5264 = vmatmul.mubr.bf16.gmra.mxu0 %v4993
  %v5265 = vpop.f32.mrf.mxu0
  %v5266 = vadd.f32 %v5138, %v5265
  %v5267 = vpop.f32.mrf.mxu0
  %v5268 = vpop.f32.mrf.mxu0
  %v5269 = vadd.f32 %v5141, %v5268
  %v5270 = vpop.f32.mrf.mxu0
  %5271 = vmatprep.mubr.bf16.mxu0 0
  %5272 = vmatmul.mubr.bf16.gmra.mxu0 %v4994
  %v5273 = vpop.f32.mrf.mxu0
  %v5274 = vadd.f32 %v5146, %v5273
  %v5275 = vpop.f32.mrf.mxu0
  %v5276 = vpop.f32.mrf.mxu0
  %v5277 = vadd.f32 %v5149, %v5276
  %v5278 = vpop.f32.mrf.mxu0
  %5279 = vmatprep.mubr.bf16.mxu0 0
  %5280 = vmatmul.mubr.bf16.gmra.mxu0 %v4995
  %v5281 = vpop.f32.mrf.mxu0
  %v5282 = vadd.f32 %v5154, %v5281
  %v5283 = vpop.f32.mrf.mxu0
  %v5284 = vpop.f32.mrf.mxu0
  %v5285 = vadd.f32 %v5157, %v5284
  %v5286 = vpop.f32.mrf.mxu0
  %5287 = vmatprep.mubr.bf16.mxu0 0
  %5288 = vmatmul.mubr.bf16.gmra.mxu0 %v4996
  %v5289 = vpop.f32.mrf.mxu0
  %v5290 = vadd.f32 %v5162, %v5289
  %v5291 = vpop.f32.mrf.mxu0
  %v5292 = vpop.f32.mrf.mxu0
  %v5293 = vadd.f32 %v5165, %v5292
  %v5294 = vpop.f32.mrf.mxu0
  %5295 = vmatprep.mubr.bf16.mxu0 0
  %5296 = vmatmul.mubr.bf16.gmra.mxu0 %v4997
  %v5297 = vpop.f32.mrf.mxu0
  %v5298 = vadd.f32 %v5170, %v5297
  %v5299 = vpop.f32.mrf.mxu0
  %v5300 = vpop.f32.mrf.mxu0
  %v5301 = vpop.f32.mrf.mxu0
  %5302 = vdwg.mxu0
  %v5303 = vld [vmem:[#allocation2 + $0x10a] sm:$0xff]
  %v5304 = vld [vmem:[#allocation2 + $0x112] sm:$0xff]
  %v5305 = vld [vmem:[#allocation2 + $0x11a] sm:$0xff]
  %v5306 = vld [vmem:[#allocation2 + $0x122] sm:$0xff]
  %v5307 = vld [vmem:[#allocation2 + $0x12a] sm:$0xff]
  %v5308 = vld [vmem:[#allocation2 + $0x132] sm:$0xff]
  %v5309 = vld [vmem:[#allocation2 + $0x13a] sm:$0xff]
  %v5310 = vld [vmem:[#allocation2 + $0x142] sm:$0xff]
  %v5311 = vld [vmem:[#allocation2 + $0x14a] sm:$0xff]
  %v5312 = vld [vmem:[#allocation2 + $0x152] sm:$0xff]
  %v5313 = vld [vmem:[#allocation2 + $0x15a] sm:$0xff]
  %v5314 = vpack.c.bf16 %v5304, %v5303
  %v5315 = vpack.c.bf16 %v5306, %v5305
  %v5316 = vpack.c.bf16 %v5308, %v5307
  %v5317 = vpack.c.bf16 %v5310, %v5309
  %v5318 = vpack.c.bf16 %v5312, %v5311
  %v5319 = vpack.c.bf16 %v5313, %v5313
  %v5320 = vld [vmem:[%s564] sm:$0xf]
  %v5321 = vld [vmem:[%s564 + $0x4] sm:$0xf]
  %v5322 = vld [vmem:[%s564 + $0x8] sm:$0xf]
  %v5323 = vld [vmem:[%s564 + $0xc] sm:$0xf]
  %v5324 = vld [vmem:[%s564 + $0x10] sm:$0xf]
  %v5325 = vld [vmem:[%s564 + $0x14] sm:$0xf]
  %v5326 = vld [vmem:[%s564 + $0x18] sm:$0xf]
  %v5327 = vld [vmem:[%s564 + $0x1c] sm:$0xf]
  %v5328 = vld [vmem:[%s564 + $0x20] sm:$0xf]
  %v5329 = vld [vmem:[%s564 + $0x24] sm:$0xf]
  %v5330 = vld [vmem:[%s564 + $0x28] sm:$0xf]
  %v5331 = vld [vmem:[%s564 + $0x2c] sm:$0xf]
  %v5332 = vld [vmem:[%s564 + $0x30] sm:$0xf]
  %v5333 = vld [vmem:[%s564 + $0x34] sm:$0xf]
  %v5334 = vld [vmem:[%s564 + $0x38] sm:$0xf]
  %v5335 = vld [vmem:[%s564 + $0x3c] sm:$0xf]
  %v5352 = vunpack.c.l.b16 %v5320
  %v5353 = vunpack.c.l.b16 %v5321
  %v5354 = vunpack.c.l.b16 %v5322
  %v5355 = vunpack.c.l.b16 %v5323
  %v5356 = vunpack.c.l.b16 %v5324
  %v5357 = vunpack.c.l.b16 %v5325
  %v5358 = vunpack.c.l.b16 %v5326
  %v5359 = vunpack.c.l.b16 %v5327
  %v5360 = vunpack.c.l.b16 %v5328
  %v5361 = vunpack.c.l.b16 %v5329
  %v5362 = vunpack.c.l.b16 %v5330
  %v5363 = vunpack.c.l.b16 %v5331
  %v5364 = vunpack.c.l.b16 %v5332
  %v5365 = vunpack.c.l.b16 %v5333
  %v5366 = vunpack.c.l.b16 %v5334
  %v5367 = vunpack.c.l.b16 %v5335
  %v5368 = vpack.c.b16 %v5353, %v5352
  %v5369 = vpack.c.b16 %v5355, %v5354
  %v5370 = vpack.c.b16 %v5357, %v5356
  %v5371 = vpack.c.b16 %v5359, %v5358
  %v5372 = vpack.c.b16 %v5361, %v5360
  %v5373 = vpack.c.b16 %v5363, %v5362
  %v5374 = vpack.c.b16 %v5365, %v5364
  %v5375 = vpack.c.b16 %v5367, %v5366
  %5384 = vmatprep.subr.bf16.mxu0 0
  %5385 = vmatpush1.bf16.msra.mxu0 %v5375
  %5386 = vmatprep.subr.bf16.mxu0 0
  %5387 = vmatpush1.bf16.msra.mxu0 %v5374
  %5388 = vmatprep.subr.bf16.mxu0 0
  %5389 = vmatpush1.bf16.msra.mxu0 %v5373
  %5390 = vmatprep.subr.bf16.mxu0 0
  %5391 = vmatpush1.bf16.msra.mxu0 %v5372
  %5392 = vmatprep.subr.bf16.mxu0 0
  %5393 = vmatpush1.bf16.msra.mxu0 %v5371
  %5394 = vmatprep.subr.bf16.mxu0 0
  %5395 = vmatpush1.bf16.msra.mxu0 %v5370
  %5396 = vmatprep.subr.bf16.mxu0 0
  %5397 = vmatpush1.bf16.msra.mxu0 %v5369
  %5398 = vmatprep.subr.bf16.mxu0 0
  %5399 = vmatpush1.bf16.msra.mxu0 %v5368
  %5400 = vmatprep.subr.bf16.mxu0 0
  %5401 = vmatpush2.bf16.msra.mxu0 0
  %5402 = vmatprep.subr.bf16.mxu0 0
  %5403 = vmatpush2.bf16.msra.mxu0 0
  %5404 = vmatprep.subr.bf16.mxu0 0
  %5405 = vmatpush2.bf16.msra.mxu0 0
  %5406 = vmatprep.subr.bf16.mxu0 0
  %5407 = vmatpush2.bf16.msra.mxu0 0
  %5408 = vmatprep.subr.bf16.mxu0 0
  %5409 = vmatpush2.bf16.msra.mxu0 0
  %5410 = vmatprep.subr.bf16.mxu0 0
  %5411 = vmatpush2.bf16.msra.mxu0 0
  %5412 = vmatprep.subr.bf16.mxu0 0
  %5413 = vmatpush2.bf16.msra.mxu0 0
  %5414 = vmatprep.subr.bf16.mxu0 0
  %5415 = vmatpush2.bf16.msra.mxu0 0
  %5416 = vmatprep.mubr.bf16.mxu0 0
  %5417 = vmatmul.mubr.bf16.gmra.mxu0 %v5314
  %v5418 = vpop.f32.mrf.mxu0
  %v5419 = vadd.f32 0.0, %v5418
  %v5420 = vpop.f32.mrf.mxu0
  %v5421 = vpop.f32.mrf.mxu0
  %v5422 = vadd.f32 0.0, %v5421
  %v5423 = vpop.f32.mrf.mxu0
  %5424 = vmatprep.mubr.bf16.mxu0 0
  %5425 = vmatmul.mubr.bf16.gmra.mxu0 %v5315
  %v5426 = vpop.f32.mrf.mxu0
  %v5427 = vadd.f32 0.0, %v5426
  %v5428 = vpop.f32.mrf.mxu0
  %v5429 = vpop.f32.mrf.mxu0
  %v5430 = vadd.f32 0.0, %v5429
  %v5431 = vpop.f32.mrf.mxu0
  %5432 = vmatprep.mubr.bf16.mxu0 0
  %5433 = vmatmul.mubr.bf16.gmra.mxu0 %v5316
  %v5434 = vpop.f32.mrf.mxu0
  %v5435 = vadd.f32 0.0, %v5434
  %v5436 = vpop.f32.mrf.mxu0
  %v5437 = vpop.f32.mrf.mxu0
  %v5438 = vadd.f32 0.0, %v5437
  %v5439 = vpop.f32.mrf.mxu0
  %5440 = vmatprep.mubr.bf16.mxu0 0
  %5441 = vmatmul.mubr.bf16.gmra.mxu0 %v5317
  %v5442 = vpop.f32.mrf.mxu0
  %v5443 = vadd.f32 0.0, %v5442
  %v5444 = vpop.f32.mrf.mxu0
  %v5445 = vpop.f32.mrf.mxu0
  %v5446 = vadd.f32 0.0, %v5445
  %v5447 = vpop.f32.mrf.mxu0
  %5448 = vmatprep.mubr.bf16.mxu0 0
  %5449 = vmatmul.mubr.bf16.gmra.mxu0 %v5318
  %v5450 = vpop.f32.mrf.mxu0
  %v5451 = vadd.f32 0.0, %v5450
  %v5452 = vpop.f32.mrf.mxu0
  %v5453 = vpop.f32.mrf.mxu0
  %v5454 = vadd.f32 0.0, %v5453
  %v5455 = vpop.f32.mrf.mxu0
  %5456 = vmatprep.mubr.bf16.mxu0 0
  %5457 = vmatmul.mubr.bf16.gmra.mxu0 %v5319
  %v5458 = vpop.f32.mrf.mxu0
  %v5459 = vadd.f32 0.0, %v5458
  %v5460 = vpop.f32.mrf.mxu0
  %v5461 = vpop.f32.mrf.mxu0
  %v5462 = vpop.f32.mrf.mxu0
  %5463 = vdwg.mxu0
  %v5464 = vadd.f32 %v5258, %v5419
  %v5465 = vadd.f32 %v5261, %v5422
  %v5466 = vadd.f32 %v5266, %v5427
  %v5467 = vadd.f32 %v5269, %v5430
  %v5468 = vadd.f32 %v5274, %v5435
  %v5469 = vadd.f32 %v5277, %v5438
  %v5470 = vadd.f32 %v5282, %v5443
  %v5471 = vadd.f32 %v5285, %v5446
  %v5472 = vadd.f32 %v5290, %v5451
  %v5473 = vadd.f32 %v5293, %v5454
  %v5474 = vadd.f32 %v5298, %v5459
  %v5475 = vld [vmem:[#allocation2 + $0x11a] sm:$0xff]
  %v5476 = vld [vmem:[#allocation2 + $0x122] sm:$0xff]
  %v5477 = vld [vmem:[#allocation2 + $0x12a] sm:$0xff]
  %v5478 = vld [vmem:[#allocation2 + $0x132] sm:$0xff]
  %v5479 = vld [vmem:[#allocation2 + $0x13a] sm:$0xff]
  %v5480 = vld [vmem:[#allocation2 + $0x142] sm:$0xff]
  %v5481 = vld [vmem:[#allocation2 + $0x14a] sm:$0xff]
  %v5482 = vld [vmem:[#allocation2 + $0x152] sm:$0xff]
  %v5483 = vld [vmem:[#allocation2 + $0x15a] sm:$0xff]
  %v5484 = vld [vmem:[#allocation2 + $0x162] sm:$0xff]
  %v5485 = vld [vmem:[#allocation2 + $0x16a] sm:$0xff]
  %v5486 = vpack.c.bf16 %v5476, %v5475
  %v5487 = vpack.c.bf16 %v5478, %v5477
  %v5488 = vpack.c.bf16 %v5480, %v5479
  %v5489 = vpack.c.bf16 %v5482, %v5481
  %v5490 = vpack.c.bf16 %v5484, %v5483
  %v5491 = vpack.c.bf16 %v5485, %v5485
  %v5492 = vld [vmem:[%s737] sm:$0xf]
  %v5493 = vld [vmem:[%s737 + $0x4] sm:$0xf]
  %v5494 = vld [vmem:[%s737 + $0x8] sm:$0xf]
  %v5495 = vld [vmem:[%s737 + $0xc] sm:$0xf]
  %v5496 = vld [vmem:[%s737 + $0x10] sm:$0xf]
  %v5497 = vld [vmem:[%s737 + $0x14] sm:$0xf]
  %v5498 = vld [vmem:[%s737 + $0x18] sm:$0xf]
  %v5499 = vld [vmem:[%s737 + $0x1c] sm:$0xf]
  %v5500 = vld [vmem:[%s737 + $0x20] sm:$0xf]
  %v5501 = vld [vmem:[%s737 + $0x24] sm:$0xf]
  %v5502 = vld [vmem:[%s737 + $0x28] sm:$0xf]
  %v5503 = vld [vmem:[%s737 + $0x2c] sm:$0xf]
  %v5504 = vld [vmem:[%s737 + $0x30] sm:$0xf]
  %v5505 = vld [vmem:[%s737 + $0x34] sm:$0xf]
  %v5506 = vld [vmem:[%s737 + $0x38] sm:$0xf]
  %v5507 = vld [vmem:[%s737 + $0x3c] sm:$0xf]
  %v5524 = vunpack.c.l.b16 %v5492
  %v5525 = vunpack.c.l.b16 %v5493
  %v5526 = vunpack.c.l.b16 %v5494
  %v5527 = vunpack.c.l.b16 %v5495
  %v5528 = vunpack.c.l.b16 %v5496
  %v5529 = vunpack.c.l.b16 %v5497
  %v5530 = vunpack.c.l.b16 %v5498
  %v5531 = vunpack.c.l.b16 %v5499
  %v5532 = vunpack.c.l.b16 %v5500
  %v5533 = vunpack.c.l.b16 %v5501
  %v5534 = vunpack.c.l.b16 %v5502
  %v5535 = vunpack.c.l.b16 %v5503
  %v5536 = vunpack.c.l.b16 %v5504
  %v5537 = vunpack.c.l.b16 %v5505
  %v5538 = vunpack.c.l.b16 %v5506
  %v5539 = vunpack.c.l.b16 %v5507
  %v5540 = vpack.c.b16 %v5525, %v5524
  %v5541 = vpack.c.b16 %v5527, %v5526
  %v5542 = vpack.c.b16 %v5529, %v5528
  %v5543 = vpack.c.b16 %v5531, %v5530
  %v5544 = vpack.c.b16 %v5533, %v5532
  %v5545 = vpack.c.b16 %v5535, %v5534
  %v5546 = vpack.c.b16 %v5537, %v5536
  %v5547 = vpack.c.b16 %v5539, %v5538
  %5556 = vmatprep.subr.bf16.mxu0 0
  %5557 = vmatpush1.bf16.msra.mxu0 %v5547
  %5558 = vmatprep.subr.bf16.mxu0 0
  %5559 = vmatpush1.bf16.msra.mxu0 %v5546
  %5560 = vmatprep.subr.bf16.mxu0 0
  %5561 = vmatpush1.bf16.msra.mxu0 %v5545
  %5562 = vmatprep.subr.bf16.mxu0 0
  %5563 = vmatpush1.bf16.msra.mxu0 %v5544
  %5564 = vmatprep.subr.bf16.mxu0 0
  %5565 = vmatpush1.bf16.msra.mxu0 %v5543
  %5566 = vmatprep.subr.bf16.mxu0 0
  %5567 = vmatpush1.bf16.msra.mxu0 %v5542
  %5568 = vmatprep.subr.bf16.mxu0 0
  %5569 = vmatpush1.bf16.msra.mxu0 %v5541
  %5570 = vmatprep.subr.bf16.mxu0 0
  %5571 = vmatpush1.bf16.msra.mxu0 %v5540
  %5572 = vmatprep.subr.bf16.mxu0 0
  %5573 = vmatpush2.bf16.msra.mxu0 0
  %5574 = vmatprep.subr.bf16.mxu0 0
  %5575 = vmatpush2.bf16.msra.mxu0 0
  %5576 = vmatprep.subr.bf16.mxu0 0
  %5577 = vmatpush2.bf16.msra.mxu0 0
  %5578 = vmatprep.subr.bf16.mxu0 0
  %5579 = vmatpush2.bf16.msra.mxu0 0
  %5580 = vmatprep.subr.bf16.mxu0 0
  %5581 = vmatpush2.bf16.msra.mxu0 0
  %5582 = vmatprep.subr.bf16.mxu0 0
  %5583 = vmatpush2.bf16.msra.mxu0 0
  %5584 = vmatprep.subr.bf16.mxu0 0
  %5585 = vmatpush2.bf16.msra.mxu0 0
  %5586 = vmatprep.subr.bf16.mxu0 0
  %5587 = vmatpush2.bf16.msra.mxu0 0
  %5588 = vmatprep.mubr.bf16.mxu0 0
  %5589 = vmatmul.mubr.bf16.gmra.mxu0 %v5486
  %v5590 = vpop.f32.mrf.mxu0
  %v5591 = vadd.f32 0.0, %v5590
  %v5592 = vpop.f32.mrf.mxu0
  %v5593 = vpop.f32.mrf.mxu0
  %v5594 = vadd.f32 0.0, %v5593
  %v5595 = vpop.f32.mrf.mxu0
  %5596 = vmatprep.mubr.bf16.mxu0 0
  %5597 = vmatmul.mubr.bf16.gmra.mxu0 %v5487
  %v5598 = vpop.f32.mrf.mxu0
  %v5599 = vadd.f32 0.0, %v5598
  %v5600 = vpop.f32.mrf.mxu0
  %v5601 = vpop.f32.mrf.mxu0
  %v5602 = vadd.f32 0.0, %v5601
  %v5603 = vpop.f32.mrf.mxu0
  %5604 = vmatprep.mubr.bf16.mxu0 0
  %5605 = vmatmul.mubr.bf16.gmra.mxu0 %v5488
  %v5606 = vpop.f32.mrf.mxu0
  %v5607 = vadd.f32 0.0, %v5606
  %v5608 = vpop.f32.mrf.mxu0
  %v5609 = vpop.f32.mrf.mxu0
  %v5610 = vadd.f32 0.0, %v5609
  %v5611 = vpop.f32.mrf.mxu0
  %5612 = vmatprep.mubr.bf16.mxu0 0
  %5613 = vmatmul.mubr.bf16.gmra.mxu0 %v5489
  %v5614 = vpop.f32.mrf.mxu0
  %v5615 = vadd.f32 0.0, %v5614
  %v5616 = vpop.f32.mrf.mxu0
  %v5617 = vpop.f32.mrf.mxu0
  %v5618 = vadd.f32 0.0, %v5617
  %v5619 = vpop.f32.mrf.mxu0
  %5620 = vmatprep.mubr.bf16.mxu0 0
  %5621 = vmatmul.mubr.bf16.gmra.mxu0 %v5490
  %v5622 = vpop.f32.mrf.mxu0
  %v5623 = vadd.f32 0.0, %v5622
  %v5624 = vpop.f32.mrf.mxu0
  %v5625 = vpop.f32.mrf.mxu0
  %v5626 = vadd.f32 0.0, %v5625
  %v5627 = vpop.f32.mrf.mxu0
  %5628 = vmatprep.mubr.bf16.mxu0 0
  %5629 = vmatmul.mubr.bf16.gmra.mxu0 %v5491
  %v5630 = vpop.f32.mrf.mxu0
  %v5631 = vadd.f32 0.0, %v5630
  %v5632 = vpop.f32.mrf.mxu0
  %v5633 = vpop.f32.mrf.mxu0
  %v5634 = vpop.f32.mrf.mxu0
  %5635 = vdwg.mxu0
  %v5636 = vadd.f32 %v5464, %v5591
  %v5637 = vadd.f32 %v5465, %v5594
  %v5638 = vadd.f32 %v5466, %v5599
  %v5639 = vadd.f32 %v5467, %v5602
  %v5640 = vadd.f32 %v5468, %v5607
  %v5641 = vadd.f32 %v5469, %v5610
  %v5642 = vadd.f32 %v5470, %v5615
  %v5643 = vadd.f32 %v5471, %v5618
  %v5644 = vadd.f32 %v5472, %v5623
  %v5645 = vadd.f32 %v5473, %v5626
  %v5646 = vadd.f32 %v5474, %v5631
  %v5647 = vld [vmem:[#allocation2 + $0x11b] sm:$0xff]
  %v5648 = vld [vmem:[#allocation2 + $0x123] sm:$0xff]
  %v5649 = vld [vmem:[#allocation2 + $0x12b] sm:$0xff]
  %v5650 = vld [vmem:[#allocation2 + $0x133] sm:$0xff]
  %v5651 = vld [vmem:[#allocation2 + $0x13b] sm:$0xff]
  %v5652 = vld [vmem:[#allocation2 + $0x143] sm:$0xff]
  %v5653 = vld [vmem:[#allocation2 + $0x14b] sm:$0xff]
  %v5654 = vld [vmem:[#allocation2 + $0x153] sm:$0xff]
  %v5655 = vld [vmem:[#allocation2 + $0x15b] sm:$0xff]
  %v5656 = vld [vmem:[#allocation2 + $0x163] sm:$0xff]
  %v5657 = vld [vmem:[#allocation2 + $0x16b] sm:$0xff]
  %v5658 = vpack.c.bf16 %v5648, %v5647
  %v5659 = vpack.c.bf16 %v5650, %v5649
  %v5660 = vpack.c.bf16 %v5652, %v5651
  %v5661 = vpack.c.bf16 %v5654, %v5653
  %v5662 = vpack.c.bf16 %v5656, %v5655
  %v5663 = vpack.c.bf16 %v5657, %v5657
  %v5664 = vld [vmem:[%s910] sm:$0xf]
  %v5665 = vld [vmem:[%s910 + $0x4] sm:$0xf]
  %v5666 = vld [vmem:[%s910 + $0x8] sm:$0xf]
  %v5667 = vld [vmem:[%s910 + $0xc] sm:$0xf]
  %v5668 = vld [vmem:[%s910 + $0x10] sm:$0xf]
  %v5669 = vld [vmem:[%s910 + $0x14] sm:$0xf]
  %v5670 = vld [vmem:[%s910 + $0x18] sm:$0xf]
  %v5671 = vld [vmem:[%s910 + $0x1c] sm:$0xf]
  %v5672 = vld [vmem:[%s910 + $0x20] sm:$0xf]
  %v5673 = vld [vmem:[%s910 + $0x24] sm:$0xf]
  %v5674 = vld [vmem:[%s910 + $0x28] sm:$0xf]
  %v5675 = vld [vmem:[%s910 + $0x2c] sm:$0xf]
  %v5676 = vld [vmem:[%s910 + $0x30] sm:$0xf]
  %v5677 = vld [vmem:[%s910 + $0x34] sm:$0xf]
  %v5678 = vld [vmem:[%s910 + $0x38] sm:$0xf]
  %v5679 = vld [vmem:[%s910 + $0x3c] sm:$0xf]
  %v5696 = vunpack.c.l.b16 %v5664
  %v5697 = vunpack.c.l.b16 %v5665
  %v5698 = vunpack.c.l.b16 %v5666
  %v5699 = vunpack.c.l.b16 %v5667
  %v5700 = vunpack.c.l.b16 %v5668
  %v5701 = vunpack.c.l.b16 %v5669
  %v5702 = vunpack.c.l.b16 %v5670
  %v5703 = vunpack.c.l.b16 %v5671
  %v5704 = vunpack.c.l.b16 %v5672
  %v5705 = vunpack.c.l.b16 %v5673
  %v5706 = vunpack.c.l.b16 %v5674
  %v5707 = vunpack.c.l.b16 %v5675
  %v5708 = vunpack.c.l.b16 %v5676
  %v5709 = vunpack.c.l.b16 %v5677
  %v5710 = vunpack.c.l.b16 %v5678
  %v5711 = vunpack.c.l.b16 %v5679
  %v5712 = vpack.c.b16 %v5697, %v5696
  %v5713 = vpack.c.b16 %v5699, %v5698
  %v5714 = vpack.c.b16 %v5701, %v5700
  %v5715 = vpack.c.b16 %v5703, %v5702
  %v5716 = vpack.c.b16 %v5705, %v5704
  %v5717 = vpack.c.b16 %v5707, %v5706
  %v5718 = vpack.c.b16 %v5709, %v5708
  %v5719 = vpack.c.b16 %v5711, %v5710
  %5728 = vmatprep.subr.bf16.mxu0 0
  %5729 = vmatpush1.bf16.msra.mxu0 %v5719
  %5730 = vmatprep.subr.bf16.mxu0 0
  %5731 = vmatpush1.bf16.msra.mxu0 %v5718
  %5732 = vmatprep.subr.bf16.mxu0 0
  %5733 = vmatpush1.bf16.msra.mxu0 %v5717
  %5734 = vmatprep.subr.bf16.mxu0 0
  %5735 = vmatpush1.bf16.msra.mxu0 %v5716
  %5736 = vmatprep.subr.bf16.mxu0 0
  %5737 = vmatpush1.bf16.msra.mxu0 %v5715
  %5738 = vmatprep.subr.bf16.mxu0 0
  %5739 = vmatpush1.bf16.msra.mxu0 %v5714
  %5740 = vmatprep.subr.bf16.mxu0 0
  %5741 = vmatpush1.bf16.msra.mxu0 %v5713
  %5742 = vmatprep.subr.bf16.mxu0 0
  %5743 = vmatpush1.bf16.msra.mxu0 %v5712
  %5744 = vmatprep.subr.bf16.mxu0 0
  %5745 = vmatpush2.bf16.msra.mxu0 0
  %5746 = vmatprep.subr.bf16.mxu0 0
  %5747 = vmatpush2.bf16.msra.mxu0 0
  %5748 = vmatprep.subr.bf16.mxu0 0
  %5749 = vmatpush2.bf16.msra.mxu0 0
  %5750 = vmatprep.subr.bf16.mxu0 0
  %5751 = vmatpush2.bf16.msra.mxu0 0
  %5752 = vmatprep.subr.bf16.mxu0 0
  %5753 = vmatpush2.bf16.msra.mxu0 0
  %5754 = vmatprep.subr.bf16.mxu0 0
  %5755 = vmatpush2.bf16.msra.mxu0 0
  %5756 = vmatprep.subr.bf16.mxu0 0
  %5757 = vmatpush2.bf16.msra.mxu0 0
  %5758 = vmatprep.subr.bf16.mxu0 0
  %5759 = vmatpush2.bf16.msra.mxu0 0
  %5760 = vmatprep.mubr.bf16.mxu0 0
  %5761 = vmatmul.mubr.bf16.gmra.mxu0 %v5658
  %v5762 = vpop.f32.mrf.mxu0
  %v5763 = vadd.f32 0.0, %v5762
  %v5764 = vpop.f32.mrf.mxu0
  %v5765 = vpop.f32.mrf.mxu0
  %v5766 = vadd.f32 0.0, %v5765
  %v5767 = vpop.f32.mrf.mxu0
  %5768 = vmatprep.mubr.bf16.mxu0 0
  %5769 = vmatmul.mubr.bf16.gmra.mxu0 %v5659
  %v5770 = vpop.f32.mrf.mxu0
  %v5771 = vadd.f32 0.0, %v5770
  %v5772 = vpop.f32.mrf.mxu0
  %v5773 = vpop.f32.mrf.mxu0
  %v5774 = vadd.f32 0.0, %v5773
  %v5775 = vpop.f32.mrf.mxu0
  %5776 = vmatprep.mubr.bf16.mxu0 0
  %5777 = vmatmul.mubr.bf16.gmra.mxu0 %v5660
  %v5778 = vpop.f32.mrf.mxu0
  %v5779 = vadd.f32 0.0, %v5778
  %v5780 = vpop.f32.mrf.mxu0
  %v5781 = vpop.f32.mrf.mxu0
  %v5782 = vadd.f32 0.0, %v5781
  %v5783 = vpop.f32.mrf.mxu0
  %5784 = vmatprep.mubr.bf16.mxu0 0
  %5785 = vmatmul.mubr.bf16.gmra.mxu0 %v5661
  %v5786 = vpop.f32.mrf.mxu0
  %v5787 = vadd.f32 0.0, %v5786
  %v5788 = vpop.f32.mrf.mxu0
  %v5789 = vpop.f32.mrf.mxu0
  %v5790 = vadd.f32 0.0, %v5789
  %v5791 = vpop.f32.mrf.mxu0
  %5792 = vmatprep.mubr.bf16.mxu0 0
  %5793 = vmatmul.mubr.bf16.gmra.mxu0 %v5662
  %v5794 = vpop.f32.mrf.mxu0
  %v5795 = vadd.f32 0.0, %v5794
  %v5796 = vpop.f32.mrf.mxu0
  %v5797 = vpop.f32.mrf.mxu0
  %v5798 = vadd.f32 0.0, %v5797
  %v5799 = vpop.f32.mrf.mxu0
  %5800 = vmatprep.mubr.bf16.mxu0 0
  %5801 = vmatmul.mubr.bf16.gmra.mxu0 %v5663
  %v5802 = vpop.f32.mrf.mxu0
  %v5803 = vadd.f32 0.0, %v5802
  %v5804 = vpop.f32.mrf.mxu0
  %v5805 = vpop.f32.mrf.mxu0
  %v5806 = vpop.f32.mrf.mxu0
  %5807 = vdwg.mxu0
  %v5808 = vadd.f32 %v5636, %v5763
  %v5809 = vadd.f32 %v5637, %v5766
  %v5810 = vadd.f32 %v5638, %v5771
  %v5811 = vadd.f32 %v5639, %v5774
  %v5812 = vadd.f32 %v5640, %v5779
  %v5813 = vadd.f32 %v5641, %v5782
  %v5814 = vadd.f32 %v5642, %v5787
  %v5815 = vadd.f32 %v5643, %v5790
  %v5816 = vadd.f32 %v5644, %v5795
  %v5817 = vadd.f32 %v5645, %v5798
  %v5818 = vadd.f32 %v5646, %v5803
  %v5819 = vld [vmem:[#allocation2 + $0x11c] sm:$0xff]
  %v5820 = vld [vmem:[#allocation2 + $0x124] sm:$0xff]
  %v5821 = vld [vmem:[#allocation2 + $0x12c] sm:$0xff]
  %v5822 = vld [vmem:[#allocation2 + $0x134] sm:$0xff]
  %v5823 = vld [vmem:[#allocation2 + $0x13c] sm:$0xff]
  %v5824 = vld [vmem:[#allocation2 + $0x144] sm:$0xff]
  %v5825 = vld [vmem:[#allocation2 + $0x14c] sm:$0xff]
  %v5826 = vld [vmem:[#allocation2 + $0x154] sm:$0xff]
  %v5827 = vld [vmem:[#allocation2 + $0x15c] sm:$0xff]
  %v5828 = vld [vmem:[#allocation2 + $0x164] sm:$0xff]
  %v5829 = vld [vmem:[#allocation2 + $0x16c] sm:$0xff]
  %v5830 = vpack.c.bf16 %v5820, %v5819
  %v5831 = vpack.c.bf16 %v5822, %v5821
  %v5832 = vpack.c.bf16 %v5824, %v5823
  %v5833 = vpack.c.bf16 %v5826, %v5825
  %v5834 = vpack.c.bf16 %v5828, %v5827
  %v5835 = vpack.c.bf16 %v5829, %v5829
  %v5836 = vld [vmem:[%s1083] sm:$0xf]
  %v5837 = vld [vmem:[%s1083 + $0x4] sm:$0xf]
  %v5838 = vld [vmem:[%s1083 + $0x8] sm:$0xf]
  %v5839 = vld [vmem:[%s1083 + $0xc] sm:$0xf]
  %v5840 = vld [vmem:[%s1083 + $0x10] sm:$0xf]
  %v5841 = vld [vmem:[%s1083 + $0x14] sm:$0xf]
  %v5842 = vld [vmem:[%s1083 + $0x18] sm:$0xf]
  %v5843 = vld [vmem:[%s1083 + $0x1c] sm:$0xf]
  %v5844 = vld [vmem:[%s1083 + $0x20] sm:$0xf]
  %v5845 = vld [vmem:[%s1083 + $0x24] sm:$0xf]
  %v5846 = vld [vmem:[%s1083 + $0x28] sm:$0xf]
  %v5847 = vld [vmem:[%s1083 + $0x2c] sm:$0xf]
  %v5848 = vld [vmem:[%s1083 + $0x30] sm:$0xf]
  %v5849 = vld [vmem:[%s1083 + $0x34] sm:$0xf]
  %v5850 = vld [vmem:[%s1083 + $0x38] sm:$0xf]
  %v5851 = vld [vmem:[%s1083 + $0x3c] sm:$0xf]
  %v5868 = vunpack.c.l.b16 %v5836
  %v5869 = vunpack.c.l.b16 %v5837
  %v5870 = vunpack.c.l.b16 %v5838
  %v5871 = vunpack.c.l.b16 %v5839
  %v5872 = vunpack.c.l.b16 %v5840
  %v5873 = vunpack.c.l.b16 %v5841
  %v5874 = vunpack.c.l.b16 %v5842
  %v5875 = vunpack.c.l.b16 %v5843
  %v5876 = vunpack.c.l.b16 %v5844
  %v5877 = vunpack.c.l.b16 %v5845
  %v5878 = vunpack.c.l.b16 %v5846
  %v5879 = vunpack.c.l.b16 %v5847
  %v5880 = vunpack.c.l.b16 %v5848
  %v5881 = vunpack.c.l.b16 %v5849
  %v5882 = vunpack.c.l.b16 %v5850
  %v5883 = vunpack.c.l.b16 %v5851
  %v5884 = vpack.c.b16 %v5869, %v5868
  %v5885 = vpack.c.b16 %v5871, %v5870
  %v5886 = vpack.c.b16 %v5873, %v5872
  %v5887 = vpack.c.b16 %v5875, %v5874
  %v5888 = vpack.c.b16 %v5877, %v5876
  %v5889 = vpack.c.b16 %v5879, %v5878
  %v5890 = vpack.c.b16 %v5881, %v5880
  %v5891 = vpack.c.b16 %v5883, %v5882
  %5900 = vmatprep.subr.bf16.mxu0 0
  %5901 = vmatpush1.bf16.msra.mxu0 %v5891
  %5902 = vmatprep.subr.bf16.mxu0 0
  %5903 = vmatpush1.bf16.msra.mxu0 %v5890
  %5904 = vmatprep.subr.bf16.mxu0 0
  %5905 = vmatpush1.bf16.msra.mxu0 %v5889
  %5906 = vmatprep.subr.bf16.mxu0 0
  %5907 = vmatpush1.bf16.msra.mxu0 %v5888
  %5908 = vmatprep.subr.bf16.mxu0 0
  %5909 = vmatpush1.bf16.msra.mxu0 %v5887
  %5910 = vmatprep.subr.bf16.mxu0 0
  %5911 = vmatpush1.bf16.msra.mxu0 %v5886
  %5912 = vmatprep.subr.bf16.mxu0 0
  %5913 = vmatpush1.bf16.msra.mxu0 %v5885
  %5914 = vmatprep.subr.bf16.mxu0 0
  %5915 = vmatpush1.bf16.msra.mxu0 %v5884
  %5916 = vmatprep.subr.bf16.mxu0 0
  %5917 = vmatpush2.bf16.msra.mxu0 0
  %5918 = vmatprep.subr.bf16.mxu0 0
  %5919 = vmatpush2.bf16.msra.mxu0 0
  %5920 = vmatprep.subr.bf16.mxu0 0
  %5921 = vmatpush2.bf16.msra.mxu0 0
  %5922 = vmatprep.subr.bf16.mxu0 0
  %5923 = vmatpush2.bf16.msra.mxu0 0
  %5924 = vmatprep.subr.bf16.mxu0 0
  %5925 = vmatpush2.bf16.msra.mxu0 0
  %5926 = vmatprep.subr.bf16.mxu0 0
  %5927 = vmatpush2.bf16.msra.mxu0 0
  %5928 = vmatprep.subr.bf16.mxu0 0
  %5929 = vmatpush2.bf16.msra.mxu0 0
  %5930 = vmatprep.subr.bf16.mxu0 0
  %5931 = vmatpush2.bf16.msra.mxu0 0
  %5932 = vmatprep.mubr.bf16.mxu0 0
  %5933 = vmatmul.mubr.bf16.gmra.mxu0 %v5830
  %v5934 = vpop.f32.mrf.mxu0
  %v5935 = vadd.f32 0.0, %v5934
  %v5936 = vpop.f32.mrf.mxu0
  %v5937 = vpop.f32.mrf.mxu0
  %v5938 = vadd.f32 0.0, %v5937
  %v5939 = vpop.f32.mrf.mxu0
  %5940 = vmatprep.mubr.bf16.mxu0 0
  %5941 = vmatmul.mubr.bf16.gmra.mxu0 %v5831
  %v5942 = vpop.f32.mrf.mxu0
  %v5943 = vadd.f32 0.0, %v5942
  %v5944 = vpop.f32.mrf.mxu0
  %v5945 = vpop.f32.mrf.mxu0
  %v5946 = vadd.f32 0.0, %v5945
  %v5947 = vpop.f32.mrf.mxu0
  %5948 = vmatprep.mubr.bf16.mxu0 0
  %5949 = vmatmul.mubr.bf16.gmra.mxu0 %v5832
  %v5950 = vpop.f32.mrf.mxu0
  %v5951 = vadd.f32 0.0, %v5950
  %v5952 = vpop.f32.mrf.mxu0
  %v5953 = vpop.f32.mrf.mxu0
  %v5954 = vadd.f32 0.0, %v5953
  %v5955 = vpop.f32.mrf.mxu0
  %5956 = vmatprep.mubr.bf16.mxu0 0
  %5957 = vmatmul.mubr.bf16.gmra.mxu0 %v5833
  %v5958 = vpop.f32.mrf.mxu0
  %v5959 = vadd.f32 0.0, %v5958
  %v5960 = vpop.f32.mrf.mxu0
  %v5961 = vpop.f32.mrf.mxu0
  %v5962 = vadd.f32 0.0, %v5961
  %v5963 = vpop.f32.mrf.mxu0
  %5964 = vmatprep.mubr.bf16.mxu0 0
  %5965 = vmatmul.mubr.bf16.gmra.mxu0 %v5834
  %v5966 = vpop.f32.mrf.mxu0
  %v5967 = vadd.f32 0.0, %v5966
  %v5968 = vpop.f32.mrf.mxu0
  %v5969 = vpop.f32.mrf.mxu0
  %v5970 = vadd.f32 0.0, %v5969
  %v5971 = vpop.f32.mrf.mxu0
  %5972 = vmatprep.mubr.bf16.mxu0 0
  %5973 = vmatmul.mubr.bf16.gmra.mxu0 %v5835
  %v5974 = vpop.f32.mrf.mxu0
  %v5975 = vadd.f32 0.0, %v5974
  %v5976 = vpop.f32.mrf.mxu0
  %v5977 = vpop.f32.mrf.mxu0
  %v5978 = vpop.f32.mrf.mxu0
  %5979 = vdwg.mxu0
  %v5980 = vadd.f32 %v5808, %v5935
  %v5981 = vadd.f32 %v5809, %v5938
  %v5982 = vadd.f32 %v5810, %v5943
  %v5983 = vadd.f32 %v5811, %v5946
  %v5984 = vadd.f32 %v5812, %v5951
  %v5985 = vadd.f32 %v5813, %v5954
  %v5986 = vadd.f32 %v5814, %v5959
  %v5987 = vadd.f32 %v5815, %v5962
  %v5988 = vadd.f32 %v5816, %v5967
  %v5989 = vadd.f32 %v5817, %v5970
  %v5990 = vadd.f32 %v5818, %v5975
  %v5991 = vld [vmem:[#allocation2 + $0x12c] sm:$0xff]
  %v5992 = vld [vmem:[#allocation2 + $0x134] sm:$0xff]
  %v5993 = vld [vmem:[#allocation2 + $0x13c] sm:$0xff]
  %v5994 = vld [vmem:[#allocation2 + $0x144] sm:$0xff]
  %v5995 = vld [vmem:[#allocation2 + $0x14c] sm:$0xff]
  %v5996 = vld [vmem:[#allocation2 + $0x154] sm:$0xff]
  %v5997 = vld [vmem:[#allocation2 + $0x15c] sm:$0xff]
  %v5998 = vld [vmem:[#allocation2 + $0x164] sm:$0xff]
  %v5999 = vld [vmem:[#allocation2 + $0x16c] sm:$0xff]
  %v6000 = vld [vmem:[#allocation2 + $0x174] sm:$0xff]
  %v6001 = vld [vmem:[#allocation2 + $0x17c] sm:$0xff]
  %v6002 = vpack.c.bf16 %v5992, %v5991
  %v6003 = vpack.c.bf16 %v5994, %v5993
  %v6004 = vpack.c.bf16 %v5996, %v5995
  %v6005 = vpack.c.bf16 %v5998, %v5997
  %v6006 = vpack.c.bf16 %v6000, %v5999
  %v6007 = vpack.c.bf16 %v6001, %v6001
  %v6008 = vld [vmem:[%s1256] sm:$0xf]
  %v6009 = vld [vmem:[%s1256 + $0x4] sm:$0xf]
  %v6010 = vld [vmem:[%s1256 + $0x8] sm:$0xf]
  %v6011 = vld [vmem:[%s1256 + $0xc] sm:$0xf]
  %v6012 = vld [vmem:[%s1256 + $0x10] sm:$0xf]
  %v6013 = vld [vmem:[%s1256 + $0x14] sm:$0xf]
  %v6014 = vld [vmem:[%s1256 + $0x18] sm:$0xf]
  %v6015 = vld [vmem:[%s1256 + $0x1c] sm:$0xf]
  %v6016 = vld [vmem:[%s1256 + $0x20] sm:$0xf]
  %v6017 = vld [vmem:[%s1256 + $0x24] sm:$0xf]
  %v6018 = vld [vmem:[%s1256 + $0x28] sm:$0xf]
  %v6019 = vld [vmem:[%s1256 + $0x2c] sm:$0xf]
  %v6020 = vld [vmem:[%s1256 + $0x30] sm:$0xf]
  %v6021 = vld [vmem:[%s1256 + $0x34] sm:$0xf]
  %v6022 = vld [vmem:[%s1256 + $0x38] sm:$0xf]
  %v6023 = vld [vmem:[%s1256 + $0x3c] sm:$0xf]
  %v6040 = vunpack.c.l.b16 %v6008
  %v6041 = vunpack.c.l.b16 %v6009
  %v6042 = vunpack.c.l.b16 %v6010
  %v6043 = vunpack.c.l.b16 %v6011
  %v6044 = vunpack.c.l.b16 %v6012
  %v6045 = vunpack.c.l.b16 %v6013
  %v6046 = vunpack.c.l.b16 %v6014
  %v6047 = vunpack.c.l.b16 %v6015
  %v6048 = vunpack.c.l.b16 %v6016
  %v6049 = vunpack.c.l.b16 %v6017
  %v6050 = vunpack.c.l.b16 %v6018
  %v6051 = vunpack.c.l.b16 %v6019
  %v6052 = vunpack.c.l.b16 %v6020
  %v6053 = vunpack.c.l.b16 %v6021
  %v6054 = vunpack.c.l.b16 %v6022
  %v6055 = vunpack.c.l.b16 %v6023
  %v6056 = vpack.c.b16 %v6041, %v6040
  %v6057 = vpack.c.b16 %v6043, %v6042
  %v6058 = vpack.c.b16 %v6045, %v6044
  %v6059 = vpack.c.b16 %v6047, %v6046
  %v6060 = vpack.c.b16 %v6049, %v6048
  %v6061 = vpack.c.b16 %v6051, %v6050
  %v6062 = vpack.c.b16 %v6053, %v6052
  %v6063 = vpack.c.b16 %v6055, %v6054
  %6072 = vmatprep.subr.bf16.mxu0 0
  %6073 = vmatpush1.bf16.msra.mxu0 %v6063
  %6074 = vmatprep.subr.bf16.mxu0 0
  %6075 = vmatpush1.bf16.msra.mxu0 %v6062
  %6076 = vmatprep.subr.bf16.mxu0 0
  %6077 = vmatpush1.bf16.msra.mxu0 %v6061
  %6078 = vmatprep.subr.bf16.mxu0 0
  %6079 = vmatpush1.bf16.msra.mxu0 %v6060
  %6080 = vmatprep.subr.bf16.mxu0 0
  %6081 = vmatpush1.bf16.msra.mxu0 %v6059
  %6082 = vmatprep.subr.bf16.mxu0 0
  %6083 = vmatpush1.bf16.msra.mxu0 %v6058
  %6084 = vmatprep.subr.bf16.mxu0 0
  %6085 = vmatpush1.bf16.msra.mxu0 %v6057
  %6086 = vmatprep.subr.bf16.mxu0 0
  %6087 = vmatpush1.bf16.msra.mxu0 %v6056
  %6088 = vmatprep.subr.bf16.mxu0 0
  %6089 = vmatpush2.bf16.msra.mxu0 0
  %6090 = vmatprep.subr.bf16.mxu0 0
  %6091 = vmatpush2.bf16.msra.mxu0 0
  %6092 = vmatprep.subr.bf16.mxu0 0
  %6093 = vmatpush2.bf16.msra.mxu0 0
  %6094 = vmatprep.subr.bf16.mxu0 0
  %6095 = vmatpush2.bf16.msra.mxu0 0
  %6096 = vmatprep.subr.bf16.mxu0 0
  %6097 = vmatpush2.bf16.msra.mxu0 0
  %6098 = vmatprep.subr.bf16.mxu0 0
  %6099 = vmatpush2.bf16.msra.mxu0 0
  %6100 = vmatprep.subr.bf16.mxu0 0
  %6101 = vmatpush2.bf16.msra.mxu0 0
  %6102 = vmatprep.subr.bf16.mxu0 0
  %6103 = vmatpush2.bf16.msra.mxu0 0
  %6104 = vmatprep.mubr.bf16.mxu0 0
  %6105 = vmatmul.mubr.bf16.gmra.mxu0 %v6002
  %v6106 = vpop.f32.mrf.mxu0
  %v6107 = vadd.f32 0.0, %v6106
  %v6108 = vpop.f32.mrf.mxu0
  %v6109 = vpop.f32.mrf.mxu0
  %v6110 = vadd.f32 0.0, %v6109
  %v6111 = vpop.f32.mrf.mxu0
  %6112 = vmatprep.mubr.bf16.mxu0 0
  %6113 = vmatmul.mubr.bf16.gmra.mxu0 %v6003
  %v6114 = vpop.f32.mrf.mxu0
  %v6115 = vadd.f32 0.0, %v6114
  %v6116 = vpop.f32.mrf.mxu0
  %v6117 = vpop.f32.mrf.mxu0
  %v6118 = vadd.f32 0.0, %v6117
  %v6119 = vpop.f32.mrf.mxu0
  %6120 = vmatprep.mubr.bf16.mxu0 0
  %6121 = vmatmul.mubr.bf16.gmra.mxu0 %v6004
  %v6122 = vpop.f32.mrf.mxu0
  %v6123 = vadd.f32 0.0, %v6122
  %v6124 = vpop.f32.mrf.mxu0
  %v6125 = vpop.f32.mrf.mxu0
  %v6126 = vadd.f32 0.0, %v6125
  %v6127 = vpop.f32.mrf.mxu0
  %6128 = vmatprep.mubr.bf16.mxu0 0
  %6129 = vmatmul.mubr.bf16.gmra.mxu0 %v6005
  %v6130 = vpop.f32.mrf.mxu0
  %v6131 = vadd.f32 0.0, %v6130
  %v6132 = vpop.f32.mrf.mxu0
  %v6133 = vpop.f32.mrf.mxu0
  %v6134 = vadd.f32 0.0, %v6133
  %v6135 = vpop.f32.mrf.mxu0
  %6136 = vmatprep.mubr.bf16.mxu0 0
  %6137 = vmatmul.mubr.bf16.gmra.mxu0 %v6006
  %v6138 = vpop.f32.mrf.mxu0
  %v6139 = vadd.f32 0.0, %v6138
  %v6140 = vpop.f32.mrf.mxu0
  %v6141 = vpop.f32.mrf.mxu0
  %v6142 = vadd.f32 0.0, %v6141
  %v6143 = vpop.f32.mrf.mxu0
  %6144 = vmatprep.mubr.bf16.mxu0 0
  %6145 = vmatmul.mubr.bf16.gmra.mxu0 %v6007
  %v6146 = vpop.f32.mrf.mxu0
  %v6147 = vadd.f32 0.0, %v6146
  %v6148 = vpop.f32.mrf.mxu0
  %v6149 = vpop.f32.mrf.mxu0
  %v6150 = vpop.f32.mrf.mxu0
  %6151 = vdwg.mxu0
  %v6152 = vadd.f32 %v5980, %v6107
  %v6153 = vadd.f32 %v5981, %v6110
  %v6154 = vadd.f32 %v5982, %v6115
  %v6155 = vadd.f32 %v5983, %v6118
  %v6156 = vadd.f32 %v5984, %v6123
  %v6157 = vadd.f32 %v5985, %v6126
  %v6158 = vadd.f32 %v5986, %v6131
  %v6159 = vadd.f32 %v5987, %v6134
  %v6160 = vadd.f32 %v5988, %v6139
  %v6161 = vadd.f32 %v5989, %v6142
  %v6162 = vadd.f32 %v5990, %v6147
  %v6163 = vld [vmem:[#allocation2 + $0x12d] sm:$0xff]
  %v6164 = vld [vmem:[#allocation2 + $0x135] sm:$0xff]
  %v6165 = vld [vmem:[#allocation2 + $0x13d] sm:$0xff]
  %v6166 = vld [vmem:[#allocation2 + $0x145] sm:$0xff]
  %v6167 = vld [vmem:[#allocation2 + $0x14d] sm:$0xff]
  %v6168 = vld [vmem:[#allocation2 + $0x155] sm:$0xff]
  %v6169 = vld [vmem:[#allocation2 + $0x15d] sm:$0xff]
  %v6170 = vld [vmem:[#allocation2 + $0x165] sm:$0xff]
  %v6171 = vld [vmem:[#allocation2 + $0x16d] sm:$0xff]
  %v6172 = vld [vmem:[#allocation2 + $0x175] sm:$0xff]
  %v6173 = vld [vmem:[#allocation2 + $0x17d] sm:$0xff]
  %v6174 = vpack.c.bf16 %v6164, %v6163
  %v6175 = vpack.c.bf16 %v6166, %v6165
  %v6176 = vpack.c.bf16 %v6168, %v6167
  %v6177 = vpack.c.bf16 %v6170, %v6169
  %v6178 = vpack.c.bf16 %v6172, %v6171
  %v6179 = vpack.c.bf16 %v6173, %v6173
  %v6180 = vld [vmem:[%s1429] sm:$0xf]
  %v6181 = vld [vmem:[%s1429 + $0x4] sm:$0xf]
  %v6182 = vld [vmem:[%s1429 + $0x8] sm:$0xf]
  %v6183 = vld [vmem:[%s1429 + $0xc] sm:$0xf]
  %v6184 = vld [vmem:[%s1429 + $0x10] sm:$0xf]
  %v6185 = vld [vmem:[%s1429 + $0x14] sm:$0xf]
  %v6186 = vld [vmem:[%s1429 + $0x18] sm:$0xf]
  %v6187 = vld [vmem:[%s1429 + $0x1c] sm:$0xf]
  %v6188 = vld [vmem:[%s1429 + $0x20] sm:$0xf]
  %v6189 = vld [vmem:[%s1429 + $0x24] sm:$0xf]
  %v6190 = vld [vmem:[%s1429 + $0x28] sm:$0xf]
  %v6191 = vld [vmem:[%s1429 + $0x2c] sm:$0xf]
  %v6192 = vld [vmem:[%s1429 + $0x30] sm:$0xf]
  %v6193 = vld [vmem:[%s1429 + $0x34] sm:$0xf]
  %v6194 = vld [vmem:[%s1429 + $0x38] sm:$0xf]
  %v6195 = vld [vmem:[%s1429 + $0x3c] sm:$0xf]
  %v6212 = vunpack.c.l.b16 %v6180
  %v6213 = vunpack.c.l.b16 %v6181
  %v6214 = vunpack.c.l.b16 %v6182
  %v6215 = vunpack.c.l.b16 %v6183
  %v6216 = vunpack.c.l.b16 %v6184
  %v6217 = vunpack.c.l.b16 %v6185
  %v6218 = vunpack.c.l.b16 %v6186
  %v6219 = vunpack.c.l.b16 %v6187
  %v6220 = vunpack.c.l.b16 %v6188
  %v6221 = vunpack.c.l.b16 %v6189
  %v6222 = vunpack.c.l.b16 %v6190
  %v6223 = vunpack.c.l.b16 %v6191
  %v6224 = vunpack.c.l.b16 %v6192
  %v6225 = vunpack.c.l.b16 %v6193
  %v6226 = vunpack.c.l.b16 %v6194
  %v6227 = vunpack.c.l.b16 %v6195
  %v6228 = vpack.c.b16 %v6213, %v6212
  %v6229 = vpack.c.b16 %v6215, %v6214
  %v6230 = vpack.c.b16 %v6217, %v6216
  %v6231 = vpack.c.b16 %v6219, %v6218
  %v6232 = vpack.c.b16 %v6221, %v6220
  %v6233 = vpack.c.b16 %v6223, %v6222
  %v6234 = vpack.c.b16 %v6225, %v6224
  %v6235 = vpack.c.b16 %v6227, %v6226
  %6244 = vmatprep.subr.bf16.mxu0 0
  %6245 = vmatpush1.bf16.msra.mxu0 %v6235
  %6246 = vmatprep.subr.bf16.mxu0 0
  %6247 = vmatpush1.bf16.msra.mxu0 %v6234
  %6248 = vmatprep.subr.bf16.mxu0 0
  %6249 = vmatpush1.bf16.msra.mxu0 %v6233
  %6250 = vmatprep.subr.bf16.mxu0 0
  %6251 = vmatpush1.bf16.msra.mxu0 %v6232
  %6252 = vmatprep.subr.bf16.mxu0 0
  %6253 = vmatpush1.bf16.msra.mxu0 %v6231
  %6254 = vmatprep.subr.bf16.mxu0 0
  %6255 = vmatpush1.bf16.msra.mxu0 %v6230
  %6256 = vmatprep.subr.bf16.mxu0 0
  %6257 = vmatpush1.bf16.msra.mxu0 %v6229
  %6258 = vmatprep.subr.bf16.mxu0 0
  %6259 = vmatpush1.bf16.msra.mxu0 %v6228
  %6260 = vmatprep.subr.bf16.mxu0 0
  %6261 = vmatpush2.bf16.msra.mxu0 0
  %6262 = vmatprep.subr.bf16.mxu0 0
  %6263 = vmatpush2.bf16.msra.mxu0 0
  %6264 = vmatprep.subr.bf16.mxu0 0
  %6265 = vmatpush2.bf16.msra.mxu0 0
  %6266 = vmatprep.subr.bf16.mxu0 0
  %6267 = vmatpush2.bf16.msra.mxu0 0
  %6268 = vmatprep.subr.bf16.mxu0 0
  %6269 = vmatpush2.bf16.msra.mxu0 0
  %6270 = vmatprep.subr.bf16.mxu0 0
  %6271 = vmatpush2.bf16.msra.mxu0 0
  %6272 = vmatprep.subr.bf16.mxu0 0
  %6273 = vmatpush2.bf16.msra.mxu0 0
  %6274 = vmatprep.subr.bf16.mxu0 0
  %6275 = vmatpush2.bf16.msra.mxu0 0
  %6276 = vmatprep.mubr.bf16.mxu0 0
  %6277 = vmatmul.mubr.bf16.gmra.mxu0 %v6174
  %v6278 = vpop.f32.mrf.mxu0
  %v6279 = vadd.f32 0.0, %v6278
  %v6280 = vpop.f32.mrf.mxu0
  %v6281 = vpop.f32.mrf.mxu0
  %v6282 = vadd.f32 0.0, %v6281
  %v6283 = vpop.f32.mrf.mxu0
  %6284 = vmatprep.mubr.bf16.mxu0 0
  %6285 = vmatmul.mubr.bf16.gmra.mxu0 %v6175
  %v6286 = vpop.f32.mrf.mxu0
  %v6287 = vadd.f32 0.0, %v6286
  %v6288 = vpop.f32.mrf.mxu0
  %v6289 = vpop.f32.mrf.mxu0
  %v6290 = vadd.f32 0.0, %v6289
  %v6291 = vpop.f32.mrf.mxu0
  %6292 = vmatprep.mubr.bf16.mxu0 0
  %6293 = vmatmul.mubr.bf16.gmra.mxu0 %v6176
  %v6294 = vpop.f32.mrf.mxu0
  %v6295 = vadd.f32 0.0, %v6294
  %v6296 = vpop.f32.mrf.mxu0
  %v6297 = vpop.f32.mrf.mxu0
  %v6298 = vadd.f32 0.0, %v6297
  %v6299 = vpop.f32.mrf.mxu0
  %6300 = vmatprep.mubr.bf16.mxu0 0
  %6301 = vmatmul.mubr.bf16.gmra.mxu0 %v6177
  %v6302 = vpop.f32.mrf.mxu0
  %v6303 = vadd.f32 0.0, %v6302
  %v6304 = vpop.f32.mrf.mxu0
  %v6305 = vpop.f32.mrf.mxu0
  %v6306 = vadd.f32 0.0, %v6305
  %v6307 = vpop.f32.mrf.mxu0
  %6308 = vmatprep.mubr.bf16.mxu0 0
  %6309 = vmatmul.mubr.bf16.gmra.mxu0 %v6178
  %v6310 = vpop.f32.mrf.mxu0
  %v6311 = vadd.f32 0.0, %v6310
  %v6312 = vpop.f32.mrf.mxu0
  %v6313 = vpop.f32.mrf.mxu0
  %v6314 = vadd.f32 0.0, %v6313
  %v6315 = vpop.f32.mrf.mxu0
  %6316 = vmatprep.mubr.bf16.mxu0 0
  %6317 = vmatmul.mubr.bf16.gmra.mxu0 %v6179
  %v6318 = vpop.f32.mrf.mxu0
  %v6319 = vadd.f32 0.0, %v6318
  %v6320 = vpop.f32.mrf.mxu0
  %v6321 = vpop.f32.mrf.mxu0
  %v6322 = vpop.f32.mrf.mxu0
  %6323 = vdwg.mxu0
  %v6324 = vadd.f32 %v6152, %v6279
  %v6325 = vadd.f32 %v6153, %v6282
  %v6326 = vadd.f32 %v6154, %v6287
  %v6327 = vadd.f32 %v6155, %v6290
  %v6328 = vadd.f32 %v6156, %v6295
  %v6329 = vadd.f32 %v6157, %v6298
  %v6330 = vadd.f32 %v6158, %v6303
  %v6331 = vadd.f32 %v6159, %v6306
  %v6332 = vadd.f32 %v6160, %v6311
  %v6333 = vadd.f32 %v6161, %v6314
  %v6334 = vadd.f32 %v6162, %v6319
  %v6335 = vld [vmem:[#allocation2 + $0x12e] sm:$0xff]
  %v6336 = vld [vmem:[#allocation2 + $0x136] sm:$0xff]
  %v6337 = vld [vmem:[#allocation2 + $0x13e] sm:$0xff]
  %v6338 = vld [vmem:[#allocation2 + $0x146] sm:$0xff]
  %v6339 = vld [vmem:[#allocation2 + $0x14e] sm:$0xff]
  %v6340 = vld [vmem:[#allocation2 + $0x156] sm:$0xff]
  %v6341 = vld [vmem:[#allocation2 + $0x15e] sm:$0xff]
  %v6342 = vld [vmem:[#allocation2 + $0x166] sm:$0xff]
  %v6343 = vld [vmem:[#allocation2 + $0x16e] sm:$0xff]
  %v6344 = vld [vmem:[#allocation2 + $0x176] sm:$0xff]
  %v6345 = vld [vmem:[#allocation2 + $0x17e] sm:$0xff]
  %v6346 = vpack.c.bf16 %v6336, %v6335
  %v6347 = vpack.c.bf16 %v6338, %v6337
  %v6348 = vpack.c.bf16 %v6340, %v6339
  %v6349 = vpack.c.bf16 %v6342, %v6341
  %v6350 = vpack.c.bf16 %v6344, %v6343
  %v6351 = vpack.c.bf16 %v6345, %v6345
  %v6352 = vld [vmem:[%s1602] sm:$0xf]
  %v6353 = vld [vmem:[%s1602 + $0x4] sm:$0xf]
  %v6354 = vld [vmem:[%s1602 + $0x8] sm:$0xf]
  %v6355 = vld [vmem:[%s1602 + $0xc] sm:$0xf]
  %v6356 = vld [vmem:[%s1602 + $0x10] sm:$0xf]
  %v6357 = vld [vmem:[%s1602 + $0x14] sm:$0xf]
  %v6358 = vld [vmem:[%s1602 + $0x18] sm:$0xf]
  %v6359 = vld [vmem:[%s1602 + $0x1c] sm:$0xf]
  %v6360 = vld [vmem:[%s1602 + $0x20] sm:$0xf]
  %v6361 = vld [vmem:[%s1602 + $0x24] sm:$0xf]
  %v6362 = vld [vmem:[%s1602 + $0x28] sm:$0xf]
  %v6363 = vld [vmem:[%s1602 + $0x2c] sm:$0xf]
  %v6364 = vld [vmem:[%s1602 + $0x30] sm:$0xf]
  %v6365 = vld [vmem:[%s1602 + $0x34] sm:$0xf]
  %v6366 = vld [vmem:[%s1602 + $0x38] sm:$0xf]
  %v6367 = vld [vmem:[%s1602 + $0x3c] sm:$0xf]
  %v6384 = vunpack.c.l.b16 %v6352
  %v6385 = vunpack.c.l.b16 %v6353
  %v6386 = vunpack.c.l.b16 %v6354
  %v6387 = vunpack.c.l.b16 %v6355
  %v6388 = vunpack.c.l.b16 %v6356
  %v6389 = vunpack.c.l.b16 %v6357
  %v6390 = vunpack.c.l.b16 %v6358
  %v6391 = vunpack.c.l.b16 %v6359
  %v6392 = vunpack.c.l.b16 %v6360
  %v6393 = vunpack.c.l.b16 %v6361
  %v6394 = vunpack.c.l.b16 %v6362
  %v6395 = vunpack.c.l.b16 %v6363
  %v6396 = vunpack.c.l.b16 %v6364
  %v6397 = vunpack.c.l.b16 %v6365
  %v6398 = vunpack.c.l.b16 %v6366
  %v6399 = vunpack.c.l.b16 %v6367
  %v6400 = vpack.c.b16 %v6385, %v6384
  %v6401 = vpack.c.b16 %v6387, %v6386
  %v6402 = vpack.c.b16 %v6389, %v6388
  %v6403 = vpack.c.b16 %v6391, %v6390
  %v6404 = vpack.c.b16 %v6393, %v6392
  %v6405 = vpack.c.b16 %v6395, %v6394
  %v6406 = vpack.c.b16 %v6397, %v6396
  %v6407 = vpack.c.b16 %v6399, %v6398
  %6416 = vmatprep.subr.bf16.mxu0 0
  %6417 = vmatpush1.bf16.msra.mxu0 %v6407
  %6418 = vmatprep.subr.bf16.mxu0 0
  %6419 = vmatpush1.bf16.msra.mxu0 %v6406
  %6420 = vmatprep.subr.bf16.mxu0 0
  %6421 = vmatpush1.bf16.msra.mxu0 %v6405
  %6422 = vmatprep.subr.bf16.mxu0 0
  %6423 = vmatpush1.bf16.msra.mxu0 %v6404
  %6424 = vmatprep.subr.bf16.mxu0 0
  %6425 = vmatpush1.bf16.msra.mxu0 %v6403
  %6426 = vmatprep.subr.bf16.mxu0 0
  %6427 = vmatpush1.bf16.msra.mxu0 %v6402
  %6428 = vmatprep.subr.bf16.mxu0 0
  %6429 = vmatpush1.bf16.msra.mxu0 %v6401
  %6430 = vmatprep.subr.bf16.mxu0 0
  %6431 = vmatpush1.bf16.msra.mxu0 %v6400
  %6432 = vmatprep.subr.bf16.mxu0 0
  %6433 = vmatpush2.bf16.msra.mxu0 0
  %6434 = vmatprep.subr.bf16.mxu0 0
  %6435 = vmatpush2.bf16.msra.mxu0 0
  %6436 = vmatprep.subr.bf16.mxu0 0
  %6437 = vmatpush2.bf16.msra.mxu0 0
  %6438 = vmatprep.subr.bf16.mxu0 0
  %6439 = vmatpush2.bf16.msra.mxu0 0
  %6440 = vmatprep.subr.bf16.mxu0 0
  %6441 = vmatpush2.bf16.msra.mxu0 0
  %6442 = vmatprep.subr.bf16.mxu0 0
  %6443 = vmatpush2.bf16.msra.mxu0 0
  %6444 = vmatprep.subr.bf16.mxu0 0
  %6445 = vmatpush2.bf16.msra.mxu0 0
  %6446 = vmatprep.subr.bf16.mxu0 0
  %6447 = vmatpush2.bf16.msra.mxu0 0
  %6448 = vmatprep.mubr.bf16.mxu0 0
  %6449 = vmatmul.mubr.bf16.gmra.mxu0 %v6346
  %v6450 = vpop.f32.mrf.mxu0
  %v6451 = vadd.f32 0.0, %v6450
  %v6452 = vpop.f32.mrf.mxu0
  %v6453 = vpop.f32.mrf.mxu0
  %v6454 = vadd.f32 0.0, %v6453
  %v6455 = vpop.f32.mrf.mxu0
  %6456 = vmatprep.mubr.bf16.mxu0 0
  %6457 = vmatmul.mubr.bf16.gmra.mxu0 %v6347
  %v6458 = vpop.f32.mrf.mxu0
  %v6459 = vadd.f32 0.0, %v6458
  %v6460 = vpop.f32.mrf.mxu0
  %v6461 = vpop.f32.mrf.mxu0
  %v6462 = vadd.f32 0.0, %v6461
  %v6463 = vpop.f32.mrf.mxu0
  %6464 = vmatprep.mubr.bf16.mxu0 0
  %6465 = vmatmul.mubr.bf16.gmra.mxu0 %v6348
  %v6466 = vpop.f32.mrf.mxu0
  %v6467 = vadd.f32 0.0, %v6466
  %v6468 = vpop.f32.mrf.mxu0
  %v6469 = vpop.f32.mrf.mxu0
  %v6470 = vadd.f32 0.0, %v6469
  %v6471 = vpop.f32.mrf.mxu0
  %6472 = vmatprep.mubr.bf16.mxu0 0
  %6473 = vmatmul.mubr.bf16.gmra.mxu0 %v6349
  %v6474 = vpop.f32.mrf.mxu0
  %v6475 = vadd.f32 0.0, %v6474
  %v6476 = vpop.f32.mrf.mxu0
  %v6477 = vpop.f32.mrf.mxu0
  %v6478 = vadd.f32 0.0, %v6477
  %v6479 = vpop.f32.mrf.mxu0
  %6480 = vmatprep.mubr.bf16.mxu0 0
  %6481 = vmatmul.mubr.bf16.gmra.mxu0 %v6350
  %v6482 = vpop.f32.mrf.mxu0
  %v6483 = vadd.f32 0.0, %v6482
  %v6484 = vpop.f32.mrf.mxu0
  %v6485 = vpop.f32.mrf.mxu0
  %v6486 = vadd.f32 0.0, %v6485
  %v6487 = vpop.f32.mrf.mxu0
  %6488 = vmatprep.mubr.bf16.mxu0 0
  %6489 = vmatmul.mubr.bf16.gmra.mxu0 %v6351
  %v6490 = vpop.f32.mrf.mxu0
  %v6491 = vadd.f32 0.0, %v6490
  %v6492 = vpop.f32.mrf.mxu0
  %v6493 = vpop.f32.mrf.mxu0
  %v6494 = vpop.f32.mrf.mxu0
  %6495 = vdwg.mxu0
  %v6496 = vadd.f32 %v6324, %v6451
  %v6497 = vadd.f32 %v6325, %v6454
  %v6498 = vadd.f32 %v6326, %v6459
  %v6499 = vadd.f32 %v6327, %v6462
  %v6500 = vadd.f32 %v6328, %v6467
  %v6501 = vadd.f32 %v6329, %v6470
  %v6502 = vadd.f32 %v6330, %v6475
  %v6503 = vadd.f32 %v6331, %v6478
  %v6504 = vadd.f32 %v6332, %v6483
  %v6505 = vadd.f32 %v6333, %v6486
  %v6506 = vadd.f32 %v6334, %v6491
  %v6507 = vadd.f32 %v6496, %v5647
  %v6508 = vadd.f32 %v6497, %v5648
  %v6509 = vadd.f32 %v6498, %v5649
  %v6510 = vadd.f32 %v6499, %v5650
  %v6511 = vadd.f32 %v6500, %v5651
  %v6512 = vadd.f32 %v6501, %v5652
  %v6513 = vadd.f32 %v6502, %v5653
  %v6514 = vadd.f32 %v6503, %v5654
  %v6515 = vadd.f32 %v6504, %v5655
  %v6516 = vadd.f32 %v6505, %v5656
  %v6517 = vadd.f32 %v6506, %v5657
  %v6518 = vadd.f32 %v6507, %v1773
  %v6519 = vadd.f32 %v6508, %v1773
  %v6520 = vadd.f32 %v6509, %v1773
  %v6521 = vadd.f32 %v6510, %v1773
  %v6522 = vadd.f32 %v6511, %v1773
  %v6523 = vadd.f32 %v6512, %v1773
  %v6524 = vadd.f32 %v6513, %v1773
  %v6525 = vadd.f32 %v6514, %v1773
  %v6526 = vadd.f32 %v6515, %v1773
  %v6527 = vadd.f32 %v6516, %v1773
  %v6528 = vadd.f32 %v6517, %v1773
  %v6529 = vmul.f32 %v6518, 0.1
  %v6530 = vmul.f32 %v6519, 0.1
  %v6531 = vmul.f32 %v6520, 0.1
  %v6532 = vmul.f32 %v6521, 0.1
  %v6533 = vmul.f32 %v6522, 0.1
  %v6534 = vmul.f32 %v6523, 0.1
  %v6535 = vmul.f32 %v6524, 0.1
  %v6536 = vmul.f32 %v6525, 0.1
  %v6537 = vmul.f32 %v6526, 0.1
  %v6538 = vmul.f32 %v6527, 0.1
  %v6539 = vmul.f32 %v6528, 0.1
  %v6540 = vmax.f32 %v6518, %v6529
  %v6541 = vmax.f32 %v6519, %v6530
  %v6542 = vmax.f32 %v6520, %v6531
  %v6543 = vmax.f32 %v6521, %v6532
  %v6544 = vmax.f32 %v6522, %v6533
  %v6545 = vmax.f32 %v6523, %v6534
  %v6546 = vmax.f32 %v6524, %v6535
  %v6547 = vmax.f32 %v6525, %v6536
  %v6548 = vmax.f32 %v6526, %v6537
  %v6549 = vmax.f32 %v6527, %v6538
  %v6550 = vmax.f32 %v6528, %v6539
  %6551 = vst [vmem:[%s3 + $0x108] sm:$0xff] %v6540
  %6552 = vst [vmem:[%s3 + $0x110] sm:$0xff] %v6541
  %6553 = vst [vmem:[%s3 + $0x118] sm:$0xff] %v6542
  %6554 = vst [vmem:[%s3 + $0x120] sm:$0xff] %v6543
  %6555 = vst [vmem:[%s3 + $0x128] sm:$0xff] %v6544
  %6556 = vst [vmem:[%s3 + $0x130] sm:$0xff] %v6545
  %6557 = vst [vmem:[%s3 + $0x138] sm:$0xff] %v6546
  %6558 = vst [vmem:[%s3 + $0x140] sm:$0xff] %v6547
  %6559 = vst [vmem:[%s3 + $0x148] sm:$0xff] %v6548
  %6560 = vst [vmem:[%s3 + $0x150] sm:$0xff] %v6549
  %6561 = vst [vmem:[%s3 + $0x158] sm:$0xff] %v6550
  %v6562 = vld [vmem:[#allocation2 + $0x160] sm:$0xff]
  %v6563 = vld [vmem:[#allocation2 + $0x168] sm:$0xff]
  %v6564 = vld [vmem:[#allocation2 + $0x170] sm:$0xff]
  %v6565 = vld [vmem:[#allocation2 + $0x178] sm:$0xff]
  %v6566 = vld [vmem:[#allocation2 + $0x180] sm:$0xff]
  %v6567 = vld [vmem:[#allocation2 + $0x188] sm:$0xff]
  %v6568 = vld [vmem:[#allocation2 + $0x190] sm:$0xff]
  %v6569 = vld [vmem:[#allocation2 + $0x198] sm:$0xff]
  %v6570 = vld [vmem:[#allocation2 + $0x1a0] sm:$0xff]
  %v6571 = vld [vmem:[#allocation2 + $0x1a8] sm:$0xff]
  %v6572 = vld [vmem:[#allocation2 + $0x1b0] sm:$0xff]
  %v6573 = vpack.c.bf16 %v6563, %v6562
  %v6574 = vpack.c.bf16 %v6565, %v6564
  %v6575 = vpack.c.bf16 %v6567, %v6566
  %v6576 = vpack.c.bf16 %v6569, %v6568
  %v6577 = vpack.c.bf16 %v6571, %v6570
  %v6578 = vpack.c.bf16 %v6572, %v6572
  %v6579 = vld [vmem:[%s1] sm:$0xf]
  %v6580 = vld [vmem:[%s1 + $0x4] sm:$0xf]
  %v6581 = vld [vmem:[%s1 + $0x8] sm:$0xf]
  %v6582 = vld [vmem:[%s1 + $0xc] sm:$0xf]
  %v6583 = vld [vmem:[%s1 + $0x10] sm:$0xf]
  %v6584 = vld [vmem:[%s1 + $0x14] sm:$0xf]
  %v6585 = vld [vmem:[%s1 + $0x18] sm:$0xf]
  %v6586 = vld [vmem:[%s1 + $0x1c] sm:$0xf]
  %v6587 = vld [vmem:[%s1 + $0x20] sm:$0xf]
  %v6588 = vld [vmem:[%s1 + $0x24] sm:$0xf]
  %v6589 = vld [vmem:[%s1 + $0x28] sm:$0xf]
  %v6590 = vld [vmem:[%s1 + $0x2c] sm:$0xf]
  %v6591 = vld [vmem:[%s1 + $0x30] sm:$0xf]
  %v6592 = vld [vmem:[%s1 + $0x34] sm:$0xf]
  %v6593 = vld [vmem:[%s1 + $0x38] sm:$0xf]
  %v6594 = vld [vmem:[%s1 + $0x3c] sm:$0xf]
  %v6595 = vld [vmem:[#allocation2 + $0x161] sm:$0xff]
  %v6596 = vld [vmem:[#allocation2 + $0x169] sm:$0xff]
  %v6597 = vld [vmem:[#allocation2 + $0x171] sm:$0xff]
  %v6598 = vld [vmem:[#allocation2 + $0x179] sm:$0xff]
  %v6599 = vld [vmem:[#allocation2 + $0x181] sm:$0xff]
  %v6600 = vld [vmem:[#allocation2 + $0x189] sm:$0xff]
  %v6601 = vld [vmem:[#allocation2 + $0x191] sm:$0xff]
  %v6602 = vld [vmem:[#allocation2 + $0x199] sm:$0xff]
  %v6603 = vld [vmem:[#allocation2 + $0x1a1] sm:$0xff]
  %v6604 = vld [vmem:[#allocation2 + $0x1a9] sm:$0xff]
  %v6605 = vld [vmem:[#allocation2 + $0x1b1] sm:$0xff]
  %v6606 = vpack.c.bf16 %v6596, %v6595
  %v6607 = vpack.c.bf16 %v6598, %v6597
  %v6608 = vpack.c.bf16 %v6600, %v6599
  %v6609 = vpack.c.bf16 %v6602, %v6601
  %v6610 = vpack.c.bf16 %v6604, %v6603
  %v6611 = vpack.c.bf16 %v6605, %v6605
  %v6612 = vld [vmem:[%s274] sm:$0xf]
  %v6613 = vld [vmem:[%s274 + $0x4] sm:$0xf]
  %v6614 = vld [vmem:[%s274 + $0x8] sm:$0xf]
  %v6615 = vld [vmem:[%s274 + $0xc] sm:$0xf]
  %v6616 = vld [vmem:[%s274 + $0x10] sm:$0xf]
  %v6617 = vld [vmem:[%s274 + $0x14] sm:$0xf]
  %v6618 = vld [vmem:[%s274 + $0x18] sm:$0xf]
  %v6619 = vld [vmem:[%s274 + $0x1c] sm:$0xf]
  %v6620 = vld [vmem:[%s274 + $0x20] sm:$0xf]
  %v6621 = vld [vmem:[%s274 + $0x24] sm:$0xf]
  %v6622 = vld [vmem:[%s274 + $0x28] sm:$0xf]
  %v6623 = vld [vmem:[%s274 + $0x2c] sm:$0xf]
  %v6624 = vld [vmem:[%s274 + $0x30] sm:$0xf]
  %v6625 = vld [vmem:[%s274 + $0x34] sm:$0xf]
  %v6626 = vld [vmem:[%s274 + $0x38] sm:$0xf]
  %v6627 = vld [vmem:[%s274 + $0x3c] sm:$0xf]
  %v6644 = vunpack.c.l.b16 %v6612
  %v6645 = vunpack.c.l.b16 %v6613
  %v6646 = vunpack.c.l.b16 %v6614
  %v6647 = vunpack.c.l.b16 %v6615
  %v6648 = vunpack.c.l.b16 %v6616
  %v6649 = vunpack.c.l.b16 %v6617
  %v6650 = vunpack.c.l.b16 %v6618
  %v6651 = vunpack.c.l.b16 %v6619
  %v6652 = vunpack.c.l.b16 %v6620
  %v6653 = vunpack.c.l.b16 %v6621
  %v6654 = vunpack.c.l.b16 %v6622
  %v6655 = vunpack.c.l.b16 %v6623
  %v6656 = vunpack.c.l.b16 %v6624
  %v6657 = vunpack.c.l.b16 %v6625
  %v6658 = vunpack.c.l.b16 %v6626
  %v6659 = vunpack.c.l.b16 %v6627
  %v6660 = vpack.c.b16 %v6645, %v6644
  %v6661 = vpack.c.b16 %v6647, %v6646
  %v6662 = vpack.c.b16 %v6649, %v6648
  %v6663 = vpack.c.b16 %v6651, %v6650
  %v6664 = vpack.c.b16 %v6653, %v6652
  %v6665 = vpack.c.b16 %v6655, %v6654
  %v6666 = vpack.c.b16 %v6657, %v6656
  %v6667 = vpack.c.b16 %v6659, %v6658
  %6676 = vmatprep.subr.bf16.mxu0 0
  %6677 = vmatpush1.bf16.msra.mxu0 %v6667
  %6678 = vmatprep.subr.bf16.mxu0 0
  %6679 = vmatpush1.bf16.msra.mxu0 %v6666
  %6680 = vmatprep.subr.bf16.mxu0 0
  %6681 = vmatpush1.bf16.msra.mxu0 %v6665
  %6682 = vmatprep.subr.bf16.mxu0 0
  %6683 = vmatpush1.bf16.msra.mxu0 %v6664
  %6684 = vmatprep.subr.bf16.mxu0 0
  %6685 = vmatpush1.bf16.msra.mxu0 %v6663
  %6686 = vmatprep.subr.bf16.mxu0 0
  %6687 = vmatpush1.bf16.msra.mxu0 %v6662
  %6688 = vmatprep.subr.bf16.mxu0 0
  %6689 = vmatpush1.bf16.msra.mxu0 %v6661
  %6690 = vmatprep.subr.bf16.mxu0 0
  %6691 = vmatpush1.bf16.msra.mxu0 %v6660
  %6692 = vmatprep.subr.bf16.mxu0 0
  %6693 = vmatpush2.bf16.msra.mxu0 0
  %6694 = vmatprep.subr.bf16.mxu0 0
  %6695 = vmatpush2.bf16.msra.mxu0 0
  %6696 = vmatprep.subr.bf16.mxu0 0
  %6697 = vmatpush2.bf16.msra.mxu0 0
  %6698 = vmatprep.subr.bf16.mxu0 0
  %6699 = vmatpush2.bf16.msra.mxu0 0
  %6700 = vmatprep.subr.bf16.mxu0 0
  %6701 = vmatpush2.bf16.msra.mxu0 0
  %6702 = vmatprep.subr.bf16.mxu0 0
  %6703 = vmatpush2.bf16.msra.mxu0 0
  %6704 = vmatprep.subr.bf16.mxu0 0
  %6705 = vmatpush2.bf16.msra.mxu0 0
  %6706 = vmatprep.subr.bf16.mxu0 0
  %6707 = vmatpush2.bf16.msra.mxu0 0
  %6708 = vmatprep.mubr.bf16.mxu0 0
  %6709 = vmatmul.mubr.bf16.gmra.mxu0 %v6606
  %v6710 = vpop.f32.mrf.mxu0
  %v6711 = vadd.f32 0.0, %v6710
  %v6712 = vpop.f32.mrf.mxu0
  %v6713 = vpop.f32.mrf.mxu0
  %v6714 = vadd.f32 0.0, %v6713
  %v6715 = vpop.f32.mrf.mxu0
  %6716 = vmatprep.mubr.bf16.mxu0 0
  %6717 = vmatmul.mubr.bf16.gmra.mxu0 %v6607
  %v6718 = vpop.f32.mrf.mxu0
  %v6719 = vadd.f32 0.0, %v6718
  %v6720 = vpop.f32.mrf.mxu0
  %v6721 = vpop.f32.mrf.mxu0
  %v6722 = vadd.f32 0.0, %v6721
  %v6723 = vpop.f32.mrf.mxu0
  %6724 = vmatprep.mubr.bf16.mxu0 0
  %6725 = vmatmul.mubr.bf16.gmra.mxu0 %v6608
  %v6726 = vpop.f32.mrf.mxu0
  %v6727 = vadd.f32 0.0, %v6726
  %v6728 = vpop.f32.mrf.mxu0
  %v6729 = vpop.f32.mrf.mxu0
  %v6730 = vadd.f32 0.0, %v6729
  %v6731 = vpop.f32.mrf.mxu0
  %6732 = vmatprep.mubr.bf16.mxu0 0
  %6733 = vmatmul.mubr.bf16.gmra.mxu0 %v6609
  %v6734 = vpop.f32.mrf.mxu0
  %v6735 = vadd.f32 0.0, %v6734
  %v6736 = vpop.f32.mrf.mxu0
  %v6737 = vpop.f32.mrf.mxu0
  %v6738 = vadd.f32 0.0, %v6737
  %v6739 = vpop.f32.mrf.mxu0
  %6740 = vmatprep.mubr.bf16.mxu0 0
  %6741 = vmatmul.mubr.bf16.gmra.mxu0 %v6610
  %v6742 = vpop.f32.mrf.mxu0
  %v6743 = vadd.f32 0.0, %v6742
  %v6744 = vpop.f32.mrf.mxu0
  %v6745 = vpop.f32.mrf.mxu0
  %v6746 = vadd.f32 0.0, %v6745
  %v6747 = vpop.f32.mrf.mxu0
  %6748 = vmatprep.mubr.bf16.mxu0 0
  %6749 = vmatmul.mubr.bf16.gmra.mxu0 %v6611
  %v6750 = vpop.f32.mrf.mxu0
  %v6751 = vadd.f32 0.0, %v6750
  %v6752 = vpop.f32.mrf.mxu0
  %v6753 = vpop.f32.mrf.mxu0
  %v6754 = vpop.f32.mrf.mxu0
  %6755 = vdwg.mxu0
  %v6772 = vunpack.c.l.b16 %v6579
  %v6773 = vunpack.c.l.b16 %v6580
  %v6774 = vunpack.c.l.b16 %v6581
  %v6775 = vunpack.c.l.b16 %v6582
  %v6776 = vunpack.c.l.b16 %v6583
  %v6777 = vunpack.c.l.b16 %v6584
  %v6778 = vunpack.c.l.b16 %v6585
  %v6779 = vunpack.c.l.b16 %v6586
  %v6780 = vunpack.c.l.b16 %v6587
  %v6781 = vunpack.c.l.b16 %v6588
  %v6782 = vunpack.c.l.b16 %v6589
  %v6783 = vunpack.c.l.b16 %v6590
  %v6784 = vunpack.c.l.b16 %v6591
  %v6785 = vunpack.c.l.b16 %v6592
  %v6786 = vunpack.c.l.b16 %v6593
  %v6787 = vunpack.c.l.b16 %v6594
  %v6788 = vpack.c.b16 %v6773, %v6772
  %v6789 = vpack.c.b16 %v6775, %v6774
  %v6790 = vpack.c.b16 %v6777, %v6776
  %v6791 = vpack.c.b16 %v6779, %v6778
  %v6792 = vpack.c.b16 %v6781, %v6780
  %v6793 = vpack.c.b16 %v6783, %v6782
  %v6794 = vpack.c.b16 %v6785, %v6784
  %v6795 = vpack.c.b16 %v6787, %v6786
  %6804 = vmatprep.subr.bf16.mxu0 0
  %6805 = vmatpush1.bf16.msra.mxu0 %v6795
  %6806 = vmatprep.subr.bf16.mxu0 0
  %6807 = vmatpush1.bf16.msra.mxu0 %v6794
  %6808 = vmatprep.subr.bf16.mxu0 0
  %6809 = vmatpush1.bf16.msra.mxu0 %v6793
  %6810 = vmatprep.subr.bf16.mxu0 0
  %6811 = vmatpush1.bf16.msra.mxu0 %v6792
  %6812 = vmatprep.subr.bf16.mxu0 0
  %6813 = vmatpush1.bf16.msra.mxu0 %v6791
  %6814 = vmatprep.subr.bf16.mxu0 0
  %6815 = vmatpush1.bf16.msra.mxu0 %v6790
  %6816 = vmatprep.subr.bf16.mxu0 0
  %6817 = vmatpush1.bf16.msra.mxu0 %v6789
  %6818 = vmatprep.subr.bf16.mxu0 0
  %6819 = vmatpush1.bf16.msra.mxu0 %v6788
  %6820 = vmatprep.subr.bf16.mxu0 0
  %6821 = vmatpush2.bf16.msra.mxu0 0
  %6822 = vmatprep.subr.bf16.mxu0 0
  %6823 = vmatpush2.bf16.msra.mxu0 0
  %6824 = vmatprep.subr.bf16.mxu0 0
  %6825 = vmatpush2.bf16.msra.mxu0 0
  %6826 = vmatprep.subr.bf16.mxu0 0
  %6827 = vmatpush2.bf16.msra.mxu0 0
  %6828 = vmatprep.subr.bf16.mxu0 0
  %6829 = vmatpush2.bf16.msra.mxu0 0
  %6830 = vmatprep.subr.bf16.mxu0 0
  %6831 = vmatpush2.bf16.msra.mxu0 0
  %6832 = vmatprep.subr.bf16.mxu0 0
  %6833 = vmatpush2.bf16.msra.mxu0 0
  %6834 = vmatprep.subr.bf16.mxu0 0
  %6835 = vmatpush2.bf16.msra.mxu0 0
  %6836 = vmatprep.mubr.bf16.mxu0 0
  %6837 = vmatmul.mubr.bf16.gmra.mxu0 %v6573
  %v6838 = vpop.f32.mrf.mxu0
  %v6839 = vadd.f32 %v6711, %v6838
  %v6840 = vpop.f32.mrf.mxu0
  %v6841 = vpop.f32.mrf.mxu0
  %v6842 = vadd.f32 %v6714, %v6841
  %v6843 = vpop.f32.mrf.mxu0
  %6844 = vmatprep.mubr.bf16.mxu0 0
  %6845 = vmatmul.mubr.bf16.gmra.mxu0 %v6574
  %v6846 = vpop.f32.mrf.mxu0
  %v6847 = vadd.f32 %v6719, %v6846
  %v6848 = vpop.f32.mrf.mxu0
  %v6849 = vpop.f32.mrf.mxu0
  %v6850 = vadd.f32 %v6722, %v6849
  %v6851 = vpop.f32.mrf.mxu0
  %6852 = vmatprep.mubr.bf16.mxu0 0
  %6853 = vmatmul.mubr.bf16.gmra.mxu0 %v6575
  %v6854 = vpop.f32.mrf.mxu0
  %v6855 = vadd.f32 %v6727, %v6854
  %v6856 = vpop.f32.mrf.mxu0
  %v6857 = vpop.f32.mrf.mxu0
  %v6858 = vadd.f32 %v6730, %v6857
  %v6859 = vpop.f32.mrf.mxu0
  %6860 = vmatprep.mubr.bf16.mxu0 0
  %6861 = vmatmul.mubr.bf16.gmra.mxu0 %v6576
  %v6862 = vpop.f32.mrf.mxu0
  %v6863 = vadd.f32 %v6735, %v6862
  %v6864 = vpop.f32.mrf.mxu0
  %v6865 = vpop.f32.mrf.mxu0
  %v6866 = vadd.f32 %v6738, %v6865
  %v6867 = vpop.f32.mrf.mxu0
  %6868 = vmatprep.mubr.bf16.mxu0 0
  %6869 = vmatmul.mubr.bf16.gmra.mxu0 %v6577
  %v6870 = vpop.f32.mrf.mxu0
  %v6871 = vadd.f32 %v6743, %v6870
  %v6872 = vpop.f32.mrf.mxu0
  %v6873 = vpop.f32.mrf.mxu0
  %v6874 = vadd.f32 %v6746, %v6873
  %v6875 = vpop.f32.mrf.mxu0
  %6876 = vmatprep.mubr.bf16.mxu0 0
  %6877 = vmatmul.mubr.bf16.gmra.mxu0 %v6578
  %v6878 = vpop.f32.mrf.mxu0
  %v6879 = vadd.f32 %v6751, %v6878
  %v6880 = vpop.f32.mrf.mxu0
  %v6881 = vpop.f32.mrf.mxu0
  %v6882 = vpop.f32.mrf.mxu0
  %6883 = vdwg.mxu0
  %v6884 = vld [vmem:[#allocation2 + $0x162] sm:$0xff]
  %v6885 = vld [vmem:[#allocation2 + $0x16a] sm:$0xff]
  %v6886 = vld [vmem:[#allocation2 + $0x172] sm:$0xff]
  %v6887 = vld [vmem:[#allocation2 + $0x17a] sm:$0xff]
  %v6888 = vld [vmem:[#allocation2 + $0x182] sm:$0xff]
  %v6889 = vld [vmem:[#allocation2 + $0x18a] sm:$0xff]
  %v6890 = vld [vmem:[#allocation2 + $0x192] sm:$0xff]
  %v6891 = vld [vmem:[#allocation2 + $0x19a] sm:$0xff]
  %v6892 = vld [vmem:[#allocation2 + $0x1a2] sm:$0xff]
  %v6893 = vld [vmem:[#allocation2 + $0x1aa] sm:$0xff]
  %v6894 = vld [vmem:[#allocation2 + $0x1b2] sm:$0xff]
  %v6895 = vpack.c.bf16 %v6885, %v6884
  %v6896 = vpack.c.bf16 %v6887, %v6886
  %v6897 = vpack.c.bf16 %v6889, %v6888
  %v6898 = vpack.c.bf16 %v6891, %v6890
  %v6899 = vpack.c.bf16 %v6893, %v6892
  %v6900 = vpack.c.bf16 %v6894, %v6894
  %v6901 = vld [vmem:[%s564] sm:$0xf]
  %v6902 = vld [vmem:[%s564 + $0x4] sm:$0xf]
  %v6903 = vld [vmem:[%s564 + $0x8] sm:$0xf]
  %v6904 = vld [vmem:[%s564 + $0xc] sm:$0xf]
  %v6905 = vld [vmem:[%s564 + $0x10] sm:$0xf]
  %v6906 = vld [vmem:[%s564 + $0x14] sm:$0xf]
  %v6907 = vld [vmem:[%s564 + $0x18] sm:$0xf]
  %v6908 = vld [vmem:[%s564 + $0x1c] sm:$0xf]
  %v6909 = vld [vmem:[%s564 + $0x20] sm:$0xf]
  %v6910 = vld [vmem:[%s564 + $0x24] sm:$0xf]
  %v6911 = vld [vmem:[%s564 + $0x28] sm:$0xf]
  %v6912 = vld [vmem:[%s564 + $0x2c] sm:$0xf]
  %v6913 = vld [vmem:[%s564 + $0x30] sm:$0xf]
  %v6914 = vld [vmem:[%s564 + $0x34] sm:$0xf]
  %v6915 = vld [vmem:[%s564 + $0x38] sm:$0xf]
  %v6916 = vld [vmem:[%s564 + $0x3c] sm:$0xf]
  %v6933 = vunpack.c.l.b16 %v6901
  %v6934 = vunpack.c.l.b16 %v6902
  %v6935 = vunpack.c.l.b16 %v6903
  %v6936 = vunpack.c.l.b16 %v6904
  %v6937 = vunpack.c.l.b16 %v6905
  %v6938 = vunpack.c.l.b16 %v6906
  %v6939 = vunpack.c.l.b16 %v6907
  %v6940 = vunpack.c.l.b16 %v6908
  %v6941 = vunpack.c.l.b16 %v6909
  %v6942 = vunpack.c.l.b16 %v6910
  %v6943 = vunpack.c.l.b16 %v6911
  %v6944 = vunpack.c.l.b16 %v6912
  %v6945 = vunpack.c.l.b16 %v6913
  %v6946 = vunpack.c.l.b16 %v6914
  %v6947 = vunpack.c.l.b16 %v6915
  %v6948 = vunpack.c.l.b16 %v6916
  %v6949 = vpack.c.b16 %v6934, %v6933
  %v6950 = vpack.c.b16 %v6936, %v6935
  %v6951 = vpack.c.b16 %v6938, %v6937
  %v6952 = vpack.c.b16 %v6940, %v6939
  %v6953 = vpack.c.b16 %v6942, %v6941
  %v6954 = vpack.c.b16 %v6944, %v6943
  %v6955 = vpack.c.b16 %v6946, %v6945
  %v6956 = vpack.c.b16 %v6948, %v6947
  %6965 = vmatprep.subr.bf16.mxu0 0
  %6966 = vmatpush1.bf16.msra.mxu0 %v6956
  %6967 = vmatprep.subr.bf16.mxu0 0
  %6968 = vmatpush1.bf16.msra.mxu0 %v6955
  %6969 = vmatprep.subr.bf16.mxu0 0
  %6970 = vmatpush1.bf16.msra.mxu0 %v6954
  %6971 = vmatprep.subr.bf16.mxu0 0
  %6972 = vmatpush1.bf16.msra.mxu0 %v6953
  %6973 = vmatprep.subr.bf16.mxu0 0
  %6974 = vmatpush1.bf16.msra.mxu0 %v6952
  %6975 = vmatprep.subr.bf16.mxu0 0
  %6976 = vmatpush1.bf16.msra.mxu0 %v6951
  %6977 = vmatprep.subr.bf16.mxu0 0
  %6978 = vmatpush1.bf16.msra.mxu0 %v6950
  %6979 = vmatprep.subr.bf16.mxu0 0
  %6980 = vmatpush1.bf16.msra.mxu0 %v6949
  %6981 = vmatprep.subr.bf16.mxu0 0
  %6982 = vmatpush2.bf16.msra.mxu0 0
  %6983 = vmatprep.subr.bf16.mxu0 0
  %6984 = vmatpush2.bf16.msra.mxu0 0
  %6985 = vmatprep.subr.bf16.mxu0 0
  %6986 = vmatpush2.bf16.msra.mxu0 0
  %6987 = vmatprep.subr.bf16.mxu0 0
  %6988 = vmatpush2.bf16.msra.mxu0 0
  %6989 = vmatprep.subr.bf16.mxu0 0
  %6990 = vmatpush2.bf16.msra.mxu0 0
  %6991 = vmatprep.subr.bf16.mxu0 0
  %6992 = vmatpush2.bf16.msra.mxu0 0
  %6993 = vmatprep.subr.bf16.mxu0 0
  %6994 = vmatpush2.bf16.msra.mxu0 0
  %6995 = vmatprep.subr.bf16.mxu0 0
  %6996 = vmatpush2.bf16.msra.mxu0 0
  %6997 = vmatprep.mubr.bf16.mxu0 0
  %6998 = vmatmul.mubr.bf16.gmra.mxu0 %v6895
  %v6999 = vpop.f32.mrf.mxu0
  %v7000 = vadd.f32 0.0, %v6999
  %v7001 = vpop.f32.mrf.mxu0
  %v7002 = vpop.f32.mrf.mxu0
  %v7003 = vadd.f32 0.0, %v7002
  %v7004 = vpop.f32.mrf.mxu0
  %7005 = vmatprep.mubr.bf16.mxu0 0
  %7006 = vmatmul.mubr.bf16.gmra.mxu0 %v6896
  %v7007 = vpop.f32.mrf.mxu0
  %v7008 = vadd.f32 0.0, %v7007
  %v7009 = vpop.f32.mrf.mxu0
  %v7010 = vpop.f32.mrf.mxu0
  %v7011 = vadd.f32 0.0, %v7010
  %v7012 = vpop.f32.mrf.mxu0
  %7013 = vmatprep.mubr.bf16.mxu0 0
  %7014 = vmatmul.mubr.bf16.gmra.mxu0 %v6897
  %v7015 = vpop.f32.mrf.mxu0
  %v7016 = vadd.f32 0.0, %v7015
  %v7017 = vpop.f32.mrf.mxu0
  %v7018 = vpop.f32.mrf.mxu0
  %v7019 = vadd.f32 0.0, %v7018
  %v7020 = vpop.f32.mrf.mxu0
  %7021 = vmatprep.mubr.bf16.mxu0 0
  %7022 = vmatmul.mubr.bf16.gmra.mxu0 %v6898
  %v7023 = vpop.f32.mrf.mxu0
  %v7024 = vadd.f32 0.0, %v7023
  %v7025 = vpop.f32.mrf.mxu0
  %v7026 = vpop.f32.mrf.mxu0
  %v7027 = vadd.f32 0.0, %v7026
  %v7028 = vpop.f32.mrf.mxu0
  %7029 = vmatprep.mubr.bf16.mxu0 0
  %7030 = vmatmul.mubr.bf16.gmra.mxu0 %v6899
  %v7031 = vpop.f32.mrf.mxu0
  %v7032 = vadd.f32 0.0, %v7031
  %v7033 = vpop.f32.mrf.mxu0
  %v7034 = vpop.f32.mrf.mxu0
  %v7035 = vadd.f32 0.0, %v7034
  %v7036 = vpop.f32.mrf.mxu0
  %7037 = vmatprep.mubr.bf16.mxu0 0
  %7038 = vmatmul.mubr.bf16.gmra.mxu0 %v6900
  %v7039 = vpop.f32.mrf.mxu0
  %v7040 = vadd.f32 0.0, %v7039
  %v7041 = vpop.f32.mrf.mxu0
  %v7042 = vpop.f32.mrf.mxu0
  %v7043 = vpop.f32.mrf.mxu0
  %7044 = vdwg.mxu0
  %v7045 = vadd.f32 %v6839, %v7000
  %v7046 = vadd.f32 %v6842, %v7003
  %v7047 = vadd.f32 %v6847, %v7008
  %v7048 = vadd.f32 %v6850, %v7011
  %v7049 = vadd.f32 %v6855, %v7016
  %v7050 = vadd.f32 %v6858, %v7019
  %v7051 = vadd.f32 %v6863, %v7024
  %v7052 = vadd.f32 %v6866, %v7027
  %v7053 = vadd.f32 %v6871, %v7032
  %v7054 = vadd.f32 %v6874, %v7035
  %v7055 = vadd.f32 %v6879, %v7040
  %v7056 = vld [vmem:[#allocation2 + $0x172] sm:$0xff]
  %v7057 = vld [vmem:[#allocation2 + $0x17a] sm:$0xff]
  %v7058 = vld [vmem:[#allocation2 + $0x182] sm:$0xff]
  %v7059 = vld [vmem:[#allocation2 + $0x18a] sm:$0xff]
  %v7060 = vld [vmem:[#allocation2 + $0x192] sm:$0xff]
  %v7061 = vld [vmem:[#allocation2 + $0x19a] sm:$0xff]
  %v7062 = vld [vmem:[#allocation2 + $0x1a2] sm:$0xff]
  %v7063 = vld [vmem:[#allocation2 + $0x1aa] sm:$0xff]
  %v7064 = vld [vmem:[#allocation2 + $0x1b2] sm:$0xff]
  %v7065 = vld [vmem:[#allocation2 + $0x1ba] sm:$0xff]
  %v7066 = vld [vmem:[#allocation2 + $0x1c2] sm:$0xff]
  %v7067 = vpack.c.bf16 %v7057, %v7056
  %v7068 = vpack.c.bf16 %v7059, %v7058
  %v7069 = vpack.c.bf16 %v7061, %v7060
  %v7070 = vpack.c.bf16 %v7063, %v7062
  %v7071 = vpack.c.bf16 %v7065, %v7064
  %v7072 = vpack.c.bf16 %v7066, %v7066
  %v7073 = vld [vmem:[%s737] sm:$0xf]
  %v7074 = vld [vmem:[%s737 + $0x4] sm:$0xf]
  %v7075 = vld [vmem:[%s737 + $0x8] sm:$0xf]
  %v7076 = vld [vmem:[%s737 + $0xc] sm:$0xf]
  %v7077 = vld [vmem:[%s737 + $0x10] sm:$0xf]
  %v7078 = vld [vmem:[%s737 + $0x14] sm:$0xf]
  %v7079 = vld [vmem:[%s737 + $0x18] sm:$0xf]
  %v7080 = vld [vmem:[%s737 + $0x1c] sm:$0xf]
  %v7081 = vld [vmem:[%s737 + $0x20] sm:$0xf]
  %v7082 = vld [vmem:[%s737 + $0x24] sm:$0xf]
  %v7083 = vld [vmem:[%s737 + $0x28] sm:$0xf]
  %v7084 = vld [vmem:[%s737 + $0x2c] sm:$0xf]
  %v7085 = vld [vmem:[%s737 + $0x30] sm:$0xf]
  %v7086 = vld [vmem:[%s737 + $0x34] sm:$0xf]
  %v7087 = vld [vmem:[%s737 + $0x38] sm:$0xf]
  %v7088 = vld [vmem:[%s737 + $0x3c] sm:$0xf]
  %v7105 = vunpack.c.l.b16 %v7073
  %v7106 = vunpack.c.l.b16 %v7074
  %v7107 = vunpack.c.l.b16 %v7075
  %v7108 = vunpack.c.l.b16 %v7076
  %v7109 = vunpack.c.l.b16 %v7077
  %v7110 = vunpack.c.l.b16 %v7078
  %v7111 = vunpack.c.l.b16 %v7079
  %v7112 = vunpack.c.l.b16 %v7080
  %v7113 = vunpack.c.l.b16 %v7081
  %v7114 = vunpack.c.l.b16 %v7082
  %v7115 = vunpack.c.l.b16 %v7083
  %v7116 = vunpack.c.l.b16 %v7084
  %v7117 = vunpack.c.l.b16 %v7085
  %v7118 = vunpack.c.l.b16 %v7086
  %v7119 = vunpack.c.l.b16 %v7087
  %v7120 = vunpack.c.l.b16 %v7088
  %v7121 = vpack.c.b16 %v7106, %v7105
  %v7122 = vpack.c.b16 %v7108, %v7107
  %v7123 = vpack.c.b16 %v7110, %v7109
  %v7124 = vpack.c.b16 %v7112, %v7111
  %v7125 = vpack.c.b16 %v7114, %v7113
  %v7126 = vpack.c.b16 %v7116, %v7115
  %v7127 = vpack.c.b16 %v7118, %v7117
  %v7128 = vpack.c.b16 %v7120, %v7119
  %7137 = vmatprep.subr.bf16.mxu0 0
  %7138 = vmatpush1.bf16.msra.mxu0 %v7128
  %7139 = vmatprep.subr.bf16.mxu0 0
  %7140 = vmatpush1.bf16.msra.mxu0 %v7127
  %7141 = vmatprep.subr.bf16.mxu0 0
  %7142 = vmatpush1.bf16.msra.mxu0 %v7126
  %7143 = vmatprep.subr.bf16.mxu0 0
  %7144 = vmatpush1.bf16.msra.mxu0 %v7125
  %7145 = vmatprep.subr.bf16.mxu0 0
  %7146 = vmatpush1.bf16.msra.mxu0 %v7124
  %7147 = vmatprep.subr.bf16.mxu0 0
  %7148 = vmatpush1.bf16.msra.mxu0 %v7123
  %7149 = vmatprep.subr.bf16.mxu0 0
  %7150 = vmatpush1.bf16.msra.mxu0 %v7122
  %7151 = vmatprep.subr.bf16.mxu0 0
  %7152 = vmatpush1.bf16.msra.mxu0 %v7121
  %7153 = vmatprep.subr.bf16.mxu0 0
  %7154 = vmatpush2.bf16.msra.mxu0 0
  %7155 = vmatprep.subr.bf16.mxu0 0
  %7156 = vmatpush2.bf16.msra.mxu0 0
  %7157 = vmatprep.subr.bf16.mxu0 0
  %7158 = vmatpush2.bf16.msra.mxu0 0
  %7159 = vmatprep.subr.bf16.mxu0 0
  %7160 = vmatpush2.bf16.msra.mxu0 0
  %7161 = vmatprep.subr.bf16.mxu0 0
  %7162 = vmatpush2.bf16.msra.mxu0 0
  %7163 = vmatprep.subr.bf16.mxu0 0
  %7164 = vmatpush2.bf16.msra.mxu0 0
  %7165 = vmatprep.subr.bf16.mxu0 0
  %7166 = vmatpush2.bf16.msra.mxu0 0
  %7167 = vmatprep.subr.bf16.mxu0 0
  %7168 = vmatpush2.bf16.msra.mxu0 0
  %7169 = vmatprep.mubr.bf16.mxu0 0
  %7170 = vmatmul.mubr.bf16.gmra.mxu0 %v7067
  %v7171 = vpop.f32.mrf.mxu0
  %v7172 = vadd.f32 0.0, %v7171
  %v7173 = vpop.f32.mrf.mxu0
  %v7174 = vpop.f32.mrf.mxu0
  %v7175 = vadd.f32 0.0, %v7174
  %v7176 = vpop.f32.mrf.mxu0
  %7177 = vmatprep.mubr.bf16.mxu0 0
  %7178 = vmatmul.mubr.bf16.gmra.mxu0 %v7068
  %v7179 = vpop.f32.mrf.mxu0
  %v7180 = vadd.f32 0.0, %v7179
  %v7181 = vpop.f32.mrf.mxu0
  %v7182 = vpop.f32.mrf.mxu0
  %v7183 = vadd.f32 0.0, %v7182
  %v7184 = vpop.f32.mrf.mxu0
  %7185 = vmatprep.mubr.bf16.mxu0 0
  %7186 = vmatmul.mubr.bf16.gmra.mxu0 %v7069
  %v7187 = vpop.f32.mrf.mxu0
  %v7188 = vadd.f32 0.0, %v7187
  %v7189 = vpop.f32.mrf.mxu0
  %v7190 = vpop.f32.mrf.mxu0
  %v7191 = vadd.f32 0.0, %v7190
  %v7192 = vpop.f32.mrf.mxu0
  %7193 = vmatprep.mubr.bf16.mxu0 0
  %7194 = vmatmul.mubr.bf16.gmra.mxu0 %v7070
  %v7195 = vpop.f32.mrf.mxu0
  %v7196 = vadd.f32 0.0, %v7195
  %v7197 = vpop.f32.mrf.mxu0
  %v7198 = vpop.f32.mrf.mxu0
  %v7199 = vadd.f32 0.0, %v7198
  %v7200 = vpop.f32.mrf.mxu0
  %7201 = vmatprep.mubr.bf16.mxu0 0
  %7202 = vmatmul.mubr.bf16.gmra.mxu0 %v7071
  %v7203 = vpop.f32.mrf.mxu0
  %v7204 = vadd.f32 0.0, %v7203
  %v7205 = vpop.f32.mrf.mxu0
  %v7206 = vpop.f32.mrf.mxu0
  %v7207 = vadd.f32 0.0, %v7206
  %v7208 = vpop.f32.mrf.mxu0
  %7209 = vmatprep.mubr.bf16.mxu0 0
  %7210 = vmatmul.mubr.bf16.gmra.mxu0 %v7072
  %v7211 = vpop.f32.mrf.mxu0
  %v7212 = vadd.f32 0.0, %v7211
  %v7213 = vpop.f32.mrf.mxu0
  %v7214 = vpop.f32.mrf.mxu0
  %v7215 = vpop.f32.mrf.mxu0
  %7216 = vdwg.mxu0
  %v7217 = vadd.f32 %v7045, %v7172
  %v7218 = vadd.f32 %v7046, %v7175
  %v7219 = vadd.f32 %v7047, %v7180
  %v7220 = vadd.f32 %v7048, %v7183
  %v7221 = vadd.f32 %v7049, %v7188
  %v7222 = vadd.f32 %v7050, %v7191
  %v7223 = vadd.f32 %v7051, %v7196
  %v7224 = vadd.f32 %v7052, %v7199
  %v7225 = vadd.f32 %v7053, %v7204
  %v7226 = vadd.f32 %v7054, %v7207
  %v7227 = vadd.f32 %v7055, %v7212
  %v7228 = vld [vmem:[#allocation2 + $0x173] sm:$0xff]
  %v7229 = vld [vmem:[#allocation2 + $0x17b] sm:$0xff]
  %v7230 = vld [vmem:[#allocation2 + $0x183] sm:$0xff]
  %v7231 = vld [vmem:[#allocation2 + $0x18b] sm:$0xff]
  %v7232 = vld [vmem:[#allocation2 + $0x193] sm:$0xff]
  %v7233 = vld [vmem:[#allocation2 + $0x19b] sm:$0xff]
  %v7234 = vld [vmem:[#allocation2 + $0x1a3] sm:$0xff]
  %v7235 = vld [vmem:[#allocation2 + $0x1ab] sm:$0xff]
  %v7236 = vld [vmem:[#allocation2 + $0x1b3] sm:$0xff]
  %v7237 = vld [vmem:[#allocation2 + $0x1bb] sm:$0xff]
  %v7238 = vld [vmem:[#allocation2 + $0x1c3] sm:$0xff]
  %v7239 = vpack.c.bf16 %v7229, %v7228
  %v7240 = vpack.c.bf16 %v7231, %v7230
  %v7241 = vpack.c.bf16 %v7233, %v7232
  %v7242 = vpack.c.bf16 %v7235, %v7234
  %v7243 = vpack.c.bf16 %v7237, %v7236
  %v7244 = vpack.c.bf16 %v7238, %v7238
  %v7245 = vld [vmem:[%s910] sm:$0xf]
  %v7246 = vld [vmem:[%s910 + $0x4] sm:$0xf]
  %v7247 = vld [vmem:[%s910 + $0x8] sm:$0xf]
  %v7248 = vld [vmem:[%s910 + $0xc] sm:$0xf]
  %v7249 = vld [vmem:[%s910 + $0x10] sm:$0xf]
  %v7250 = vld [vmem:[%s910 + $0x14] sm:$0xf]
  %v7251 = vld [vmem:[%s910 + $0x18] sm:$0xf]
  %v7252 = vld [vmem:[%s910 + $0x1c] sm:$0xf]
  %v7253 = vld [vmem:[%s910 + $0x20] sm:$0xf]
  %v7254 = vld [vmem:[%s910 + $0x24] sm:$0xf]
  %v7255 = vld [vmem:[%s910 + $0x28] sm:$0xf]
  %v7256 = vld [vmem:[%s910 + $0x2c] sm:$0xf]
  %v7257 = vld [vmem:[%s910 + $0x30] sm:$0xf]
  %v7258 = vld [vmem:[%s910 + $0x34] sm:$0xf]
  %v7259 = vld [vmem:[%s910 + $0x38] sm:$0xf]
  %v7260 = vld [vmem:[%s910 + $0x3c] sm:$0xf]
  %v7277 = vunpack.c.l.b16 %v7245
  %v7278 = vunpack.c.l.b16 %v7246
  %v7279 = vunpack.c.l.b16 %v7247
  %v7280 = vunpack.c.l.b16 %v7248
  %v7281 = vunpack.c.l.b16 %v7249
  %v7282 = vunpack.c.l.b16 %v7250
  %v7283 = vunpack.c.l.b16 %v7251
  %v7284 = vunpack.c.l.b16 %v7252
  %v7285 = vunpack.c.l.b16 %v7253
  %v7286 = vunpack.c.l.b16 %v7254
  %v7287 = vunpack.c.l.b16 %v7255
  %v7288 = vunpack.c.l.b16 %v7256
  %v7289 = vunpack.c.l.b16 %v7257
  %v7290 = vunpack.c.l.b16 %v7258
  %v7291 = vunpack.c.l.b16 %v7259
  %v7292 = vunpack.c.l.b16 %v7260
  %v7293 = vpack.c.b16 %v7278, %v7277
  %v7294 = vpack.c.b16 %v7280, %v7279
  %v7295 = vpack.c.b16 %v7282, %v7281
  %v7296 = vpack.c.b16 %v7284, %v7283
  %v7297 = vpack.c.b16 %v7286, %v7285
  %v7298 = vpack.c.b16 %v7288, %v7287
  %v7299 = vpack.c.b16 %v7290, %v7289
  %v7300 = vpack.c.b16 %v7292, %v7291
  %7309 = vmatprep.subr.bf16.mxu0 0
  %7310 = vmatpush1.bf16.msra.mxu0 %v7300
  %7311 = vmatprep.subr.bf16.mxu0 0
  %7312 = vmatpush1.bf16.msra.mxu0 %v7299
  %7313 = vmatprep.subr.bf16.mxu0 0
  %7314 = vmatpush1.bf16.msra.mxu0 %v7298
  %7315 = vmatprep.subr.bf16.mxu0 0
  %7316 = vmatpush1.bf16.msra.mxu0 %v7297
  %7317 = vmatprep.subr.bf16.mxu0 0
  %7318 = vmatpush1.bf16.msra.mxu0 %v7296
  %7319 = vmatprep.subr.bf16.mxu0 0
  %7320 = vmatpush1.bf16.msra.mxu0 %v7295
  %7321 = vmatprep.subr.bf16.mxu0 0
  %7322 = vmatpush1.bf16.msra.mxu0 %v7294
  %7323 = vmatprep.subr.bf16.mxu0 0
  %7324 = vmatpush1.bf16.msra.mxu0 %v7293
  %7325 = vmatprep.subr.bf16.mxu0 0
  %7326 = vmatpush2.bf16.msra.mxu0 0
  %7327 = vmatprep.subr.bf16.mxu0 0
  %7328 = vmatpush2.bf16.msra.mxu0 0
  %7329 = vmatprep.subr.bf16.mxu0 0
  %7330 = vmatpush2.bf16.msra.mxu0 0
  %7331 = vmatprep.subr.bf16.mxu0 0
  %7332 = vmatpush2.bf16.msra.mxu0 0
  %7333 = vmatprep.subr.bf16.mxu0 0
  %7334 = vmatpush2.bf16.msra.mxu0 0
  %7335 = vmatprep.subr.bf16.mxu0 0
  %7336 = vmatpush2.bf16.msra.mxu0 0
  %7337 = vmatprep.subr.bf16.mxu0 0
  %7338 = vmatpush2.bf16.msra.mxu0 0
  %7339 = vmatprep.subr.bf16.mxu0 0
  %7340 = vmatpush2.bf16.msra.mxu0 0
  %7341 = vmatprep.mubr.bf16.mxu0 0
  %7342 = vmatmul.mubr.bf16.gmra.mxu0 %v7239
  %v7343 = vpop.f32.mrf.mxu0
  %v7344 = vadd.f32 0.0, %v7343
  %v7345 = vpop.f32.mrf.mxu0
  %v7346 = vpop.f32.mrf.mxu0
  %v7347 = vadd.f32 0.0, %v7346
  %v7348 = vpop.f32.mrf.mxu0
  %7349 = vmatprep.mubr.bf16.mxu0 0
  %7350 = vmatmul.mubr.bf16.gmra.mxu0 %v7240
  %v7351 = vpop.f32.mrf.mxu0
  %v7352 = vadd.f32 0.0, %v7351
  %v7353 = vpop.f32.mrf.mxu0
  %v7354 = vpop.f32.mrf.mxu0
  %v7355 = vadd.f32 0.0, %v7354
  %v7356 = vpop.f32.mrf.mxu0
  %7357 = vmatprep.mubr.bf16.mxu0 0
  %7358 = vmatmul.mubr.bf16.gmra.mxu0 %v7241
  %v7359 = vpop.f32.mrf.mxu0
  %v7360 = vadd.f32 0.0, %v7359
  %v7361 = vpop.f32.mrf.mxu0
  %v7362 = vpop.f32.mrf.mxu0
  %v7363 = vadd.f32 0.0, %v7362
  %v7364 = vpop.f32.mrf.mxu0
  %7365 = vmatprep.mubr.bf16.mxu0 0
  %7366 = vmatmul.mubr.bf16.gmra.mxu0 %v7242
  %v7367 = vpop.f32.mrf.mxu0
  %v7368 = vadd.f32 0.0, %v7367
  %v7369 = vpop.f32.mrf.mxu0
  %v7370 = vpop.f32.mrf.mxu0
  %v7371 = vadd.f32 0.0, %v7370
  %v7372 = vpop.f32.mrf.mxu0
  %7373 = vmatprep.mubr.bf16.mxu0 0
  %7374 = vmatmul.mubr.bf16.gmra.mxu0 %v7243
  %v7375 = vpop.f32.mrf.mxu0
  %v7376 = vadd.f32 0.0, %v7375
  %v7377 = vpop.f32.mrf.mxu0
  %v7378 = vpop.f32.mrf.mxu0
  %v7379 = vadd.f32 0.0, %v7378
  %v7380 = vpop.f32.mrf.mxu0
  %7381 = vmatprep.mubr.bf16.mxu0 0
  %7382 = vmatmul.mubr.bf16.gmra.mxu0 %v7244
  %v7383 = vpop.f32.mrf.mxu0
  %v7384 = vadd.f32 0.0, %v7383
  %v7385 = vpop.f32.mrf.mxu0
  %v7386 = vpop.f32.mrf.mxu0
  %v7387 = vpop.f32.mrf.mxu0
  %7388 = vdwg.mxu0
  %v7389 = vadd.f32 %v7217, %v7344
  %v7390 = vadd.f32 %v7218, %v7347
  %v7391 = vadd.f32 %v7219, %v7352
  %v7392 = vadd.f32 %v7220, %v7355
  %v7393 = vadd.f32 %v7221, %v7360
  %v7394 = vadd.f32 %v7222, %v7363
  %v7395 = vadd.f32 %v7223, %v7368
  %v7396 = vadd.f32 %v7224, %v7371
  %v7397 = vadd.f32 %v7225, %v7376
  %v7398 = vadd.f32 %v7226, %v7379
  %v7399 = vadd.f32 %v7227, %v7384
  %v7400 = vld [vmem:[#allocation2 + $0x174] sm:$0xff]
  %v7401 = vld [vmem:[#allocation2 + $0x17c] sm:$0xff]
  %v7402 = vld [vmem:[#allocation2 + $0x184] sm:$0xff]
  %v7403 = vld [vmem:[#allocation2 + $0x18c] sm:$0xff]
  %v7404 = vld [vmem:[#allocation2 + $0x194] sm:$0xff]
  %v7405 = vld [vmem:[#allocation2 + $0x19c] sm:$0xff]
  %v7406 = vld [vmem:[#allocation2 + $0x1a4] sm:$0xff]
  %v7407 = vld [vmem:[#allocation2 + $0x1ac] sm:$0xff]
  %v7408 = vld [vmem:[#allocation2 + $0x1b4] sm:$0xff]
  %v7409 = vld [vmem:[#allocation2 + $0x1bc] sm:$0xff]
  %v7410 = vld [vmem:[#allocation2 + $0x1c4] sm:$0xff]
  %v7411 = vpack.c.bf16 %v7401, %v7400
  %v7412 = vpack.c.bf16 %v7403, %v7402
  %v7413 = vpack.c.bf16 %v7405, %v7404
  %v7414 = vpack.c.bf16 %v7407, %v7406
  %v7415 = vpack.c.bf16 %v7409, %v7408
  %v7416 = vpack.c.bf16 %v7410, %v7410
  %v7417 = vld [vmem:[%s1083] sm:$0xf]
  %v7418 = vld [vmem:[%s1083 + $0x4] sm:$0xf]
  %v7419 = vld [vmem:[%s1083 + $0x8] sm:$0xf]
  %v7420 = vld [vmem:[%s1083 + $0xc] sm:$0xf]
  %v7421 = vld [vmem:[%s1083 + $0x10] sm:$0xf]
  %v7422 = vld [vmem:[%s1083 + $0x14] sm:$0xf]
  %v7423 = vld [vmem:[%s1083 + $0x18] sm:$0xf]
  %v7424 = vld [vmem:[%s1083 + $0x1c] sm:$0xf]
  %v7425 = vld [vmem:[%s1083 + $0x20] sm:$0xf]
  %v7426 = vld [vmem:[%s1083 + $0x24] sm:$0xf]
  %v7427 = vld [vmem:[%s1083 + $0x28] sm:$0xf]
  %v7428 = vld [vmem:[%s1083 + $0x2c] sm:$0xf]
  %v7429 = vld [vmem:[%s1083 + $0x30] sm:$0xf]
  %v7430 = vld [vmem:[%s1083 + $0x34] sm:$0xf]
  %v7431 = vld [vmem:[%s1083 + $0x38] sm:$0xf]
  %v7432 = vld [vmem:[%s1083 + $0x3c] sm:$0xf]
  %v7449 = vunpack.c.l.b16 %v7417
  %v7450 = vunpack.c.l.b16 %v7418
  %v7451 = vunpack.c.l.b16 %v7419
  %v7452 = vunpack.c.l.b16 %v7420
  %v7453 = vunpack.c.l.b16 %v7421
  %v7454 = vunpack.c.l.b16 %v7422
  %v7455 = vunpack.c.l.b16 %v7423
  %v7456 = vunpack.c.l.b16 %v7424
  %v7457 = vunpack.c.l.b16 %v7425
  %v7458 = vunpack.c.l.b16 %v7426
  %v7459 = vunpack.c.l.b16 %v7427
  %v7460 = vunpack.c.l.b16 %v7428
  %v7461 = vunpack.c.l.b16 %v7429
  %v7462 = vunpack.c.l.b16 %v7430
  %v7463 = vunpack.c.l.b16 %v7431
  %v7464 = vunpack.c.l.b16 %v7432
  %v7465 = vpack.c.b16 %v7450, %v7449
  %v7466 = vpack.c.b16 %v7452, %v7451
  %v7467 = vpack.c.b16 %v7454, %v7453
  %v7468 = vpack.c.b16 %v7456, %v7455
  %v7469 = vpack.c.b16 %v7458, %v7457
  %v7470 = vpack.c.b16 %v7460, %v7459
  %v7471 = vpack.c.b16 %v7462, %v7461
  %v7472 = vpack.c.b16 %v7464, %v7463
  %7481 = vmatprep.subr.bf16.mxu0 0
  %7482 = vmatpush1.bf16.msra.mxu0 %v7472
  %7483 = vmatprep.subr.bf16.mxu0 0
  %7484 = vmatpush1.bf16.msra.mxu0 %v7471
  %7485 = vmatprep.subr.bf16.mxu0 0
  %7486 = vmatpush1.bf16.msra.mxu0 %v7470
  %7487 = vmatprep.subr.bf16.mxu0 0
  %7488 = vmatpush1.bf16.msra.mxu0 %v7469
  %7489 = vmatprep.subr.bf16.mxu0 0
  %7490 = vmatpush1.bf16.msra.mxu0 %v7468
  %7491 = vmatprep.subr.bf16.mxu0 0
  %7492 = vmatpush1.bf16.msra.mxu0 %v7467
  %7493 = vmatprep.subr.bf16.mxu0 0
  %7494 = vmatpush1.bf16.msra.mxu0 %v7466
  %7495 = vmatprep.subr.bf16.mxu0 0
  %7496 = vmatpush1.bf16.msra.mxu0 %v7465
  %7497 = vmatprep.subr.bf16.mxu0 0
  %7498 = vmatpush2.bf16.msra.mxu0 0
  %7499 = vmatprep.subr.bf16.mxu0 0
  %7500 = vmatpush2.bf16.msra.mxu0 0
  %7501 = vmatprep.subr.bf16.mxu0 0
  %7502 = vmatpush2.bf16.msra.mxu0 0
  %7503 = vmatprep.subr.bf16.mxu0 0
  %7504 = vmatpush2.bf16.msra.mxu0 0
  %7505 = vmatprep.subr.bf16.mxu0 0
  %7506 = vmatpush2.bf16.msra.mxu0 0
  %7507 = vmatprep.subr.bf16.mxu0 0
  %7508 = vmatpush2.bf16.msra.mxu0 0
  %7509 = vmatprep.subr.bf16.mxu0 0
  %7510 = vmatpush2.bf16.msra.mxu0 0
  %7511 = vmatprep.subr.bf16.mxu0 0
  %7512 = vmatpush2.bf16.msra.mxu0 0
  %7513 = vmatprep.mubr.bf16.mxu0 0
  %7514 = vmatmul.mubr.bf16.gmra.mxu0 %v7411
  %v7515 = vpop.f32.mrf.mxu0
  %v7516 = vadd.f32 0.0, %v7515
  %v7517 = vpop.f32.mrf.mxu0
  %v7518 = vpop.f32.mrf.mxu0
  %v7519 = vadd.f32 0.0, %v7518
  %v7520 = vpop.f32.mrf.mxu0
  %7521 = vmatprep.mubr.bf16.mxu0 0
  %7522 = vmatmul.mubr.bf16.gmra.mxu0 %v7412
  %v7523 = vpop.f32.mrf.mxu0
  %v7524 = vadd.f32 0.0, %v7523
  %v7525 = vpop.f32.mrf.mxu0
  %v7526 = vpop.f32.mrf.mxu0
  %v7527 = vadd.f32 0.0, %v7526
  %v7528 = vpop.f32.mrf.mxu0
  %7529 = vmatprep.mubr.bf16.mxu0 0
  %7530 = vmatmul.mubr.bf16.gmra.mxu0 %v7413
  %v7531 = vpop.f32.mrf.mxu0
  %v7532 = vadd.f32 0.0, %v7531
  %v7533 = vpop.f32.mrf.mxu0
  %v7534 = vpop.f32.mrf.mxu0
  %v7535 = vadd.f32 0.0, %v7534
  %v7536 = vpop.f32.mrf.mxu0
  %7537 = vmatprep.mubr.bf16.mxu0 0
  %7538 = vmatmul.mubr.bf16.gmra.mxu0 %v7414
  %v7539 = vpop.f32.mrf.mxu0
  %v7540 = vadd.f32 0.0, %v7539
  %v7541 = vpop.f32.mrf.mxu0
  %v7542 = vpop.f32.mrf.mxu0
  %v7543 = vadd.f32 0.0, %v7542
  %v7544 = vpop.f32.mrf.mxu0
  %7545 = vmatprep.mubr.bf16.mxu0 0
  %7546 = vmatmul.mubr.bf16.gmra.mxu0 %v7415
  %v7547 = vpop.f32.mrf.mxu0
  %v7548 = vadd.f32 0.0, %v7547
  %v7549 = vpop.f32.mrf.mxu0
  %v7550 = vpop.f32.mrf.mxu0
  %v7551 = vadd.f32 0.0, %v7550
  %v7552 = vpop.f32.mrf.mxu0
  %7553 = vmatprep.mubr.bf16.mxu0 0
  %7554 = vmatmul.mubr.bf16.gmra.mxu0 %v7416
  %v7555 = vpop.f32.mrf.mxu0
  %v7556 = vadd.f32 0.0, %v7555
  %v7557 = vpop.f32.mrf.mxu0
  %v7558 = vpop.f32.mrf.mxu0
  %v7559 = vpop.f32.mrf.mxu0
  %7560 = vdwg.mxu0
  %v7561 = vadd.f32 %v7389, %v7516
  %v7562 = vadd.f32 %v7390, %v7519
  %v7563 = vadd.f32 %v7391, %v7524
  %v7564 = vadd.f32 %v7392, %v7527
  %v7565 = vadd.f32 %v7393, %v7532
  %v7566 = vadd.f32 %v7394, %v7535
  %v7567 = vadd.f32 %v7395, %v7540
  %v7568 = vadd.f32 %v7396, %v7543
  %v7569 = vadd.f32 %v7397, %v7548
  %v7570 = vadd.f32 %v7398, %v7551
  %v7571 = vadd.f32 %v7399, %v7556
  %v7572 = vld [vmem:[#allocation2 + $0x184] sm:$0xff]
  %v7573 = vld [vmem:[#allocation2 + $0x18c] sm:$0xff]
  %v7574 = vld [vmem:[#allocation2 + $0x194] sm:$0xff]
  %v7575 = vld [vmem:[#allocation2 + $0x19c] sm:$0xff]
  %v7576 = vld [vmem:[#allocation2 + $0x1a4] sm:$0xff]
  %v7577 = vld [vmem:[#allocation2 + $0x1ac] sm:$0xff]
  %v7578 = vld [vmem:[#allocation2 + $0x1b4] sm:$0xff]
  %v7579 = vld [vmem:[#allocation2 + $0x1bc] sm:$0xff]
  %v7580 = vld [vmem:[#allocation2 + $0x1c4] sm:$0xff]
  %v7581 = vld [vmem:[#allocation2 + $0x1cc] sm:$0xff]
  %v7582 = vld [vmem:[#allocation2 + $0x1d4] sm:$0xff]
  %v7583 = vpack.c.bf16 %v7573, %v7572
  %v7584 = vpack.c.bf16 %v7575, %v7574
  %v7585 = vpack.c.bf16 %v7577, %v7576
  %v7586 = vpack.c.bf16 %v7579, %v7578
  %v7587 = vpack.c.bf16 %v7581, %v7580
  %v7588 = vpack.c.bf16 %v7582, %v7582
  %v7589 = vld [vmem:[%s1256] sm:$0xf]
  %v7590 = vld [vmem:[%s1256 + $0x4] sm:$0xf]
  %v7591 = vld [vmem:[%s1256 + $0x8] sm:$0xf]
  %v7592 = vld [vmem:[%s1256 + $0xc] sm:$0xf]
  %v7593 = vld [vmem:[%s1256 + $0x10] sm:$0xf]
  %v7594 = vld [vmem:[%s1256 + $0x14] sm:$0xf]
  %v7595 = vld [vmem:[%s1256 + $0x18] sm:$0xf]
  %v7596 = vld [vmem:[%s1256 + $0x1c] sm:$0xf]
  %v7597 = vld [vmem:[%s1256 + $0x20] sm:$0xf]
  %v7598 = vld [vmem:[%s1256 + $0x24] sm:$0xf]
  %v7599 = vld [vmem:[%s1256 + $0x28] sm:$0xf]
  %v7600 = vld [vmem:[%s1256 + $0x2c] sm:$0xf]
  %v7601 = vld [vmem:[%s1256 + $0x30] sm:$0xf]
  %v7602 = vld [vmem:[%s1256 + $0x34] sm:$0xf]
  %v7603 = vld [vmem:[%s1256 + $0x38] sm:$0xf]
  %v7604 = vld [vmem:[%s1256 + $0x3c] sm:$0xf]
  %v7621 = vunpack.c.l.b16 %v7589
  %v7622 = vunpack.c.l.b16 %v7590
  %v7623 = vunpack.c.l.b16 %v7591
  %v7624 = vunpack.c.l.b16 %v7592
  %v7625 = vunpack.c.l.b16 %v7593
  %v7626 = vunpack.c.l.b16 %v7594
  %v7627 = vunpack.c.l.b16 %v7595
  %v7628 = vunpack.c.l.b16 %v7596
  %v7629 = vunpack.c.l.b16 %v7597
  %v7630 = vunpack.c.l.b16 %v7598
  %v7631 = vunpack.c.l.b16 %v7599
  %v7632 = vunpack.c.l.b16 %v7600
  %v7633 = vunpack.c.l.b16 %v7601
  %v7634 = vunpack.c.l.b16 %v7602
  %v7635 = vunpack.c.l.b16 %v7603
  %v7636 = vunpack.c.l.b16 %v7604
  %v7637 = vpack.c.b16 %v7622, %v7621
  %v7638 = vpack.c.b16 %v7624, %v7623
  %v7639 = vpack.c.b16 %v7626, %v7625
  %v7640 = vpack.c.b16 %v7628, %v7627
  %v7641 = vpack.c.b16 %v7630, %v7629
  %v7642 = vpack.c.b16 %v7632, %v7631
  %v7643 = vpack.c.b16 %v7634, %v7633
  %v7644 = vpack.c.b16 %v7636, %v7635
  %7653 = vmatprep.subr.bf16.mxu0 0
  %7654 = vmatpush1.bf16.msra.mxu0 %v7644
  %7655 = vmatprep.subr.bf16.mxu0 0
  %7656 = vmatpush1.bf16.msra.mxu0 %v7643
  %7657 = vmatprep.subr.bf16.mxu0 0
  %7658 = vmatpush1.bf16.msra.mxu0 %v7642
  %7659 = vmatprep.subr.bf16.mxu0 0
  %7660 = vmatpush1.bf16.msra.mxu0 %v7641
  %7661 = vmatprep.subr.bf16.mxu0 0
  %7662 = vmatpush1.bf16.msra.mxu0 %v7640
  %7663 = vmatprep.subr.bf16.mxu0 0
  %7664 = vmatpush1.bf16.msra.mxu0 %v7639
  %7665 = vmatprep.subr.bf16.mxu0 0
  %7666 = vmatpush1.bf16.msra.mxu0 %v7638
  %7667 = vmatprep.subr.bf16.mxu0 0
  %7668 = vmatpush1.bf16.msra.mxu0 %v7637
  %7669 = vmatprep.subr.bf16.mxu0 0
  %7670 = vmatpush2.bf16.msra.mxu0 0
  %7671 = vmatprep.subr.bf16.mxu0 0
  %7672 = vmatpush2.bf16.msra.mxu0 0
  %7673 = vmatprep.subr.bf16.mxu0 0
  %7674 = vmatpush2.bf16.msra.mxu0 0
  %7675 = vmatprep.subr.bf16.mxu0 0
  %7676 = vmatpush2.bf16.msra.mxu0 0
  %7677 = vmatprep.subr.bf16.mxu0 0
  %7678 = vmatpush2.bf16.msra.mxu0 0
  %7679 = vmatprep.subr.bf16.mxu0 0
  %7680 = vmatpush2.bf16.msra.mxu0 0
  %7681 = vmatprep.subr.bf16.mxu0 0
  %7682 = vmatpush2.bf16.msra.mxu0 0
  %7683 = vmatprep.subr.bf16.mxu0 0
  %7684 = vmatpush2.bf16.msra.mxu0 0
  %7685 = vmatprep.mubr.bf16.mxu0 0
  %7686 = vmatmul.mubr.bf16.gmra.mxu0 %v7583
  %v7687 = vpop.f32.mrf.mxu0
  %v7688 = vadd.f32 0.0, %v7687
  %v7689 = vpop.f32.mrf.mxu0
  %v7690 = vpop.f32.mrf.mxu0
  %v7691 = vadd.f32 0.0, %v7690
  %v7692 = vpop.f32.mrf.mxu0
  %7693 = vmatprep.mubr.bf16.mxu0 0
  %7694 = vmatmul.mubr.bf16.gmra.mxu0 %v7584
  %v7695 = vpop.f32.mrf.mxu0
  %v7696 = vadd.f32 0.0, %v7695
  %v7697 = vpop.f32.mrf.mxu0
  %v7698 = vpop.f32.mrf.mxu0
  %v7699 = vadd.f32 0.0, %v7698
  %v7700 = vpop.f32.mrf.mxu0
  %7701 = vmatprep.mubr.bf16.mxu0 0
  %7702 = vmatmul.mubr.bf16.gmra.mxu0 %v7585
  %v7703 = vpop.f32.mrf.mxu0
  %v7704 = vadd.f32 0.0, %v7703
  %v7705 = vpop.f32.mrf.mxu0
  %v7706 = vpop.f32.mrf.mxu0
  %v7707 = vadd.f32 0.0, %v7706
  %v7708 = vpop.f32.mrf.mxu0
  %7709 = vmatprep.mubr.bf16.mxu0 0
  %7710 = vmatmul.mubr.bf16.gmra.mxu0 %v7586
  %v7711 = vpop.f32.mrf.mxu0
  %v7712 = vadd.f32 0.0, %v7711
  %v7713 = vpop.f32.mrf.mxu0
  %v7714 = vpop.f32.mrf.mxu0
  %v7715 = vadd.f32 0.0, %v7714
  %v7716 = vpop.f32.mrf.mxu0
  %7717 = vmatprep.mubr.bf16.mxu0 0
  %7718 = vmatmul.mubr.bf16.gmra.mxu0 %v7587
  %v7719 = vpop.f32.mrf.mxu0
  %v7720 = vadd.f32 0.0, %v7719
  %v7721 = vpop.f32.mrf.mxu0
  %v7722 = vpop.f32.mrf.mxu0
  %v7723 = vadd.f32 0.0, %v7722
  %v7724 = vpop.f32.mrf.mxu0
  %7725 = vmatprep.mubr.bf16.mxu0 0
  %7726 = vmatmul.mubr.bf16.gmra.mxu0 %v7588
  %v7727 = vpop.f32.mrf.mxu0
  %v7728 = vadd.f32 0.0, %v7727
  %v7729 = vpop.f32.mrf.mxu0
  %v7730 = vpop.f32.mrf.mxu0
  %v7731 = vpop.f32.mrf.mxu0
  %7732 = vdwg.mxu0
  %v7733 = vadd.f32 %v7561, %v7688
  %v7734 = vadd.f32 %v7562, %v7691
  %v7735 = vadd.f32 %v7563, %v7696
  %v7736 = vadd.f32 %v7564, %v7699
  %v7737 = vadd.f32 %v7565, %v7704
  %v7738 = vadd.f32 %v7566, %v7707
  %v7739 = vadd.f32 %v7567, %v7712
  %v7740 = vadd.f32 %v7568, %v7715
  %v7741 = vadd.f32 %v7569, %v7720
  %v7742 = vadd.f32 %v7570, %v7723
  %v7743 = vadd.f32 %v7571, %v7728
  %v7744 = vld [vmem:[#allocation2 + $0x185] sm:$0xff]
  %v7745 = vld [vmem:[#allocation2 + $0x18d] sm:$0xff]
  %v7746 = vld [vmem:[#allocation2 + $0x195] sm:$0xff]
  %v7747 = vld [vmem:[#allocation2 + $0x19d] sm:$0xff]
  %v7748 = vld [vmem:[#allocation2 + $0x1a5] sm:$0xff]
  %v7749 = vld [vmem:[#allocation2 + $0x1ad] sm:$0xff]
  %v7750 = vld [vmem:[#allocation2 + $0x1b5] sm:$0xff]
  %v7751 = vld [vmem:[#allocation2 + $0x1bd] sm:$0xff]
  %v7752 = vld [vmem:[#allocation2 + $0x1c5] sm:$0xff]
  %v7753 = vld [vmem:[#allocation2 + $0x1cd] sm:$0xff]
  %v7754 = vld [vmem:[#allocation2 + $0x1d5] sm:$0xff]
  %v7755 = vpack.c.bf16 %v7745, %v7744
  %v7756 = vpack.c.bf16 %v7747, %v7746
  %v7757 = vpack.c.bf16 %v7749, %v7748
  %v7758 = vpack.c.bf16 %v7751, %v7750
  %v7759 = vpack.c.bf16 %v7753, %v7752
  %v7760 = vpack.c.bf16 %v7754, %v7754
  %v7761 = vld [vmem:[%s1429] sm:$0xf]
  %v7762 = vld [vmem:[%s1429 + $0x4] sm:$0xf]
  %v7763 = vld [vmem:[%s1429 + $0x8] sm:$0xf]
  %v7764 = vld [vmem:[%s1429 + $0xc] sm:$0xf]
  %v7765 = vld [vmem:[%s1429 + $0x10] sm:$0xf]
  %v7766 = vld [vmem:[%s1429 + $0x14] sm:$0xf]
  %v7767 = vld [vmem:[%s1429 + $0x18] sm:$0xf]
  %v7768 = vld [vmem:[%s1429 + $0x1c] sm:$0xf]
  %v7769 = vld [vmem:[%s1429 + $0x20] sm:$0xf]
  %v7770 = vld [vmem:[%s1429 + $0x24] sm:$0xf]
  %v7771 = vld [vmem:[%s1429 + $0x28] sm:$0xf]
  %v7772 = vld [vmem:[%s1429 + $0x2c] sm:$0xf]
  %v7773 = vld [vmem:[%s1429 + $0x30] sm:$0xf]
  %v7774 = vld [vmem:[%s1429 + $0x34] sm:$0xf]
  %v7775 = vld [vmem:[%s1429 + $0x38] sm:$0xf]
  %v7776 = vld [vmem:[%s1429 + $0x3c] sm:$0xf]
  %v7793 = vunpack.c.l.b16 %v7761
  %v7794 = vunpack.c.l.b16 %v7762
  %v7795 = vunpack.c.l.b16 %v7763
  %v7796 = vunpack.c.l.b16 %v7764
  %v7797 = vunpack.c.l.b16 %v7765
  %v7798 = vunpack.c.l.b16 %v7766
  %v7799 = vunpack.c.l.b16 %v7767
  %v7800 = vunpack.c.l.b16 %v7768
  %v7801 = vunpack.c.l.b16 %v7769
  %v7802 = vunpack.c.l.b16 %v7770
  %v7803 = vunpack.c.l.b16 %v7771
  %v7804 = vunpack.c.l.b16 %v7772
  %v7805 = vunpack.c.l.b16 %v7773
  %v7806 = vunpack.c.l.b16 %v7774
  %v7807 = vunpack.c.l.b16 %v7775
  %v7808 = vunpack.c.l.b16 %v7776
  %v7809 = vpack.c.b16 %v7794, %v7793
  %v7810 = vpack.c.b16 %v7796, %v7795
  %v7811 = vpack.c.b16 %v7798, %v7797
  %v7812 = vpack.c.b16 %v7800, %v7799
  %v7813 = vpack.c.b16 %v7802, %v7801
  %v7814 = vpack.c.b16 %v7804, %v7803
  %v7815 = vpack.c.b16 %v7806, %v7805
  %v7816 = vpack.c.b16 %v7808, %v7807
  %7825 = vmatprep.subr.bf16.mxu0 0
  %7826 = vmatpush1.bf16.msra.mxu0 %v7816
  %7827 = vmatprep.subr.bf16.mxu0 0
  %7828 = vmatpush1.bf16.msra.mxu0 %v7815
  %7829 = vmatprep.subr.bf16.mxu0 0
  %7830 = vmatpush1.bf16.msra.mxu0 %v7814
  %7831 = vmatprep.subr.bf16.mxu0 0
  %7832 = vmatpush1.bf16.msra.mxu0 %v7813
  %7833 = vmatprep.subr.bf16.mxu0 0
  %7834 = vmatpush1.bf16.msra.mxu0 %v7812
  %7835 = vmatprep.subr.bf16.mxu0 0
  %7836 = vmatpush1.bf16.msra.mxu0 %v7811
  %7837 = vmatprep.subr.bf16.mxu0 0
  %7838 = vmatpush1.bf16.msra.mxu0 %v7810
  %7839 = vmatprep.subr.bf16.mxu0 0
  %7840 = vmatpush1.bf16.msra.mxu0 %v7809
  %7841 = vmatprep.subr.bf16.mxu0 0
  %7842 = vmatpush2.bf16.msra.mxu0 0
  %7843 = vmatprep.subr.bf16.mxu0 0
  %7844 = vmatpush2.bf16.msra.mxu0 0
  %7845 = vmatprep.subr.bf16.mxu0 0
  %7846 = vmatpush2.bf16.msra.mxu0 0
  %7847 = vmatprep.subr.bf16.mxu0 0
  %7848 = vmatpush2.bf16.msra.mxu0 0
  %7849 = vmatprep.subr.bf16.mxu0 0
  %7850 = vmatpush2.bf16.msra.mxu0 0
  %7851 = vmatprep.subr.bf16.mxu0 0
  %7852 = vmatpush2.bf16.msra.mxu0 0
  %7853 = vmatprep.subr.bf16.mxu0 0
  %7854 = vmatpush2.bf16.msra.mxu0 0
  %7855 = vmatprep.subr.bf16.mxu0 0
  %7856 = vmatpush2.bf16.msra.mxu0 0
  %7857 = vmatprep.mubr.bf16.mxu0 0
  %7858 = vmatmul.mubr.bf16.gmra.mxu0 %v7755
  %v7859 = vpop.f32.mrf.mxu0
  %v7860 = vadd.f32 0.0, %v7859
  %v7861 = vpop.f32.mrf.mxu0
  %v7862 = vpop.f32.mrf.mxu0
  %v7863 = vadd.f32 0.0, %v7862
  %v7864 = vpop.f32.mrf.mxu0
  %7865 = vmatprep.mubr.bf16.mxu0 0
  %7866 = vmatmul.mubr.bf16.gmra.mxu0 %v7756
  %v7867 = vpop.f32.mrf.mxu0
  %v7868 = vadd.f32 0.0, %v7867
  %v7869 = vpop.f32.mrf.mxu0
  %v7870 = vpop.f32.mrf.mxu0
  %v7871 = vadd.f32 0.0, %v7870
  %v7872 = vpop.f32.mrf.mxu0
  %7873 = vmatprep.mubr.bf16.mxu0 0
  %7874 = vmatmul.mubr.bf16.gmra.mxu0 %v7757
  %v7875 = vpop.f32.mrf.mxu0
  %v7876 = vadd.f32 0.0, %v7875
  %v7877 = vpop.f32.mrf.mxu0
  %v7878 = vpop.f32.mrf.mxu0
  %v7879 = vadd.f32 0.0, %v7878
  %v7880 = vpop.f32.mrf.mxu0
  %7881 = vmatprep.mubr.bf16.mxu0 0
  %7882 = vmatmul.mubr.bf16.gmra.mxu0 %v7758
  %v7883 = vpop.f32.mrf.mxu0
  %v7884 = vadd.f32 0.0, %v7883
  %v7885 = vpop.f32.mrf.mxu0
  %v7886 = vpop.f32.mrf.mxu0
  %v7887 = vadd.f32 0.0, %v7886
  %v7888 = vpop.f32.mrf.mxu0
  %7889 = vmatprep.mubr.bf16.mxu0 0
  %7890 = vmatmul.mubr.bf16.gmra.mxu0 %v7759
  %v7891 = vpop.f32.mrf.mxu0
  %v7892 = vadd.f32 0.0, %v7891
  %v7893 = vpop.f32.mrf.mxu0
  %v7894 = vpop.f32.mrf.mxu0
  %v7895 = vadd.f32 0.0, %v7894
  %v7896 = vpop.f32.mrf.mxu0
  %7897 = vmatprep.mubr.bf16.mxu0 0
  %7898 = vmatmul.mubr.bf16.gmra.mxu0 %v7760
  %v7899 = vpop.f32.mrf.mxu0
  %v7900 = vadd.f32 0.0, %v7899
  %v7901 = vpop.f32.mrf.mxu0
  %v7902 = vpop.f32.mrf.mxu0
  %v7903 = vpop.f32.mrf.mxu0
  %7904 = vdwg.mxu0
  %v7905 = vadd.f32 %v7733, %v7860
  %v7906 = vadd.f32 %v7734, %v7863
  %v7907 = vadd.f32 %v7735, %v7868
  %v7908 = vadd.f32 %v7736, %v7871
  %v7909 = vadd.f32 %v7737, %v7876
  %v7910 = vadd.f32 %v7738, %v7879
  %v7911 = vadd.f32 %v7739, %v7884
  %v7912 = vadd.f32 %v7740, %v7887
  %v7913 = vadd.f32 %v7741, %v7892
  %v7914 = vadd.f32 %v7742, %v7895
  %v7915 = vadd.f32 %v7743, %v7900
  %v7916 = vld [vmem:[#allocation2 + $0x186] sm:$0xff]
  %v7917 = vld [vmem:[#allocation2 + $0x18e] sm:$0xff]
  %v7918 = vld [vmem:[#allocation2 + $0x196] sm:$0xff]
  %v7919 = vld [vmem:[#allocation2 + $0x19e] sm:$0xff]
  %v7920 = vld [vmem:[#allocation2 + $0x1a6] sm:$0xff]
  %v7921 = vld [vmem:[#allocation2 + $0x1ae] sm:$0xff]
  %v7922 = vld [vmem:[#allocation2 + $0x1b6] sm:$0xff]
  %v7923 = vld [vmem:[#allocation2 + $0x1be] sm:$0xff]
  %v7924 = vld [vmem:[#allocation2 + $0x1c6] sm:$0xff]
  %v7925 = vld [vmem:[#allocation2 + $0x1ce] sm:$0xff]
  %v7926 = vld [vmem:[#allocation2 + $0x1d6] sm:$0xff]
  %v7927 = vpack.c.bf16 %v7917, %v7916
  %v7928 = vpack.c.bf16 %v7919, %v7918
  %v7929 = vpack.c.bf16 %v7921, %v7920
  %v7930 = vpack.c.bf16 %v7923, %v7922
  %v7931 = vpack.c.bf16 %v7925, %v7924
  %v7932 = vpack.c.bf16 %v7926, %v7926
  %v7933 = vld [vmem:[%s1602] sm:$0xf]
  %v7934 = vld [vmem:[%s1602 + $0x4] sm:$0xf]
  %v7935 = vld [vmem:[%s1602 + $0x8] sm:$0xf]
  %v7936 = vld [vmem:[%s1602 + $0xc] sm:$0xf]
  %v7937 = vld [vmem:[%s1602 + $0x10] sm:$0xf]
  %v7938 = vld [vmem:[%s1602 + $0x14] sm:$0xf]
  %v7939 = vld [vmem:[%s1602 + $0x18] sm:$0xf]
  %v7940 = vld [vmem:[%s1602 + $0x1c] sm:$0xf]
  %v7941 = vld [vmem:[%s1602 + $0x20] sm:$0xf]
  %v7942 = vld [vmem:[%s1602 + $0x24] sm:$0xf]
  %v7943 = vld [vmem:[%s1602 + $0x28] sm:$0xf]
  %v7944 = vld [vmem:[%s1602 + $0x2c] sm:$0xf]
  %v7945 = vld [vmem:[%s1602 + $0x30] sm:$0xf]
  %v7946 = vld [vmem:[%s1602 + $0x34] sm:$0xf]
  %v7947 = vld [vmem:[%s1602 + $0x38] sm:$0xf]
  %v7948 = vld [vmem:[%s1602 + $0x3c] sm:$0xf]
  %v7965 = vunpack.c.l.b16 %v7933
  %v7966 = vunpack.c.l.b16 %v7934
  %v7967 = vunpack.c.l.b16 %v7935
  %v7968 = vunpack.c.l.b16 %v7936
  %v7969 = vunpack.c.l.b16 %v7937
  %v7970 = vunpack.c.l.b16 %v7938
  %v7971 = vunpack.c.l.b16 %v7939
  %v7972 = vunpack.c.l.b16 %v7940
  %v7973 = vunpack.c.l.b16 %v7941
  %v7974 = vunpack.c.l.b16 %v7942
  %v7975 = vunpack.c.l.b16 %v7943
  %v7976 = vunpack.c.l.b16 %v7944
  %v7977 = vunpack.c.l.b16 %v7945
  %v7978 = vunpack.c.l.b16 %v7946
  %v7979 = vunpack.c.l.b16 %v7947
  %v7980 = vunpack.c.l.b16 %v7948
  %v7981 = vpack.c.b16 %v7966, %v7965
  %v7982 = vpack.c.b16 %v7968, %v7967
  %v7983 = vpack.c.b16 %v7970, %v7969
  %v7984 = vpack.c.b16 %v7972, %v7971
  %v7985 = vpack.c.b16 %v7974, %v7973
  %v7986 = vpack.c.b16 %v7976, %v7975
  %v7987 = vpack.c.b16 %v7978, %v7977
  %v7988 = vpack.c.b16 %v7980, %v7979
  %7997 = vmatprep.subr.bf16.mxu0 0
  %7998 = vmatpush1.bf16.msra.mxu0 %v7988
  %7999 = vmatprep.subr.bf16.mxu0 0
  %8000 = vmatpush1.bf16.msra.mxu0 %v7987
  %8001 = vmatprep.subr.bf16.mxu0 0
  %8002 = vmatpush1.bf16.msra.mxu0 %v7986
  %8003 = vmatprep.subr.bf16.mxu0 0
  %8004 = vmatpush1.bf16.msra.mxu0 %v7985
  %8005 = vmatprep.subr.bf16.mxu0 0
  %8006 = vmatpush1.bf16.msra.mxu0 %v7984
  %8007 = vmatprep.subr.bf16.mxu0 0
  %8008 = vmatpush1.bf16.msra.mxu0 %v7983
  %8009 = vmatprep.subr.bf16.mxu0 0
  %8010 = vmatpush1.bf16.msra.mxu0 %v7982
  %8011 = vmatprep.subr.bf16.mxu0 0
  %8012 = vmatpush1.bf16.msra.mxu0 %v7981
  %8013 = vmatprep.subr.bf16.mxu0 0
  %8014 = vmatpush2.bf16.msra.mxu0 0
  %8015 = vmatprep.subr.bf16.mxu0 0
  %8016 = vmatpush2.bf16.msra.mxu0 0
  %8017 = vmatprep.subr.bf16.mxu0 0
  %8018 = vmatpush2.bf16.msra.mxu0 0
  %8019 = vmatprep.subr.bf16.mxu0 0
  %8020 = vmatpush2.bf16.msra.mxu0 0
  %8021 = vmatprep.subr.bf16.mxu0 0
  %8022 = vmatpush2.bf16.msra.mxu0 0
  %8023 = vmatprep.subr.bf16.mxu0 0
  %8024 = vmatpush2.bf16.msra.mxu0 0
  %8025 = vmatprep.subr.bf16.mxu0 0
  %8026 = vmatpush2.bf16.msra.mxu0 0
  %8027 = vmatprep.subr.bf16.mxu0 0
  %8028 = vmatpush2.bf16.msra.mxu0 0
  %8029 = vmatprep.mubr.bf16.mxu0 0
  %8030 = vmatmul.mubr.bf16.gmra.mxu0 %v7927
  %v8031 = vpop.f32.mrf.mxu0
  %v8032 = vadd.f32 0.0, %v8031
  %v8033 = vpop.f32.mrf.mxu0
  %v8034 = vpop.f32.mrf.mxu0
  %v8035 = vadd.f32 0.0, %v8034
  %v8036 = vpop.f32.mrf.mxu0
  %8037 = vmatprep.mubr.bf16.mxu0 0
  %8038 = vmatmul.mubr.bf16.gmra.mxu0 %v7928
  %v8039 = vpop.f32.mrf.mxu0
  %v8040 = vadd.f32 0.0, %v8039
  %v8041 = vpop.f32.mrf.mxu0
  %v8042 = vpop.f32.mrf.mxu0
  %v8043 = vadd.f32 0.0, %v8042
  %v8044 = vpop.f32.mrf.mxu0
  %8045 = vmatprep.mubr.bf16.mxu0 0
  %8046 = vmatmul.mubr.bf16.gmra.mxu0 %v7929
  %v8047 = vpop.f32.mrf.mxu0
  %v8048 = vadd.f32 0.0, %v8047
  %v8049 = vpop.f32.mrf.mxu0
  %v8050 = vpop.f32.mrf.mxu0
  %v8051 = vadd.f32 0.0, %v8050
  %v8052 = vpop.f32.mrf.mxu0
  %8053 = vmatprep.mubr.bf16.mxu0 0
  %8054 = vmatmul.mubr.bf16.gmra.mxu0 %v7930
  %v8055 = vpop.f32.mrf.mxu0
  %v8056 = vadd.f32 0.0, %v8055
  %v8057 = vpop.f32.mrf.mxu0
  %v8058 = vpop.f32.mrf.mxu0
  %v8059 = vadd.f32 0.0, %v8058
  %v8060 = vpop.f32.mrf.mxu0
  %8061 = vmatprep.mubr.bf16.mxu0 0
  %8062 = vmatmul.mubr.bf16.gmra.mxu0 %v7931
  %v8063 = vpop.f32.mrf.mxu0
  %v8064 = vadd.f32 0.0, %v8063
  %v8065 = vpop.f32.mrf.mxu0
  %v8066 = vpop.f32.mrf.mxu0
  %v8067 = vadd.f32 0.0, %v8066
  %v8068 = vpop.f32.mrf.mxu0
  %8069 = vmatprep.mubr.bf16.mxu0 0
  %8070 = vmatmul.mubr.bf16.gmra.mxu0 %v7932
  %v8071 = vpop.f32.mrf.mxu0
  %v8072 = vadd.f32 0.0, %v8071
  %v8073 = vpop.f32.mrf.mxu0
  %v8074 = vpop.f32.mrf.mxu0
  %v8075 = vpop.f32.mrf.mxu0
  %8076 = vdwg.mxu0
  %v8077 = vadd.f32 %v7905, %v8032
  %v8078 = vadd.f32 %v7906, %v8035
  %v8079 = vadd.f32 %v7907, %v8040
  %v8080 = vadd.f32 %v7908, %v8043
  %v8081 = vadd.f32 %v7909, %v8048
  %v8082 = vadd.f32 %v7910, %v8051
  %v8083 = vadd.f32 %v7911, %v8056
  %v8084 = vadd.f32 %v7912, %v8059
  %v8085 = vadd.f32 %v7913, %v8064
  %v8086 = vadd.f32 %v7914, %v8067
  %v8087 = vadd.f32 %v7915, %v8072
  %v8088 = vadd.f32 %v8077, %v7228
  %v8089 = vadd.f32 %v8078, %v7229
  %v8090 = vadd.f32 %v8079, %v7230
  %v8091 = vadd.f32 %v8080, %v7231
  %v8092 = vadd.f32 %v8081, %v7232
  %v8093 = vadd.f32 %v8082, %v7233
  %v8094 = vadd.f32 %v8083, %v7234
  %v8095 = vadd.f32 %v8084, %v7235
  %v8096 = vadd.f32 %v8085, %v7236
  %v8097 = vadd.f32 %v8086, %v7237
  %v8098 = vadd.f32 %v8087, %v7238
  %v8099 = vadd.f32 %v8088, %v1773
  %v8100 = vadd.f32 %v8089, %v1773
  %v8101 = vadd.f32 %v8090, %v1773
  %v8102 = vadd.f32 %v8091, %v1773
  %v8103 = vadd.f32 %v8092, %v1773
  %v8104 = vadd.f32 %v8093, %v1773
  %v8105 = vadd.f32 %v8094, %v1773
  %v8106 = vadd.f32 %v8095, %v1773
  %v8107 = vadd.f32 %v8096, %v1773
  %v8108 = vadd.f32 %v8097, %v1773
  %v8109 = vadd.f32 %v8098, %v1773
  %v8110 = vmul.f32 %v8099, 0.1
  %v8111 = vmul.f32 %v8100, 0.1
  %v8112 = vmul.f32 %v8101, 0.1
  %v8113 = vmul.f32 %v8102, 0.1
  %v8114 = vmul.f32 %v8103, 0.1
  %v8115 = vmul.f32 %v8104, 0.1
  %v8116 = vmul.f32 %v8105, 0.1
  %v8117 = vmul.f32 %v8106, 0.1
  %v8118 = vmul.f32 %v8107, 0.1
  %v8119 = vmul.f32 %v8108, 0.1
  %v8120 = vmul.f32 %v8109, 0.1
  %v8121 = vmax.f32 %v8099, %v8110
  %v8122 = vmax.f32 %v8100, %v8111
  %v8123 = vmax.f32 %v8101, %v8112
  %v8124 = vmax.f32 %v8102, %v8113
  %v8125 = vmax.f32 %v8103, %v8114
  %v8126 = vmax.f32 %v8104, %v8115
  %v8127 = vmax.f32 %v8105, %v8116
  %v8128 = vmax.f32 %v8106, %v8117
  %v8129 = vmax.f32 %v8107, %v8118
  %v8130 = vmax.f32 %v8108, %v8119
  %v8131 = vmax.f32 %v8109, %v8120
  %8132 = vst [vmem:[%s3 + $0x160] sm:$0xff] %v8121
  %8133 = vst [vmem:[%s3 + $0x168] sm:$0xff] %v8122
  %8134 = vst [vmem:[%s3 + $0x170] sm:$0xff] %v8123
  %8135 = vst [vmem:[%s3 + $0x178] sm:$0xff] %v8124
  %8136 = vst [vmem:[%s3 + $0x180] sm:$0xff] %v8125
  %8137 = vst [vmem:[%s3 + $0x188] sm:$0xff] %v8126
  %8138 = vst [vmem:[%s3 + $0x190] sm:$0xff] %v8127
  %8139 = vst [vmem:[%s3 + $0x198] sm:$0xff] %v8128
  %8140 = vst [vmem:[%s3 + $0x1a0] sm:$0xff] %v8129
  %8141 = vst [vmem:[%s3 + $0x1a8] sm:$0xff] %v8130
  %8142 = vst [vmem:[%s3 + $0x1b0] sm:$0xff] %v8131
  %v8143 = vld [vmem:[#allocation2 + $0x1b8] sm:$0xff]
  %v8144 = vld [vmem:[#allocation2 + $0x1c0] sm:$0xff]
  %v8145 = vld [vmem:[#allocation2 + $0x1c8] sm:$0xff]
  %v8146 = vld [vmem:[#allocation2 + $0x1d0] sm:$0xff]
  %v8147 = vld [vmem:[#allocation2 + $0x1d8] sm:$0xff]
  %v8148 = vld [vmem:[#allocation2 + $0x1e0] sm:$0xff]
  %v8149 = vld [vmem:[#allocation2 + $0x1e8] sm:$0xff]
  %v8150 = vld [vmem:[#allocation2 + $0x1f0] sm:$0xff]
  %v8151 = vld [vmem:[#allocation2 + $0x1f8] sm:$0xff]
  %v8152 = vld [vmem:[#allocation2 + $0x200] sm:$0xff]
  %v8153 = vld [vmem:[#allocation2 + $0x208] sm:$0xff]
  %v8154 = vpack.c.bf16 %v8144, %v8143
  %v8155 = vpack.c.bf16 %v8146, %v8145
  %v8156 = vpack.c.bf16 %v8148, %v8147
  %v8157 = vpack.c.bf16 %v8150, %v8149
  %v8158 = vpack.c.bf16 %v8152, %v8151
  %v8159 = vpack.c.bf16 %v8153, %v8153
  %v8160 = vld [vmem:[%s1] sm:$0xf]
  %v8161 = vld [vmem:[%s1 + $0x4] sm:$0xf]
  %v8162 = vld [vmem:[%s1 + $0x8] sm:$0xf]
  %v8163 = vld [vmem:[%s1 + $0xc] sm:$0xf]
  %v8164 = vld [vmem:[%s1 + $0x10] sm:$0xf]
  %v8165 = vld [vmem:[%s1 + $0x14] sm:$0xf]
  %v8166 = vld [vmem:[%s1 + $0x18] sm:$0xf]
  %v8167 = vld [vmem:[%s1 + $0x1c] sm:$0xf]
  %v8168 = vld [vmem:[%s1 + $0x20] sm:$0xf]
  %v8169 = vld [vmem:[%s1 + $0x24] sm:$0xf]
  %v8170 = vld [vmem:[%s1 + $0x28] sm:$0xf]
  %v8171 = vld [vmem:[%s1 + $0x2c] sm:$0xf]
  %v8172 = vld [vmem:[%s1 + $0x30] sm:$0xf]
  %v8173 = vld [vmem:[%s1 + $0x34] sm:$0xf]
  %v8174 = vld [vmem:[%s1 + $0x38] sm:$0xf]
  %v8175 = vld [vmem:[%s1 + $0x3c] sm:$0xf]
  %v8176 = vld [vmem:[#allocation2 + $0x1b9] sm:$0xff]
  %v8177 = vld [vmem:[#allocation2 + $0x1c1] sm:$0xff]
  %v8178 = vld [vmem:[#allocation2 + $0x1c9] sm:$0xff]
  %v8179 = vld [vmem:[#allocation2 + $0x1d1] sm:$0xff]
  %v8180 = vld [vmem:[#allocation2 + $0x1d9] sm:$0xff]
  %v8181 = vld [vmem:[#allocation2 + $0x1e1] sm:$0xff]
  %v8182 = vld [vmem:[#allocation2 + $0x1e9] sm:$0xff]
  %v8183 = vld [vmem:[#allocation2 + $0x1f1] sm:$0xff]
  %v8184 = vld [vmem:[#allocation2 + $0x1f9] sm:$0xff]
  %v8185 = vld [vmem:[#allocation2 + $0x201] sm:$0xff]
  %v8186 = vld [vmem:[#allocation2 + $0x209] sm:$0xff]
  %v8187 = vpack.c.bf16 %v8177, %v8176
  %v8188 = vpack.c.bf16 %v8179, %v8178
  %v8189 = vpack.c.bf16 %v8181, %v8180
  %v8190 = vpack.c.bf16 %v8183, %v8182
  %v8191 = vpack.c.bf16 %v8185, %v8184
  %v8192 = vpack.c.bf16 %v8186, %v8186
  %v8193 = vld [vmem:[%s274] sm:$0xf]
  %v8194 = vld [vmem:[%s274 + $0x4] sm:$0xf]
  %v8195 = vld [vmem:[%s274 + $0x8] sm:$0xf]
  %v8196 = vld [vmem:[%s274 + $0xc] sm:$0xf]
  %v8197 = vld [vmem:[%s274 + $0x10] sm:$0xf]
  %v8198 = vld [vmem:[%s274 + $0x14] sm:$0xf]
  %v8199 = vld [vmem:[%s274 + $0x18] sm:$0xf]
  %v8200 = vld [vmem:[%s274 + $0x1c] sm:$0xf]
  %v8201 = vld [vmem:[%s274 + $0x20] sm:$0xf]
  %v8202 = vld [vmem:[%s274 + $0x24] sm:$0xf]
  %v8203 = vld [vmem:[%s274 + $0x28] sm:$0xf]
  %v8204 = vld [vmem:[%s274 + $0x2c] sm:$0xf]
  %v8205 = vld [vmem:[%s274 + $0x30] sm:$0xf]
  %v8206 = vld [vmem:[%s274 + $0x34] sm:$0xf]
  %v8207 = vld [vmem:[%s274 + $0x38] sm:$0xf]
  %v8208 = vld [vmem:[%s274 + $0x3c] sm:$0xf]
  %v8225 = vunpack.c.l.b16 %v8193
  %v8226 = vunpack.c.l.b16 %v8194
  %v8227 = vunpack.c.l.b16 %v8195
  %v8228 = vunpack.c.l.b16 %v8196
  %v8229 = vunpack.c.l.b16 %v8197
  %v8230 = vunpack.c.l.b16 %v8198
  %v8231 = vunpack.c.l.b16 %v8199
  %v8232 = vunpack.c.l.b16 %v8200
  %v8233 = vunpack.c.l.b16 %v8201
  %v8234 = vunpack.c.l.b16 %v8202
  %v8235 = vunpack.c.l.b16 %v8203
  %v8236 = vunpack.c.l.b16 %v8204
  %v8237 = vunpack.c.l.b16 %v8205
  %v8238 = vunpack.c.l.b16 %v8206
  %v8239 = vunpack.c.l.b16 %v8207
  %v8240 = vunpack.c.l.b16 %v8208
  %v8241 = vpack.c.b16 %v8226, %v8225
  %v8242 = vpack.c.b16 %v8228, %v8227
  %v8243 = vpack.c.b16 %v8230, %v8229
  %v8244 = vpack.c.b16 %v8232, %v8231
  %v8245 = vpack.c.b16 %v8234, %v8233
  %v8246 = vpack.c.b16 %v8236, %v8235
  %v8247 = vpack.c.b16 %v8238, %v8237
  %v8248 = vpack.c.b16 %v8240, %v8239
  %8257 = vmatprep.subr.bf16.mxu0 0
  %8258 = vmatpush1.bf16.msra.mxu0 %v8248
  %8259 = vmatprep.subr.bf16.mxu0 0
  %8260 = vmatpush1.bf16.msra.mxu0 %v8247
  %8261 = vmatprep.subr.bf16.mxu0 0
  %8262 = vmatpush1.bf16.msra.mxu0 %v8246
  %8263 = vmatprep.subr.bf16.mxu0 0
  %8264 = vmatpush1.bf16.msra.mxu0 %v8245
  %8265 = vmatprep.subr.bf16.mxu0 0
  %8266 = vmatpush1.bf16.msra.mxu0 %v8244
  %8267 = vmatprep.subr.bf16.mxu0 0
  %8268 = vmatpush1.bf16.msra.mxu0 %v8243
  %8269 = vmatprep.subr.bf16.mxu0 0
  %8270 = vmatpush1.bf16.msra.mxu0 %v8242
  %8271 = vmatprep.subr.bf16.mxu0 0
  %8272 = vmatpush1.bf16.msra.mxu0 %v8241
  %8273 = vmatprep.subr.bf16.mxu0 0
  %8274 = vmatpush2.bf16.msra.mxu0 0
  %8275 = vmatprep.subr.bf16.mxu0 0
  %8276 = vmatpush2.bf16.msra.mxu0 0
  %8277 = vmatprep.subr.bf16.mxu0 0
  %8278 = vmatpush2.bf16.msra.mxu0 0
  %8279 = vmatprep.subr.bf16.mxu0 0
  %8280 = vmatpush2.bf16.msra.mxu0 0
  %8281 = vmatprep.subr.bf16.mxu0 0
  %8282 = vmatpush2.bf16.msra.mxu0 0
  %8283 = vmatprep.subr.bf16.mxu0 0
  %8284 = vmatpush2.bf16.msra.mxu0 0
  %8285 = vmatprep.subr.bf16.mxu0 0
  %8286 = vmatpush2.bf16.msra.mxu0 0
  %8287 = vmatprep.subr.bf16.mxu0 0
  %8288 = vmatpush2.bf16.msra.mxu0 0
  %8289 = vmatprep.mubr.bf16.mxu0 0
  %8290 = vmatmul.mubr.bf16.gmra.mxu0 %v8187
  %v8291 = vpop.f32.mrf.mxu0
  %v8292 = vadd.f32 0.0, %v8291
  %v8293 = vpop.f32.mrf.mxu0
  %v8294 = vpop.f32.mrf.mxu0
  %v8295 = vadd.f32 0.0, %v8294
  %v8296 = vpop.f32.mrf.mxu0
  %8297 = vmatprep.mubr.bf16.mxu0 0
  %8298 = vmatmul.mubr.bf16.gmra.mxu0 %v8188
  %v8299 = vpop.f32.mrf.mxu0
  %v8300 = vadd.f32 0.0, %v8299
  %v8301 = vpop.f32.mrf.mxu0
  %v8302 = vpop.f32.mrf.mxu0
  %v8303 = vadd.f32 0.0, %v8302
  %v8304 = vpop.f32.mrf.mxu0
  %8305 = vmatprep.mubr.bf16.mxu0 0
  %8306 = vmatmul.mubr.bf16.gmra.mxu0 %v8189
  %v8307 = vpop.f32.mrf.mxu0
  %v8308 = vadd.f32 0.0, %v8307
  %v8309 = vpop.f32.mrf.mxu0
  %v8310 = vpop.f32.mrf.mxu0
  %v8311 = vadd.f32 0.0, %v8310
  %v8312 = vpop.f32.mrf.mxu0
  %8313 = vmatprep.mubr.bf16.mxu0 0
  %8314 = vmatmul.mubr.bf16.gmra.mxu0 %v8190
  %v8315 = vpop.f32.mrf.mxu0
  %v8316 = vadd.f32 0.0, %v8315
  %v8317 = vpop.f32.mrf.mxu0
  %v8318 = vpop.f32.mrf.mxu0
  %v8319 = vadd.f32 0.0, %v8318
  %v8320 = vpop.f32.mrf.mxu0
  %8321 = vmatprep.mubr.bf16.mxu0 0
  %8322 = vmatmul.mubr.bf16.gmra.mxu0 %v8191
  %v8323 = vpop.f32.mrf.mxu0
  %v8324 = vadd.f32 0.0, %v8323
  %v8325 = vpop.f32.mrf.mxu0
  %v8326 = vpop.f32.mrf.mxu0
  %v8327 = vadd.f32 0.0, %v8326
  %v8328 = vpop.f32.mrf.mxu0
  %8329 = vmatprep.mubr.bf16.mxu0 0
  %8330 = vmatmul.mubr.bf16.gmra.mxu0 %v8192
  %v8331 = vpop.f32.mrf.mxu0
  %v8332 = vadd.f32 0.0, %v8331
  %v8333 = vpop.f32.mrf.mxu0
  %v8334 = vpop.f32.mrf.mxu0
  %v8335 = vpop.f32.mrf.mxu0
  %8336 = vdwg.mxu0
  %v8353 = vunpack.c.l.b16 %v8160
  %v8354 = vunpack.c.l.b16 %v8161
  %v8355 = vunpack.c.l.b16 %v8162
  %v8356 = vunpack.c.l.b16 %v8163
  %v8357 = vunpack.c.l.b16 %v8164
  %v8358 = vunpack.c.l.b16 %v8165
  %v8359 = vunpack.c.l.b16 %v8166
  %v8360 = vunpack.c.l.b16 %v8167
  %v8361 = vunpack.c.l.b16 %v8168
  %v8362 = vunpack.c.l.b16 %v8169
  %v8363 = vunpack.c.l.b16 %v8170
  %v8364 = vunpack.c.l.b16 %v8171
  %v8365 = vunpack.c.l.b16 %v8172
  %v8366 = vunpack.c.l.b16 %v8173
  %v8367 = vunpack.c.l.b16 %v8174
  %v8368 = vunpack.c.l.b16 %v8175
  %v8369 = vpack.c.b16 %v8354, %v8353
  %v8370 = vpack.c.b16 %v8356, %v8355
  %v8371 = vpack.c.b16 %v8358, %v8357
  %v8372 = vpack.c.b16 %v8360, %v8359
  %v8373 = vpack.c.b16 %v8362, %v8361
  %v8374 = vpack.c.b16 %v8364, %v8363
  %v8375 = vpack.c.b16 %v8366, %v8365
  %v8376 = vpack.c.b16 %v8368, %v8367
  %8385 = vmatprep.subr.bf16.mxu0 0
  %8386 = vmatpush1.bf16.msra.mxu0 %v8376
  %8387 = vmatprep.subr.bf16.mxu0 0
  %8388 = vmatpush1.bf16.msra.mxu0 %v8375
  %8389 = vmatprep.subr.bf16.mxu0 0
  %8390 = vmatpush1.bf16.msra.mxu0 %v8374
  %8391 = vmatprep.subr.bf16.mxu0 0
  %8392 = vmatpush1.bf16.msra.mxu0 %v8373
  %8393 = vmatprep.subr.bf16.mxu0 0
  %8394 = vmatpush1.bf16.msra.mxu0 %v8372
  %8395 = vmatprep.subr.bf16.mxu0 0
  %8396 = vmatpush1.bf16.msra.mxu0 %v8371
  %8397 = vmatprep.subr.bf16.mxu0 0
  %8398 = vmatpush1.bf16.msra.mxu0 %v8370
  %8399 = vmatprep.subr.bf16.mxu0 0
  %8400 = vmatpush1.bf16.msra.mxu0 %v8369
  %8401 = vmatprep.subr.bf16.mxu0 0
  %8402 = vmatpush2.bf16.msra.mxu0 0
  %8403 = vmatprep.subr.bf16.mxu0 0
  %8404 = vmatpush2.bf16.msra.mxu0 0
  %8405 = vmatprep.subr.bf16.mxu0 0
  %8406 = vmatpush2.bf16.msra.mxu0 0
  %8407 = vmatprep.subr.bf16.mxu0 0
  %8408 = vmatpush2.bf16.msra.mxu0 0
  %8409 = vmatprep.subr.bf16.mxu0 0
  %8410 = vmatpush2.bf16.msra.mxu0 0
  %8411 = vmatprep.subr.bf16.mxu0 0
  %8412 = vmatpush2.bf16.msra.mxu0 0
  %8413 = vmatprep.subr.bf16.mxu0 0
  %8414 = vmatpush2.bf16.msra.mxu0 0
  %8415 = vmatprep.subr.bf16.mxu0 0
  %8416 = vmatpush2.bf16.msra.mxu0 0
  %8417 = vmatprep.mubr.bf16.mxu0 0
  %8418 = vmatmul.mubr.bf16.gmra.mxu0 %v8154
  %v8419 = vpop.f32.mrf.mxu0
  %v8420 = vadd.f32 %v8292, %v8419
  %v8421 = vpop.f32.mrf.mxu0
  %v8422 = vpop.f32.mrf.mxu0
  %v8423 = vadd.f32 %v8295, %v8422
  %v8424 = vpop.f32.mrf.mxu0
  %8425 = vmatprep.mubr.bf16.mxu0 0
  %8426 = vmatmul.mubr.bf16.gmra.mxu0 %v8155
  %v8427 = vpop.f32.mrf.mxu0
  %v8428 = vadd.f32 %v8300, %v8427
  %v8429 = vpop.f32.mrf.mxu0
  %v8430 = vpop.f32.mrf.mxu0
  %v8431 = vadd.f32 %v8303, %v8430
  %v8432 = vpop.f32.mrf.mxu0
  %8433 = vmatprep.mubr.bf16.mxu0 0
  %8434 = vmatmul.mubr.bf16.gmra.mxu0 %v8156
  %v8435 = vpop.f32.mrf.mxu0
  %v8436 = vadd.f32 %v8308, %v8435
  %v8437 = vpop.f32.mrf.mxu0
  %v8438 = vpop.f32.mrf.mxu0
  %v8439 = vadd.f32 %v8311, %v8438
  %v8440 = vpop.f32.mrf.mxu0
  %8441 = vmatprep.mubr.bf16.mxu0 0
  %8442 = vmatmul.mubr.bf16.gmra.mxu0 %v8157
  %v8443 = vpop.f32.mrf.mxu0
  %v8444 = vadd.f32 %v8316, %v8443
  %v8445 = vpop.f32.mrf.mxu0
  %v8446 = vpop.f32.mrf.mxu0
  %v8447 = vadd.f32 %v8319, %v8446
  %v8448 = vpop.f32.mrf.mxu0
  %8449 = vmatprep.mubr.bf16.mxu0 0
  %8450 = vmatmul.mubr.bf16.gmra.mxu0 %v8158
  %v8451 = vpop.f32.mrf.mxu0
  %v8452 = vadd.f32 %v8324, %v8451
  %v8453 = vpop.f32.mrf.mxu0
  %v8454 = vpop.f32.mrf.mxu0
  %v8455 = vadd.f32 %v8327, %v8454
  %v8456 = vpop.f32.mrf.mxu0
  %8457 = vmatprep.mubr.bf16.mxu0 0
  %8458 = vmatmul.mubr.bf16.gmra.mxu0 %v8159
  %v8459 = vpop.f32.mrf.mxu0
  %v8460 = vadd.f32 %v8332, %v8459
  %v8461 = vpop.f32.mrf.mxu0
  %v8462 = vpop.f32.mrf.mxu0
  %v8463 = vpop.f32.mrf.mxu0
  %8464 = vdwg.mxu0
  %v8465 = vld [vmem:[#allocation2 + $0x1ba] sm:$0xff]
  %v8466 = vld [vmem:[#allocation2 + $0x1c2] sm:$0xff]
  %v8467 = vld [vmem:[#allocation2 + $0x1ca] sm:$0xff]
  %v8468 = vld [vmem:[#allocation2 + $0x1d2] sm:$0xff]
  %v8469 = vld [vmem:[#allocation2 + $0x1da] sm:$0xff]
  %v8470 = vld [vmem:[#allocation2 + $0x1e2] sm:$0xff]
  %v8471 = vld [vmem:[#allocation2 + $0x1ea] sm:$0xff]
  %v8472 = vld [vmem:[#allocation2 + $0x1f2] sm:$0xff]
  %v8473 = vld [vmem:[#allocation2 + $0x1fa] sm:$0xff]
  %v8474 = vld [vmem:[#allocation2 + $0x202] sm:$0xff]
  %v8475 = vld [vmem:[#allocation2 + $0x20a] sm:$0xff]
  %v8476 = vpack.c.bf16 %v8466, %v8465
  %v8477 = vpack.c.bf16 %v8468, %v8467
  %v8478 = vpack.c.bf16 %v8470, %v8469
  %v8479 = vpack.c.bf16 %v8472, %v8471
  %v8480 = vpack.c.bf16 %v8474, %v8473
  %v8481 = vpack.c.bf16 %v8475, %v8475
  %v8482 = vld [vmem:[%s564] sm:$0xf]
  %v8483 = vld [vmem:[%s564 + $0x4] sm:$0xf]
  %v8484 = vld [vmem:[%s564 + $0x8] sm:$0xf]
  %v8485 = vld [vmem:[%s564 + $0xc] sm:$0xf]
  %v8486 = vld [vmem:[%s564 + $0x10] sm:$0xf]
  %v8487 = vld [vmem:[%s564 + $0x14] sm:$0xf]
  %v8488 = vld [vmem:[%s564 + $0x18] sm:$0xf]
  %v8489 = vld [vmem:[%s564 + $0x1c] sm:$0xf]
  %v8490 = vld [vmem:[%s564 + $0x20] sm:$0xf]
  %v8491 = vld [vmem:[%s564 + $0x24] sm:$0xf]
  %v8492 = vld [vmem:[%s564 + $0x28] sm:$0xf]
  %v8493 = vld [vmem:[%s564 + $0x2c] sm:$0xf]
  %v8494 = vld [vmem:[%s564 + $0x30] sm:$0xf]
  %v8495 = vld [vmem:[%s564 + $0x34] sm:$0xf]
  %v8496 = vld [vmem:[%s564 + $0x38] sm:$0xf]
  %v8497 = vld [vmem:[%s564 + $0x3c] sm:$0xf]
  %v8514 = vunpack.c.l.b16 %v8482
  %v8515 = vunpack.c.l.b16 %v8483
  %v8516 = vunpack.c.l.b16 %v8484
  %v8517 = vunpack.c.l.b16 %v8485
  %v8518 = vunpack.c.l.b16 %v8486
  %v8519 = vunpack.c.l.b16 %v8487
  %v8520 = vunpack.c.l.b16 %v8488
  %v8521 = vunpack.c.l.b16 %v8489
  %v8522 = vunpack.c.l.b16 %v8490
  %v8523 = vunpack.c.l.b16 %v8491
  %v8524 = vunpack.c.l.b16 %v8492
  %v8525 = vunpack.c.l.b16 %v8493
  %v8526 = vunpack.c.l.b16 %v8494
  %v8527 = vunpack.c.l.b16 %v8495
  %v8528 = vunpack.c.l.b16 %v8496
  %v8529 = vunpack.c.l.b16 %v8497
  %v8530 = vpack.c.b16 %v8515, %v8514
  %v8531 = vpack.c.b16 %v8517, %v8516
  %v8532 = vpack.c.b16 %v8519, %v8518
  %v8533 = vpack.c.b16 %v8521, %v8520
  %v8534 = vpack.c.b16 %v8523, %v8522
  %v8535 = vpack.c.b16 %v8525, %v8524
  %v8536 = vpack.c.b16 %v8527, %v8526
  %v8537 = vpack.c.b16 %v8529, %v8528
  %8546 = vmatprep.subr.bf16.mxu0 0
  %8547 = vmatpush1.bf16.msra.mxu0 %v8537
  %8548 = vmatprep.subr.bf16.mxu0 0
  %8549 = vmatpush1.bf16.msra.mxu0 %v8536
  %8550 = vmatprep.subr.bf16.mxu0 0
  %8551 = vmatpush1.bf16.msra.mxu0 %v8535
  %8552 = vmatprep.subr.bf16.mxu0 0
  %8553 = vmatpush1.bf16.msra.mxu0 %v8534
  %8554 = vmatprep.subr.bf16.mxu0 0
  %8555 = vmatpush1.bf16.msra.mxu0 %v8533
  %8556 = vmatprep.subr.bf16.mxu0 0
  %8557 = vmatpush1.bf16.msra.mxu0 %v8532
  %8558 = vmatprep.subr.bf16.mxu0 0
  %8559 = vmatpush1.bf16.msra.mxu0 %v8531
  %8560 = vmatprep.subr.bf16.mxu0 0
  %8561 = vmatpush1.bf16.msra.mxu0 %v8530
  %8562 = vmatprep.subr.bf16.mxu0 0
  %8563 = vmatpush2.bf16.msra.mxu0 0
  %8564 = vmatprep.subr.bf16.mxu0 0
  %8565 = vmatpush2.bf16.msra.mxu0 0
  %8566 = vmatprep.subr.bf16.mxu0 0
  %8567 = vmatpush2.bf16.msra.mxu0 0
  %8568 = vmatprep.subr.bf16.mxu0 0
  %8569 = vmatpush2.bf16.msra.mxu0 0
  %8570 = vmatprep.subr.bf16.mxu0 0
  %8571 = vmatpush2.bf16.msra.mxu0 0
  %8572 = vmatprep.subr.bf16.mxu0 0
  %8573 = vmatpush2.bf16.msra.mxu0 0
  %8574 = vmatprep.subr.bf16.mxu0 0
  %8575 = vmatpush2.bf16.msra.mxu0 0
  %8576 = vmatprep.subr.bf16.mxu0 0
  %8577 = vmatpush2.bf16.msra.mxu0 0
  %8578 = vmatprep.mubr.bf16.mxu0 0
  %8579 = vmatmul.mubr.bf16.gmra.mxu0 %v8476
  %v8580 = vpop.f32.mrf.mxu0
  %v8581 = vadd.f32 0.0, %v8580
  %v8582 = vpop.f32.mrf.mxu0
  %v8583 = vpop.f32.mrf.mxu0
  %v8584 = vadd.f32 0.0, %v8583
  %v8585 = vpop.f32.mrf.mxu0
  %8586 = vmatprep.mubr.bf16.mxu0 0
  %8587 = vmatmul.mubr.bf16.gmra.mxu0 %v8477
  %v8588 = vpop.f32.mrf.mxu0
  %v8589 = vadd.f32 0.0, %v8588
  %v8590 = vpop.f32.mrf.mxu0
  %v8591 = vpop.f32.mrf.mxu0
  %v8592 = vadd.f32 0.0, %v8591
  %v8593 = vpop.f32.mrf.mxu0
  %8594 = vmatprep.mubr.bf16.mxu0 0
  %8595 = vmatmul.mubr.bf16.gmra.mxu0 %v8478
  %v8596 = vpop.f32.mrf.mxu0
  %v8597 = vadd.f32 0.0, %v8596
  %v8598 = vpop.f32.mrf.mxu0
  %v8599 = vpop.f32.mrf.mxu0
  %v8600 = vadd.f32 0.0, %v8599
  %v8601 = vpop.f32.mrf.mxu0
  %8602 = vmatprep.mubr.bf16.mxu0 0
  %8603 = vmatmul.mubr.bf16.gmra.mxu0 %v8479
  %v8604 = vpop.f32.mrf.mxu0
  %v8605 = vadd.f32 0.0, %v8604
  %v8606 = vpop.f32.mrf.mxu0
  %v8607 = vpop.f32.mrf.mxu0
  %v8608 = vadd.f32 0.0, %v8607
  %v8609 = vpop.f32.mrf.mxu0
  %8610 = vmatprep.mubr.bf16.mxu0 0
  %8611 = vmatmul.mubr.bf16.gmra.mxu0 %v8480
  %v8612 = vpop.f32.mrf.mxu0
  %v8613 = vadd.f32 0.0, %v8612
  %v8614 = vpop.f32.mrf.mxu0
  %v8615 = vpop.f32.mrf.mxu0
  %v8616 = vadd.f32 0.0, %v8615
  %v8617 = vpop.f32.mrf.mxu0
  %8618 = vmatprep.mubr.bf16.mxu0 0
  %8619 = vmatmul.mubr.bf16.gmra.mxu0 %v8481
  %v8620 = vpop.f32.mrf.mxu0
  %v8621 = vadd.f32 0.0, %v8620
  %v8622 = vpop.f32.mrf.mxu0
  %v8623 = vpop.f32.mrf.mxu0
  %v8624 = vpop.f32.mrf.mxu0
  %8625 = vdwg.mxu0
  %v8626 = vadd.f32 %v8420, %v8581
  %v8627 = vadd.f32 %v8423, %v8584
  %v8628 = vadd.f32 %v8428, %v8589
  %v8629 = vadd.f32 %v8431, %v8592
  %v8630 = vadd.f32 %v8436, %v8597
  %v8631 = vadd.f32 %v8439, %v8600
  %v8632 = vadd.f32 %v8444, %v8605
  %v8633 = vadd.f32 %v8447, %v8608
  %v8634 = vadd.f32 %v8452, %v8613
  %v8635 = vadd.f32 %v8455, %v8616
  %v8636 = vadd.f32 %v8460, %v8621
  %v8637 = vld [vmem:[#allocation2 + $0x1ca] sm:$0xff]
  %v8638 = vld [vmem:[#allocation2 + $0x1d2] sm:$0xff]
  %v8639 = vld [vmem:[#allocation2 + $0x1da] sm:$0xff]
  %v8640 = vld [vmem:[#allocation2 + $0x1e2] sm:$0xff]
  %v8641 = vld [vmem:[#allocation2 + $0x1ea] sm:$0xff]
  %v8642 = vld [vmem:[#allocation2 + $0x1f2] sm:$0xff]
  %v8643 = vld [vmem:[#allocation2 + $0x1fa] sm:$0xff]
  %v8644 = vld [vmem:[#allocation2 + $0x202] sm:$0xff]
  %v8645 = vld [vmem:[#allocation2 + $0x20a] sm:$0xff]
  %v8646 = vld [vmem:[#allocation2 + $0x212] sm:$0xff]
  %v8647 = vld [vmem:[#allocation2 + $0x21a] sm:$0xff]
  %v8648 = vpack.c.bf16 %v8638, %v8637
  %v8649 = vpack.c.bf16 %v8640, %v8639
  %v8650 = vpack.c.bf16 %v8642, %v8641
  %v8651 = vpack.c.bf16 %v8644, %v8643
  %v8652 = vpack.c.bf16 %v8646, %v8645
  %v8653 = vpack.c.bf16 %v8647, %v8647
  %v8654 = vld [vmem:[%s737] sm:$0xf]
  %v8655 = vld [vmem:[%s737 + $0x4] sm:$0xf]
  %v8656 = vld [vmem:[%s737 + $0x8] sm:$0xf]
  %v8657 = vld [vmem:[%s737 + $0xc] sm:$0xf]
  %v8658 = vld [vmem:[%s737 + $0x10] sm:$0xf]
  %v8659 = vld [vmem:[%s737 + $0x14] sm:$0xf]
  %v8660 = vld [vmem:[%s737 + $0x18] sm:$0xf]
  %v8661 = vld [vmem:[%s737 + $0x1c] sm:$0xf]
  %v8662 = vld [vmem:[%s737 + $0x20] sm:$0xf]
  %v8663 = vld [vmem:[%s737 + $0x24] sm:$0xf]
  %v8664 = vld [vmem:[%s737 + $0x28] sm:$0xf]
  %v8665 = vld [vmem:[%s737 + $0x2c] sm:$0xf]
  %v8666 = vld [vmem:[%s737 + $0x30] sm:$0xf]
  %v8667 = vld [vmem:[%s737 + $0x34] sm:$0xf]
  %v8668 = vld [vmem:[%s737 + $0x38] sm:$0xf]
  %v8669 = vld [vmem:[%s737 + $0x3c] sm:$0xf]
  %v8686 = vunpack.c.l.b16 %v8654
  %v8687 = vunpack.c.l.b16 %v8655
  %v8688 = vunpack.c.l.b16 %v8656
  %v8689 = vunpack.c.l.b16 %v8657
  %v8690 = vunpack.c.l.b16 %v8658
  %v8691 = vunpack.c.l.b16 %v8659
  %v8692 = vunpack.c.l.b16 %v8660
  %v8693 = vunpack.c.l.b16 %v8661
  %v8694 = vunpack.c.l.b16 %v8662
  %v8695 = vunpack.c.l.b16 %v8663
  %v8696 = vunpack.c.l.b16 %v8664
  %v8697 = vunpack.c.l.b16 %v8665
  %v8698 = vunpack.c.l.b16 %v8666
  %v8699 = vunpack.c.l.b16 %v8667
  %v8700 = vunpack.c.l.b16 %v8668
  %v8701 = vunpack.c.l.b16 %v8669
  %v8702 = vpack.c.b16 %v8687, %v8686
  %v8703 = vpack.c.b16 %v8689, %v8688
  %v8704 = vpack.c.b16 %v8691, %v8690
  %v8705 = vpack.c.b16 %v8693, %v8692
  %v8706 = vpack.c.b16 %v8695, %v8694
  %v8707 = vpack.c.b16 %v8697, %v8696
  %v8708 = vpack.c.b16 %v8699, %v8698
  %v8709 = vpack.c.b16 %v8701, %v8700
  %8718 = vmatprep.subr.bf16.mxu0 0
  %8719 = vmatpush1.bf16.msra.mxu0 %v8709
  %8720 = vmatprep.subr.bf16.mxu0 0
  %8721 = vmatpush1.bf16.msra.mxu0 %v8708
  %8722 = vmatprep.subr.bf16.mxu0 0
  %8723 = vmatpush1.bf16.msra.mxu0 %v8707
  %8724 = vmatprep.subr.bf16.mxu0 0
  %8725 = vmatpush1.bf16.msra.mxu0 %v8706
  %8726 = vmatprep.subr.bf16.mxu0 0
  %8727 = vmatpush1.bf16.msra.mxu0 %v8705
  %8728 = vmatprep.subr.bf16.mxu0 0
  %8729 = vmatpush1.bf16.msra.mxu0 %v8704
  %8730 = vmatprep.subr.bf16.mxu0 0
  %8731 = vmatpush1.bf16.msra.mxu0 %v8703
  %8732 = vmatprep.subr.bf16.mxu0 0
  %8733 = vmatpush1.bf16.msra.mxu0 %v8702
  %8734 = vmatprep.subr.bf16.mxu0 0
  %8735 = vmatpush2.bf16.msra.mxu0 0
  %8736 = vmatprep.subr.bf16.mxu0 0
  %8737 = vmatpush2.bf16.msra.mxu0 0
  %8738 = vmatprep.subr.bf16.mxu0 0
  %8739 = vmatpush2.bf16.msra.mxu0 0
  %8740 = vmatprep.subr.bf16.mxu0 0
  %8741 = vmatpush2.bf16.msra.mxu0 0
  %8742 = vmatprep.subr.bf16.mxu0 0
  %8743 = vmatpush2.bf16.msra.mxu0 0
  %8744 = vmatprep.subr.bf16.mxu0 0
  %8745 = vmatpush2.bf16.msra.mxu0 0
  %8746 = vmatprep.subr.bf16.mxu0 0
  %8747 = vmatpush2.bf16.msra.mxu0 0
  %8748 = vmatprep.subr.bf16.mxu0 0
  %8749 = vmatpush2.bf16.msra.mxu0 0
  %8750 = vmatprep.mubr.bf16.mxu0 0
  %8751 = vmatmul.mubr.bf16.gmra.mxu0 %v8648
  %v8752 = vpop.f32.mrf.mxu0
  %v8753 = vadd.f32 0.0, %v8752
  %v8754 = vpop.f32.mrf.mxu0
  %v8755 = vpop.f32.mrf.mxu0
  %v8756 = vadd.f32 0.0, %v8755
  %v8757 = vpop.f32.mrf.mxu0
  %8758 = vmatprep.mubr.bf16.mxu0 0
  %8759 = vmatmul.mubr.bf16.gmra.mxu0 %v8649
  %v8760 = vpop.f32.mrf.mxu0
  %v8761 = vadd.f32 0.0, %v8760
  %v8762 = vpop.f32.mrf.mxu0
  %v8763 = vpop.f32.mrf.mxu0
  %v8764 = vadd.f32 0.0, %v8763
  %v8765 = vpop.f32.mrf.mxu0
  %8766 = vmatprep.mubr.bf16.mxu0 0
  %8767 = vmatmul.mubr.bf16.gmra.mxu0 %v8650
  %v8768 = vpop.f32.mrf.mxu0
  %v8769 = vadd.f32 0.0, %v8768
  %v8770 = vpop.f32.mrf.mxu0
  %v8771 = vpop.f32.mrf.mxu0
  %v8772 = vadd.f32 0.0, %v8771
  %v8773 = vpop.f32.mrf.mxu0
  %8774 = vmatprep.mubr.bf16.mxu0 0
  %8775 = vmatmul.mubr.bf16.gmra.mxu0 %v8651
  %v8776 = vpop.f32.mrf.mxu0
  %v8777 = vadd.f32 0.0, %v8776
  %v8778 = vpop.f32.mrf.mxu0
  %v8779 = vpop.f32.mrf.mxu0
  %v8780 = vadd.f32 0.0, %v8779
  %v8781 = vpop.f32.mrf.mxu0
  %8782 = vmatprep.mubr.bf16.mxu0 0
  %8783 = vmatmul.mubr.bf16.gmra.mxu0 %v8652
  %v8784 = vpop.f32.mrf.mxu0
  %v8785 = vadd.f32 0.0, %v8784
  %v8786 = vpop.f32.mrf.mxu0
  %v8787 = vpop.f32.mrf.mxu0
  %v8788 = vadd.f32 0.0, %v8787
  %v8789 = vpop.f32.mrf.mxu0
  %8790 = vmatprep.mubr.bf16.mxu0 0
  %8791 = vmatmul.mubr.bf16.gmra.mxu0 %v8653
  %v8792 = vpop.f32.mrf.mxu0
  %v8793 = vadd.f32 0.0, %v8792
  %v8794 = vpop.f32.mrf.mxu0
  %v8795 = vpop.f32.mrf.mxu0
  %v8796 = vpop.f32.mrf.mxu0
  %8797 = vdwg.mxu0
  %v8798 = vadd.f32 %v8626, %v8753
  %v8799 = vadd.f32 %v8627, %v8756
  %v8800 = vadd.f32 %v8628, %v8761
  %v8801 = vadd.f32 %v8629, %v8764
  %v8802 = vadd.f32 %v8630, %v8769
  %v8803 = vadd.f32 %v8631, %v8772
  %v8804 = vadd.f32 %v8632, %v8777
  %v8805 = vadd.f32 %v8633, %v8780
  %v8806 = vadd.f32 %v8634, %v8785
  %v8807 = vadd.f32 %v8635, %v8788
  %v8808 = vadd.f32 %v8636, %v8793
  %v8809 = vld [vmem:[#allocation2 + $0x1cb] sm:$0xff]
  %v8810 = vld [vmem:[#allocation2 + $0x1d3] sm:$0xff]
  %v8811 = vld [vmem:[#allocation2 + $0x1db] sm:$0xff]
  %v8812 = vld [vmem:[#allocation2 + $0x1e3] sm:$0xff]
  %v8813 = vld [vmem:[#allocation2 + $0x1eb] sm:$0xff]
  %v8814 = vld [vmem:[#allocation2 + $0x1f3] sm:$0xff]
  %v8815 = vld [vmem:[#allocation2 + $0x1fb] sm:$0xff]
  %v8816 = vld [vmem:[#allocation2 + $0x203] sm:$0xff]
  %v8817 = vld [vmem:[#allocation2 + $0x20b] sm:$0xff]
  %v8818 = vld [vmem:[#allocation2 + $0x213] sm:$0xff]
  %v8819 = vld [vmem:[#allocation2 + $0x21b] sm:$0xff]
  %v8820 = vpack.c.bf16 %v8810, %v8809
  %v8821 = vpack.c.bf16 %v8812, %v8811
  %v8822 = vpack.c.bf16 %v8814, %v8813
  %v8823 = vpack.c.bf16 %v8816, %v8815
  %v8824 = vpack.c.bf16 %v8818, %v8817
  %v8825 = vpack.c.bf16 %v8819, %v8819
  %v8826 = vld [vmem:[%s910] sm:$0xf]
  %v8827 = vld [vmem:[%s910 + $0x4] sm:$0xf]
  %v8828 = vld [vmem:[%s910 + $0x8] sm:$0xf]
  %v8829 = vld [vmem:[%s910 + $0xc] sm:$0xf]
  %v8830 = vld [vmem:[%s910 + $0x10] sm:$0xf]
  %v8831 = vld [vmem:[%s910 + $0x14] sm:$0xf]
  %v8832 = vld [vmem:[%s910 + $0x18] sm:$0xf]
  %v8833 = vld [vmem:[%s910 + $0x1c] sm:$0xf]
  %v8834 = vld [vmem:[%s910 + $0x20] sm:$0xf]
  %v8835 = vld [vmem:[%s910 + $0x24] sm:$0xf]
  %v8836 = vld [vmem:[%s910 + $0x28] sm:$0xf]
  %v8837 = vld [vmem:[%s910 + $0x2c] sm:$0xf]
  %v8838 = vld [vmem:[%s910 + $0x30] sm:$0xf]
  %v8839 = vld [vmem:[%s910 + $0x34] sm:$0xf]
  %v8840 = vld [vmem:[%s910 + $0x38] sm:$0xf]
  %v8841 = vld [vmem:[%s910 + $0x3c] sm:$0xf]
  %v8858 = vunpack.c.l.b16 %v8826
  %v8859 = vunpack.c.l.b16 %v8827
  %v8860 = vunpack.c.l.b16 %v8828
  %v8861 = vunpack.c.l.b16 %v8829
  %v8862 = vunpack.c.l.b16 %v8830
  %v8863 = vunpack.c.l.b16 %v8831
  %v8864 = vunpack.c.l.b16 %v8832
  %v8865 = vunpack.c.l.b16 %v8833
  %v8866 = vunpack.c.l.b16 %v8834
  %v8867 = vunpack.c.l.b16 %v8835
  %v8868 = vunpack.c.l.b16 %v8836
  %v8869 = vunpack.c.l.b16 %v8837
  %v8870 = vunpack.c.l.b16 %v8838
  %v8871 = vunpack.c.l.b16 %v8839
  %v8872 = vunpack.c.l.b16 %v8840
  %v8873 = vunpack.c.l.b16 %v8841
  %v8874 = vpack.c.b16 %v8859, %v8858
  %v8875 = vpack.c.b16 %v8861, %v8860
  %v8876 = vpack.c.b16 %v8863, %v8862
  %v8877 = vpack.c.b16 %v8865, %v8864
  %v8878 = vpack.c.b16 %v8867, %v8866
  %v8879 = vpack.c.b16 %v8869, %v8868
  %v8880 = vpack.c.b16 %v8871, %v8870
  %v8881 = vpack.c.b16 %v8873, %v8872
  %8890 = vmatprep.subr.bf16.mxu0 0
  %8891 = vmatpush1.bf16.msra.mxu0 %v8881
  %8892 = vmatprep.subr.bf16.mxu0 0
  %8893 = vmatpush1.bf16.msra.mxu0 %v8880
  %8894 = vmatprep.subr.bf16.mxu0 0
  %8895 = vmatpush1.bf16.msra.mxu0 %v8879
  %8896 = vmatprep.subr.bf16.mxu0 0
  %8897 = vmatpush1.bf16.msra.mxu0 %v8878
  %8898 = vmatprep.subr.bf16.mxu0 0
  %8899 = vmatpush1.bf16.msra.mxu0 %v8877
  %8900 = vmatprep.subr.bf16.mxu0 0
  %8901 = vmatpush1.bf16.msra.mxu0 %v8876
  %8902 = vmatprep.subr.bf16.mxu0 0
  %8903 = vmatpush1.bf16.msra.mxu0 %v8875
  %8904 = vmatprep.subr.bf16.mxu0 0
  %8905 = vmatpush1.bf16.msra.mxu0 %v8874
  %8906 = vmatprep.subr.bf16.mxu0 0
  %8907 = vmatpush2.bf16.msra.mxu0 0
  %8908 = vmatprep.subr.bf16.mxu0 0
  %8909 = vmatpush2.bf16.msra.mxu0 0
  %8910 = vmatprep.subr.bf16.mxu0 0
  %8911 = vmatpush2.bf16.msra.mxu0 0
  %8912 = vmatprep.subr.bf16.mxu0 0
  %8913 = vmatpush2.bf16.msra.mxu0 0
  %8914 = vmatprep.subr.bf16.mxu0 0
  %8915 = vmatpush2.bf16.msra.mxu0 0
  %8916 = vmatprep.subr.bf16.mxu0 0
  %8917 = vmatpush2.bf16.msra.mxu0 0
  %8918 = vmatprep.subr.bf16.mxu0 0
  %8919 = vmatpush2.bf16.msra.mxu0 0
  %8920 = vmatprep.subr.bf16.mxu0 0
  %8921 = vmatpush2.bf16.msra.mxu0 0
  %8922 = vmatprep.mubr.bf16.mxu0 0
  %8923 = vmatmul.mubr.bf16.gmra.mxu0 %v8820
  %v8924 = vpop.f32.mrf.mxu0
  %v8925 = vadd.f32 0.0, %v8924
  %v8926 = vpop.f32.mrf.mxu0
  %v8927 = vpop.f32.mrf.mxu0
  %v8928 = vadd.f32 0.0, %v8927
  %v8929 = vpop.f32.mrf.mxu0
  %8930 = vmatprep.mubr.bf16.mxu0 0
  %8931 = vmatmul.mubr.bf16.gmra.mxu0 %v8821
  %v8932 = vpop.f32.mrf.mxu0
  %v8933 = vadd.f32 0.0, %v8932
  %v8934 = vpop.f32.mrf.mxu0
  %v8935 = vpop.f32.mrf.mxu0
  %v8936 = vadd.f32 0.0, %v8935
  %v8937 = vpop.f32.mrf.mxu0
  %8938 = vmatprep.mubr.bf16.mxu0 0
  %8939 = vmatmul.mubr.bf16.gmra.mxu0 %v8822
  %v8940 = vpop.f32.mrf.mxu0
  %v8941 = vadd.f32 0.0, %v8940
  %v8942 = vpop.f32.mrf.mxu0
  %v8943 = vpop.f32.mrf.mxu0
  %v8944 = vadd.f32 0.0, %v8943
  %v8945 = vpop.f32.mrf.mxu0
  %8946 = vmatprep.mubr.bf16.mxu0 0
  %8947 = vmatmul.mubr.bf16.gmra.mxu0 %v8823
  %v8948 = vpop.f32.mrf.mxu0
  %v8949 = vadd.f32 0.0, %v8948
  %v8950 = vpop.f32.mrf.mxu0
  %v8951 = vpop.f32.mrf.mxu0
  %v8952 = vadd.f32 0.0, %v8951
  %v8953 = vpop.f32.mrf.mxu0
  %8954 = vmatprep.mubr.bf16.mxu0 0
  %8955 = vmatmul.mubr.bf16.gmra.mxu0 %v8824
  %v8956 = vpop.f32.mrf.mxu0
  %v8957 = vadd.f32 0.0, %v8956
  %v8958 = vpop.f32.mrf.mxu0
  %v8959 = vpop.f32.mrf.mxu0
  %v8960 = vadd.f32 0.0, %v8959
  %v8961 = vpop.f32.mrf.mxu0
  %8962 = vmatprep.mubr.bf16.mxu0 0
  %8963 = vmatmul.mubr.bf16.gmra.mxu0 %v8825
  %v8964 = vpop.f32.mrf.mxu0
  %v8965 = vadd.f32 0.0, %v8964
  %v8966 = vpop.f32.mrf.mxu0
  %v8967 = vpop.f32.mrf.mxu0
  %v8968 = vpop.f32.mrf.mxu0
  %8969 = vdwg.mxu0
  %v8970 = vadd.f32 %v8798, %v8925
  %v8971 = vadd.f32 %v8799, %v8928
  %v8972 = vadd.f32 %v8800, %v8933
  %v8973 = vadd.f32 %v8801, %v8936
  %v8974 = vadd.f32 %v8802, %v8941
  %v8975 = vadd.f32 %v8803, %v8944
  %v8976 = vadd.f32 %v8804, %v8949
  %v8977 = vadd.f32 %v8805, %v8952
  %v8978 = vadd.f32 %v8806, %v8957
  %v8979 = vadd.f32 %v8807, %v8960
  %v8980 = vadd.f32 %v8808, %v8965
  %v8981 = vld [vmem:[#allocation2 + $0x1cc] sm:$0xff]
  %v8982 = vld [vmem:[#allocation2 + $0x1d4] sm:$0xff]
  %v8983 = vld [vmem:[#allocation2 + $0x1dc] sm:$0xff]
  %v8984 = vld [vmem:[#allocation2 + $0x1e4] sm:$0xff]
  %v8985 = vld [vmem:[#allocation2 + $0x1ec] sm:$0xff]
  %v8986 = vld [vmem:[#allocation2 + $0x1f4] sm:$0xff]
  %v8987 = vld [vmem:[#allocation2 + $0x1fc] sm:$0xff]
  %v8988 = vld [vmem:[#allocation2 + $0x204] sm:$0xff]
  %v8989 = vld [vmem:[#allocation2 + $0x20c] sm:$0xff]
  %v8990 = vld [vmem:[#allocation2 + $0x214] sm:$0xff]
  %v8991 = vld [vmem:[#allocation2 + $0x21c] sm:$0xff]
  %v8992 = vpack.c.bf16 %v8982, %v8981
  %v8993 = vpack.c.bf16 %v8984, %v8983
  %v8994 = vpack.c.bf16 %v8986, %v8985
  %v8995 = vpack.c.bf16 %v8988, %v8987
  %v8996 = vpack.c.bf16 %v8990, %v8989
  %v8997 = vpack.c.bf16 %v8991, %v8991
  %v8998 = vld [vmem:[%s1083] sm:$0xf]
  %v8999 = vld [vmem:[%s1083 + $0x4] sm:$0xf]
  %v9000 = vld [vmem:[%s1083 + $0x8] sm:$0xf]
  %v9001 = vld [vmem:[%s1083 + $0xc] sm:$0xf]
  %v9002 = vld [vmem:[%s1083 + $0x10] sm:$0xf]
  %v9003 = vld [vmem:[%s1083 + $0x14] sm:$0xf]
  %v9004 = vld [vmem:[%s1083 + $0x18] sm:$0xf]
  %v9005 = vld [vmem:[%s1083 + $0x1c] sm:$0xf]
  %v9006 = vld [vmem:[%s1083 + $0x20] sm:$0xf]
  %v9007 = vld [vmem:[%s1083 + $0x24] sm:$0xf]
  %v9008 = vld [vmem:[%s1083 + $0x28] sm:$0xf]
  %v9009 = vld [vmem:[%s1083 + $0x2c] sm:$0xf]
  %v9010 = vld [vmem:[%s1083 + $0x30] sm:$0xf]
  %v9011 = vld [vmem:[%s1083 + $0x34] sm:$0xf]
  %v9012 = vld [vmem:[%s1083 + $0x38] sm:$0xf]
  %v9013 = vld [vmem:[%s1083 + $0x3c] sm:$0xf]
  %v9030 = vunpack.c.l.b16 %v8998
  %v9031 = vunpack.c.l.b16 %v8999
  %v9032 = vunpack.c.l.b16 %v9000
  %v9033 = vunpack.c.l.b16 %v9001
  %v9034 = vunpack.c.l.b16 %v9002
  %v9035 = vunpack.c.l.b16 %v9003
  %v9036 = vunpack.c.l.b16 %v9004
  %v9037 = vunpack.c.l.b16 %v9005
  %v9038 = vunpack.c.l.b16 %v9006
  %v9039 = vunpack.c.l.b16 %v9007
  %v9040 = vunpack.c.l.b16 %v9008
  %v9041 = vunpack.c.l.b16 %v9009
  %v9042 = vunpack.c.l.b16 %v9010
  %v9043 = vunpack.c.l.b16 %v9011
  %v9044 = vunpack.c.l.b16 %v9012
  %v9045 = vunpack.c.l.b16 %v9013
  %v9046 = vpack.c.b16 %v9031, %v9030
  %v9047 = vpack.c.b16 %v9033, %v9032
  %v9048 = vpack.c.b16 %v9035, %v9034
  %v9049 = vpack.c.b16 %v9037, %v9036
  %v9050 = vpack.c.b16 %v9039, %v9038
  %v9051 = vpack.c.b16 %v9041, %v9040
  %v9052 = vpack.c.b16 %v9043, %v9042
  %v9053 = vpack.c.b16 %v9045, %v9044
  %9062 = vmatprep.subr.bf16.mxu0 0
  %9063 = vmatpush1.bf16.msra.mxu0 %v9053
  %9064 = vmatprep.subr.bf16.mxu0 0
  %9065 = vmatpush1.bf16.msra.mxu0 %v9052
  %9066 = vmatprep.subr.bf16.mxu0 0
  %9067 = vmatpush1.bf16.msra.mxu0 %v9051
  %9068 = vmatprep.subr.bf16.mxu0 0
  %9069 = vmatpush1.bf16.msra.mxu0 %v9050
  %9070 = vmatprep.subr.bf16.mxu0 0
  %9071 = vmatpush1.bf16.msra.mxu0 %v9049
  %9072 = vmatprep.subr.bf16.mxu0 0
  %9073 = vmatpush1.bf16.msra.mxu0 %v9048
  %9074 = vmatprep.subr.bf16.mxu0 0
  %9075 = vmatpush1.bf16.msra.mxu0 %v9047
  %9076 = vmatprep.subr.bf16.mxu0 0
  %9077 = vmatpush1.bf16.msra.mxu0 %v9046
  %9078 = vmatprep.subr.bf16.mxu0 0
  %9079 = vmatpush2.bf16.msra.mxu0 0
  %9080 = vmatprep.subr.bf16.mxu0 0
  %9081 = vmatpush2.bf16.msra.mxu0 0
  %9082 = vmatprep.subr.bf16.mxu0 0
  %9083 = vmatpush2.bf16.msra.mxu0 0
  %9084 = vmatprep.subr.bf16.mxu0 0
  %9085 = vmatpush2.bf16.msra.mxu0 0
  %9086 = vmatprep.subr.bf16.mxu0 0
  %9087 = vmatpush2.bf16.msra.mxu0 0
  %9088 = vmatprep.subr.bf16.mxu0 0
  %9089 = vmatpush2.bf16.msra.mxu0 0
  %9090 = vmatprep.subr.bf16.mxu0 0
  %9091 = vmatpush2.bf16.msra.mxu0 0
  %9092 = vmatprep.subr.bf16.mxu0 0
  %9093 = vmatpush2.bf16.msra.mxu0 0
  %9094 = vmatprep.mubr.bf16.mxu0 0
  %9095 = vmatmul.mubr.bf16.gmra.mxu0 %v8992
  %v9096 = vpop.f32.mrf.mxu0
  %v9097 = vadd.f32 0.0, %v9096
  %v9098 = vpop.f32.mrf.mxu0
  %v9099 = vpop.f32.mrf.mxu0
  %v9100 = vadd.f32 0.0, %v9099
  %v9101 = vpop.f32.mrf.mxu0
  %9102 = vmatprep.mubr.bf16.mxu0 0
  %9103 = vmatmul.mubr.bf16.gmra.mxu0 %v8993
  %v9104 = vpop.f32.mrf.mxu0
  %v9105 = vadd.f32 0.0, %v9104
  %v9106 = vpop.f32.mrf.mxu0
  %v9107 = vpop.f32.mrf.mxu0
  %v9108 = vadd.f32 0.0, %v9107
  %v9109 = vpop.f32.mrf.mxu0
  %9110 = vmatprep.mubr.bf16.mxu0 0
  %9111 = vmatmul.mubr.bf16.gmra.mxu0 %v8994
  %v9112 = vpop.f32.mrf.mxu0
  %v9113 = vadd.f32 0.0, %v9112
  %v9114 = vpop.f32.mrf.mxu0
  %v9115 = vpop.f32.mrf.mxu0
  %v9116 = vadd.f32 0.0, %v9115
  %v9117 = vpop.f32.mrf.mxu0
  %9118 = vmatprep.mubr.bf16.mxu0 0
  %9119 = vmatmul.mubr.bf16.gmra.mxu0 %v8995
  %v9120 = vpop.f32.mrf.mxu0
  %v9121 = vadd.f32 0.0, %v9120
  %v9122 = vpop.f32.mrf.mxu0
  %v9123 = vpop.f32.mrf.mxu0
  %v9124 = vadd.f32 0.0, %v9123
  %v9125 = vpop.f32.mrf.mxu0
  %9126 = vmatprep.mubr.bf16.mxu0 0
  %9127 = vmatmul.mubr.bf16.gmra.mxu0 %v8996
  %v9128 = vpop.f32.mrf.mxu0
  %v9129 = vadd.f32 0.0, %v9128
  %v9130 = vpop.f32.mrf.mxu0
  %v9131 = vpop.f32.mrf.mxu0
  %v9132 = vadd.f32 0.0, %v9131
  %v9133 = vpop.f32.mrf.mxu0
  %9134 = vmatprep.mubr.bf16.mxu0 0
  %9135 = vmatmul.mubr.bf16.gmra.mxu0 %v8997
  %v9136 = vpop.f32.mrf.mxu0
  %v9137 = vadd.f32 0.0, %v9136
  %v9138 = vpop.f32.mrf.mxu0
  %v9139 = vpop.f32.mrf.mxu0
  %v9140 = vpop.f32.mrf.mxu0
  %9141 = vdwg.mxu0
  %v9142 = vadd.f32 %v8970, %v9097
  %v9143 = vadd.f32 %v8971, %v9100
  %v9144 = vadd.f32 %v8972, %v9105
  %v9145 = vadd.f32 %v8973, %v9108
  %v9146 = vadd.f32 %v8974, %v9113
  %v9147 = vadd.f32 %v8975, %v9116
  %v9148 = vadd.f32 %v8976, %v9121
  %v9149 = vadd.f32 %v8977, %v9124
  %v9150 = vadd.f32 %v8978, %v9129
  %v9151 = vadd.f32 %v8979, %v9132
  %v9152 = vadd.f32 %v8980, %v9137
  %v9153 = vld [vmem:[#allocation2 + $0x1dc] sm:$0xff]
  %v9154 = vld [vmem:[#allocation2 + $0x1e4] sm:$0xff]
  %v9155 = vld [vmem:[#allocation2 + $0x1ec] sm:$0xff]
  %v9156 = vld [vmem:[#allocation2 + $0x1f4] sm:$0xff]
  %v9157 = vld [vmem:[#allocation2 + $0x1fc] sm:$0xff]
  %v9158 = vld [vmem:[#allocation2 + $0x204] sm:$0xff]
  %v9159 = vld [vmem:[#allocation2 + $0x20c] sm:$0xff]
  %v9160 = vld [vmem:[#allocation2 + $0x214] sm:$0xff]
  %v9161 = vld [vmem:[#allocation2 + $0x21c] sm:$0xff]
  %v9162 = vld [vmem:[#allocation2 + $0x224] sm:$0xff]
  %v9163 = vld [vmem:[#allocation2 + $0x22c] sm:$0xff]
  %v9164 = vpack.c.bf16 %v9154, %v9153
  %v9165 = vpack.c.bf16 %v9156, %v9155
  %v9166 = vpack.c.bf16 %v9158, %v9157
  %v9167 = vpack.c.bf16 %v9160, %v9159
  %v9168 = vpack.c.bf16 %v9162, %v9161
  %v9169 = vpack.c.bf16 %v9163, %v9163
  %v9170 = vld [vmem:[%s1256] sm:$0xf]
  %v9171 = vld [vmem:[%s1256 + $0x4] sm:$0xf]
  %v9172 = vld [vmem:[%s1256 + $0x8] sm:$0xf]
  %v9173 = vld [vmem:[%s1256 + $0xc] sm:$0xf]
  %v9174 = vld [vmem:[%s1256 + $0x10] sm:$0xf]
  %v9175 = vld [vmem:[%s1256 + $0x14] sm:$0xf]
  %v9176 = vld [vmem:[%s1256 + $0x18] sm:$0xf]
  %v9177 = vld [vmem:[%s1256 + $0x1c] sm:$0xf]
  %v9178 = vld [vmem:[%s1256 + $0x20] sm:$0xf]
  %v9179 = vld [vmem:[%s1256 + $0x24] sm:$0xf]
  %v9180 = vld [vmem:[%s1256 + $0x28] sm:$0xf]
  %v9181 = vld [vmem:[%s1256 + $0x2c] sm:$0xf]
  %v9182 = vld [vmem:[%s1256 + $0x30] sm:$0xf]
  %v9183 = vld [vmem:[%s1256 + $0x34] sm:$0xf]
  %v9184 = vld [vmem:[%s1256 + $0x38] sm:$0xf]
  %v9185 = vld [vmem:[%s1256 + $0x3c] sm:$0xf]
  %v9202 = vunpack.c.l.b16 %v9170
  %v9203 = vunpack.c.l.b16 %v9171
  %v9204 = vunpack.c.l.b16 %v9172
  %v9205 = vunpack.c.l.b16 %v9173
  %v9206 = vunpack.c.l.b16 %v9174
  %v9207 = vunpack.c.l.b16 %v9175
  %v9208 = vunpack.c.l.b16 %v9176
  %v9209 = vunpack.c.l.b16 %v9177
  %v9210 = vunpack.c.l.b16 %v9178
  %v9211 = vunpack.c.l.b16 %v9179
  %v9212 = vunpack.c.l.b16 %v9180
  %v9213 = vunpack.c.l.b16 %v9181
  %v9214 = vunpack.c.l.b16 %v9182
  %v9215 = vunpack.c.l.b16 %v9183
  %v9216 = vunpack.c.l.b16 %v9184
  %v9217 = vunpack.c.l.b16 %v9185
  %v9218 = vpack.c.b16 %v9203, %v9202
  %v9219 = vpack.c.b16 %v9205, %v9204
  %v9220 = vpack.c.b16 %v9207, %v9206
  %v9221 = vpack.c.b16 %v9209, %v9208
  %v9222 = vpack.c.b16 %v9211, %v9210
  %v9223 = vpack.c.b16 %v9213, %v9212
  %v9224 = vpack.c.b16 %v9215, %v9214
  %v9225 = vpack.c.b16 %v9217, %v9216
  %9234 = vmatprep.subr.bf16.mxu0 0
  %9235 = vmatpush1.bf16.msra.mxu0 %v9225
  %9236 = vmatprep.subr.bf16.mxu0 0
  %9237 = vmatpush1.bf16.msra.mxu0 %v9224
  %9238 = vmatprep.subr.bf16.mxu0 0
  %9239 = vmatpush1.bf16.msra.mxu0 %v9223
  %9240 = vmatprep.subr.bf16.mxu0 0
  %9241 = vmatpush1.bf16.msra.mxu0 %v9222
  %9242 = vmatprep.subr.bf16.mxu0 0
  %9243 = vmatpush1.bf16.msra.mxu0 %v9221
  %9244 = vmatprep.subr.bf16.mxu0 0
  %9245 = vmatpush1.bf16.msra.mxu0 %v9220
  %9246 = vmatprep.subr.bf16.mxu0 0
  %9247 = vmatpush1.bf16.msra.mxu0 %v9219
  %9248 = vmatprep.subr.bf16.mxu0 0
  %9249 = vmatpush1.bf16.msra.mxu0 %v9218
  %9250 = vmatprep.subr.bf16.mxu0 0
  %9251 = vmatpush2.bf16.msra.mxu0 0
  %9252 = vmatprep.subr.bf16.mxu0 0
  %9253 = vmatpush2.bf16.msra.mxu0 0
  %9254 = vmatprep.subr.bf16.mxu0 0
  %9255 = vmatpush2.bf16.msra.mxu0 0
  %9256 = vmatprep.subr.bf16.mxu0 0
  %9257 = vmatpush2.bf16.msra.mxu0 0
  %9258 = vmatprep.subr.bf16.mxu0 0
  %9259 = vmatpush2.bf16.msra.mxu0 0
  %9260 = vmatprep.subr.bf16.mxu0 0
  %9261 = vmatpush2.bf16.msra.mxu0 0
  %9262 = vmatprep.subr.bf16.mxu0 0
  %9263 = vmatpush2.bf16.msra.mxu0 0
  %9264 = vmatprep.subr.bf16.mxu0 0
  %9265 = vmatpush2.bf16.msra.mxu0 0
  %9266 = vmatprep.mubr.bf16.mxu0 0
  %9267 = vmatmul.mubr.bf16.gmra.mxu0 %v9164
  %v9268 = vpop.f32.mrf.mxu0
  %v9269 = vadd.f32 0.0, %v9268
  %v9270 = vpop.f32.mrf.mxu0
  %v9271 = vpop.f32.mrf.mxu0
  %v9272 = vadd.f32 0.0, %v9271
  %v9273 = vpop.f32.mrf.mxu0
  %9274 = vmatprep.mubr.bf16.mxu0 0
  %9275 = vmatmul.mubr.bf16.gmra.mxu0 %v9165
  %v9276 = vpop.f32.mrf.mxu0
  %v9277 = vadd.f32 0.0, %v9276
  %v9278 = vpop.f32.mrf.mxu0
  %v9279 = vpop.f32.mrf.mxu0
  %v9280 = vadd.f32 0.0, %v9279
  %v9281 = vpop.f32.mrf.mxu0
  %9282 = vmatprep.mubr.bf16.mxu0 0
  %9283 = vmatmul.mubr.bf16.gmra.mxu0 %v9166
  %v9284 = vpop.f32.mrf.mxu0
  %v9285 = vadd.f32 0.0, %v9284
  %v9286 = vpop.f32.mrf.mxu0
  %v9287 = vpop.f32.mrf.mxu0
  %v9288 = vadd.f32 0.0, %v9287
  %v9289 = vpop.f32.mrf.mxu0
  %9290 = vmatprep.mubr.bf16.mxu0 0
  %9291 = vmatmul.mubr.bf16.gmra.mxu0 %v9167
  %v9292 = vpop.f32.mrf.mxu0
  %v9293 = vadd.f32 0.0, %v9292
  %v9294 = vpop.f32.mrf.mxu0
  %v9295 = vpop.f32.mrf.mxu0
  %v9296 = vadd.f32 0.0, %v9295
  %v9297 = vpop.f32.mrf.mxu0
  %9298 = vmatprep.mubr.bf16.mxu0 0
  %9299 = vmatmul.mubr.bf16.gmra.mxu0 %v9168
  %v9300 = vpop.f32.mrf.mxu0
  %v9301 = vadd.f32 0.0, %v9300
  %v9302 = vpop.f32.mrf.mxu0
  %v9303 = vpop.f32.mrf.mxu0
  %v9304 = vadd.f32 0.0, %v9303
  %v9305 = vpop.f32.mrf.mxu0
  %9306 = vmatprep.mubr.bf16.mxu0 0
  %9307 = vmatmul.mubr.bf16.gmra.mxu0 %v9169
  %v9308 = vpop.f32.mrf.mxu0
  %v9309 = vadd.f32 0.0, %v9308
  %v9310 = vpop.f32.mrf.mxu0
  %v9311 = vpop.f32.mrf.mxu0
  %v9312 = vpop.f32.mrf.mxu0
  %9313 = vdwg.mxu0
  %v9314 = vadd.f32 %v9142, %v9269
  %v9315 = vadd.f32 %v9143, %v9272
  %v9316 = vadd.f32 %v9144, %v9277
  %v9317 = vadd.f32 %v9145, %v9280
  %v9318 = vadd.f32 %v9146, %v9285
  %v9319 = vadd.f32 %v9147, %v9288
  %v9320 = vadd.f32 %v9148, %v9293
  %v9321 = vadd.f32 %v9149, %v9296
  %v9322 = vadd.f32 %v9150, %v9301
  %v9323 = vadd.f32 %v9151, %v9304
  %v9324 = vadd.f32 %v9152, %v9309
  %v9325 = vld [vmem:[#allocation2 + $0x1dd] sm:$0xff]
  %v9326 = vld [vmem:[#allocation2 + $0x1e5] sm:$0xff]
  %v9327 = vld [vmem:[#allocation2 + $0x1ed] sm:$0xff]
  %v9328 = vld [vmem:[#allocation2 + $0x1f5] sm:$0xff]
  %v9329 = vld [vmem:[#allocation2 + $0x1fd] sm:$0xff]
  %v9330 = vld [vmem:[#allocation2 + $0x205] sm:$0xff]
  %v9331 = vld [vmem:[#allocation2 + $0x20d] sm:$0xff]
  %v9332 = vld [vmem:[#allocation2 + $0x215] sm:$0xff]
  %v9333 = vld [vmem:[#allocation2 + $0x21d] sm:$0xff]
  %v9334 = vld [vmem:[#allocation2 + $0x225] sm:$0xff]
  %v9335 = vld [vmem:[#allocation2 + $0x22d] sm:$0xff]
  %v9336 = vpack.c.bf16 %v9326, %v9325
  %v9337 = vpack.c.bf16 %v9328, %v9327
  %v9338 = vpack.c.bf16 %v9330, %v9329
  %v9339 = vpack.c.bf16 %v9332, %v9331
  %v9340 = vpack.c.bf16 %v9334, %v9333
  %v9341 = vpack.c.bf16 %v9335, %v9335
  %v9342 = vld [vmem:[%s1429] sm:$0xf]
  %v9343 = vld [vmem:[%s1429 + $0x4] sm:$0xf]
  %v9344 = vld [vmem:[%s1429 + $0x8] sm:$0xf]
  %v9345 = vld [vmem:[%s1429 + $0xc] sm:$0xf]
  %v9346 = vld [vmem:[%s1429 + $0x10] sm:$0xf]
  %v9347 = vld [vmem:[%s1429 + $0x14] sm:$0xf]
  %v9348 = vld [vmem:[%s1429 + $0x18] sm:$0xf]
  %v9349 = vld [vmem:[%s1429 + $0x1c] sm:$0xf]
  %v9350 = vld [vmem:[%s1429 + $0x20] sm:$0xf]
  %v9351 = vld [vmem:[%s1429 + $0x24] sm:$0xf]
  %v9352 = vld [vmem:[%s1429 + $0x28] sm:$0xf]
  %v9353 = vld [vmem:[%s1429 + $0x2c] sm:$0xf]
  %v9354 = vld [vmem:[%s1429 + $0x30] sm:$0xf]
  %v9355 = vld [vmem:[%s1429 + $0x34] sm:$0xf]
  %v9356 = vld [vmem:[%s1429 + $0x38] sm:$0xf]
  %v9357 = vld [vmem:[%s1429 + $0x3c] sm:$0xf]
  %v9374 = vunpack.c.l.b16 %v9342
  %v9375 = vunpack.c.l.b16 %v9343
  %v9376 = vunpack.c.l.b16 %v9344
  %v9377 = vunpack.c.l.b16 %v9345
  %v9378 = vunpack.c.l.b16 %v9346
  %v9379 = vunpack.c.l.b16 %v9347
  %v9380 = vunpack.c.l.b16 %v9348
  %v9381 = vunpack.c.l.b16 %v9349
  %v9382 = vunpack.c.l.b16 %v9350
  %v9383 = vunpack.c.l.b16 %v9351
  %v9384 = vunpack.c.l.b16 %v9352
  %v9385 = vunpack.c.l.b16 %v9353
  %v9386 = vunpack.c.l.b16 %v9354
  %v9387 = vunpack.c.l.b16 %v9355
  %v9388 = vunpack.c.l.b16 %v9356
  %v9389 = vunpack.c.l.b16 %v9357
  %v9390 = vpack.c.b16 %v9375, %v9374
  %v9391 = vpack.c.b16 %v9377, %v9376
  %v9392 = vpack.c.b16 %v9379, %v9378
  %v9393 = vpack.c.b16 %v9381, %v9380
  %v9394 = vpack.c.b16 %v9383, %v9382
  %v9395 = vpack.c.b16 %v9385, %v9384
  %v9396 = vpack.c.b16 %v9387, %v9386
  %v9397 = vpack.c.b16 %v9389, %v9388
  %9406 = vmatprep.subr.bf16.mxu0 0
  %9407 = vmatpush1.bf16.msra.mxu0 %v9397
  %9408 = vmatprep.subr.bf16.mxu0 0
  %9409 = vmatpush1.bf16.msra.mxu0 %v9396
  %9410 = vmatprep.subr.bf16.mxu0 0
  %9411 = vmatpush1.bf16.msra.mxu0 %v9395
  %9412 = vmatprep.subr.bf16.mxu0 0
  %9413 = vmatpush1.bf16.msra.mxu0 %v9394
  %9414 = vmatprep.subr.bf16.mxu0 0
  %9415 = vmatpush1.bf16.msra.mxu0 %v9393
  %9416 = vmatprep.subr.bf16.mxu0 0
  %9417 = vmatpush1.bf16.msra.mxu0 %v9392
  %9418 = vmatprep.subr.bf16.mxu0 0
  %9419 = vmatpush1.bf16.msra.mxu0 %v9391
  %9420 = vmatprep.subr.bf16.mxu0 0
  %9421 = vmatpush1.bf16.msra.mxu0 %v9390
  %9422 = vmatprep.subr.bf16.mxu0 0
  %9423 = vmatpush2.bf16.msra.mxu0 0
  %9424 = vmatprep.subr.bf16.mxu0 0
  %9425 = vmatpush2.bf16.msra.mxu0 0
  %9426 = vmatprep.subr.bf16.mxu0 0
  %9427 = vmatpush2.bf16.msra.mxu0 0
  %9428 = vmatprep.subr.bf16.mxu0 0
  %9429 = vmatpush2.bf16.msra.mxu0 0
  %9430 = vmatprep.subr.bf16.mxu0 0
  %9431 = vmatpush2.bf16.msra.mxu0 0
  %9432 = vmatprep.subr.bf16.mxu0 0
  %9433 = vmatpush2.bf16.msra.mxu0 0
  %9434 = vmatprep.subr.bf16.mxu0 0
  %9435 = vmatpush2.bf16.msra.mxu0 0
  %9436 = vmatprep.subr.bf16.mxu0 0
  %9437 = vmatpush2.bf16.msra.mxu0 0
  %9438 = vmatprep.mubr.bf16.mxu0 0
  %9439 = vmatmul.mubr.bf16.gmra.mxu0 %v9336
  %v9440 = vpop.f32.mrf.mxu0
  %v9441 = vadd.f32 0.0, %v9440
  %v9442 = vpop.f32.mrf.mxu0
  %v9443 = vpop.f32.mrf.mxu0
  %v9444 = vadd.f32 0.0, %v9443
  %v9445 = vpop.f32.mrf.mxu0
  %9446 = vmatprep.mubr.bf16.mxu0 0
  %9447 = vmatmul.mubr.bf16.gmra.mxu0 %v9337
  %v9448 = vpop.f32.mrf.mxu0
  %v9449 = vadd.f32 0.0, %v9448
  %v9450 = vpop.f32.mrf.mxu0
  %v9451 = vpop.f32.mrf.mxu0
  %v9452 = vadd.f32 0.0, %v9451
  %v9453 = vpop.f32.mrf.mxu0
  %9454 = vmatprep.mubr.bf16.mxu0 0
  %9455 = vmatmul.mubr.bf16.gmra.mxu0 %v9338
  %v9456 = vpop.f32.mrf.mxu0
  %v9457 = vadd.f32 0.0, %v9456
  %v9458 = vpop.f32.mrf.mxu0
  %v9459 = vpop.f32.mrf.mxu0
  %v9460 = vadd.f32 0.0, %v9459
  %v9461 = vpop.f32.mrf.mxu0
  %9462 = vmatprep.mubr.bf16.mxu0 0
  %9463 = vmatmul.mubr.bf16.gmra.mxu0 %v9339
  %v9464 = vpop.f32.mrf.mxu0
  %v9465 = vadd.f32 0.0, %v9464
  %v9466 = vpop.f32.mrf.mxu0
  %v9467 = vpop.f32.mrf.mxu0
  %v9468 = vadd.f32 0.0, %v9467
  %v9469 = vpop.f32.mrf.mxu0
  %9470 = vmatprep.mubr.bf16.mxu0 0
  %9471 = vmatmul.mubr.bf16.gmra.mxu0 %v9340
  %v9472 = vpop.f32.mrf.mxu0
  %v9473 = vadd.f32 0.0, %v9472
  %v9474 = vpop.f32.mrf.mxu0
  %v9475 = vpop.f32.mrf.mxu0
  %v9476 = vadd.f32 0.0, %v9475
  %v9477 = vpop.f32.mrf.mxu0
  %9478 = vmatprep.mubr.bf16.mxu0 0
  %9479 = vmatmul.mubr.bf16.gmra.mxu0 %v9341
  %v9480 = vpop.f32.mrf.mxu0
  %v9481 = vadd.f32 0.0, %v9480
  %v9482 = vpop.f32.mrf.mxu0
  %v9483 = vpop.f32.mrf.mxu0
  %v9484 = vpop.f32.mrf.mxu0
  %9485 = vdwg.mxu0
  %v9486 = vadd.f32 %v9314, %v9441
  %v9487 = vadd.f32 %v9315, %v9444
  %v9488 = vadd.f32 %v9316, %v9449
  %v9489 = vadd.f32 %v9317, %v9452
  %v9490 = vadd.f32 %v9318, %v9457
  %v9491 = vadd.f32 %v9319, %v9460
  %v9492 = vadd.f32 %v9320, %v9465
  %v9493 = vadd.f32 %v9321, %v9468
  %v9494 = vadd.f32 %v9322, %v9473
  %v9495 = vadd.f32 %v9323, %v9476
  %v9496 = vadd.f32 %v9324, %v9481
  %v9497 = vld [vmem:[#allocation2 + $0x1de] sm:$0xff]
  %v9498 = vld [vmem:[#allocation2 + $0x1e6] sm:$0xff]
  %v9499 = vld [vmem:[#allocation2 + $0x1ee] sm:$0xff]
  %v9500 = vld [vmem:[#allocation2 + $0x1f6] sm:$0xff]
  %v9501 = vld [vmem:[#allocation2 + $0x1fe] sm:$0xff]
  %v9502 = vld [vmem:[#allocation2 + $0x206] sm:$0xff]
  %v9503 = vld [vmem:[#allocation2 + $0x20e] sm:$0xff]
  %v9504 = vld [vmem:[#allocation2 + $0x216] sm:$0xff]
  %v9505 = vld [vmem:[#allocation2 + $0x21e] sm:$0xff]
  %v9506 = vld [vmem:[#allocation2 + $0x226] sm:$0xff]
  %v9507 = vld [vmem:[#allocation2 + $0x22e] sm:$0xff]
  %v9508 = vpack.c.bf16 %v9498, %v9497
  %v9509 = vpack.c.bf16 %v9500, %v9499
  %v9510 = vpack.c.bf16 %v9502, %v9501
  %v9511 = vpack.c.bf16 %v9504, %v9503
  %v9512 = vpack.c.bf16 %v9506, %v9505
  %v9513 = vpack.c.bf16 %v9507, %v9507
  %v9514 = vld [vmem:[%s1602] sm:$0xf]
  %v9515 = vld [vmem:[%s1602 + $0x4] sm:$0xf]
  %v9516 = vld [vmem:[%s1602 + $0x8] sm:$0xf]
  %v9517 = vld [vmem:[%s1602 + $0xc] sm:$0xf]
  %v9518 = vld [vmem:[%s1602 + $0x10] sm:$0xf]
  %v9519 = vld [vmem:[%s1602 + $0x14] sm:$0xf]
  %v9520 = vld [vmem:[%s1602 + $0x18] sm:$0xf]
  %v9521 = vld [vmem:[%s1602 + $0x1c] sm:$0xf]
  %v9522 = vld [vmem:[%s1602 + $0x20] sm:$0xf]
  %v9523 = vld [vmem:[%s1602 + $0x24] sm:$0xf]
  %v9524 = vld [vmem:[%s1602 + $0x28] sm:$0xf]
  %v9525 = vld [vmem:[%s1602 + $0x2c] sm:$0xf]
  %v9526 = vld [vmem:[%s1602 + $0x30] sm:$0xf]
  %v9527 = vld [vmem:[%s1602 + $0x34] sm:$0xf]
  %v9528 = vld [vmem:[%s1602 + $0x38] sm:$0xf]
  %v9529 = vld [vmem:[%s1602 + $0x3c] sm:$0xf]
  %v9546 = vunpack.c.l.b16 %v9514
  %v9547 = vunpack.c.l.b16 %v9515
  %v9548 = vunpack.c.l.b16 %v9516
  %v9549 = vunpack.c.l.b16 %v9517
  %v9550 = vunpack.c.l.b16 %v9518
  %v9551 = vunpack.c.l.b16 %v9519
  %v9552 = vunpack.c.l.b16 %v9520
  %v9553 = vunpack.c.l.b16 %v9521
  %v9554 = vunpack.c.l.b16 %v9522
  %v9555 = vunpack.c.l.b16 %v9523
  %v9556 = vunpack.c.l.b16 %v9524
  %v9557 = vunpack.c.l.b16 %v9525
  %v9558 = vunpack.c.l.b16 %v9526
  %v9559 = vunpack.c.l.b16 %v9527
  %v9560 = vunpack.c.l.b16 %v9528
  %v9561 = vunpack.c.l.b16 %v9529
  %v9562 = vpack.c.b16 %v9547, %v9546
  %v9563 = vpack.c.b16 %v9549, %v9548
  %v9564 = vpack.c.b16 %v9551, %v9550
  %v9565 = vpack.c.b16 %v9553, %v9552
  %v9566 = vpack.c.b16 %v9555, %v9554
  %v9567 = vpack.c.b16 %v9557, %v9556
  %v9568 = vpack.c.b16 %v9559, %v9558
  %v9569 = vpack.c.b16 %v9561, %v9560
  %9578 = vmatprep.subr.bf16.mxu0 0
  %9579 = vmatpush1.bf16.msra.mxu0 %v9569
  %9580 = vmatprep.subr.bf16.mxu0 0
  %9581 = vmatpush1.bf16.msra.mxu0 %v9568
  %9582 = vmatprep.subr.bf16.mxu0 0
  %9583 = vmatpush1.bf16.msra.mxu0 %v9567
  %9584 = vmatprep.subr.bf16.mxu0 0
  %9585 = vmatpush1.bf16.msra.mxu0 %v9566
  %9586 = vmatprep.subr.bf16.mxu0 0
  %9587 = vmatpush1.bf16.msra.mxu0 %v9565
  %9588 = vmatprep.subr.bf16.mxu0 0
  %9589 = vmatpush1.bf16.msra.mxu0 %v9564
  %9590 = vmatprep.subr.bf16.mxu0 0
  %9591 = vmatpush1.bf16.msra.mxu0 %v9563
  %9592 = vmatprep.subr.bf16.mxu0 0
  %9593 = vmatpush1.bf16.msra.mxu0 %v9562
  %9594 = vmatprep.subr.bf16.mxu0 0
  %9595 = vmatpush2.bf16.msra.mxu0 0
  %9596 = vmatprep.subr.bf16.mxu0 0
  %9597 = vmatpush2.bf16.msra.mxu0 0
  %9598 = vmatprep.subr.bf16.mxu0 0
  %9599 = vmatpush2.bf16.msra.mxu0 0
  %9600 = vmatprep.subr.bf16.mxu0 0
  %9601 = vmatpush2.bf16.msra.mxu0 0
  %9602 = vmatprep.subr.bf16.mxu0 0
  %9603 = vmatpush2.bf16.msra.mxu0 0
  %9604 = vmatprep.subr.bf16.mxu0 0
  %9605 = vmatpush2.bf16.msra.mxu0 0
  %9606 = vmatprep.subr.bf16.mxu0 0
  %9607 = vmatpush2.bf16.msra.mxu0 0
  %9608 = vmatprep.subr.bf16.mxu0 0
  %9609 = vmatpush2.bf16.msra.mxu0 0
  %9610 = vmatprep.mubr.bf16.mxu0 0
  %9611 = vmatmul.mubr.bf16.gmra.mxu0 %v9508
  %v9612 = vpop.f32.mrf.mxu0
  %v9613 = vadd.f32 0.0, %v9612
  %v9614 = vpop.f32.mrf.mxu0
  %v9615 = vpop.f32.mrf.mxu0
  %v9616 = vadd.f32 0.0, %v9615
  %v9617 = vpop.f32.mrf.mxu0
  %9618 = vmatprep.mubr.bf16.mxu0 0
  %9619 = vmatmul.mubr.bf16.gmra.mxu0 %v9509
  %v9620 = vpop.f32.mrf.mxu0
  %v9621 = vadd.f32 0.0, %v9620
  %v9622 = vpop.f32.mrf.mxu0
  %v9623 = vpop.f32.mrf.mxu0
  %v9624 = vadd.f32 0.0, %v9623
  %v9625 = vpop.f32.mrf.mxu0
  %9626 = vmatprep.mubr.bf16.mxu0 0
  %9627 = vmatmul.mubr.bf16.gmra.mxu0 %v9510
  %v9628 = vpop.f32.mrf.mxu0
  %v9629 = vadd.f32 0.0, %v9628
  %v9630 = vpop.f32.mrf.mxu0
  %v9631 = vpop.f32.mrf.mxu0
  %v9632 = vadd.f32 0.0, %v9631
  %v9633 = vpop.f32.mrf.mxu0
  %9634 = vmatprep.mubr.bf16.mxu0 0
  %9635 = vmatmul.mubr.bf16.gmra.mxu0 %v9511
  %v9636 = vpop.f32.mrf.mxu0
  %v9637 = vadd.f32 0.0, %v9636
  %v9638 = vpop.f32.mrf.mxu0
  %v9639 = vpop.f32.mrf.mxu0
  %v9640 = vadd.f32 0.0, %v9639
  %v9641 = vpop.f32.mrf.mxu0
  %9642 = vmatprep.mubr.bf16.mxu0 0
  %9643 = vmatmul.mubr.bf16.gmra.mxu0 %v9512
  %v9644 = vpop.f32.mrf.mxu0
  %v9645 = vadd.f32 0.0, %v9644
  %v9646 = vpop.f32.mrf.mxu0
  %v9647 = vpop.f32.mrf.mxu0
  %v9648 = vadd.f32 0.0, %v9647
  %v9649 = vpop.f32.mrf.mxu0
  %9650 = vmatprep.mubr.bf16.mxu0 0
  %9651 = vmatmul.mubr.bf16.gmra.mxu0 %v9513
  %v9652 = vpop.f32.mrf.mxu0
  %v9653 = vadd.f32 0.0, %v9652
  %v9654 = vpop.f32.mrf.mxu0
  %v9655 = vpop.f32.mrf.mxu0
  %v9656 = vpop.f32.mrf.mxu0
  %9657 = vdwg.mxu0
  %v9658 = vadd.f32 %v9486, %v9613
  %v9659 = vadd.f32 %v9487, %v9616
  %v9660 = vadd.f32 %v9488, %v9621
  %v9661 = vadd.f32 %v9489, %v9624
  %v9662 = vadd.f32 %v9490, %v9629
  %v9663 = vadd.f32 %v9491, %v9632
  %v9664 = vadd.f32 %v9492, %v9637
  %v9665 = vadd.f32 %v9493, %v9640
  %v9666 = vadd.f32 %v9494, %v9645
  %v9667 = vadd.f32 %v9495, %v9648
  %v9668 = vadd.f32 %v9496, %v9653
  %v9669 = vadd.f32 %v9658, %v8809
  %v9670 = vadd.f32 %v9659, %v8810
  %v9671 = vadd.f32 %v9660, %v8811
  %v9672 = vadd.f32 %v9661, %v8812
  %v9673 = vadd.f32 %v9662, %v8813
  %v9674 = vadd.f32 %v9663, %v8814
  %v9675 = vadd.f32 %v9664, %v8815
  %v9676 = vadd.f32 %v9665, %v8816
  %v9677 = vadd.f32 %v9666, %v8817
  %v9678 = vadd.f32 %v9667, %v8818
  %v9679 = vadd.f32 %v9668, %v8819
  %v9680 = vadd.f32 %v9669, %v1773
  %v9681 = vadd.f32 %v9670, %v1773
  %v9682 = vadd.f32 %v9671, %v1773
  %v9683 = vadd.f32 %v9672, %v1773
  %v9684 = vadd.f32 %v9673, %v1773
  %v9685 = vadd.f32 %v9674, %v1773
  %v9686 = vadd.f32 %v9675, %v1773
  %v9687 = vadd.f32 %v9676, %v1773
  %v9688 = vadd.f32 %v9677, %v1773
  %v9689 = vadd.f32 %v9678, %v1773
  %v9690 = vadd.f32 %v9679, %v1773
  %v9691 = vmul.f32 %v9680, 0.1
  %v9692 = vmul.f32 %v9681, 0.1
  %v9693 = vmul.f32 %v9682, 0.1
  %v9694 = vmul.f32 %v9683, 0.1
  %v9695 = vmul.f32 %v9684, 0.1
  %v9696 = vmul.f32 %v9685, 0.1
  %v9697 = vmul.f32 %v9686, 0.1
  %v9698 = vmul.f32 %v9687, 0.1
  %v9699 = vmul.f32 %v9688, 0.1
  %v9700 = vmul.f32 %v9689, 0.1
  %v9701 = vmul.f32 %v9690, 0.1
  %v9702 = vmax.f32 %v9680, %v9691
  %v9703 = vmax.f32 %v9681, %v9692
  %v9704 = vmax.f32 %v9682, %v9693
  %v9705 = vmax.f32 %v9683, %v9694
  %v9706 = vmax.f32 %v9684, %v9695
  %v9707 = vmax.f32 %v9685, %v9696
  %v9708 = vmax.f32 %v9686, %v9697
  %v9709 = vmax.f32 %v9687, %v9698
  %v9710 = vmax.f32 %v9688, %v9699
  %v9711 = vmax.f32 %v9689, %v9700
  %v9712 = vmax.f32 %v9690, %v9701
  %9713 = vst [vmem:[%s3 + $0x1b8] sm:$0xff] %v9702
  %9714 = vst [vmem:[%s3 + $0x1c0] sm:$0xff] %v9703
  %9715 = vst [vmem:[%s3 + $0x1c8] sm:$0xff] %v9704
  %9716 = vst [vmem:[%s3 + $0x1d0] sm:$0xff] %v9705
  %9717 = vst [vmem:[%s3 + $0x1d8] sm:$0xff] %v9706
  %9718 = vst [vmem:[%s3 + $0x1e0] sm:$0xff] %v9707
  %9719 = vst [vmem:[%s3 + $0x1e8] sm:$0xff] %v9708
  %9720 = vst [vmem:[%s3 + $0x1f0] sm:$0xff] %v9709
  %9721 = vst [vmem:[%s3 + $0x1f8] sm:$0xff] %v9710
  %9722 = vst [vmem:[%s3 + $0x200] sm:$0xff] %v9711
  %9723 = vst [vmem:[%s3 + $0x208] sm:$0xff] %v9712
  %v9724 = vld [vmem:[#allocation2 + $0x210] sm:$0xff]
  %v9725 = vld [vmem:[#allocation2 + $0x218] sm:$0xff]
  %v9726 = vld [vmem:[#allocation2 + $0x220] sm:$0xff]
  %v9727 = vld [vmem:[#allocation2 + $0x228] sm:$0xff]
  %v9728 = vld [vmem:[#allocation2 + $0x230] sm:$0xff]
  %v9729 = vld [vmem:[#allocation2 + $0x238] sm:$0xff]
  %v9730 = vld [vmem:[#allocation2 + $0x240] sm:$0xff]
  %v9731 = vld [vmem:[#allocation2 + $0x248] sm:$0xff]
  %v9732 = vld [vmem:[#allocation2 + $0x250] sm:$0xff]
  %v9733 = vld [vmem:[#allocation2 + $0x258] sm:$0xff]
  %v9734 = vld [vmem:[#allocation2 + $0x260] sm:$0xff]
  %v9735 = vpack.c.bf16 %v9725, %v9724
  %v9736 = vpack.c.bf16 %v9727, %v9726
  %v9737 = vpack.c.bf16 %v9729, %v9728
  %v9738 = vpack.c.bf16 %v9731, %v9730
  %v9739 = vpack.c.bf16 %v9733, %v9732
  %v9740 = vpack.c.bf16 %v9734, %v9734
  %v9741 = vld [vmem:[%s1] sm:$0xf]
  %v9742 = vld [vmem:[%s1 + $0x4] sm:$0xf]
  %v9743 = vld [vmem:[%s1 + $0x8] sm:$0xf]
  %v9744 = vld [vmem:[%s1 + $0xc] sm:$0xf]
  %v9745 = vld [vmem:[%s1 + $0x10] sm:$0xf]
  %v9746 = vld [vmem:[%s1 + $0x14] sm:$0xf]
  %v9747 = vld [vmem:[%s1 + $0x18] sm:$0xf]
  %v9748 = vld [vmem:[%s1 + $0x1c] sm:$0xf]
  %v9749 = vld [vmem:[%s1 + $0x20] sm:$0xf]
  %v9750 = vld [vmem:[%s1 + $0x24] sm:$0xf]
  %v9751 = vld [vmem:[%s1 + $0x28] sm:$0xf]
  %v9752 = vld [vmem:[%s1 + $0x2c] sm:$0xf]
  %v9753 = vld [vmem:[%s1 + $0x30] sm:$0xf]
  %v9754 = vld [vmem:[%s1 + $0x34] sm:$0xf]
  %v9755 = vld [vmem:[%s1 + $0x38] sm:$0xf]
  %v9756 = vld [vmem:[%s1 + $0x3c] sm:$0xf]
  %v9757 = vld [vmem:[#allocation2 + $0x211] sm:$0xff]
  %v9758 = vld [vmem:[#allocation2 + $0x219] sm:$0xff]
  %v9759 = vld [vmem:[#allocation2 + $0x221] sm:$0xff]
  %v9760 = vld [vmem:[#allocation2 + $0x229] sm:$0xff]
  %v9761 = vld [vmem:[#allocation2 + $0x231] sm:$0xff]
  %v9762 = vld [vmem:[#allocation2 + $0x239] sm:$0xff]
  %v9763 = vld [vmem:[#allocation2 + $0x241] sm:$0xff]
  %v9764 = vld [vmem:[#allocation2 + $0x249] sm:$0xff]
  %v9765 = vld [vmem:[#allocation2 + $0x251] sm:$0xff]
  %v9766 = vld [vmem:[#allocation2 + $0x259] sm:$0xff]
  %v9767 = vld [vmem:[#allocation2 + $0x261] sm:$0xff]
  %v9768 = vpack.c.bf16 %v9758, %v9757
  %v9769 = vpack.c.bf16 %v9760, %v9759
  %v9770 = vpack.c.bf16 %v9762, %v9761
  %v9771 = vpack.c.bf16 %v9764, %v9763
  %v9772 = vpack.c.bf16 %v9766, %v9765
  %v9773 = vpack.c.bf16 %v9767, %v9767
  %v9774 = vld [vmem:[%s274] sm:$0xf]
  %v9775 = vld [vmem:[%s274 + $0x4] sm:$0xf]
  %v9776 = vld [vmem:[%s274 + $0x8] sm:$0xf]
  %v9777 = vld [vmem:[%s274 + $0xc] sm:$0xf]
  %v9778 = vld [vmem:[%s274 + $0x10] sm:$0xf]
  %v9779 = vld [vmem:[%s274 + $0x14] sm:$0xf]
  %v9780 = vld [vmem:[%s274 + $0x18] sm:$0xf]
  %v9781 = vld [vmem:[%s274 + $0x1c] sm:$0xf]
  %v9782 = vld [vmem:[%s274 + $0x20] sm:$0xf]
  %v9783 = vld [vmem:[%s274 + $0x24] sm:$0xf]
  %v9784 = vld [vmem:[%s274 + $0x28] sm:$0xf]
  %v9785 = vld [vmem:[%s274 + $0x2c] sm:$0xf]
  %v9786 = vld [vmem:[%s274 + $0x30] sm:$0xf]
  %v9787 = vld [vmem:[%s274 + $0x34] sm:$0xf]
  %v9788 = vld [vmem:[%s274 + $0x38] sm:$0xf]
  %v9789 = vld [vmem:[%s274 + $0x3c] sm:$0xf]
  %v9806 = vunpack.c.l.b16 %v9774
  %v9807 = vunpack.c.l.b16 %v9775
  %v9808 = vunpack.c.l.b16 %v9776
  %v9809 = vunpack.c.l.b16 %v9777
  %v9810 = vunpack.c.l.b16 %v9778
  %v9811 = vunpack.c.l.b16 %v9779
  %v9812 = vunpack.c.l.b16 %v9780
  %v9813 = vunpack.c.l.b16 %v9781
  %v9814 = vunpack.c.l.b16 %v9782
  %v9815 = vunpack.c.l.b16 %v9783
  %v9816 = vunpack.c.l.b16 %v9784
  %v9817 = vunpack.c.l.b16 %v9785
  %v9818 = vunpack.c.l.b16 %v9786
  %v9819 = vunpack.c.l.b16 %v9787
  %v9820 = vunpack.c.l.b16 %v9788
  %v9821 = vunpack.c.l.b16 %v9789
  %v9822 = vpack.c.b16 %v9807, %v9806
  %v9823 = vpack.c.b16 %v9809, %v9808
  %v9824 = vpack.c.b16 %v9811, %v9810
  %v9825 = vpack.c.b16 %v9813, %v9812
  %v9826 = vpack.c.b16 %v9815, %v9814
  %v9827 = vpack.c.b16 %v9817, %v9816
  %v9828 = vpack.c.b16 %v9819, %v9818
  %v9829 = vpack.c.b16 %v9821, %v9820
  %9838 = vmatprep.subr.bf16.mxu0 0
  %9839 = vmatpush1.bf16.msra.mxu0 %v9829
  %9840 = vmatprep.subr.bf16.mxu0 0
  %9841 = vmatpush1.bf16.msra.mxu0 %v9828
  %9842 = vmatprep.subr.bf16.mxu0 0
  %9843 = vmatpush1.bf16.msra.mxu0 %v9827
  %9844 = vmatprep.subr.bf16.mxu0 0
  %9845 = vmatpush1.bf16.msra.mxu0 %v9826
  %9846 = vmatprep.subr.bf16.mxu0 0
  %9847 = vmatpush1.bf16.msra.mxu0 %v9825
  %9848 = vmatprep.subr.bf16.mxu0 0
  %9849 = vmatpush1.bf16.msra.mxu0 %v9824
  %9850 = vmatprep.subr.bf16.mxu0 0
  %9851 = vmatpush1.bf16.msra.mxu0 %v9823
  %9852 = vmatprep.subr.bf16.mxu0 0
  %9853 = vmatpush1.bf16.msra.mxu0 %v9822
  %9854 = vmatprep.subr.bf16.mxu0 0
  %9855 = vmatpush2.bf16.msra.mxu0 0
  %9856 = vmatprep.subr.bf16.mxu0 0
  %9857 = vmatpush2.bf16.msra.mxu0 0
  %9858 = vmatprep.subr.bf16.mxu0 0
  %9859 = vmatpush2.bf16.msra.mxu0 0
  %9860 = vmatprep.subr.bf16.mxu0 0
  %9861 = vmatpush2.bf16.msra.mxu0 0
  %9862 = vmatprep.subr.bf16.mxu0 0
  %9863 = vmatpush2.bf16.msra.mxu0 0
  %9864 = vmatprep.subr.bf16.mxu0 0
  %9865 = vmatpush2.bf16.msra.mxu0 0
  %9866 = vmatprep.subr.bf16.mxu0 0
  %9867 = vmatpush2.bf16.msra.mxu0 0
  %9868 = vmatprep.subr.bf16.mxu0 0
  %9869 = vmatpush2.bf16.msra.mxu0 0
  %9870 = vmatprep.mubr.bf16.mxu0 0
  %9871 = vmatmul.mubr.bf16.gmra.mxu0 %v9768
  %v9872 = vpop.f32.mrf.mxu0
  %v9873 = vadd.f32 0.0, %v9872
  %v9874 = vpop.f32.mrf.mxu0
  %v9875 = vpop.f32.mrf.mxu0
  %v9876 = vadd.f32 0.0, %v9875
  %v9877 = vpop.f32.mrf.mxu0
  %9878 = vmatprep.mubr.bf16.mxu0 0
  %9879 = vmatmul.mubr.bf16.gmra.mxu0 %v9769
  %v9880 = vpop.f32.mrf.mxu0
  %v9881 = vadd.f32 0.0, %v9880
  %v9882 = vpop.f32.mrf.mxu0
  %v9883 = vpop.f32.mrf.mxu0
  %v9884 = vadd.f32 0.0, %v9883
  %v9885 = vpop.f32.mrf.mxu0
  %9886 = vmatprep.mubr.bf16.mxu0 0
  %9887 = vmatmul.mubr.bf16.gmra.mxu0 %v9770
  %v9888 = vpop.f32.mrf.mxu0
  %v9889 = vadd.f32 0.0, %v9888
  %v9890 = vpop.f32.mrf.mxu0
  %v9891 = vpop.f32.mrf.mxu0
  %v9892 = vadd.f32 0.0, %v9891
  %v9893 = vpop.f32.mrf.mxu0
  %9894 = vmatprep.mubr.bf16.mxu0 0
  %9895 = vmatmul.mubr.bf16.gmra.mxu0 %v9771
  %v9896 = vpop.f32.mrf.mxu0
  %v9897 = vadd.f32 0.0, %v9896
  %v9898 = vpop.f32.mrf.mxu0
  %v9899 = vpop.f32.mrf.mxu0
  %v9900 = vadd.f32 0.0, %v9899
  %v9901 = vpop.f32.mrf.mxu0
  %9902 = vmatprep.mubr.bf16.mxu0 0
  %9903 = vmatmul.mubr.bf16.gmra.mxu0 %v9772
  %v9904 = vpop.f32.mrf.mxu0
  %v9905 = vadd.f32 0.0, %v9904
  %v9906 = vpop.f32.mrf.mxu0
  %v9907 = vpop.f32.mrf.mxu0
  %v9908 = vadd.f32 0.0, %v9907
  %v9909 = vpop.f32.mrf.mxu0
  %9910 = vmatprep.mubr.bf16.mxu0 0
  %9911 = vmatmul.mubr.bf16.gmra.mxu0 %v9773
  %v9912 = vpop.f32.mrf.mxu0
  %v9913 = vadd.f32 0.0, %v9912
  %v9914 = vpop.f32.mrf.mxu0
  %v9915 = vpop.f32.mrf.mxu0
  %v9916 = vpop.f32.mrf.mxu0
  %9917 = vdwg.mxu0
  %v9934 = vunpack.c.l.b16 %v9741
  %v9935 = vunpack.c.l.b16 %v9742
  %v9936 = vunpack.c.l.b16 %v9743
  %v9937 = vunpack.c.l.b16 %v9744
  %v9938 = vunpack.c.l.b16 %v9745
  %v9939 = vunpack.c.l.b16 %v9746
  %v9940 = vunpack.c.l.b16 %v9747
  %v9941 = vunpack.c.l.b16 %v9748
  %v9942 = vunpack.c.l.b16 %v9749
  %v9943 = vunpack.c.l.b16 %v9750
  %v9944 = vunpack.c.l.b16 %v9751
  %v9945 = vunpack.c.l.b16 %v9752
  %v9946 = vunpack.c.l.b16 %v9753
  %v9947 = vunpack.c.l.b16 %v9754
  %v9948 = vunpack.c.l.b16 %v9755
  %v9949 = vunpack.c.l.b16 %v9756
  %v9950 = vpack.c.b16 %v9935, %v9934
  %v9951 = vpack.c.b16 %v9937, %v9936
  %v9952 = vpack.c.b16 %v9939, %v9938
  %v9953 = vpack.c.b16 %v9941, %v9940
  %v9954 = vpack.c.b16 %v9943, %v9942
  %v9955 = vpack.c.b16 %v9945, %v9944
  %v9956 = vpack.c.b16 %v9947, %v9946
  %v9957 = vpack.c.b16 %v9949, %v9948
  %9966 = vmatprep.subr.bf16.mxu0 0
  %9967 = vmatpush1.bf16.msra.mxu0 %v9957
  %9968 = vmatprep.subr.bf16.mxu0 0
  %9969 = vmatpush1.bf16.msra.mxu0 %v9956
  %9970 = vmatprep.subr.bf16.mxu0 0
  %9971 = vmatpush1.bf16.msra.mxu0 %v9955
  %9972 = vmatprep.subr.bf16.mxu0 0
  %9973 = vmatpush1.bf16.msra.mxu0 %v9954
  %9974 = vmatprep.subr.bf16.mxu0 0
  %9975 = vmatpush1.bf16.msra.mxu0 %v9953
  %9976 = vmatprep.subr.bf16.mxu0 0
  %9977 = vmatpush1.bf16.msra.mxu0 %v9952
  %9978 = vmatprep.subr.bf16.mxu0 0
  %9979 = vmatpush1.bf16.msra.mxu0 %v9951
  %9980 = vmatprep.subr.bf16.mxu0 0
  %9981 = vmatpush1.bf16.msra.mxu0 %v9950
  %9982 = vmatprep.subr.bf16.mxu0 0
  %9983 = vmatpush2.bf16.msra.mxu0 0
  %9984 = vmatprep.subr.bf16.mxu0 0
  %9985 = vmatpush2.bf16.msra.mxu0 0
  %9986 = vmatprep.subr.bf16.mxu0 0
  %9987 = vmatpush2.bf16.msra.mxu0 0
  %9988 = vmatprep.subr.bf16.mxu0 0
  %9989 = vmatpush2.bf16.msra.mxu0 0
  %9990 = vmatprep.subr.bf16.mxu0 0
  %9991 = vmatpush2.bf16.msra.mxu0 0
  %9992 = vmatprep.subr.bf16.mxu0 0
  %9993 = vmatpush2.bf16.msra.mxu0 0
  %9994 = vmatprep.subr.bf16.mxu0 0
  %9995 = vmatpush2.bf16.msra.mxu0 0
  %9996 = vmatprep.subr.bf16.mxu0 0
  %9997 = vmatpush2.bf16.msra.mxu0 0
  %9998 = vmatprep.mubr.bf16.mxu0 0
  %9999 = vmatmul.mubr.bf16.gmra.mxu0 %v9735
  %v10000 = vpop.f32.mrf.mxu0
  %v10001 = vadd.f32 %v9873, %v10000
  %v10002 = vpop.f32.mrf.mxu0
  %v10003 = vpop.f32.mrf.mxu0
  %v10004 = vadd.f32 %v9876, %v10003
  %v10005 = vpop.f32.mrf.mxu0
  %10006 = vmatprep.mubr.bf16.mxu0 0
  %10007 = vmatmul.mubr.bf16.gmra.mxu0 %v9736
  %v10008 = vpop.f32.mrf.mxu0
  %v10009 = vadd.f32 %v9881, %v10008
  %v10010 = vpop.f32.mrf.mxu0
  %v10011 = vpop.f32.mrf.mxu0
  %v10012 = vadd.f32 %v9884, %v10011
  %v10013 = vpop.f32.mrf.mxu0
  %10014 = vmatprep.mubr.bf16.mxu0 0
  %10015 = vmatmul.mubr.bf16.gmra.mxu0 %v9737
  %v10016 = vpop.f32.mrf.mxu0
  %v10017 = vadd.f32 %v9889, %v10016
  %v10018 = vpop.f32.mrf.mxu0
  %v10019 = vpop.f32.mrf.mxu0
  %v10020 = vadd.f32 %v9892, %v10019
  %v10021 = vpop.f32.mrf.mxu0
  %10022 = vmatprep.mubr.bf16.mxu0 0
  %10023 = vmatmul.mubr.bf16.gmra.mxu0 %v9738
  %v10024 = vpop.f32.mrf.mxu0
  %v10025 = vadd.f32 %v9897, %v10024
  %v10026 = vpop.f32.mrf.mxu0
  %v10027 = vpop.f32.mrf.mxu0
  %v10028 = vadd.f32 %v9900, %v10027
  %v10029 = vpop.f32.mrf.mxu0
  %10030 = vmatprep.mubr.bf16.mxu0 0
  %10031 = vmatmul.mubr.bf16.gmra.mxu0 %v9739
  %v10032 = vpop.f32.mrf.mxu0
  %v10033 = vadd.f32 %v9905, %v10032
  %v10034 = vpop.f32.mrf.mxu0
  %v10035 = vpop.f32.mrf.mxu0
  %v10036 = vadd.f32 %v9908, %v10035
  %v10037 = vpop.f32.mrf.mxu0
  %10038 = vmatprep.mubr.bf16.mxu0 0
  %10039 = vmatmul.mubr.bf16.gmra.mxu0 %v9740
  %v10040 = vpop.f32.mrf.mxu0
  %v10041 = vadd.f32 %v9913, %v10040
  %v10042 = vpop.f32.mrf.mxu0
  %v10043 = vpop.f32.mrf.mxu0
  %v10044 = vpop.f32.mrf.mxu0
  %10045 = vdwg.mxu0
  %v10046 = vld [vmem:[#allocation2 + $0x212] sm:$0xff]
  %v10047 = vld [vmem:[#allocation2 + $0x21a] sm:$0xff]
  %v10048 = vld [vmem:[#allocation2 + $0x222] sm:$0xff]
  %v10049 = vld [vmem:[#allocation2 + $0x22a] sm:$0xff]
  %v10050 = vld [vmem:[#allocation2 + $0x232] sm:$0xff]
  %v10051 = vld [vmem:[#allocation2 + $0x23a] sm:$0xff]
  %v10052 = vld [vmem:[#allocation2 + $0x242] sm:$0xff]
  %v10053 = vld [vmem:[#allocation2 + $0x24a] sm:$0xff]
  %v10054 = vld [vmem:[#allocation2 + $0x252] sm:$0xff]
  %v10055 = vld [vmem:[#allocation2 + $0x25a] sm:$0xff]
  %v10056 = vld [vmem:[#allocation2 + $0x262] sm:$0xff]
  %v10057 = vpack.c.bf16 %v10047, %v10046
  %v10058 = vpack.c.bf16 %v10049, %v10048
  %v10059 = vpack.c.bf16 %v10051, %v10050
  %v10060 = vpack.c.bf16 %v10053, %v10052
  %v10061 = vpack.c.bf16 %v10055, %v10054
  %v10062 = vpack.c.bf16 %v10056, %v10056
  %v10063 = vld [vmem:[%s564] sm:$0xf]
  %v10064 = vld [vmem:[%s564 + $0x4] sm:$0xf]
  %v10065 = vld [vmem:[%s564 + $0x8] sm:$0xf]
  %v10066 = vld [vmem:[%s564 + $0xc] sm:$0xf]
  %v10067 = vld [vmem:[%s564 + $0x10] sm:$0xf]
  %v10068 = vld [vmem:[%s564 + $0x14] sm:$0xf]
  %v10069 = vld [vmem:[%s564 + $0x18] sm:$0xf]
  %v10070 = vld [vmem:[%s564 + $0x1c] sm:$0xf]
  %v10071 = vld [vmem:[%s564 + $0x20] sm:$0xf]
  %v10072 = vld [vmem:[%s564 + $0x24] sm:$0xf]
  %v10073 = vld [vmem:[%s564 + $0x28] sm:$0xf]
  %v10074 = vld [vmem:[%s564 + $0x2c] sm:$0xf]
  %v10075 = vld [vmem:[%s564 + $0x30] sm:$0xf]
  %v10076 = vld [vmem:[%s564 + $0x34] sm:$0xf]
  %v10077 = vld [vmem:[%s564 + $0x38] sm:$0xf]
  %v10078 = vld [vmem:[%s564 + $0x3c] sm:$0xf]
  %v10095 = vunpack.c.l.b16 %v10063
  %v10096 = vunpack.c.l.b16 %v10064
  %v10097 = vunpack.c.l.b16 %v10065
  %v10098 = vunpack.c.l.b16 %v10066
  %v10099 = vunpack.c.l.b16 %v10067
  %v10100 = vunpack.c.l.b16 %v10068
  %v10101 = vunpack.c.l.b16 %v10069
  %v10102 = vunpack.c.l.b16 %v10070
  %v10103 = vunpack.c.l.b16 %v10071
  %v10104 = vunpack.c.l.b16 %v10072
  %v10105 = vunpack.c.l.b16 %v10073
  %v10106 = vunpack.c.l.b16 %v10074
  %v10107 = vunpack.c.l.b16 %v10075
  %v10108 = vunpack.c.l.b16 %v10076
  %v10109 = vunpack.c.l.b16 %v10077
  %v10110 = vunpack.c.l.b16 %v10078
  %v10111 = vpack.c.b16 %v10096, %v10095
  %v10112 = vpack.c.b16 %v10098, %v10097
  %v10113 = vpack.c.b16 %v10100, %v10099
  %v10114 = vpack.c.b16 %v10102, %v10101
  %v10115 = vpack.c.b16 %v10104, %v10103
  %v10116 = vpack.c.b16 %v10106, %v10105
  %v10117 = vpack.c.b16 %v10108, %v10107
  %v10118 = vpack.c.b16 %v10110, %v10109
  %10127 = vmatprep.subr.bf16.mxu0 0
  %10128 = vmatpush1.bf16.msra.mxu0 %v10118
  %10129 = vmatprep.subr.bf16.mxu0 0
  %10130 = vmatpush1.bf16.msra.mxu0 %v10117
  %10131 = vmatprep.subr.bf16.mxu0 0
  %10132 = vmatpush1.bf16.msra.mxu0 %v10116
  %10133 = vmatprep.subr.bf16.mxu0 0
  %10134 = vmatpush1.bf16.msra.mxu0 %v10115
  %10135 = vmatprep.subr.bf16.mxu0 0
  %10136 = vmatpush1.bf16.msra.mxu0 %v10114
  %10137 = vmatprep.subr.bf16.mxu0 0
  %10138 = vmatpush1.bf16.msra.mxu0 %v10113
  %10139 = vmatprep.subr.bf16.mxu0 0
  %10140 = vmatpush1.bf16.msra.mxu0 %v10112
  %10141 = vmatprep.subr.bf16.mxu0 0
  %10142 = vmatpush1.bf16.msra.mxu0 %v10111
  %10143 = vmatprep.subr.bf16.mxu0 0
  %10144 = vmatpush2.bf16.msra.mxu0 0
  %10145 = vmatprep.subr.bf16.mxu0 0
  %10146 = vmatpush2.bf16.msra.mxu0 0
  %10147 = vmatprep.subr.bf16.mxu0 0
  %10148 = vmatpush2.bf16.msra.mxu0 0
  %10149 = vmatprep.subr.bf16.mxu0 0
  %10150 = vmatpush2.bf16.msra.mxu0 0
  %10151 = vmatprep.subr.bf16.mxu0 0
  %10152 = vmatpush2.bf16.msra.mxu0 0
  %10153 = vmatprep.subr.bf16.mxu0 0
  %10154 = vmatpush2.bf16.msra.mxu0 0
  %10155 = vmatprep.subr.bf16.mxu0 0
  %10156 = vmatpush2.bf16.msra.mxu0 0
  %10157 = vmatprep.subr.bf16.mxu0 0
  %10158 = vmatpush2.bf16.msra.mxu0 0
  %10159 = vmatprep.mubr.bf16.mxu0 0
  %10160 = vmatmul.mubr.bf16.gmra.mxu0 %v10057
  %v10161 = vpop.f32.mrf.mxu0
  %v10162 = vadd.f32 0.0, %v10161
  %v10163 = vpop.f32.mrf.mxu0
  %v10164 = vpop.f32.mrf.mxu0
  %v10165 = vadd.f32 0.0, %v10164
  %v10166 = vpop.f32.mrf.mxu0
  %10167 = vmatprep.mubr.bf16.mxu0 0
  %10168 = vmatmul.mubr.bf16.gmra.mxu0 %v10058
  %v10169 = vpop.f32.mrf.mxu0
  %v10170 = vadd.f32 0.0, %v10169
  %v10171 = vpop.f32.mrf.mxu0
  %v10172 = vpop.f32.mrf.mxu0
  %v10173 = vadd.f32 0.0, %v10172
  %v10174 = vpop.f32.mrf.mxu0
  %10175 = vmatprep.mubr.bf16.mxu0 0
  %10176 = vmatmul.mubr.bf16.gmra.mxu0 %v10059
  %v10177 = vpop.f32.mrf.mxu0
  %v10178 = vadd.f32 0.0, %v10177
  %v10179 = vpop.f32.mrf.mxu0
  %v10180 = vpop.f32.mrf.mxu0
  %v10181 = vadd.f32 0.0, %v10180
  %v10182 = vpop.f32.mrf.mxu0
  %10183 = vmatprep.mubr.bf16.mxu0 0
  %10184 = vmatmul.mubr.bf16.gmra.mxu0 %v10060
  %v10185 = vpop.f32.mrf.mxu0
  %v10186 = vadd.f32 0.0, %v10185
  %v10187 = vpop.f32.mrf.mxu0
  %v10188 = vpop.f32.mrf.mxu0
  %v10189 = vadd.f32 0.0, %v10188
  %v10190 = vpop.f32.mrf.mxu0
  %10191 = vmatprep.mubr.bf16.mxu0 0
  %10192 = vmatmul.mubr.bf16.gmra.mxu0 %v10061
  %v10193 = vpop.f32.mrf.mxu0
  %v10194 = vadd.f32 0.0, %v10193
  %v10195 = vpop.f32.mrf.mxu0
  %v10196 = vpop.f32.mrf.mxu0
  %v10197 = vadd.f32 0.0, %v10196
  %v10198 = vpop.f32.mrf.mxu0
  %10199 = vmatprep.mubr.bf16.mxu0 0
  %10200 = vmatmul.mubr.bf16.gmra.mxu0 %v10062
  %v10201 = vpop.f32.mrf.mxu0
  %v10202 = vadd.f32 0.0, %v10201
  %v10203 = vpop.f32.mrf.mxu0
  %v10204 = vpop.f32.mrf.mxu0
  %v10205 = vpop.f32.mrf.mxu0
  %10206 = vdwg.mxu0
  %v10207 = vadd.f32 %v10001, %v10162
  %v10208 = vadd.f32 %v10004, %v10165
  %v10209 = vadd.f32 %v10009, %v10170
  %v10210 = vadd.f32 %v10012, %v10173
  %v10211 = vadd.f32 %v10017, %v10178
  %v10212 = vadd.f32 %v10020, %v10181
  %v10213 = vadd.f32 %v10025, %v10186
  %v10214 = vadd.f32 %v10028, %v10189
  %v10215 = vadd.f32 %v10033, %v10194
  %v10216 = vadd.f32 %v10036, %v10197
  %v10217 = vadd.f32 %v10041, %v10202
  %v10218 = vld [vmem:[#allocation2 + $0x222] sm:$0xff]
  %v10219 = vld [vmem:[#allocation2 + $0x22a] sm:$0xff]
  %v10220 = vld [vmem:[#allocation2 + $0x232] sm:$0xff]
  %v10221 = vld [vmem:[#allocation2 + $0x23a] sm:$0xff]
  %v10222 = vld [vmem:[#allocation2 + $0x242] sm:$0xff]
  %v10223 = vld [vmem:[#allocation2 + $0x24a] sm:$0xff]
  %v10224 = vld [vmem:[#allocation2 + $0x252] sm:$0xff]
  %v10225 = vld [vmem:[#allocation2 + $0x25a] sm:$0xff]
  %v10226 = vld [vmem:[#allocation2 + $0x262] sm:$0xff]
  %v10227 = vld [vmem:[#allocation2 + $0x26a] sm:$0xff]
  %v10228 = vld [vmem:[#allocation2 + $0x272] sm:$0xff]
  %v10229 = vpack.c.bf16 %v10219, %v10218
  %v10230 = vpack.c.bf16 %v10221, %v10220
  %v10231 = vpack.c.bf16 %v10223, %v10222
  %v10232 = vpack.c.bf16 %v10225, %v10224
  %v10233 = vpack.c.bf16 %v10227, %v10226
  %v10234 = vpack.c.bf16 %v10228, %v10228
  %v10235 = vld [vmem:[%s737] sm:$0xf]
  %v10236 = vld [vmem:[%s737 + $0x4] sm:$0xf]
  %v10237 = vld [vmem:[%s737 + $0x8] sm:$0xf]
  %v10238 = vld [vmem:[%s737 + $0xc] sm:$0xf]
  %v10239 = vld [vmem:[%s737 + $0x10] sm:$0xf]
  %v10240 = vld [vmem:[%s737 + $0x14] sm:$0xf]
  %v10241 = vld [vmem:[%s737 + $0x18] sm:$0xf]
  %v10242 = vld [vmem:[%s737 + $0x1c] sm:$0xf]
  %v10243 = vld [vmem:[%s737 + $0x20] sm:$0xf]
  %v10244 = vld [vmem:[%s737 + $0x24] sm:$0xf]
  %v10245 = vld [vmem:[%s737 + $0x28] sm:$0xf]
  %v10246 = vld [vmem:[%s737 + $0x2c] sm:$0xf]
  %v10247 = vld [vmem:[%s737 + $0x30] sm:$0xf]
  %v10248 = vld [vmem:[%s737 + $0x34] sm:$0xf]
  %v10249 = vld [vmem:[%s737 + $0x38] sm:$0xf]
  %v10250 = vld [vmem:[%s737 + $0x3c] sm:$0xf]
  %v10267 = vunpack.c.l.b16 %v10235
  %v10268 = vunpack.c.l.b16 %v10236
  %v10269 = vunpack.c.l.b16 %v10237
  %v10270 = vunpack.c.l.b16 %v10238
  %v10271 = vunpack.c.l.b16 %v10239
  %v10272 = vunpack.c.l.b16 %v10240
  %v10273 = vunpack.c.l.b16 %v10241
  %v10274 = vunpack.c.l.b16 %v10242
  %v10275 = vunpack.c.l.b16 %v10243
  %v10276 = vunpack.c.l.b16 %v10244
  %v10277 = vunpack.c.l.b16 %v10245
  %v10278 = vunpack.c.l.b16 %v10246
  %v10279 = vunpack.c.l.b16 %v10247
  %v10280 = vunpack.c.l.b16 %v10248
  %v10281 = vunpack.c.l.b16 %v10249
  %v10282 = vunpack.c.l.b16 %v10250
  %v10283 = vpack.c.b16 %v10268, %v10267
  %v10284 = vpack.c.b16 %v10270, %v10269
  %v10285 = vpack.c.b16 %v10272, %v10271
  %v10286 = vpack.c.b16 %v10274, %v10273
  %v10287 = vpack.c.b16 %v10276, %v10275
  %v10288 = vpack.c.b16 %v10278, %v10277
  %v10289 = vpack.c.b16 %v10280, %v10279
  %v10290 = vpack.c.b16 %v10282, %v10281
  %10299 = vmatprep.subr.bf16.mxu0 0
  %10300 = vmatpush1.bf16.msra.mxu0 %v10290
  %10301 = vmatprep.subr.bf16.mxu0 0
  %10302 = vmatpush1.bf16.msra.mxu0 %v10289
  %10303 = vmatprep.subr.bf16.mxu0 0
  %10304 = vmatpush1.bf16.msra.mxu0 %v10288
  %10305 = vmatprep.subr.bf16.mxu0 0
  %10306 = vmatpush1.bf16.msra.mxu0 %v10287
  %10307 = vmatprep.subr.bf16.mxu0 0
  %10308 = vmatpush1.bf16.msra.mxu0 %v10286
  %10309 = vmatprep.subr.bf16.mxu0 0
  %10310 = vmatpush1.bf16.msra.mxu0 %v10285
  %10311 = vmatprep.subr.bf16.mxu0 0
  %10312 = vmatpush1.bf16.msra.mxu0 %v10284
  %10313 = vmatprep.subr.bf16.mxu0 0
  %10314 = vmatpush1.bf16.msra.mxu0 %v10283
  %10315 = vmatprep.subr.bf16.mxu0 0
  %10316 = vmatpush2.bf16.msra.mxu0 0
  %10317 = vmatprep.subr.bf16.mxu0 0
  %10318 = vmatpush2.bf16.msra.mxu0 0
  %10319 = vmatprep.subr.bf16.mxu0 0
  %10320 = vmatpush2.bf16.msra.mxu0 0
  %10321 = vmatprep.subr.bf16.mxu0 0
  %10322 = vmatpush2.bf16.msra.mxu0 0
  %10323 = vmatprep.subr.bf16.mxu0 0
  %10324 = vmatpush2.bf16.msra.mxu0 0
  %10325 = vmatprep.subr.bf16.mxu0 0
  %10326 = vmatpush2.bf16.msra.mxu0 0
  %10327 = vmatprep.subr.bf16.mxu0 0
  %10328 = vmatpush2.bf16.msra.mxu0 0
  %10329 = vmatprep.subr.bf16.mxu0 0
  %10330 = vmatpush2.bf16.msra.mxu0 0
  %10331 = vmatprep.mubr.bf16.mxu0 0
  %10332 = vmatmul.mubr.bf16.gmra.mxu0 %v10229
  %v10333 = vpop.f32.mrf.mxu0
  %v10334 = vadd.f32 0.0, %v10333
  %v10335 = vpop.f32.mrf.mxu0
  %v10336 = vpop.f32.mrf.mxu0
  %v10337 = vadd.f32 0.0, %v10336
  %v10338 = vpop.f32.mrf.mxu0
  %10339 = vmatprep.mubr.bf16.mxu0 0
  %10340 = vmatmul.mubr.bf16.gmra.mxu0 %v10230
  %v10341 = vpop.f32.mrf.mxu0
  %v10342 = vadd.f32 0.0, %v10341
  %v10343 = vpop.f32.mrf.mxu0
  %v10344 = vpop.f32.mrf.mxu0
  %v10345 = vadd.f32 0.0, %v10344
  %v10346 = vpop.f32.mrf.mxu0
  %10347 = vmatprep.mubr.bf16.mxu0 0
  %10348 = vmatmul.mubr.bf16.gmra.mxu0 %v10231
  %v10349 = vpop.f32.mrf.mxu0
  %v10350 = vadd.f32 0.0, %v10349
  %v10351 = vpop.f32.mrf.mxu0
  %v10352 = vpop.f32.mrf.mxu0
  %v10353 = vadd.f32 0.0, %v10352
  %v10354 = vpop.f32.mrf.mxu0
  %10355 = vmatprep.mubr.bf16.mxu0 0
  %10356 = vmatmul.mubr.bf16.gmra.mxu0 %v10232
  %v10357 = vpop.f32.mrf.mxu0
  %v10358 = vadd.f32 0.0, %v10357
  %v10359 = vpop.f32.mrf.mxu0
  %v10360 = vpop.f32.mrf.mxu0
  %v10361 = vadd.f32 0.0, %v10360
  %v10362 = vpop.f32.mrf.mxu0
  %10363 = vmatprep.mubr.bf16.mxu0 0
  %10364 = vmatmul.mubr.bf16.gmra.mxu0 %v10233
  %v10365 = vpop.f32.mrf.mxu0
  %v10366 = vadd.f32 0.0, %v10365
  %v10367 = vpop.f32.mrf.mxu0
  %v10368 = vpop.f32.mrf.mxu0
  %v10369 = vadd.f32 0.0, %v10368
  %v10370 = vpop.f32.mrf.mxu0
  %10371 = vmatprep.mubr.bf16.mxu0 0
  %10372 = vmatmul.mubr.bf16.gmra.mxu0 %v10234
  %v10373 = vpop.f32.mrf.mxu0
  %v10374 = vadd.f32 0.0, %v10373
  %v10375 = vpop.f32.mrf.mxu0
  %v10376 = vpop.f32.mrf.mxu0
  %v10377 = vpop.f32.mrf.mxu0
  %10378 = vdwg.mxu0
  %v10379 = vadd.f32 %v10207, %v10334
  %v10380 = vadd.f32 %v10208, %v10337
  %v10381 = vadd.f32 %v10209, %v10342
  %v10382 = vadd.f32 %v10210, %v10345
  %v10383 = vadd.f32 %v10211, %v10350
  %v10384 = vadd.f32 %v10212, %v10353
  %v10385 = vadd.f32 %v10213, %v10358
  %v10386 = vadd.f32 %v10214, %v10361
  %v10387 = vadd.f32 %v10215, %v10366
  %v10388 = vadd.f32 %v10216, %v10369
  %v10389 = vadd.f32 %v10217, %v10374
  %v10390 = vld [vmem:[#allocation2 + $0x223] sm:$0xff]
  %v10391 = vld [vmem:[#allocation2 + $0x22b] sm:$0xff]
  %v10392 = vld [vmem:[#allocation2 + $0x233] sm:$0xff]
  %v10393 = vld [vmem:[#allocation2 + $0x23b] sm:$0xff]
  %v10394 = vld [vmem:[#allocation2 + $0x243] sm:$0xff]
  %v10395 = vld [vmem:[#allocation2 + $0x24b] sm:$0xff]
  %v10396 = vld [vmem:[#allocation2 + $0x253] sm:$0xff]
  %v10397 = vld [vmem:[#allocation2 + $0x25b] sm:$0xff]
  %v10398 = vld [vmem:[#allocation2 + $0x263] sm:$0xff]
  %v10399 = vld [vmem:[#allocation2 + $0x26b] sm:$0xff]
  %v10400 = vld [vmem:[#allocation2 + $0x273] sm:$0xff]
  %v10401 = vpack.c.bf16 %v10391, %v10390
  %v10402 = vpack.c.bf16 %v10393, %v10392
  %v10403 = vpack.c.bf16 %v10395, %v10394
  %v10404 = vpack.c.bf16 %v10397, %v10396
  %v10405 = vpack.c.bf16 %v10399, %v10398
  %v10406 = vpack.c.bf16 %v10400, %v10400
  %v10407 = vld [vmem:[%s910] sm:$0xf]
  %v10408 = vld [vmem:[%s910 + $0x4] sm:$0xf]
  %v10409 = vld [vmem:[%s910 + $0x8] sm:$0xf]
  %v10410 = vld [vmem:[%s910 + $0xc] sm:$0xf]
  %v10411 = vld [vmem:[%s910 + $0x10] sm:$0xf]
  %v10412 = vld [vmem:[%s910 + $0x14] sm:$0xf]
  %v10413 = vld [vmem:[%s910 + $0x18] sm:$0xf]
  %v10414 = vld [vmem:[%s910 + $0x1c] sm:$0xf]
  %v10415 = vld [vmem:[%s910 + $0x20] sm:$0xf]
  %v10416 = vld [vmem:[%s910 + $0x24] sm:$0xf]
  %v10417 = vld [vmem:[%s910 + $0x28] sm:$0xf]
  %v10418 = vld [vmem:[%s910 + $0x2c] sm:$0xf]
  %v10419 = vld [vmem:[%s910 + $0x30] sm:$0xf]
  %v10420 = vld [vmem:[%s910 + $0x34] sm:$0xf]
  %v10421 = vld [vmem:[%s910 + $0x38] sm:$0xf]
  %v10422 = vld [vmem:[%s910 + $0x3c] sm:$0xf]
  %v10439 = vunpack.c.l.b16 %v10407
  %v10440 = vunpack.c.l.b16 %v10408
  %v10441 = vunpack.c.l.b16 %v10409
  %v10442 = vunpack.c.l.b16 %v10410
  %v10443 = vunpack.c.l.b16 %v10411
  %v10444 = vunpack.c.l.b16 %v10412
  %v10445 = vunpack.c.l.b16 %v10413
  %v10446 = vunpack.c.l.b16 %v10414
  %v10447 = vunpack.c.l.b16 %v10415
  %v10448 = vunpack.c.l.b16 %v10416
  %v10449 = vunpack.c.l.b16 %v10417
  %v10450 = vunpack.c.l.b16 %v10418
  %v10451 = vunpack.c.l.b16 %v10419
  %v10452 = vunpack.c.l.b16 %v10420
  %v10453 = vunpack.c.l.b16 %v10421
  %v10454 = vunpack.c.l.b16 %v10422
  %v10455 = vpack.c.b16 %v10440, %v10439
  %v10456 = vpack.c.b16 %v10442, %v10441
  %v10457 = vpack.c.b16 %v10444, %v10443
  %v10458 = vpack.c.b16 %v10446, %v10445
  %v10459 = vpack.c.b16 %v10448, %v10447
  %v10460 = vpack.c.b16 %v10450, %v10449
  %v10461 = vpack.c.b16 %v10452, %v10451
  %v10462 = vpack.c.b16 %v10454, %v10453
  %10471 = vmatprep.subr.bf16.mxu0 0
  %10472 = vmatpush1.bf16.msra.mxu0 %v10462
  %10473 = vmatprep.subr.bf16.mxu0 0
  %10474 = vmatpush1.bf16.msra.mxu0 %v10461
  %10475 = vmatprep.subr.bf16.mxu0 0
  %10476 = vmatpush1.bf16.msra.mxu0 %v10460
  %10477 = vmatprep.subr.bf16.mxu0 0
  %10478 = vmatpush1.bf16.msra.mxu0 %v10459
  %10479 = vmatprep.subr.bf16.mxu0 0
  %10480 = vmatpush1.bf16.msra.mxu0 %v10458
  %10481 = vmatprep.subr.bf16.mxu0 0
  %10482 = vmatpush1.bf16.msra.mxu0 %v10457
  %10483 = vmatprep.subr.bf16.mxu0 0
  %10484 = vmatpush1.bf16.msra.mxu0 %v10456
  %10485 = vmatprep.subr.bf16.mxu0 0
  %10486 = vmatpush1.bf16.msra.mxu0 %v10455
  %10487 = vmatprep.subr.bf16.mxu0 0
  %10488 = vmatpush2.bf16.msra.mxu0 0
  %10489 = vmatprep.subr.bf16.mxu0 0
  %10490 = vmatpush2.bf16.msra.mxu0 0
  %10491 = vmatprep.subr.bf16.mxu0 0
  %10492 = vmatpush2.bf16.msra.mxu0 0
  %10493 = vmatprep.subr.bf16.mxu0 0
  %10494 = vmatpush2.bf16.msra.mxu0 0
  %10495 = vmatprep.subr.bf16.mxu0 0
  %10496 = vmatpush2.bf16.msra.mxu0 0
  %10497 = vmatprep.subr.bf16.mxu0 0
  %10498 = vmatpush2.bf16.msra.mxu0 0
  %10499 = vmatprep.subr.bf16.mxu0 0
  %10500 = vmatpush2.bf16.msra.mxu0 0
  %10501 = vmatprep.subr.bf16.mxu0 0
  %10502 = vmatpush2.bf16.msra.mxu0 0
  %10503 = vmatprep.mubr.bf16.mxu0 0
  %10504 = vmatmul.mubr.bf16.gmra.mxu0 %v10401
  %v10505 = vpop.f32.mrf.mxu0
  %v10506 = vadd.f32 0.0, %v10505
  %v10507 = vpop.f32.mrf.mxu0
  %v10508 = vpop.f32.mrf.mxu0
  %v10509 = vadd.f32 0.0, %v10508
  %v10510 = vpop.f32.mrf.mxu0
  %10511 = vmatprep.mubr.bf16.mxu0 0
  %10512 = vmatmul.mubr.bf16.gmra.mxu0 %v10402
  %v10513 = vpop.f32.mrf.mxu0
  %v10514 = vadd.f32 0.0, %v10513
  %v10515 = vpop.f32.mrf.mxu0
  %v10516 = vpop.f32.mrf.mxu0
  %v10517 = vadd.f32 0.0, %v10516
  %v10518 = vpop.f32.mrf.mxu0
  %10519 = vmatprep.mubr.bf16.mxu0 0
  %10520 = vmatmul.mubr.bf16.gmra.mxu0 %v10403
  %v10521 = vpop.f32.mrf.mxu0
  %v10522 = vadd.f32 0.0, %v10521
  %v10523 = vpop.f32.mrf.mxu0
  %v10524 = vpop.f32.mrf.mxu0
  %v10525 = vadd.f32 0.0, %v10524
  %v10526 = vpop.f32.mrf.mxu0
  %10527 = vmatprep.mubr.bf16.mxu0 0
  %10528 = vmatmul.mubr.bf16.gmra.mxu0 %v10404
  %v10529 = vpop.f32.mrf.mxu0
  %v10530 = vadd.f32 0.0, %v10529
  %v10531 = vpop.f32.mrf.mxu0
  %v10532 = vpop.f32.mrf.mxu0
  %v10533 = vadd.f32 0.0, %v10532
  %v10534 = vpop.f32.mrf.mxu0
  %10535 = vmatprep.mubr.bf16.mxu0 0
  %10536 = vmatmul.mubr.bf16.gmra.mxu0 %v10405
  %v10537 = vpop.f32.mrf.mxu0
  %v10538 = vadd.f32 0.0, %v10537
  %v10539 = vpop.f32.mrf.mxu0
  %v10540 = vpop.f32.mrf.mxu0
  %v10541 = vadd.f32 0.0, %v10540
  %v10542 = vpop.f32.mrf.mxu0
  %10543 = vmatprep.mubr.bf16.mxu0 0
  %10544 = vmatmul.mubr.bf16.gmra.mxu0 %v10406
  %v10545 = vpop.f32.mrf.mxu0
  %v10546 = vadd.f32 0.0, %v10545
  %v10547 = vpop.f32.mrf.mxu0
  %v10548 = vpop.f32.mrf.mxu0
  %v10549 = vpop.f32.mrf.mxu0
  %10550 = vdwg.mxu0
  %v10551 = vadd.f32 %v10379, %v10506
  %v10552 = vadd.f32 %v10380, %v10509
  %v10553 = vadd.f32 %v10381, %v10514
  %v10554 = vadd.f32 %v10382, %v10517
  %v10555 = vadd.f32 %v10383, %v10522
  %v10556 = vadd.f32 %v10384, %v10525
  %v10557 = vadd.f32 %v10385, %v10530
  %v10558 = vadd.f32 %v10386, %v10533
  %v10559 = vadd.f32 %v10387, %v10538
  %v10560 = vadd.f32 %v10388, %v10541
  %v10561 = vadd.f32 %v10389, %v10546
  %v10562 = vld [vmem:[#allocation2 + $0x224] sm:$0xff]
  %v10563 = vld [vmem:[#allocation2 + $0x22c] sm:$0xff]
  %v10564 = vld [vmem:[#allocation2 + $0x234] sm:$0xff]
  %v10565 = vld [vmem:[#allocation2 + $0x23c] sm:$0xff]
  %v10566 = vld [vmem:[#allocation2 + $0x244] sm:$0xff]
  %v10567 = vld [vmem:[#allocation2 + $0x24c] sm:$0xff]
  %v10568 = vld [vmem:[#allocation2 + $0x254] sm:$0xff]
  %v10569 = vld [vmem:[#allocation2 + $0x25c] sm:$0xff]
  %v10570 = vld [vmem:[#allocation2 + $0x264] sm:$0xff]
  %v10571 = vld [vmem:[#allocation2 + $0x26c] sm:$0xff]
  %v10572 = vld [vmem:[#allocation2 + $0x274] sm:$0xff]
  %v10573 = vpack.c.bf16 %v10563, %v10562
  %v10574 = vpack.c.bf16 %v10565, %v10564
  %v10575 = vpack.c.bf16 %v10567, %v10566
  %v10576 = vpack.c.bf16 %v10569, %v10568
  %v10577 = vpack.c.bf16 %v10571, %v10570
  %v10578 = vpack.c.bf16 %v10572, %v10572
  %v10579 = vld [vmem:[%s1083] sm:$0xf]
  %v10580 = vld [vmem:[%s1083 + $0x4] sm:$0xf]
  %v10581 = vld [vmem:[%s1083 + $0x8] sm:$0xf]
  %v10582 = vld [vmem:[%s1083 + $0xc] sm:$0xf]
  %v10583 = vld [vmem:[%s1083 + $0x10] sm:$0xf]
  %v10584 = vld [vmem:[%s1083 + $0x14] sm:$0xf]
  %v10585 = vld [vmem:[%s1083 + $0x18] sm:$0xf]
  %v10586 = vld [vmem:[%s1083 + $0x1c] sm:$0xf]
  %v10587 = vld [vmem:[%s1083 + $0x20] sm:$0xf]
  %v10588 = vld [vmem:[%s1083 + $0x24] sm:$0xf]
  %v10589 = vld [vmem:[%s1083 + $0x28] sm:$0xf]
  %v10590 = vld [vmem:[%s1083 + $0x2c] sm:$0xf]
  %v10591 = vld [vmem:[%s1083 + $0x30] sm:$0xf]
  %v10592 = vld [vmem:[%s1083 + $0x34] sm:$0xf]
  %v10593 = vld [vmem:[%s1083 + $0x38] sm:$0xf]
  %v10594 = vld [vmem:[%s1083 + $0x3c] sm:$0xf]
  %v10611 = vunpack.c.l.b16 %v10579
  %v10612 = vunpack.c.l.b16 %v10580
  %v10613 = vunpack.c.l.b16 %v10581
  %v10614 = vunpack.c.l.b16 %v10582
  %v10615 = vunpack.c.l.b16 %v10583
  %v10616 = vunpack.c.l.b16 %v10584
  %v10617 = vunpack.c.l.b16 %v10585
  %v10618 = vunpack.c.l.b16 %v10586
  %v10619 = vunpack.c.l.b16 %v10587
  %v10620 = vunpack.c.l.b16 %v10588
  %v10621 = vunpack.c.l.b16 %v10589
  %v10622 = vunpack.c.l.b16 %v10590
  %v10623 = vunpack.c.l.b16 %v10591
  %v10624 = vunpack.c.l.b16 %v10592
  %v10625 = vunpack.c.l.b16 %v10593
  %v10626 = vunpack.c.l.b16 %v10594
  %v10627 = vpack.c.b16 %v10612, %v10611
  %v10628 = vpack.c.b16 %v10614, %v10613
  %v10629 = vpack.c.b16 %v10616, %v10615
  %v10630 = vpack.c.b16 %v10618, %v10617
  %v10631 = vpack.c.b16 %v10620, %v10619
  %v10632 = vpack.c.b16 %v10622, %v10621
  %v10633 = vpack.c.b16 %v10624, %v10623
  %v10634 = vpack.c.b16 %v10626, %v10625
  %10643 = vmatprep.subr.bf16.mxu0 0
  %10644 = vmatpush1.bf16.msra.mxu0 %v10634
  %10645 = vmatprep.subr.bf16.mxu0 0
  %10646 = vmatpush1.bf16.msra.mxu0 %v10633
  %10647 = vmatprep.subr.bf16.mxu0 0
  %10648 = vmatpush1.bf16.msra.mxu0 %v10632
  %10649 = vmatprep.subr.bf16.mxu0 0
  %10650 = vmatpush1.bf16.msra.mxu0 %v10631
  %10651 = vmatprep.subr.bf16.mxu0 0
  %10652 = vmatpush1.bf16.msra.mxu0 %v10630
  %10653 = vmatprep.subr.bf16.mxu0 0
  %10654 = vmatpush1.bf16.msra.mxu0 %v10629
  %10655 = vmatprep.subr.bf16.mxu0 0
  %10656 = vmatpush1.bf16.msra.mxu0 %v10628
  %10657 = vmatprep.subr.bf16.mxu0 0
  %10658 = vmatpush1.bf16.msra.mxu0 %v10627
  %10659 = vmatprep.subr.bf16.mxu0 0
  %10660 = vmatpush2.bf16.msra.mxu0 0
  %10661 = vmatprep.subr.bf16.mxu0 0
  %10662 = vmatpush2.bf16.msra.mxu0 0
  %10663 = vmatprep.subr.bf16.mxu0 0
  %10664 = vmatpush2.bf16.msra.mxu0 0
  %10665 = vmatprep.subr.bf16.mxu0 0
  %10666 = vmatpush2.bf16.msra.mxu0 0
  %10667 = vmatprep.subr.bf16.mxu0 0
  %10668 = vmatpush2.bf16.msra.mxu0 0
  %10669 = vmatprep.subr.bf16.mxu0 0
  %10670 = vmatpush2.bf16.msra.mxu0 0
  %10671 = vmatprep.subr.bf16.mxu0 0
  %10672 = vmatpush2.bf16.msra.mxu0 0
  %10673 = vmatprep.subr.bf16.mxu0 0
  %10674 = vmatpush2.bf16.msra.mxu0 0
  %10675 = vmatprep.mubr.bf16.mxu0 0
  %10676 = vmatmul.mubr.bf16.gmra.mxu0 %v10573
  %v10677 = vpop.f32.mrf.mxu0
  %v10678 = vadd.f32 0.0, %v10677
  %v10679 = vpop.f32.mrf.mxu0
  %v10680 = vpop.f32.mrf.mxu0
  %v10681 = vadd.f32 0.0, %v10680
  %v10682 = vpop.f32.mrf.mxu0
  %10683 = vmatprep.mubr.bf16.mxu0 0
  %10684 = vmatmul.mubr.bf16.gmra.mxu0 %v10574
  %v10685 = vpop.f32.mrf.mxu0
  %v10686 = vadd.f32 0.0, %v10685
  %v10687 = vpop.f32.mrf.mxu0
  %v10688 = vpop.f32.mrf.mxu0
  %v10689 = vadd.f32 0.0, %v10688
  %v10690 = vpop.f32.mrf.mxu0
  %10691 = vmatprep.mubr.bf16.mxu0 0
  %10692 = vmatmul.mubr.bf16.gmra.mxu0 %v10575
  %v10693 = vpop.f32.mrf.mxu0
  %v10694 = vadd.f32 0.0, %v10693
  %v10695 = vpop.f32.mrf.mxu0
  %v10696 = vpop.f32.mrf.mxu0
  %v10697 = vadd.f32 0.0, %v10696
  %v10698 = vpop.f32.mrf.mxu0
  %10699 = vmatprep.mubr.bf16.mxu0 0
  %10700 = vmatmul.mubr.bf16.gmra.mxu0 %v10576
  %v10701 = vpop.f32.mrf.mxu0
  %v10702 = vadd.f32 0.0, %v10701
  %v10703 = vpop.f32.mrf.mxu0
  %v10704 = vpop.f32.mrf.mxu0
  %v10705 = vadd.f32 0.0, %v10704
  %v10706 = vpop.f32.mrf.mxu0
  %10707 = vmatprep.mubr.bf16.mxu0 0
  %10708 = vmatmul.mubr.bf16.gmra.mxu0 %v10577
  %v10709 = vpop.f32.mrf.mxu0
  %v10710 = vadd.f32 0.0, %v10709
  %v10711 = vpop.f32.mrf.mxu0
  %v10712 = vpop.f32.mrf.mxu0
  %v10713 = vadd.f32 0.0, %v10712
  %v10714 = vpop.f32.mrf.mxu0
  %10715 = vmatprep.mubr.bf16.mxu0 0
  %10716 = vmatmul.mubr.bf16.gmra.mxu0 %v10578
  %v10717 = vpop.f32.mrf.mxu0
  %v10718 = vadd.f32 0.0, %v10717
  %v10719 = vpop.f32.mrf.mxu0
  %v10720 = vpop.f32.mrf.mxu0
  %v10721 = vpop.f32.mrf.mxu0
  %10722 = vdwg.mxu0
  %v10723 = vadd.f32 %v10551, %v10678
  %v10724 = vadd.f32 %v10552, %v10681
  %v10725 = vadd.f32 %v10553, %v10686
  %v10726 = vadd.f32 %v10554, %v10689
  %v10727 = vadd.f32 %v10555, %v10694
  %v10728 = vadd.f32 %v10556, %v10697
  %v10729 = vadd.f32 %v10557, %v10702
  %v10730 = vadd.f32 %v10558, %v10705
  %v10731 = vadd.f32 %v10559, %v10710
  %v10732 = vadd.f32 %v10560, %v10713
  %v10733 = vadd.f32 %v10561, %v10718
  %v10734 = vld [vmem:[#allocation2 + $0x234] sm:$0xff]
  %v10735 = vld [vmem:[#allocation2 + $0x23c] sm:$0xff]
  %v10736 = vld [vmem:[#allocation2 + $0x244] sm:$0xff]
  %v10737 = vld [vmem:[#allocation2 + $0x24c] sm:$0xff]
  %v10738 = vld [vmem:[#allocation2 + $0x254] sm:$0xff]
  %v10739 = vld [vmem:[#allocation2 + $0x25c] sm:$0xff]
  %v10740 = vld [vmem:[#allocation2 + $0x264] sm:$0xff]
  %v10741 = vld [vmem:[#allocation2 + $0x26c] sm:$0xff]
  %v10742 = vld [vmem:[#allocation2 + $0x274] sm:$0xff]
  %v10743 = vld [vmem:[#allocation2 + $0x27c] sm:$0xff]
  %v10744 = vld [vmem:[#allocation2 + $0x284] sm:$0xff]
  %v10745 = vpack.c.bf16 %v10735, %v10734
  %v10746 = vpack.c.bf16 %v10737, %v10736
  %v10747 = vpack.c.bf16 %v10739, %v10738
  %v10748 = vpack.c.bf16 %v10741, %v10740
  %v10749 = vpack.c.bf16 %v10743, %v10742
  %v10750 = vpack.c.bf16 %v10744, %v10744
  %v10751 = vld [vmem:[%s1256] sm:$0xf]
  %v10752 = vld [vmem:[%s1256 + $0x4] sm:$0xf]
  %v10753 = vld [vmem:[%s1256 + $0x8] sm:$0xf]
  %v10754 = vld [vmem:[%s1256 + $0xc] sm:$0xf]
  %v10755 = vld [vmem:[%s1256 + $0x10] sm:$0xf]
  %v10756 = vld [vmem:[%s1256 + $0x14] sm:$0xf]
  %v10757 = vld [vmem:[%s1256 + $0x18] sm:$0xf]
  %v10758 = vld [vmem:[%s1256 + $0x1c] sm:$0xf]
  %v10759 = vld [vmem:[%s1256 + $0x20] sm:$0xf]
  %v10760 = vld [vmem:[%s1256 + $0x24] sm:$0xf]
  %v10761 = vld [vmem:[%s1256 + $0x28] sm:$0xf]
  %v10762 = vld [vmem:[%s1256 + $0x2c] sm:$0xf]
  %v10763 = vld [vmem:[%s1256 + $0x30] sm:$0xf]
  %v10764 = vld [vmem:[%s1256 + $0x34] sm:$0xf]
  %v10765 = vld [vmem:[%s1256 + $0x38] sm:$0xf]
  %v10766 = vld [vmem:[%s1256 + $0x3c] sm:$0xf]
  %v10783 = vunpack.c.l.b16 %v10751
  %v10784 = vunpack.c.l.b16 %v10752
  %v10785 = vunpack.c.l.b16 %v10753
  %v10786 = vunpack.c.l.b16 %v10754
  %v10787 = vunpack.c.l.b16 %v10755
  %v10788 = vunpack.c.l.b16 %v10756
  %v10789 = vunpack.c.l.b16 %v10757
  %v10790 = vunpack.c.l.b16 %v10758
  %v10791 = vunpack.c.l.b16 %v10759
  %v10792 = vunpack.c.l.b16 %v10760
  %v10793 = vunpack.c.l.b16 %v10761
  %v10794 = vunpack.c.l.b16 %v10762
  %v10795 = vunpack.c.l.b16 %v10763
  %v10796 = vunpack.c.l.b16 %v10764
  %v10797 = vunpack.c.l.b16 %v10765
  %v10798 = vunpack.c.l.b16 %v10766
  %v10799 = vpack.c.b16 %v10784, %v10783
  %v10800 = vpack.c.b16 %v10786, %v10785
  %v10801 = vpack.c.b16 %v10788, %v10787
  %v10802 = vpack.c.b16 %v10790, %v10789
  %v10803 = vpack.c.b16 %v10792, %v10791
  %v10804 = vpack.c.b16 %v10794, %v10793
  %v10805 = vpack.c.b16 %v10796, %v10795
  %v10806 = vpack.c.b16 %v10798, %v10797
  %10815 = vmatprep.subr.bf16.mxu0 0
  %10816 = vmatpush1.bf16.msra.mxu0 %v10806
  %10817 = vmatprep.subr.bf16.mxu0 0
  %10818 = vmatpush1.bf16.msra.mxu0 %v10805
  %10819 = vmatprep.subr.bf16.mxu0 0
  %10820 = vmatpush1.bf16.msra.mxu0 %v10804
  %10821 = vmatprep.subr.bf16.mxu0 0
  %10822 = vmatpush1.bf16.msra.mxu0 %v10803
  %10823 = vmatprep.subr.bf16.mxu0 0
  %10824 = vmatpush1.bf16.msra.mxu0 %v10802
  %10825 = vmatprep.subr.bf16.mxu0 0
  %10826 = vmatpush1.bf16.msra.mxu0 %v10801
  %10827 = vmatprep.subr.bf16.mxu0 0
  %10828 = vmatpush1.bf16.msra.mxu0 %v10800
  %10829 = vmatprep.subr.bf16.mxu0 0
  %10830 = vmatpush1.bf16.msra.mxu0 %v10799
  %10831 = vmatprep.subr.bf16.mxu0 0
  %10832 = vmatpush2.bf16.msra.mxu0 0
  %10833 = vmatprep.subr.bf16.mxu0 0
  %10834 = vmatpush2.bf16.msra.mxu0 0
  %10835 = vmatprep.subr.bf16.mxu0 0
  %10836 = vmatpush2.bf16.msra.mxu0 0
  %10837 = vmatprep.subr.bf16.mxu0 0
  %10838 = vmatpush2.bf16.msra.mxu0 0
  %10839 = vmatprep.subr.bf16.mxu0 0
  %10840 = vmatpush2.bf16.msra.mxu0 0
  %10841 = vmatprep.subr.bf16.mxu0 0
  %10842 = vmatpush2.bf16.msra.mxu0 0
  %10843 = vmatprep.subr.bf16.mxu0 0
  %10844 = vmatpush2.bf16.msra.mxu0 0
  %10845 = vmatprep.subr.bf16.mxu0 0
  %10846 = vmatpush2.bf16.msra.mxu0 0
  %10847 = vmatprep.mubr.bf16.mxu0 0
  %10848 = vmatmul.mubr.bf16.gmra.mxu0 %v10745
  %v10849 = vpop.f32.mrf.mxu0
  %v10850 = vadd.f32 0.0, %v10849
  %v10851 = vpop.f32.mrf.mxu0
  %v10852 = vpop.f32.mrf.mxu0
  %v10853 = vadd.f32 0.0, %v10852
  %v10854 = vpop.f32.mrf.mxu0
  %10855 = vmatprep.mubr.bf16.mxu0 0
  %10856 = vmatmul.mubr.bf16.gmra.mxu0 %v10746
  %v10857 = vpop.f32.mrf.mxu0
  %v10858 = vadd.f32 0.0, %v10857
  %v10859 = vpop.f32.mrf.mxu0
  %v10860 = vpop.f32.mrf.mxu0
  %v10861 = vadd.f32 0.0, %v10860
  %v10862 = vpop.f32.mrf.mxu0
  %10863 = vmatprep.mubr.bf16.mxu0 0
  %10864 = vmatmul.mubr.bf16.gmra.mxu0 %v10747
  %v10865 = vpop.f32.mrf.mxu0
  %v10866 = vadd.f32 0.0, %v10865
  %v10867 = vpop.f32.mrf.mxu0
  %v10868 = vpop.f32.mrf.mxu0
  %v10869 = vadd.f32 0.0, %v10868
  %v10870 = vpop.f32.mrf.mxu0
  %10871 = vmatprep.mubr.bf16.mxu0 0
  %10872 = vmatmul.mubr.bf16.gmra.mxu0 %v10748
  %v10873 = vpop.f32.mrf.mxu0
  %v10874 = vadd.f32 0.0, %v10873
  %v10875 = vpop.f32.mrf.mxu0
  %v10876 = vpop.f32.mrf.mxu0
  %v10877 = vadd.f32 0.0, %v10876
  %v10878 = vpop.f32.mrf.mxu0
  %10879 = vmatprep.mubr.bf16.mxu0 0
  %10880 = vmatmul.mubr.bf16.gmra.mxu0 %v10749
  %v10881 = vpop.f32.mrf.mxu0
  %v10882 = vadd.f32 0.0, %v10881
  %v10883 = vpop.f32.mrf.mxu0
  %v10884 = vpop.f32.mrf.mxu0
  %v10885 = vadd.f32 0.0, %v10884
  %v10886 = vpop.f32.mrf.mxu0
  %10887 = vmatprep.mubr.bf16.mxu0 0
  %10888 = vmatmul.mubr.bf16.gmra.mxu0 %v10750
  %v10889 = vpop.f32.mrf.mxu0
  %v10890 = vadd.f32 0.0, %v10889
  %v10891 = vpop.f32.mrf.mxu0
  %v10892 = vpop.f32.mrf.mxu0
  %v10893 = vpop.f32.mrf.mxu0
  %10894 = vdwg.mxu0
  %v10895 = vadd.f32 %v10723, %v10850
  %v10896 = vadd.f32 %v10724, %v10853
  %v10897 = vadd.f32 %v10725, %v10858
  %v10898 = vadd.f32 %v10726, %v10861
  %v10899 = vadd.f32 %v10727, %v10866
  %v10900 = vadd.f32 %v10728, %v10869
  %v10901 = vadd.f32 %v10729, %v10874
  %v10902 = vadd.f32 %v10730, %v10877
  %v10903 = vadd.f32 %v10731, %v10882
  %v10904 = vadd.f32 %v10732, %v10885
  %v10905 = vadd.f32 %v10733, %v10890
  %v10906 = vld [vmem:[#allocation2 + $0x235] sm:$0xff]
  %v10907 = vld [vmem:[#allocation2 + $0x23d] sm:$0xff]
  %v10908 = vld [vmem:[#allocation2 + $0x245] sm:$0xff]
  %v10909 = vld [vmem:[#allocation2 + $0x24d] sm:$0xff]
  %v10910 = vld [vmem:[#allocation2 + $0x255] sm:$0xff]
  %v10911 = vld [vmem:[#allocation2 + $0x25d] sm:$0xff]
  %v10912 = vld [vmem:[#allocation2 + $0x265] sm:$0xff]
  %v10913 = vld [vmem:[#allocation2 + $0x26d] sm:$0xff]
  %v10914 = vld [vmem:[#allocation2 + $0x275] sm:$0xff]
  %v10915 = vld [vmem:[#allocation2 + $0x27d] sm:$0xff]
  %v10916 = vld [vmem:[#allocation2 + $0x285] sm:$0xff]
  %v10917 = vpack.c.bf16 %v10907, %v10906
  %v10918 = vpack.c.bf16 %v10909, %v10908
  %v10919 = vpack.c.bf16 %v10911, %v10910
  %v10920 = vpack.c.bf16 %v10913, %v10912
  %v10921 = vpack.c.bf16 %v10915, %v10914
  %v10922 = vpack.c.bf16 %v10916, %v10916
  %v10923 = vld [vmem:[%s1429] sm:$0xf]
  %v10924 = vld [vmem:[%s1429 + $0x4] sm:$0xf]
  %v10925 = vld [vmem:[%s1429 + $0x8] sm:$0xf]
  %v10926 = vld [vmem:[%s1429 + $0xc] sm:$0xf]
  %v10927 = vld [vmem:[%s1429 + $0x10] sm:$0xf]
  %v10928 = vld [vmem:[%s1429 + $0x14] sm:$0xf]
  %v10929 = vld [vmem:[%s1429 + $0x18] sm:$0xf]
  %v10930 = vld [vmem:[%s1429 + $0x1c] sm:$0xf]
  %v10931 = vld [vmem:[%s1429 + $0x20] sm:$0xf]
  %v10932 = vld [vmem:[%s1429 + $0x24] sm:$0xf]
  %v10933 = vld [vmem:[%s1429 + $0x28] sm:$0xf]
  %v10934 = vld [vmem:[%s1429 + $0x2c] sm:$0xf]
  %v10935 = vld [vmem:[%s1429 + $0x30] sm:$0xf]
  %v10936 = vld [vmem:[%s1429 + $0x34] sm:$0xf]
  %v10937 = vld [vmem:[%s1429 + $0x38] sm:$0xf]
  %v10938 = vld [vmem:[%s1429 + $0x3c] sm:$0xf]
  %v10955 = vunpack.c.l.b16 %v10923
  %v10956 = vunpack.c.l.b16 %v10924
  %v10957 = vunpack.c.l.b16 %v10925
  %v10958 = vunpack.c.l.b16 %v10926
  %v10959 = vunpack.c.l.b16 %v10927
  %v10960 = vunpack.c.l.b16 %v10928
  %v10961 = vunpack.c.l.b16 %v10929
  %v10962 = vunpack.c.l.b16 %v10930
  %v10963 = vunpack.c.l.b16 %v10931
  %v10964 = vunpack.c.l.b16 %v10932
  %v10965 = vunpack.c.l.b16 %v10933
  %v10966 = vunpack.c.l.b16 %v10934
  %v10967 = vunpack.c.l.b16 %v10935
  %v10968 = vunpack.c.l.b16 %v10936
  %v10969 = vunpack.c.l.b16 %v10937
  %v10970 = vunpack.c.l.b16 %v10938
  %v10971 = vpack.c.b16 %v10956, %v10955
  %v10972 = vpack.c.b16 %v10958, %v10957
  %v10973 = vpack.c.b16 %v10960, %v10959
  %v10974 = vpack.c.b16 %v10962, %v10961
  %v10975 = vpack.c.b16 %v10964, %v10963
  %v10976 = vpack.c.b16 %v10966, %v10965
  %v10977 = vpack.c.b16 %v10968, %v10967
  %v10978 = vpack.c.b16 %v10970, %v10969
  %10987 = vmatprep.subr.bf16.mxu0 0
  %10988 = vmatpush1.bf16.msra.mxu0 %v10978
  %10989 = vmatprep.subr.bf16.mxu0 0
  %10990 = vmatpush1.bf16.msra.mxu0 %v10977
  %10991 = vmatprep.subr.bf16.mxu0 0
  %10992 = vmatpush1.bf16.msra.mxu0 %v10976
  %10993 = vmatprep.subr.bf16.mxu0 0
  %10994 = vmatpush1.bf16.msra.mxu0 %v10975
  %10995 = vmatprep.subr.bf16.mxu0 0
  %10996 = vmatpush1.bf16.msra.mxu0 %v10974
  %10997 = vmatprep.subr.bf16.mxu0 0
  %10998 = vmatpush1.bf16.msra.mxu0 %v10973
  %10999 = vmatprep.subr.bf16.mxu0 0
  %11000 = vmatpush1.bf16.msra.mxu0 %v10972
  %11001 = vmatprep.subr.bf16.mxu0 0
  %11002 = vmatpush1.bf16.msra.mxu0 %v10971
  %11003 = vmatprep.subr.bf16.mxu0 0
  %11004 = vmatpush2.bf16.msra.mxu0 0
  %11005 = vmatprep.subr.bf16.mxu0 0
  %11006 = vmatpush2.bf16.msra.mxu0 0
  %11007 = vmatprep.subr.bf16.mxu0 0
  %11008 = vmatpush2.bf16.msra.mxu0 0
  %11009 = vmatprep.subr.bf16.mxu0 0
  %11010 = vmatpush2.bf16.msra.mxu0 0
  %11011 = vmatprep.subr.bf16.mxu0 0
  %11012 = vmatpush2.bf16.msra.mxu0 0
  %11013 = vmatprep.subr.bf16.mxu0 0
  %11014 = vmatpush2.bf16.msra.mxu0 0
  %11015 = vmatprep.subr.bf16.mxu0 0
  %11016 = vmatpush2.bf16.msra.mxu0 0
  %11017 = vmatprep.subr.bf16.mxu0 0
  %11018 = vmatpush2.bf16.msra.mxu0 0
  %11019 = vmatprep.mubr.bf16.mxu0 0
  %11020 = vmatmul.mubr.bf16.gmra.mxu0 %v10917
  %v11021 = vpop.f32.mrf.mxu0
  %v11022 = vadd.f32 0.0, %v11021
  %v11023 = vpop.f32.mrf.mxu0
  %v11024 = vpop.f32.mrf.mxu0
  %v11025 = vadd.f32 0.0, %v11024
  %v11026 = vpop.f32.mrf.mxu0
  %11027 = vmatprep.mubr.bf16.mxu0 0
  %11028 = vmatmul.mubr.bf16.gmra.mxu0 %v10918
  %v11029 = vpop.f32.mrf.mxu0
  %v11030 = vadd.f32 0.0, %v11029
  %v11031 = vpop.f32.mrf.mxu0
  %v11032 = vpop.f32.mrf.mxu0
  %v11033 = vadd.f32 0.0, %v11032
  %v11034 = vpop.f32.mrf.mxu0
  %11035 = vmatprep.mubr.bf16.mxu0 0
  %11036 = vmatmul.mubr.bf16.gmra.mxu0 %v10919
  %v11037 = vpop.f32.mrf.mxu0
  %v11038 = vadd.f32 0.0, %v11037
  %v11039 = vpop.f32.mrf.mxu0
  %v11040 = vpop.f32.mrf.mxu0
  %v11041 = vadd.f32 0.0, %v11040
  %v11042 = vpop.f32.mrf.mxu0
  %11043 = vmatprep.mubr.bf16.mxu0 0
  %11044 = vmatmul.mubr.bf16.gmra.mxu0 %v10920
  %v11045 = vpop.f32.mrf.mxu0
  %v11046 = vadd.f32 0.0, %v11045
  %v11047 = vpop.f32.mrf.mxu0
  %v11048 = vpop.f32.mrf.mxu0
  %v11049 = vadd.f32 0.0, %v11048
  %v11050 = vpop.f32.mrf.mxu0
  %11051 = vmatprep.mubr.bf16.mxu0 0
  %11052 = vmatmul.mubr.bf16.gmra.mxu0 %v10921
  %v11053 = vpop.f32.mrf.mxu0
  %v11054 = vadd.f32 0.0, %v11053
  %v11055 = vpop.f32.mrf.mxu0
  %v11056 = vpop.f32.mrf.mxu0
  %v11057 = vadd.f32 0.0, %v11056
  %v11058 = vpop.f32.mrf.mxu0
  %11059 = vmatprep.mubr.bf16.mxu0 0
  %11060 = vmatmul.mubr.bf16.gmra.mxu0 %v10922
  %v11061 = vpop.f32.mrf.mxu0
  %v11062 = vadd.f32 0.0, %v11061
  %v11063 = vpop.f32.mrf.mxu0
  %v11064 = vpop.f32.mrf.mxu0
  %v11065 = vpop.f32.mrf.mxu0
  %11066 = vdwg.mxu0
  %v11067 = vadd.f32 %v10895, %v11022
  %v11068 = vadd.f32 %v10896, %v11025
  %v11069 = vadd.f32 %v10897, %v11030
  %v11070 = vadd.f32 %v10898, %v11033
  %v11071 = vadd.f32 %v10899, %v11038
  %v11072 = vadd.f32 %v10900, %v11041
  %v11073 = vadd.f32 %v10901, %v11046
  %v11074 = vadd.f32 %v10902, %v11049
  %v11075 = vadd.f32 %v10903, %v11054
  %v11076 = vadd.f32 %v10904, %v11057
  %v11077 = vadd.f32 %v10905, %v11062
  %v11078 = vld [vmem:[#allocation2 + $0x236] sm:$0xff]
  %v11079 = vld [vmem:[#allocation2 + $0x23e] sm:$0xff]
  %v11080 = vld [vmem:[#allocation2 + $0x246] sm:$0xff]
  %v11081 = vld [vmem:[#allocation2 + $0x24e] sm:$0xff]
  %v11082 = vld [vmem:[#allocation2 + $0x256] sm:$0xff]
  %v11083 = vld [vmem:[#allocation2 + $0x25e] sm:$0xff]
  %v11084 = vld [vmem:[#allocation2 + $0x266] sm:$0xff]
  %v11085 = vld [vmem:[#allocation2 + $0x26e] sm:$0xff]
  %v11086 = vld [vmem:[#allocation2 + $0x276] sm:$0xff]
  %v11087 = vld [vmem:[#allocation2 + $0x27e] sm:$0xff]
  %v11088 = vld [vmem:[#allocation2 + $0x286] sm:$0xff]
  %v11089 = vpack.c.bf16 %v11079, %v11078
  %v11090 = vpack.c.bf16 %v11081, %v11080
  %v11091 = vpack.c.bf16 %v11083, %v11082
  %v11092 = vpack.c.bf16 %v11085, %v11084
  %v11093 = vpack.c.bf16 %v11087, %v11086
  %v11094 = vpack.c.bf16 %v11088, %v11088
  %v11095 = vld [vmem:[%s1602] sm:$0xf]
  %v11096 = vld [vmem:[%s1602 + $0x4] sm:$0xf]
  %v11097 = vld [vmem:[%s1602 + $0x8] sm:$0xf]
  %v11098 = vld [vmem:[%s1602 + $0xc] sm:$0xf]
  %v11099 = vld [vmem:[%s1602 + $0x10] sm:$0xf]
  %v11100 = vld [vmem:[%s1602 + $0x14] sm:$0xf]
  %v11101 = vld [vmem:[%s1602 + $0x18] sm:$0xf]
  %v11102 = vld [vmem:[%s1602 + $0x1c] sm:$0xf]
  %v11103 = vld [vmem:[%s1602 + $0x20] sm:$0xf]
  %v11104 = vld [vmem:[%s1602 + $0x24] sm:$0xf]
  %v11105 = vld [vmem:[%s1602 + $0x28] sm:$0xf]
  %v11106 = vld [vmem:[%s1602 + $0x2c] sm:$0xf]
  %v11107 = vld [vmem:[%s1602 + $0x30] sm:$0xf]
  %v11108 = vld [vmem:[%s1602 + $0x34] sm:$0xf]
  %v11109 = vld [vmem:[%s1602 + $0x38] sm:$0xf]
  %v11110 = vld [vmem:[%s1602 + $0x3c] sm:$0xf]
  %v11127 = vunpack.c.l.b16 %v11095
  %v11128 = vunpack.c.l.b16 %v11096
  %v11129 = vunpack.c.l.b16 %v11097
  %v11130 = vunpack.c.l.b16 %v11098
  %v11131 = vunpack.c.l.b16 %v11099
  %v11132 = vunpack.c.l.b16 %v11100
  %v11133 = vunpack.c.l.b16 %v11101
  %v11134 = vunpack.c.l.b16 %v11102
  %v11135 = vunpack.c.l.b16 %v11103
  %v11136 = vunpack.c.l.b16 %v11104
  %v11137 = vunpack.c.l.b16 %v11105
  %v11138 = vunpack.c.l.b16 %v11106
  %v11139 = vunpack.c.l.b16 %v11107
  %v11140 = vunpack.c.l.b16 %v11108
  %v11141 = vunpack.c.l.b16 %v11109
  %v11142 = vunpack.c.l.b16 %v11110
  %v11143 = vpack.c.b16 %v11128, %v11127
  %v11144 = vpack.c.b16 %v11130, %v11129
  %v11145 = vpack.c.b16 %v11132, %v11131
  %v11146 = vpack.c.b16 %v11134, %v11133
  %v11147 = vpack.c.b16 %v11136, %v11135
  %v11148 = vpack.c.b16 %v11138, %v11137
  %v11149 = vpack.c.b16 %v11140, %v11139
  %v11150 = vpack.c.b16 %v11142, %v11141
  %11159 = vmatprep.subr.bf16.mxu0 0
  %11160 = vmatpush1.bf16.msra.mxu0 %v11150
  %11161 = vmatprep.subr.bf16.mxu0 0
  %11162 = vmatpush1.bf16.msra.mxu0 %v11149
  %11163 = vmatprep.subr.bf16.mxu0 0
  %11164 = vmatpush1.bf16.msra.mxu0 %v11148
  %11165 = vmatprep.subr.bf16.mxu0 0
  %11166 = vmatpush1.bf16.msra.mxu0 %v11147
  %11167 = vmatprep.subr.bf16.mxu0 0
  %11168 = vmatpush1.bf16.msra.mxu0 %v11146
  %11169 = vmatprep.subr.bf16.mxu0 0
  %11170 = vmatpush1.bf16.msra.mxu0 %v11145
  %11171 = vmatprep.subr.bf16.mxu0 0
  %11172 = vmatpush1.bf16.msra.mxu0 %v11144
  %11173 = vmatprep.subr.bf16.mxu0 0
  %11174 = vmatpush1.bf16.msra.mxu0 %v11143
  %11175 = vmatprep.subr.bf16.mxu0 0
  %11176 = vmatpush2.bf16.msra.mxu0 0
  %11177 = vmatprep.subr.bf16.mxu0 0
  %11178 = vmatpush2.bf16.msra.mxu0 0
  %11179 = vmatprep.subr.bf16.mxu0 0
  %11180 = vmatpush2.bf16.msra.mxu0 0
  %11181 = vmatprep.subr.bf16.mxu0 0
  %11182 = vmatpush2.bf16.msra.mxu0 0
  %11183 = vmatprep.subr.bf16.mxu0 0
  %11184 = vmatpush2.bf16.msra.mxu0 0
  %11185 = vmatprep.subr.bf16.mxu0 0
  %11186 = vmatpush2.bf16.msra.mxu0 0
  %11187 = vmatprep.subr.bf16.mxu0 0
  %11188 = vmatpush2.bf16.msra.mxu0 0
  %11189 = vmatprep.subr.bf16.mxu0 0
  %11190 = vmatpush2.bf16.msra.mxu0 0
  %11191 = vmatprep.mubr.bf16.mxu0 0
  %11192 = vmatmul.mubr.bf16.gmra.mxu0 %v11089
  %v11193 = vpop.f32.mrf.mxu0
  %v11194 = vadd.f32 0.0, %v11193
  %v11195 = vpop.f32.mrf.mxu0
  %v11196 = vpop.f32.mrf.mxu0
  %v11197 = vadd.f32 0.0, %v11196
  %v11198 = vpop.f32.mrf.mxu0
  %11199 = vmatprep.mubr.bf16.mxu0 0
  %11200 = vmatmul.mubr.bf16.gmra.mxu0 %v11090
  %v11201 = vpop.f32.mrf.mxu0
  %v11202 = vadd.f32 0.0, %v11201
  %v11203 = vpop.f32.mrf.mxu0
  %v11204 = vpop.f32.mrf.mxu0
  %v11205 = vadd.f32 0.0, %v11204
  %v11206 = vpop.f32.mrf.mxu0
  %11207 = vmatprep.mubr.bf16.mxu0 0
  %11208 = vmatmul.mubr.bf16.gmra.mxu0 %v11091
  %v11209 = vpop.f32.mrf.mxu0
  %v11210 = vadd.f32 0.0, %v11209
  %v11211 = vpop.f32.mrf.mxu0
  %v11212 = vpop.f32.mrf.mxu0
  %v11213 = vadd.f32 0.0, %v11212
  %v11214 = vpop.f32.mrf.mxu0
  %11215 = vmatprep.mubr.bf16.mxu0 0
  %11216 = vmatmul.mubr.bf16.gmra.mxu0 %v11092
  %v11217 = vpop.f32.mrf.mxu0
  %v11218 = vadd.f32 0.0, %v11217
  %v11219 = vpop.f32.mrf.mxu0
  %v11220 = vpop.f32.mrf.mxu0
  %v11221 = vadd.f32 0.0, %v11220
  %v11222 = vpop.f32.mrf.mxu0
  %11223 = vmatprep.mubr.bf16.mxu0 0
  %11224 = vmatmul.mubr.bf16.gmra.mxu0 %v11093
  %v11225 = vpop.f32.mrf.mxu0
  %v11226 = vadd.f32 0.0, %v11225
  %v11227 = vpop.f32.mrf.mxu0
  %v11228 = vpop.f32.mrf.mxu0
  %v11229 = vadd.f32 0.0, %v11228
  %v11230 = vpop.f32.mrf.mxu0
  %11231 = vmatprep.mubr.bf16.mxu0 0
  %11232 = vmatmul.mubr.bf16.gmra.mxu0 %v11094
  %v11233 = vpop.f32.mrf.mxu0
  %v11234 = vadd.f32 0.0, %v11233
  %v11235 = vpop.f32.mrf.mxu0
  %v11236 = vpop.f32.mrf.mxu0
  %v11237 = vpop.f32.mrf.mxu0
  %11238 = vdwg.mxu0
  %v11239 = vadd.f32 %v11067, %v11194
  %v11240 = vadd.f32 %v11068, %v11197
  %v11241 = vadd.f32 %v11069, %v11202
  %v11242 = vadd.f32 %v11070, %v11205
  %v11243 = vadd.f32 %v11071, %v11210
  %v11244 = vadd.f32 %v11072, %v11213
  %v11245 = vadd.f32 %v11073, %v11218
  %v11246 = vadd.f32 %v11074, %v11221
  %v11247 = vadd.f32 %v11075, %v11226
  %v11248 = vadd.f32 %v11076, %v11229
  %v11249 = vadd.f32 %v11077, %v11234
  %v11250 = vadd.f32 %v11239, %v10390
  %v11251 = vadd.f32 %v11240, %v10391
  %v11252 = vadd.f32 %v11241, %v10392
  %v11253 = vadd.f32 %v11242, %v10393
  %v11254 = vadd.f32 %v11243, %v10394
  %v11255 = vadd.f32 %v11244, %v10395
  %v11256 = vadd.f32 %v11245, %v10396
  %v11257 = vadd.f32 %v11246, %v10397
  %v11258 = vadd.f32 %v11247, %v10398
  %v11259 = vadd.f32 %v11248, %v10399
  %v11260 = vadd.f32 %v11249, %v10400
  %v11261 = vadd.f32 %v11250, %v1773
  %v11262 = vadd.f32 %v11251, %v1773
  %v11263 = vadd.f32 %v11252, %v1773
  %v11264 = vadd.f32 %v11253, %v1773
  %v11265 = vadd.f32 %v11254, %v1773
  %v11266 = vadd.f32 %v11255, %v1773
  %v11267 = vadd.f32 %v11256, %v1773
  %v11268 = vadd.f32 %v11257, %v1773
  %v11269 = vadd.f32 %v11258, %v1773
  %v11270 = vadd.f32 %v11259, %v1773
  %v11271 = vadd.f32 %v11260, %v1773
  %v11272 = vmul.f32 %v11261, 0.1
  %v11273 = vmul.f32 %v11262, 0.1
  %v11274 = vmul.f32 %v11263, 0.1
  %v11275 = vmul.f32 %v11264, 0.1
  %v11276 = vmul.f32 %v11265, 0.1
  %v11277 = vmul.f32 %v11266, 0.1
  %v11278 = vmul.f32 %v11267, 0.1
  %v11279 = vmul.f32 %v11268, 0.1
  %v11280 = vmul.f32 %v11269, 0.1
  %v11281 = vmul.f32 %v11270, 0.1
  %v11282 = vmul.f32 %v11271, 0.1
  %v11283 = vmax.f32 %v11261, %v11272
  %v11284 = vmax.f32 %v11262, %v11273
  %v11285 = vmax.f32 %v11263, %v11274
  %v11286 = vmax.f32 %v11264, %v11275
  %v11287 = vmax.f32 %v11265, %v11276
  %v11288 = vmax.f32 %v11266, %v11277
  %v11289 = vmax.f32 %v11267, %v11278
  %v11290 = vmax.f32 %v11268, %v11279
  %v11291 = vmax.f32 %v11269, %v11280
  %v11292 = vmax.f32 %v11270, %v11281
  %v11293 = vmax.f32 %v11271, %v11282
  %11294 = vst [vmem:[%s3 + $0x210] sm:$0xff] %v11283
  %11295 = vst [vmem:[%s3 + $0x218] sm:$0xff] %v11284
  %11296 = vst [vmem:[%s3 + $0x220] sm:$0xff] %v11285
  %11297 = vst [vmem:[%s3 + $0x228] sm:$0xff] %v11286
  %11298 = vst [vmem:[%s3 + $0x230] sm:$0xff] %v11287
  %11299 = vst [vmem:[%s3 + $0x238] sm:$0xff] %v11288
  %11300 = vst [vmem:[%s3 + $0x240] sm:$0xff] %v11289
  %11301 = vst [vmem:[%s3 + $0x248] sm:$0xff] %v11290
  %11302 = vst [vmem:[%s3 + $0x250] sm:$0xff] %v11291
  %11303 = vst [vmem:[%s3 + $0x258] sm:$0xff] %v11292
  %11304 = vst [vmem:[%s3 + $0x260] sm:$0xff] %v11293
  // Predicated region
  $region44: #{conv_res_block.1} parent=0 // pred_check
    _
  $region45: #{conv_res_block.1} parent=0 // pred_check_branch
    %11306 = sbr.rel (0) target = $region47
  $region46: #{conv_res_block.1} parent=0 // pred_region
    _
  $region47: #{conv_res_block.1} parent=0 // pred_fallthru
    _
  // Predicated region
  $region48: #{conv_res_block.1} parent=0 // pred_check
    _
  $region49: #{conv_res_block.1} parent=0 // pred_check_branch
    %11308 = sbr.rel (0) target = $region51
  $region50: #{conv_res_block.1} parent=0 // pred_region
    _
  $region51: #{conv_res_block.1} parent=0 // pred_fallthru
    _
  %11309 = vsyncmov [#allocation3]
  %s11310 = vpop.sfrf %11309
  %p11311 = scmp.eq.s32.totalorder %s11310, 0
  %p11312 = pneg %p11311
  %11314 = shalt.err (%p11312)

</llo_original>
